<compile_context>
chip_gen: v5e
topology: v5e:2x2
jax: 0.10.0
libtpu: 0.0.40
codegen_flags: <defaults>
</compile_context>

<pallas_src>
import numpy as np
import jax
import jax.numpy as jnp
from jax import lax
from jax.experimental import pallas as pl
from jax.experimental.pallas import tpu as pltpu


_PADL = 8  # left halo padding of the conv scratch (sublane-tile aligned store)


# ----------------------------------------------------------------------------
# Static bilinear (align_corners=True) helpers
# ----------------------------------------------------------------------------
def lerp_coeffs(n_out, n_in):
    """Static 2-tap gather indices + weights for align_corners bilinear."""
    if n_in == 1:
        return [0] * n_out, [0] * n_out, [0.0] * n_out
    if n_out == 1:
        coords = np.zeros((1,), np.float64)
    else:
        coords = np.arange(n_out, dtype=np.float64) * (n_in - 1) / (n_out - 1)
    lo = np.clip(np.floor(coords).astype(np.int64), 0, n_in - 2)
    frac = coords - lo
    return [int(v) for v in lo], [int(v) + 1 for v in lo], [float(v) for v in frac]


def bilinear_matrix(n_out, n_in):
    """Interpolation matrix for F.interpolate(mode='bilinear', align_corners=True)."""
    R = np.zeros((n_out, n_in), np.float32)
    lo, hi, fr = lerp_coeffs(n_out, n_in)
    for i in range(n_out):
        R[i, lo[i]] += 1.0 - fr[i]
        R[i, hi[i]] += fr[i]
    return R


# ----------------------------------------------------------------------------
# Weight packing (BN scale folded into the packed bf16 weights)
# ----------------------------------------------------------------------------
def pack_conv3x3_taps(w_oihw, scale=None, dtype=jnp.bfloat16):
    """(Cout, Cin, 3, 3) -> (9, Cin, Cout); per-output-channel scale folded in."""
    cout, cin = w_oihw.shape[0], w_oihw.shape[1]
    w = jnp.transpose(w_oihw, (2, 3, 1, 0)).reshape(9, cin, cout)
    if scale is not None:
        w = w * jnp.asarray(scale, jnp.float32)[None, None, :]
    return w.astype(dtype)


def pack_conv1x1(w_oihw, scale=None, dtype=jnp.bfloat16):
    w = jnp.transpose(w_oihw[:, :, 0, 0], (1, 0))
    if scale is not None:
        w = w * jnp.asarray(scale, jnp.float32)[None, :]
    return w.astype(dtype)


# ----------------------------------------------------------------------------
# decoder_end forward: one fused Pallas kernel, grid over batch
# ----------------------------------------------------------------------------
def decoder_end_pallas(params, path12, path1_2, l2, shape):
    """Forward of decoder_end (edge=False).  Inputs NCHW, output NCHW (B,1,oh,ow)."""
    p12 = jnp.transpose(path12, (0, 2, 3, 1))      # (B, H, W, 64)
    p1_2 = jnp.transpose(path1_2, (0, 2, 3, 1))    # (B, h2, w2, 64)
    l2n = jnp.transpose(l2, (0, 2, 3, 1))          # (B, H, W, 128)

    B, H, W, C_l2 = l2n.shape
    _, h2, w2, C = p1_2.shape
    oh, ow = int(shape[0]), int(shape[1])
    HW = H * W
    PW = W + 2 * _PADL                             # padded width of conv halo buffer

    # static 2-tap lerp tables for upsampling path1_2 -> (H, W)
    H_LO, H_HI, H_FR = lerp_coeffs(H, h2)
    W_LO, W_HI, W_FR = lerp_coeffs(W, w2)

    # interpolation matrices for the final resize to `shape`
    rh = jnp.asarray(bilinear_matrix(oh, H))       # (oh, H)
    rwT = jnp.asarray(bilinear_matrix(ow, W).T)    # (W, ow)

    def kernel(p12_ref, p1_2_ref, l2_ref,
               w_p3_ref, w_f1_ref, w_f2_ref, w_att_ref, w_b1_ref, w_b2_ref,
               w_head_ref, bias_ref, rh_ref, rwT_ref,
               out_ref, pad_ref, upt_ref, upp_ref):
        # Zero the halo buffer once per grid step; only its interior is
        # rewritten by each conv, the border stays zero ('same' padding).
        pad_ref[...] = jnp.zeros_like(pad_ref)

        def set_pad(x2d):
            pad_ref[1:H + 1, _PADL:_PADL + W, :] = x2d.reshape(H, W, C)

        def conv3x3(x2d, w_ref, bias_idx):
            """relu(conv3x3(x) * bn_scale + shift); scale pre-folded into w."""
            set_pad(x2d)
            acc = None
            for k in range(9):
                dy, dx = divmod(k, 3)
                tap = pad_ref[dy:dy + H, _PADL + dx - 1:_PADL + dx - 1 + W, :]
                tap = tap.reshape(HW, C).astype(jnp.bfloat16)
                d = jnp.dot(tap, w_ref[k], preferred_element_type=jnp.float32)
                acc = d if acc is None else acc + d
            return jnp.maximum(acc + bias_ref[bias_idx:bias_idx + 1, :], 0.0)

        # ---- path3_1 = relu(BN(conv1x1 128->64 (l2)))   [BN scale folded in w]
        l2_2d = l2_ref[...].reshape(HW, C_l2).astype(jnp.bfloat16)
        p31 = jnp.dot(l2_2d, w_p3_ref[...], preferred_element_type=jnp.float32)
        p31 = jnp.maximum(p31 + bias_ref[0:1, :], 0.0)               # (HW, 64)

        # ---- path3_2 = bilinear(path1_2 -> (H, W)): 2-tap lerp on the VPU
        x12 = p1_2_ref[...]                                           # (h2, w2, 64)
        for i in range(H):
            upt_ref[i] = x12[H_LO[i]] * (1.0 - H_FR[i]) + x12[H_HI[i]] * H_FR[i]
        for j in range(W):
            lo = upt_ref[:, W_LO[j]:W_LO[j] + 1, :]
            hi = upt_ref[:, W_HI[j]:W_HI[j] + 1, :]
            upp_ref[:, j:j + 1, :] = lo * (1.0 - W_FR[j]) + hi * W_FR[j]

        # ---- fuse3 = FFM(path3_1, path3_2): fused multiply + two 3x3 convs
        prod = p31 * upp_ref[...].reshape(HW, C)
        z = conv3x3(prod, w_f1_ref, 1)
        path3 = conv3x3(z, w_f2_ref, 2)

        # ---- fuse23 = BRM(path12, path3)
        x = p12_ref[...].reshape(HW, C) + path3
        m = jnp.mean(x, axis=0, keepdims=True)                        # GAP -> (1, 64)
        a = jax.nn.sigmoid(jnp.dot(m.astype(jnp.bfloat16), w_att_ref[...],
                                   preferred_element_type=jnp.float32))
        xb = x * (1.0 + a)                                            # x*atten + x
        z = conv3x3(xb, w_b1_ref, 3)
        pout = conv3x3(z, w_b2_ref, 4)

        # ---- head_1: 3x3 conv 64->1 (+bias), lane-dense (H, W) via VPU+reduce
        set_pad(pout)
        logit = None
        for k in range(9):
            dy, dx = divmod(k, 3)
            tap = pad_ref[dy:dy + H, _PADL + dx - 1:_PADL + dx - 1 + W, :]
            c = jnp.sum(tap * w_head_ref[k:k + 1, :], axis=-1)        # (H, W)
            logit = c if logit is None else logit + c
        logit = logit + bias_ref[5:6, 0:1]                            # head bias

        # ---- final bilinear resize to `shape` as two small 2-D matmuls
        t = jnp.dot(rh_ref[...], logit, preferred_element_type=jnp.float32)
        out_ref[...] = jnp.dot(t, rwT_ref[...], preferred_element_type=jnp.float32)

    def full(*s):  # full-array block, constant-indexed -> stays VMEM resident
        return pl.BlockSpec(s, lambda b, _s=s: (0,) * len(_s))

    grid_spec = pltpu.PrefetchScalarGridSpec(
        num_scalar_prefetch=0,
        grid=(B,),
        in_specs=[
            pl.BlockSpec((None, H, W, C), lambda b: (b, 0, 0, 0)),     # path12
            pl.BlockSpec((None, h2, w2, C), lambda b: (b, 0, 0, 0)),   # path1_2
            pl.BlockSpec((None, H, W, C_l2), lambda b: (b, 0, 0, 0)),  # l2
            full(C_l2, C),                                             # w_path3
            full(9, C, C), full(9, C, C),                              # fuse3 convs
            full(C, C),                                                # w_att
            full(9, C, C), full(9, C, C),                              # brm convs
            full(9, C),                                                # w_head
            full(6, C),                                                # bias table
            full(oh, H), full(W, ow),                                  # resize mats
        ],
        out_specs=pl.BlockSpec((None, oh, ow), lambda b: (b, 0, 0)),
        scratch_shapes=[
            pltpu.VMEM((H + 2, PW, C), jnp.float32),   # zero-padded conv halo
            pltpu.VMEM((H, w2, C), jnp.float32),       # upsample, H pass
            pltpu.VMEM((H, W, C), jnp.float32),        # upsample, W pass (path3_2)
        ],
    )

    logits = pl.pallas_call(
        kernel,
        out_shape=jax.ShapeDtypeStruct((B, oh, ow), jnp.float32),
        grid_spec=grid_spec,
        compiler_params=pltpu.CompilerParams(
            dimension_semantics=("parallel",)),
    )(p12, p1_2, l2n,
      params["w_path3"], params["w_f3c1"], params["w_f3c2"], params["w_att"],
      params["w_brm1"], params["w_brm2"], params["w_head"], params["bias_tbl"],
      rh, rwT)

    return logits[:, None, :, :]                      # NCHW (B, 1, oh, ow)


# ----------------------------------------------------------------------------
# Pure-JAX reference (NCHW) for correctness checking
# ----------------------------------------------------------------------------
def ref_forward(params, path12, path1_2, l2, shape):
    raw = params["raw"]
    bn_mul = 1.0 / np.sqrt(1.0 + 1e-5)

    def conv(x, w, b=None, pad=0):
        y = lax.conv_general_dilated(
            x, w, window_strides=(1, 1), padding=[(pad, pad), (pad, pad)],
            dimension_numbers=("NCHW", "OIHW", "NCHW"))
        if b is not None:
            y = y + b.reshape(1, -1, 1, 1)
        return y

    def resize(x, oh, ow):
        Rh = jnp.asarray(bilinear_matrix(oh, x.shape[2]))
        Rw = jnp.asarray(bilinear_matrix(ow, x.shape[3]))
        y = jnp.einsum("oh,bchw->bcow", Rh, x)
        return jnp.einsum("pw,bcow->bcop", Rw, y)

    H, W = l2.shape[2], l2.shape[3]
    path3_1 = jax.nn.relu(conv(l2, raw["path3_conv"]) * bn_mul)
    path3_2 = resize(path1_2, H, W)
    out = path3_1 * path3_2
    out = jax.nn.relu(conv(out, raw["fuse3_c1"], pad=1) * bn_mul)
    path3 = jax.nn.relu(conv(out, raw["fuse3_c2"], pad=1) * bn_mul)
    x = path12 + path3
    atten = jnp.mean(x, axis=(2, 3), keepdims=True)
    atten = jax.nn.sigmoid(conv(atten, raw["brm_att"]))
    out = x * atten + x
    out = jax.nn.relu(conv(out, raw["brm_c1"], pad=1) * bn_mul)
    path_out = jax.nn.relu(conv(out, raw["brm_c2"], pad=1) * bn_mul)
    logits = conv(path_out, raw["head1"], raw["head1_b"], pad=1)
    return resize(logits, shape[0], shape[1])


# ----------------------------------------------------------------------------
# Deterministic parameter init (kaiming fan_in for convs, identity BN)
# ----------------------------------------------------------------------------
def init_params(key):
    def kaiming(k, cout, cin, kh, kw):
        std = np.sqrt(2.0 / (cin * kh * kw))
        return jax.random.normal(k, (cout, cin, kh, kw), jnp.float32) * std

    ks = jax.random.split(key, 7)
    raw = {
        "path3_conv": kaiming(ks[0], 64, 128, 1, 1),
        "fuse3_c1": kaiming(ks[1], 64, 64, 3, 3),
        "fuse3_c2": kaiming(ks[2], 64, 64, 3, 3),
        "brm_att": kaiming(ks[3], 64, 64, 1, 1),
        "brm_c1": kaiming(ks[4], 64, 64, 3, 3),
        "brm_c2": kaiming(ks[5], 64, 64, 3, 3),
        "head1": kaiming(ks[6], 1, 64, 3, 3),
        "head1_b": jnp.zeros((1,), jnp.float32),
    }
    # inference-mode BN (gamma=1, beta=0, mean=0, var=1, eps=1e-5):
    # scale folded into packed weights; shift (=0) kept in the bias table.
    bn_scale = np.full((64,), 1.0 / np.sqrt(1.0 + 1e-5), np.float32)
    bias_tbl = np.zeros((6, 64), np.float32)      # rows 0-4: BN shifts; row 5: head bias
    bias_tbl[5, 0] = float(raw["head1_b"][0])

    params = {
        "raw": raw,
        "w_path3": pack_conv1x1(raw["path3_conv"], bn_scale),
        "w_f3c1": pack_conv3x3_taps(raw["fuse3_c1"], bn_scale),
        "w_f3c2": pack_conv3x3_taps(raw["fuse3_c2"], bn_scale),
        "w_att": pack_conv1x1(raw["brm_att"], None),
        "w_brm1": pack_conv3x3_taps(raw["brm_c1"], bn_scale),
        "w_brm2": pack_conv3x3_taps(raw["brm_c2"], bn_scale),
        "w_head": pack_conv3x3_taps(raw["head1"], None,
                                    dtype=jnp.float32).reshape(9, 64),
        "bias_tbl": jnp.asarray(bias_tbl),
    }
    return params


if __name__ == "__main__":
    key = jax.random.PRNGKey(0)
    kp, k1, k2, k3 = jax.random.split(key, 4)
    params = init_params(kp)

    B, H, W = 2, 8, 8
    path12 = jax.random.normal(k1, (B, 64, H, W), jnp.float32)            # fine-scale
    path1_2 = jax.random.normal(k2, (B, 64, H // 2, W // 2), jnp.float32)  # coarse
    l2 = jax.random.normal(k3, (B, 128, H, W), jnp.float32)               # backbone l2
    shape = (16, 16)                                                       # output size

    out = decoder_end_pallas(params, path12, path1_2, l2, shape)
    out = jax.block_until_ready(out)
    assert out.shape == (B, 1, shape[0], shape[1])

    ref = ref_forward(params, path12, path1_2, l2, shape)
    # bf16 MXU operands vs f32 reference -> loose-ish tolerance
    np.testing.assert_allclose(np.asarray(out), np.asarray(ref), rtol=5e-2, atol=5e-2)
    print("KERNEL_OK")
</pallas_src>

<mosaic_0001>
module attributes {stable_mosaic.version = 11 : i64} {
  func.func @kernel(%arg0: i32, %arg1: memref<1x8x8x64xf32, #tpu.memory_space<vmem>>, %arg2: memref<1x4x4x64xf32, #tpu.memory_space<vmem>>, %arg3: memref<1x8x8x128xf32, #tpu.memory_space<vmem>>, %arg4: memref<128x64xbf16, #tpu.memory_space<vmem>>, %arg5: memref<9x64x64xbf16, #tpu.memory_space<vmem>>, %arg6: memref<9x64x64xbf16, #tpu.memory_space<vmem>>, %arg7: memref<64x64xbf16, #tpu.memory_space<vmem>>, %arg8: memref<9x64x64xbf16, #tpu.memory_space<vmem>>, %arg9: memref<9x64x64xbf16, #tpu.memory_space<vmem>>, %arg10: memref<9x64xf32, #tpu.memory_space<vmem>>, %arg11: memref<6x64xf32, #tpu.memory_space<vmem>>, %arg12: memref<16x8xf32, #tpu.memory_space<vmem>>, %arg13: memref<8x16xf32, #tpu.memory_space<vmem>>, %arg14: memref<1x16x16xf32, #tpu.memory_space<vmem>>, %arg15: memref<10x24x64xf32, #tpu.memory_space<vmem>>, %arg16: memref<8x4x64xf32, #tpu.memory_space<vmem>>, %arg17: memref<8x8x64xf32, #tpu.memory_space<vmem>>) attributes {dimension_semantics = [#tpu.dimension_semantics<parallel>], iteration_bounds = array<i64: 2>, scalar_prefetch = 0 : i64, scratch_operands = 3 : i64, tpu.core_type = #tpu.core_type<tc>, window_params = [{transform_indices = @transform_0, window_bounds = array<i64: 1, 8, 8, 64>}, {transform_indices = @transform_1, window_bounds = array<i64: 1, 4, 4, 64>}, {transform_indices = @transform_2, window_bounds = array<i64: 1, 8, 8, 128>}, {pipeline_mode = #tpu.pipeline_mode<synchronous>, transform_indices = @transform_3, window_bounds = array<i64: 128, 64>}, {pipeline_mode = #tpu.pipeline_mode<synchronous>, transform_indices = @transform_4, window_bounds = array<i64: 9, 64, 64>}, {pipeline_mode = #tpu.pipeline_mode<synchronous>, transform_indices = @transform_5, window_bounds = array<i64: 9, 64, 64>}, {pipeline_mode = #tpu.pipeline_mode<synchronous>, transform_indices = @transform_6, window_bounds = array<i64: 64, 64>}, {pipeline_mode = #tpu.pipeline_mode<synchronous>, transform_indices = @transform_7, window_bounds = array<i64: 9, 64, 64>}, {pipeline_mode = #tpu.pipeline_mode<synchronous>, transform_indices = @transform_8, window_bounds = array<i64: 9, 64, 64>}, {pipeline_mode = #tpu.pipeline_mode<synchronous>, transform_indices = @transform_9, window_bounds = array<i64: 9, 64>}, {pipeline_mode = #tpu.pipeline_mode<synchronous>, transform_indices = @transform_10, window_bounds = array<i64: 6, 64>}, {pipeline_mode = #tpu.pipeline_mode<synchronous>, transform_indices = @transform_11, window_bounds = array<i64: 16, 8>}, {pipeline_mode = #tpu.pipeline_mode<synchronous>, transform_indices = @transform_12, window_bounds = array<i64: 8, 16>}, {transform_indices = @transform_13, window_bounds = array<i64: 1, 16, 16>}]} {
    %cst = arith.constant 0.000000e+00 : f32
    %0 = vector.broadcast %cst : f32 to vector<10x24x64xf32>
    %c0 = arith.constant 0 : index
    %c0_0 = arith.constant 0 : index
    %c0_1 = arith.constant 0 : index
    %1 = vector.load %arg15[%c0, %c0_0, %c0_1] : memref<10x24x64xf32, #tpu.memory_space<vmem>>, vector<10x24x64xf32>
    tpu.vector_store %arg15[%c0, %c0_0, %c0_1], %0 {strides = array<i32>} : memref<10x24x64xf32, #tpu.memory_space<vmem>>, vector<10x24x64xf32>,
    %c0_2 = arith.constant 0 : index
    %c0_3 = arith.constant 0 : index
    %c0_4 = arith.constant 0 : index
    %c0_5 = arith.constant 0 : index
    %2 = vector.load %arg3[%c0_2, %c0_3, %c0_4, %c0_5] : memref<1x8x8x128xf32, #tpu.memory_space<vmem>>, vector<1x8x8x128xf32>
    %3 = vector.shape_cast %2 : vector<1x8x8x128xf32> to vector<8x8x128xf32>
    %4 = vector.shape_cast %3 : vector<8x8x128xf32> to vector<64x128xf32>
    %5 = arith.truncf %4 : vector<64x128xf32> to vector<64x128xbf16>
    %c0_6 = arith.constant 0 : index
    %c0_7 = arith.constant 0 : index
    %6 = vector.load %arg4[%c0_6, %c0_7] : memref<128x64xbf16, #tpu.memory_space<vmem>>, vector<128x64xbf16>
    %cst_8 = arith.constant dense<0.000000e+00> : vector<64x64xf32>
    %7 = tpu.matmul %5, %6, %cst_8 {dimension_numbers = #tpu.dot_dimension_numbers<[1], [0], [0], [1], [0, 0, 1, 1], [], []>} : vector<64x128xbf16>, vector<128x64xbf16>, vector<64x64xf32> -> vector<64x64xf32>
    %c0_9 = arith.constant 0 : index
    %c0_10 = arith.constant 0 : index
    %8 = vector.load %arg11[%c0_9, %c0_10] : memref<6x64xf32, #tpu.memory_space<vmem>>, vector<1x64xf32>
    %9 = vector.broadcast %8 : vector<1x64xf32> to vector<64x64xf32>
    %10 = arith.addf %7, %9 : vector<64x64xf32>
    %cst_11 = arith.constant 0.000000e+00 : f32
    %11 = vector.broadcast %cst_11 : f32 to vector<64x64xf32>
    %12 = arith.maximumf %10, %11 : vector<64x64xf32>
    %c0_12 = arith.constant 0 : index
    %c0_13 = arith.constant 0 : index
    %c0_14 = arith.constant 0 : index
    %c0_15 = arith.constant 0 : index
    %13 = vector.load %arg2[%c0_12, %c0_13, %c0_14, %c0_15] : memref<1x4x4x64xf32, #tpu.memory_space<vmem>>, vector<1x4x4x64xf32>
    %14 = vector.shape_cast %13 : vector<1x4x4x64xf32> to vector<4x4x64xf32>
    %15 = vector.extract_strided_slice %14 {offsets = [0, 0, 0], sizes = [1, 4, 64], strides = [1, 1, 1]} : vector<4x4x64xf32> to vector<1x4x64xf32>
    %16 = vector.shape_cast %15 : vector<1x4x64xf32> to vector<4x64xf32>
    %cst_16 = arith.constant 1.000000e+00 : f32
    %17 = vector.broadcast %cst_16 : f32 to vector<4x64xf32>
    %18 = arith.mulf %16, %17 : vector<4x64xf32>
    %19 = vector.extract_strided_slice %14 {offsets = [1, 0, 0], sizes = [1, 4, 64], strides = [1, 1, 1]} : vector<4x4x64xf32> to vector<1x4x64xf32>
    %20 = vector.shape_cast %19 : vector<1x4x64xf32> to vector<4x64xf32>
    %cst_17 = arith.constant 0.000000e+00 : f32
    %21 = vector.broadcast %cst_17 : f32 to vector<4x64xf32>
    %22 = arith.mulf %20, %21 : vector<4x64xf32>
    %23 = arith.addf %18, %22 : vector<4x64xf32>
    %c0_18 = arith.constant 0 : index
    %c0_19 = arith.constant 0 : index
    %c0_20 = arith.constant 0 : index
    %24 = vector.load %arg16[%c0_18, %c0_19, %c0_20] : memref<8x4x64xf32, #tpu.memory_space<vmem>>, vector<1x4x64xf32>
    %25 = vector.shape_cast %24 : vector<1x4x64xf32> to vector<4x64xf32>
    %26 = vector.shape_cast %23 : vector<4x64xf32> to vector<1x4x64xf32>
    tpu.vector_store %arg16[%c0_18, %c0_19, %c0_20], %26 {strides = array<i32>} : memref<8x4x64xf32, #tpu.memory_space<vmem>>, vector<1x4x64xf32>,
    %27 = vector.extract_strided_slice %14 {offsets = [0, 0, 0], sizes = [1, 4, 64], strides = [1, 1, 1]} : vector<4x4x64xf32> to vector<1x4x64xf32>
    %28 = vector.shape_cast %27 : vector<1x4x64xf32> to vector<4x64xf32>
    %cst_21 = arith.constant 0.571428597 : f32
    %29 = vector.broadcast %cst_21 : f32 to vector<4x64xf32>
    %30 = arith.mulf %28, %29 : vector<4x64xf32>
    %31 = vector.extract_strided_slice %14 {offsets = [1, 0, 0], sizes = [1, 4, 64], strides = [1, 1, 1]} : vector<4x4x64xf32> to vector<1x4x64xf32>
    %32 = vector.shape_cast %31 : vector<1x4x64xf32> to vector<4x64xf32>
    %cst_22 = arith.constant 0.428571433 : f32
    %33 = vector.broadcast %cst_22 : f32 to vector<4x64xf32>
    %34 = arith.mulf %32, %33 : vector<4x64xf32>
    %35 = arith.addf %30, %34 : vector<4x64xf32>
    %c1 = arith.constant 1 : index
    %c0_23 = arith.constant 0 : index
    %c0_24 = arith.constant 0 : index
    %36 = vector.load %arg16[%c1, %c0_23, %c0_24] : memref<8x4x64xf32, #tpu.memory_space<vmem>>, vector<1x4x64xf32>
    %37 = vector.shape_cast %36 : vector<1x4x64xf32> to vector<4x64xf32>
    %38 = vector.shape_cast %35 : vector<4x64xf32> to vector<1x4x64xf32>
    tpu.vector_store %arg16[%c1, %c0_23, %c0_24], %38 {strides = array<i32>} : memref<8x4x64xf32, #tpu.memory_space<vmem>>, vector<1x4x64xf32>,
    %39 = vector.extract_strided_slice %14 {offsets = [0, 0, 0], sizes = [1, 4, 64], strides = [1, 1, 1]} : vector<4x4x64xf32> to vector<1x4x64xf32>
    %40 = vector.shape_cast %39 : vector<1x4x64xf32> to vector<4x64xf32>
    %cst_25 = arith.constant 0.142857149 : f32
    %41 = vector.broadcast %cst_25 : f32 to vector<4x64xf32>
    %42 = arith.mulf %40, %41 : vector<4x64xf32>
    %43 = vector.extract_strided_slice %14 {offsets = [1, 0, 0], sizes = [1, 4, 64], strides = [1, 1, 1]} : vector<4x4x64xf32> to vector<1x4x64xf32>
    %44 = vector.shape_cast %43 : vector<1x4x64xf32> to vector<4x64xf32>
    %cst_26 = arith.constant 0.857142865 : f32
    %45 = vector.broadcast %cst_26 : f32 to vector<4x64xf32>
    %46 = arith.mulf %44, %45 : vector<4x64xf32>
    %47 = arith.addf %42, %46 : vector<4x64xf32>
    %c2 = arith.constant 2 : index
    %c0_27 = arith.constant 0 : index
    %c0_28 = arith.constant 0 : index
    %48 = vector.load %arg16[%c2, %c0_27, %c0_28] : memref<8x4x64xf32, #tpu.memory_space<vmem>>, vector<1x4x64xf32>
    %49 = vector.shape_cast %48 : vector<1x4x64xf32> to vector<4x64xf32>
    %50 = vector.shape_cast %47 : vector<4x64xf32> to vector<1x4x64xf32>
    tpu.vector_store %arg16[%c2, %c0_27, %c0_28], %50 {strides = array<i32>} : memref<8x4x64xf32, #tpu.memory_space<vmem>>, vector<1x4x64xf32>,
    %51 = vector.extract_strided_slice %14 {offsets = [1, 0, 0], sizes = [1, 4, 64], strides = [1, 1, 1]} : vector<4x4x64xf32> to vector<1x4x64xf32>
    %52 = vector.shape_cast %51 : vector<1x4x64xf32> to vector<4x64xf32>
    %cst_29 = arith.constant 0.714285731 : f32
    %53 = vector.broadcast %cst_29 : f32 to vector<4x64xf32>
    %54 = arith.mulf %52, %53 : vector<4x64xf32>
    %55 = vector.extract_strided_slice %14 {offsets = [2, 0, 0], sizes = [1, 4, 64], strides = [1, 1, 1]} : vector<4x4x64xf32> to vector<1x4x64xf32>
    %56 = vector.shape_cast %55 : vector<1x4x64xf32> to vector<4x64xf32>
    %cst_30 = arith.constant 0.285714298 : f32
    %57 = vector.broadcast %cst_30 : f32 to vector<4x64xf32>
    %58 = arith.mulf %56, %57 : vector<4x64xf32>
    %59 = arith.addf %54, %58 : vector<4x64xf32>
    %c3 = arith.constant 3 : index
    %c0_31 = arith.constant 0 : index
    %c0_32 = arith.constant 0 : index
    %60 = vector.load %arg16[%c3, %c0_31, %c0_32] : memref<8x4x64xf32, #tpu.memory_space<vmem>>, vector<1x4x64xf32>
    %61 = vector.shape_cast %60 : vector<1x4x64xf32> to vector<4x64xf32>
    %62 = vector.shape_cast %59 : vector<4x64xf32> to vector<1x4x64xf32>
    tpu.vector_store %arg16[%c3, %c0_31, %c0_32], %62 {strides = array<i32>} : memref<8x4x64xf32, #tpu.memory_space<vmem>>, vector<1x4x64xf32>,
    %63 = vector.extract_strided_slice %14 {offsets = [1, 0, 0], sizes = [1, 4, 64], strides = [1, 1, 1]} : vector<4x4x64xf32> to vector<1x4x64xf32>
    %64 = vector.shape_cast %63 : vector<1x4x64xf32> to vector<4x64xf32>
    %cst_33 = arith.constant 0.285714298 : f32
    %65 = vector.broadcast %cst_33 : f32 to vector<4x64xf32>
    %66 = arith.mulf %64, %65 : vector<4x64xf32>
    %67 = vector.extract_strided_slice %14 {offsets = [2, 0, 0], sizes = [1, 4, 64], strides = [1, 1, 1]} : vector<4x4x64xf32> to vector<1x4x64xf32>
    %68 = vector.shape_cast %67 : vector<1x4x64xf32> to vector<4x64xf32>
    %cst_34 = arith.constant 0.714285731 : f32
    %69 = vector.broadcast %cst_34 : f32 to vector<4x64xf32>
    %70 = arith.mulf %68, %69 : vector<4x64xf32>
    %71 = arith.addf %66, %70 : vector<4x64xf32>
    %c4 = arith.constant 4 : index
    %c0_35 = arith.constant 0 : index
    %c0_36 = arith.constant 0 : index
    %72 = vector.load %arg16[%c4, %c0_35, %c0_36] : memref<8x4x64xf32, #tpu.memory_space<vmem>>, vector<1x4x64xf32>
    %73 = vector.shape_cast %72 : vector<1x4x64xf32> to vector<4x64xf32>
    %74 = vector.shape_cast %71 : vector<4x64xf32> to vector<1x4x64xf32>
    tpu.vector_store %arg16[%c4, %c0_35, %c0_36], %74 {strides = array<i32>} : memref<8x4x64xf32, #tpu.memory_space<vmem>>, vector<1x4x64xf32>,
    %75 = vector.extract_strided_slice %14 {offsets = [2, 0, 0], sizes = [1, 4, 64], strides = [1, 1, 1]} : vector<4x4x64xf32> to vector<1x4x64xf32>
    %76 = vector.shape_cast %75 : vector<1x4x64xf32> to vector<4x64xf32>
    %cst_37 = arith.constant 0.857142865 : f32
    %77 = vector.broadcast %cst_37 : f32 to vector<4x64xf32>
    %78 = arith.mulf %76, %77 : vector<4x64xf32>
    %79 = vector.extract_strided_slice %14 {offsets = [3, 0, 0], sizes = [1, 4, 64], strides = [1, 1, 1]} : vector<4x4x64xf32> to vector<1x4x64xf32>
    %80 = vector.shape_cast %79 : vector<1x4x64xf32> to vector<4x64xf32>
    %cst_38 = arith.constant 0.142857149 : f32
    %81 = vector.broadcast %cst_38 : f32 to vector<4x64xf32>
    %82 = arith.mulf %80, %81 : vector<4x64xf32>
    %83 = arith.addf %78, %82 : vector<4x64xf32>
    %c5 = arith.constant 5 : index
    %c0_39 = arith.constant 0 : index
    %c0_40 = arith.constant 0 : index
    %84 = vector.load %arg16[%c5, %c0_39, %c0_40] : memref<8x4x64xf32, #tpu.memory_space<vmem>>, vector<1x4x64xf32>
    %85 = vector.shape_cast %84 : vector<1x4x64xf32> to vector<4x64xf32>
    %86 = vector.shape_cast %83 : vector<4x64xf32> to vector<1x4x64xf32>
    tpu.vector_store %arg16[%c5, %c0_39, %c0_40], %86 {strides = array<i32>} : memref<8x4x64xf32, #tpu.memory_space<vmem>>, vector<1x4x64xf32>,
    %87 = vector.extract_strided_slice %14 {offsets = [2, 0, 0], sizes = [1, 4, 64], strides = [1, 1, 1]} : vector<4x4x64xf32> to vector<1x4x64xf32>
    %88 = vector.shape_cast %87 : vector<1x4x64xf32> to vector<4x64xf32>
    %cst_41 = arith.constant 0.428571433 : f32
    %89 = vector.broadcast %cst_41 : f32 to vector<4x64xf32>
    %90 = arith.mulf %88, %89 : vector<4x64xf32>
    %91 = vector.extract_strided_slice %14 {offsets = [3, 0, 0], sizes = [1, 4, 64], strides = [1, 1, 1]} : vector<4x4x64xf32> to vector<1x4x64xf32>
    %92 = vector.shape_cast %91 : vector<1x4x64xf32> to vector<4x64xf32>
    %cst_42 = arith.constant 0.571428597 : f32
    %93 = vector.broadcast %cst_42 : f32 to vector<4x64xf32>
    %94 = arith.mulf %92, %93 : vector<4x64xf32>
    %95 = arith.addf %90, %94 : vector<4x64xf32>
    %c6 = arith.constant 6 : index
    %c0_43 = arith.constant 0 : index
    %c0_44 = arith.constant 0 : index
    %96 = vector.load %arg16[%c6, %c0_43, %c0_44] : memref<8x4x64xf32, #tpu.memory_space<vmem>>, vector<1x4x64xf32>
    %97 = vector.shape_cast %96 : vector<1x4x64xf32> to vector<4x64xf32>
    %98 = vector.shape_cast %95 : vector<4x64xf32> to vector<1x4x64xf32>
    tpu.vector_store %arg16[%c6, %c0_43, %c0_44], %98 {strides = array<i32>} : memref<8x4x64xf32, #tpu.memory_space<vmem>>, vector<1x4x64xf32>,
    %99 = vector.extract_strided_slice %14 {offsets = [2, 0, 0], sizes = [1, 4, 64], strides = [1, 1, 1]} : vector<4x4x64xf32> to vector<1x4x64xf32>
    %100 = vector.shape_cast %99 : vector<1x4x64xf32> to vector<4x64xf32>
    %cst_45 = arith.constant 0.000000e+00 : f32
    %101 = vector.broadcast %cst_45 : f32 to vector<4x64xf32>
    %102 = arith.mulf %100, %101 : vector<4x64xf32>
    %103 = vector.extract_strided_slice %14 {offsets = [3, 0, 0], sizes = [1, 4, 64], strides = [1, 1, 1]} : vector<4x4x64xf32> to vector<1x4x64xf32>
    %104 = vector.shape_cast %103 : vector<1x4x64xf32> to vector<4x64xf32>
    %cst_46 = arith.constant 1.000000e+00 : f32
    %105 = vector.broadcast %cst_46 : f32 to vector<4x64xf32>
    %106 = arith.mulf %104, %105 : vector<4x64xf32>
    %107 = arith.addf %102, %106 : vector<4x64xf32>
    %c7 = arith.constant 7 : index
    %c0_47 = arith.constant 0 : index
    %c0_48 = arith.constant 0 : index
    %108 = vector.load %arg16[%c7, %c0_47, %c0_48] : memref<8x4x64xf32, #tpu.memory_space<vmem>>, vector<1x4x64xf32>
    %109 = vector.shape_cast %108 : vector<1x4x64xf32> to vector<4x64xf32>
    %110 = vector.shape_cast %107 : vector<4x64xf32> to vector<1x4x64xf32>
    tpu.vector_store %arg16[%c7, %c0_47, %c0_48], %110 {strides = array<i32>} : memref<8x4x64xf32, #tpu.memory_space<vmem>>, vector<1x4x64xf32>,
    %c0_49 = arith.constant 0 : index
    %c0_50 = arith.constant 0 : index
    %c0_51 = arith.constant 0 : index
    %111 = vector.load %arg16[%c0_49, %c0_50, %c0_51] : memref<8x4x64xf32, #tpu.memory_space<vmem>>, vector<8x1x64xf32>
    %c0_52 = arith.constant 0 : index
    %c1_53 = arith.constant 1 : index
    %c0_54 = arith.constant 0 : index
    %112 = vector.load %arg16[%c0_52, %c1_53, %c0_54] : memref<8x4x64xf32, #tpu.memory_space<vmem>>, vector<8x1x64xf32>
    %cst_55 = arith.constant 1.000000e+00 : f32
    %113 = vector.broadcast %cst_55 : f32 to vector<8x1x64xf32>
    %114 = arith.mulf %111, %113 : vector<8x1x64xf32>
    %cst_56 = arith.constant 0.000000e+00 : f32
    %115 = vector.broadcast %cst_56 : f32 to vector<8x1x64xf32>
    %116 = arith.mulf %112, %115 : vector<8x1x64xf32>
    %117 = arith.addf %114, %116 : vector<8x1x64xf32>
    %c0_57 = arith.constant 0 : index
    %c0_58 = arith.constant 0 : index
    %c0_59 = arith.constant 0 : index
    %118 = vector.load %arg17[%c0_57, %c0_58, %c0_59] : memref<8x8x64xf32, #tpu.memory_space<vmem>>, vector<8x1x64xf32>
    tpu.vector_store %arg17[%c0_57, %c0_58, %c0_59], %117 {strides = array<i32>} : memref<8x8x64xf32, #tpu.memory_space<vmem>>, vector<8x1x64xf32>,
    %c0_60 = arith.constant 0 : index
    %c0_61 = arith.constant 0 : index
    %c0_62 = arith.constant 0 : index
    %119 = vector.load %arg16[%c0_60, %c0_61, %c0_62] : memref<8x4x64xf32, #tpu.memory_space<vmem>>, vector<8x1x64xf32>
    %c0_63 = arith.constant 0 : index
    %c1_64 = arith.constant 1 : index
    %c0_65 = arith.constant 0 : index
    %120 = vector.load %arg16[%c0_63, %c1_64, %c0_65] : memref<8x4x64xf32, #tpu.memory_space<vmem>>, vector<8x1x64xf32>
    %cst_66 = arith.constant 0.571428597 : f32
    %121 = vector.broadcast %cst_66 : f32 to vector<8x1x64xf32>
    %122 = arith.mulf %119, %121 : vector<8x1x64xf32>
    %cst_67 = arith.constant 0.428571433 : f32
    %123 = vector.broadcast %cst_67 : f32 to vector<8x1x64xf32>
    %124 = arith.mulf %120, %123 : vector<8x1x64xf32>
    %125 = arith.addf %122, %124 : vector<8x1x64xf32>
    %c0_68 = arith.constant 0 : index
    %c1_69 = arith.constant 1 : index
    %c0_70 = arith.constant 0 : index
    %126 = vector.load %arg17[%c0_68, %c1_69, %c0_70] : memref<8x8x64xf32, #tpu.memory_space<vmem>>, vector<8x1x64xf32>
    tpu.vector_store %arg17[%c0_68, %c1_69, %c0_70], %125 {strides = array<i32>} : memref<8x8x64xf32, #tpu.memory_space<vmem>>, vector<8x1x64xf32>,
    %c0_71 = arith.constant 0 : index
    %c0_72 = arith.constant 0 : index
    %c0_73 = arith.constant 0 : index
    %127 = vector.load %arg16[%c0_71, %c0_72, %c0_73] : memref<8x4x64xf32, #tpu.memory_space<vmem>>, vector<8x1x64xf32>
    %c0_74 = arith.constant 0 : index
    %c1_75 = arith.constant 1 : index
    %c0_76 = arith.constant 0 : index
    %128 = vector.load %arg16[%c0_74, %c1_75, %c0_76] : memref<8x4x64xf32, #tpu.memory_space<vmem>>, vector<8x1x64xf32>
    %cst_77 = arith.constant 0.142857149 : f32
    %129 = vector.broadcast %cst_77 : f32 to vector<8x1x64xf32>
    %130 = arith.mulf %127, %129 : vector<8x1x64xf32>
    %cst_78 = arith.constant 0.857142865 : f32
    %131 = vector.broadcast %cst_78 : f32 to vector<8x1x64xf32>
    %132 = arith.mulf %128, %131 : vector<8x1x64xf32>
    %133 = arith.addf %130, %132 : vector<8x1x64xf32>
    %c0_79 = arith.constant 0 : index
    %c2_80 = arith.constant 2 : index
    %c0_81 = arith.constant 0 : index
    %134 = vector.load %arg17[%c0_79, %c2_80, %c0_81] : memref<8x8x64xf32, #tpu.memory_space<vmem>>, vector<8x1x64xf32>
    tpu.vector_store %arg17[%c0_79, %c2_80, %c0_81], %133 {strides = array<i32>} : memref<8x8x64xf32, #tpu.memory_space<vmem>>, vector<8x1x64xf32>,
    %c0_82 = arith.constant 0 : index
    %c1_83 = arith.constant 1 : index
    %c0_84 = arith.constant 0 : index
    %135 = vector.load %arg16[%c0_82, %c1_83, %c0_84] : memref<8x4x64xf32, #tpu.memory_space<vmem>>, vector<8x1x64xf32>
    %c0_85 = arith.constant 0 : index
    %c2_86 = arith.constant 2 : index
    %c0_87 = arith.constant 0 : index
    %136 = vector.load %arg16[%c0_85, %c2_86, %c0_87] : memref<8x4x64xf32, #tpu.memory_space<vmem>>, vector<8x1x64xf32>
    %cst_88 = arith.constant 0.714285731 : f32
    %137 = vector.broadcast %cst_88 : f32 to vector<8x1x64xf32>
    %138 = arith.mulf %135, %137 : vector<8x1x64xf32>
    %cst_89 = arith.constant 0.285714298 : f32
    %139 = vector.broadcast %cst_89 : f32 to vector<8x1x64xf32>
    %140 = arith.mulf %136, %139 : vector<8x1x64xf32>
    %141 = arith.addf %138, %140 : vector<8x1x64xf32>
    %c0_90 = arith.constant 0 : index
    %c3_91 = arith.constant 3 : index
    %c0_92 = arith.constant 0 : index
    %142 = vector.load %arg17[%c0_90, %c3_91, %c0_92] : memref<8x8x64xf32, #tpu.memory_space<vmem>>, vector<8x1x64xf32>
    tpu.vector_store %arg17[%c0_90, %c3_91, %c0_92], %141 {strides = array<i32>} : memref<8x8x64xf32, #tpu.memory_space<vmem>>, vector<8x1x64xf32>,
    %c0_93 = arith.constant 0 : index
    %c1_94 = arith.constant 1 : index
    %c0_95 = arith.constant 0 : index
    %143 = vector.load %arg16[%c0_93, %c1_94, %c0_95] : memref<8x4x64xf32, #tpu.memory_space<vmem>>, vector<8x1x64xf32>
    %c0_96 = arith.constant 0 : index
    %c2_97 = arith.constant 2 : index
    %c0_98 = arith.constant 0 : index
    %144 = vector.load %arg16[%c0_96, %c2_97, %c0_98] : memref<8x4x64xf32, #tpu.memory_space<vmem>>, vector<8x1x64xf32>
    %cst_99 = arith.constant 0.285714298 : f32
    %145 = vector.broadcast %cst_99 : f32 to vector<8x1x64xf32>
    %146 = arith.mulf %143, %145 : vector<8x1x64xf32>
    %cst_100 = arith.constant 0.714285731 : f32
    %147 = vector.broadcast %cst_100 : f32 to vector<8x1x64xf32>
    %148 = arith.mulf %144, %147 : vector<8x1x64xf32>
    %149 = arith.addf %146, %148 : vector<8x1x64xf32>
    %c0_101 = arith.constant 0 : index
    %c4_102 = arith.constant 4 : index
    %c0_103 = arith.constant 0 : index
    %150 = vector.load %arg17[%c0_101, %c4_102, %c0_103] : memref<8x8x64xf32, #tpu.memory_space<vmem>>, vector<8x1x64xf32>
    tpu.vector_store %arg17[%c0_101, %c4_102, %c0_103], %149 {strides = array<i32>} : memref<8x8x64xf32, #tpu.memory_space<vmem>>, vector<8x1x64xf32>,
    %c0_104 = arith.constant 0 : index
    %c2_105 = arith.constant 2 : index
    %c0_106 = arith.constant 0 : index
    %151 = vector.load %arg16[%c0_104, %c2_105, %c0_106] : memref<8x4x64xf32, #tpu.memory_space<vmem>>, vector<8x1x64xf32>
    %c0_107 = arith.constant 0 : index
    %c3_108 = arith.constant 3 : index
    %c0_109 = arith.constant 0 : index
    %152 = vector.load %arg16[%c0_107, %c3_108, %c0_109] : memref<8x4x64xf32, #tpu.memory_space<vmem>>, vector<8x1x64xf32>
    %cst_110 = arith.constant 0.857142865 : f32
    %153 = vector.broadcast %cst_110 : f32 to vector<8x1x64xf32>
    %154 = arith.mulf %151, %153 : vector<8x1x64xf32>
    %cst_111 = arith.constant 0.142857149 : f32
    %155 = vector.broadcast %cst_111 : f32 to vector<8x1x64xf32>
    %156 = arith.mulf %152, %155 : vector<8x1x64xf32>
    %157 = arith.addf %154, %156 : vector<8x1x64xf32>
    %c0_112 = arith.constant 0 : index
    %c5_113 = arith.constant 5 : index
    %c0_114 = arith.constant 0 : index
    %158 = vector.load %arg17[%c0_112, %c5_113, %c0_114] : memref<8x8x64xf32, #tpu.memory_space<vmem>>, vector<8x1x64xf32>
    tpu.vector_store %arg17[%c0_112, %c5_113, %c0_114], %157 {strides = array<i32>} : memref<8x8x64xf32, #tpu.memory_space<vmem>>, vector<8x1x64xf32>,
    %c0_115 = arith.constant 0 : index
    %c2_116 = arith.constant 2 : index
    %c0_117 = arith.constant 0 : index
    %159 = vector.load %arg16[%c0_115, %c2_116, %c0_117] : memref<8x4x64xf32, #tpu.memory_space<vmem>>, vector<8x1x64xf32>
    %c0_118 = arith.constant 0 : index
    %c3_119 = arith.constant 3 : index
    %c0_120 = arith.constant 0 : index
    %160 = vector.load %arg16[%c0_118, %c3_119, %c0_120] : memref<8x4x64xf32, #tpu.memory_space<vmem>>, vector<8x1x64xf32>
    %cst_121 = arith.constant 0.428571433 : f32
    %161 = vector.broadcast %cst_121 : f32 to vector<8x1x64xf32>
    %162 = arith.mulf %159, %161 : vector<8x1x64xf32>
    %cst_122 = arith.constant 0.571428597 : f32
    %163 = vector.broadcast %cst_122 : f32 to vector<8x1x64xf32>
    %164 = arith.mulf %160, %163 : vector<8x1x64xf32>
    %165 = arith.addf %162, %164 : vector<8x1x64xf32>
    %c0_123 = arith.constant 0 : index
    %c6_124 = arith.constant 6 : index
    %c0_125 = arith.constant 0 : index
    %166 = vector.load %arg17[%c0_123, %c6_124, %c0_125] : memref<8x8x64xf32, #tpu.memory_space<vmem>>, vector<8x1x64xf32>
    tpu.vector_store %arg17[%c0_123, %c6_124, %c0_125], %165 {strides = array<i32>} : memref<8x8x64xf32, #tpu.memory_space<vmem>>, vector<8x1x64xf32>,
    %c0_126 = arith.constant 0 : index
    %c2_127 = arith.constant 2 : index
    %c0_128 = arith.constant 0 : index
    %167 = vector.load %arg16[%c0_126, %c2_127, %c0_128] : memref<8x4x64xf32, #tpu.memory_space<vmem>>, vector<8x1x64xf32>
    %c0_129 = arith.constant 0 : index
    %c3_130 = arith.constant 3 : index
    %c0_131 = arith.constant 0 : index
    %168 = vector.load %arg16[%c0_129, %c3_130, %c0_131] : memref<8x4x64xf32, #tpu.memory_space<vmem>>, vector<8x1x64xf32>
    %cst_132 = arith.constant 0.000000e+00 : f32
    %169 = vector.broadcast %cst_132 : f32 to vector<8x1x64xf32>
    %170 = arith.mulf %167, %169 : vector<8x1x64xf32>
    %cst_133 = arith.constant 1.000000e+00 : f32
    %171 = vector.broadcast %cst_133 : f32 to vector<8x1x64xf32>
    %172 = arith.mulf %168, %171 : vector<8x1x64xf32>
    %173 = arith.addf %170, %172 : vector<8x1x64xf32>
    %c0_134 = arith.constant 0 : index
    %c7_135 = arith.constant 7 : index
    %c0_136 = arith.constant 0 : index
    %174 = vector.load %arg17[%c0_134, %c7_135, %c0_136] : memref<8x8x64xf32, #tpu.memory_space<vmem>>, vector<8x1x64xf32>
    tpu.vector_store %arg17[%c0_134, %c7_135, %c0_136], %173 {strides = array<i32>} : memref<8x8x64xf32, #tpu.memory_space<vmem>>, vector<8x1x64xf32>,
    %c0_137 = arith.constant 0 : index
    %c0_138 = arith.constant 0 : index
    %c0_139 = arith.constant 0 : index
    %175 = vector.load %arg17[%c0_137, %c0_138, %c0_139] : memref<8x8x64xf32, #tpu.memory_space<vmem>>, vector<8x8x64xf32>
    %176 = vector.shape_cast %175 : vector<8x8x64xf32> to vector<64x64xf32>
    %177 = arith.mulf %12, %176 : vector<64x64xf32>
    %178 = vector.shape_cast %177 : vector<64x64xf32> to vector<8x8x64xf32>
    %c1_140 = arith.constant 1 : index
    %c8 = arith.constant 8 : index
    %c0_141 = arith.constant 0 : index
    %179 = vector.load %arg15[%c1_140, %c8, %c0_141] : memref<10x24x64xf32, #tpu.memory_space<vmem>>, vector<8x8x64xf32>
    tpu.vector_store %arg15[%c1_140, %c8, %c0_141], %178 {strides = array<i32>} : memref<10x24x64xf32, #tpu.memory_space<vmem>>, vector<8x8x64xf32>,
    %c0_142 = arith.constant 0 : index
    %c7_143 = arith.constant 7 : index
    %c0_144 = arith.constant 0 : index
    %180 = vector.load %arg15[%c0_142, %c7_143, %c0_144] : memref<10x24x64xf32, #tpu.memory_space<vmem>>, vector<8x8x64xf32>
    %181 = vector.shape_cast %180 : vector<8x8x64xf32> to vector<64x64xf32>
    %182 = arith.truncf %181 : vector<64x64xf32> to vector<64x64xbf16>
    %c0_145 = arith.constant 0 : index
    %c0_146 = arith.constant 0 : index
    %c0_147 = arith.constant 0 : index
    %183 = vector.load %arg5[%c0_145, %c0_146, %c0_147] : memref<9x64x64xbf16, #tpu.memory_space<vmem>>, vector<1x64x64xbf16>
    %184 = vector.shape_cast %183 : vector<1x64x64xbf16> to vector<64x64xbf16>
    %cst_148 = arith.constant dense<0.000000e+00> : vector<64x64xf32>
    %185 = tpu.matmul %182, %184, %cst_148 {dimension_numbers = #tpu.dot_dimension_numbers<[1], [0], [0], [1], [0, 0, 1, 1], [], []>} : vector<64x64xbf16>, vector<64x64xbf16>, vector<64x64xf32> -> vector<64x64xf32>
    %c0_149 = arith.constant 0 : index
    %c8_150 = arith.constant 8 : index
    %c0_151 = arith.constant 0 : index
    %186 = vector.load %arg15[%c0_149, %c8_150, %c0_151] : memref<10x24x64xf32, #tpu.memory_space<vmem>>, vector<8x8x64xf32>
    %187 = vector.shape_cast %186 : vector<8x8x64xf32> to vector<64x64xf32>
    %188 = arith.truncf %187 : vector<64x64xf32> to vector<64x64xbf16>
    %c1_152 = arith.constant 1 : index
    %c0_153 = arith.constant 0 : index
    %c0_154 = arith.constant 0 : index
    %189 = vector.load %arg5[%c1_152, %c0_153, %c0_154] : memref<9x64x64xbf16, #tpu.memory_space<vmem>>, vector<1x64x64xbf16>
    %190 = vector.shape_cast %189 : vector<1x64x64xbf16> to vector<64x64xbf16>
    %cst_155 = arith.constant dense<0.000000e+00> : vector<64x64xf32>
    %191 = tpu.matmul %188, %190, %cst_155 {dimension_numbers = #tpu.dot_dimension_numbers<[1], [0], [0], [1], [0, 0, 1, 1], [], []>} : vector<64x64xbf16>, vector<64x64xbf16>, vector<64x64xf32> -> vector<64x64xf32>
    %192 = arith.addf %185, %191 : vector<64x64xf32>
    %c0_156 = arith.constant 0 : index
    %c9 = arith.constant 9 : index
    %c0_157 = arith.constant 0 : index
    %193 = vector.load %arg15[%c0_156, %c9, %c0_157] : memref<10x24x64xf32, #tpu.memory_space<vmem>>, vector<8x8x64xf32>
    %194 = vector.shape_cast %193 : vector<8x8x64xf32> to vector<64x64xf32>
    %195 = arith.truncf %194 : vector<64x64xf32> to vector<64x64xbf16>
    %c2_158 = arith.constant 2 : index
    %c0_159 = arith.constant 0 : index
    %c0_160 = arith.constant 0 : index
    %196 = vector.load %arg5[%c2_158, %c0_159, %c0_160] : memref<9x64x64xbf16, #tpu.memory_space<vmem>>, vector<1x64x64xbf16>
    %197 = vector.shape_cast %196 : vector<1x64x64xbf16> to vector<64x64xbf16>
    %cst_161 = arith.constant dense<0.000000e+00> : vector<64x64xf32>
    %198 = tpu.matmul %195, %197, %cst_161 {dimension_numbers = #tpu.dot_dimension_numbers<[1], [0], [0], [1], [0, 0, 1, 1], [], []>} : vector<64x64xbf16>, vector<64x64xbf16>, vector<64x64xf32> -> vector<64x64xf32>
    %199 = arith.addf %192, %198 : vector<64x64xf32>
    %c1_162 = arith.constant 1 : index
    %c7_163 = arith.constant 7 : index
    %c0_164 = arith.constant 0 : index
    %200 = vector.load %arg15[%c1_162, %c7_163, %c0_164] : memref<10x24x64xf32, #tpu.memory_space<vmem>>, vector<8x8x64xf32>
    %201 = vector.shape_cast %200 : vector<8x8x64xf32> to vector<64x64xf32>
    %202 = arith.truncf %201 : vector<64x64xf32> to vector<64x64xbf16>
    %c3_165 = arith.constant 3 : index
    %c0_166 = arith.constant 0 : index
    %c0_167 = arith.constant 0 : index
    %203 = vector.load %arg5[%c3_165, %c0_166, %c0_167] : memref<9x64x64xbf16, #tpu.memory_space<vmem>>, vector<1x64x64xbf16>
    %204 = vector.shape_cast %203 : vector<1x64x64xbf16> to vector<64x64xbf16>
    %cst_168 = arith.constant dense<0.000000e+00> : vector<64x64xf32>
    %205 = tpu.matmul %202, %204, %cst_168 {dimension_numbers = #tpu.dot_dimension_numbers<[1], [0], [0], [1], [0, 0, 1, 1], [], []>} : vector<64x64xbf16>, vector<64x64xbf16>, vector<64x64xf32> -> vector<64x64xf32>
    %206 = arith.addf %199, %205 : vector<64x64xf32>
    %c1_169 = arith.constant 1 : index
    %c8_170 = arith.constant 8 : index
    %c0_171 = arith.constant 0 : index
    %207 = vector.load %arg15[%c1_169, %c8_170, %c0_171] : memref<10x24x64xf32, #tpu.memory_space<vmem>>, vector<8x8x64xf32>
    %208 = vector.shape_cast %207 : vector<8x8x64xf32> to vector<64x64xf32>
    %209 = arith.truncf %208 : vector<64x64xf32> to vector<64x64xbf16>
    %c4_172 = arith.constant 4 : index
    %c0_173 = arith.constant 0 : index
    %c0_174 = arith.constant 0 : index
    %210 = vector.load %arg5[%c4_172, %c0_173, %c0_174] : memref<9x64x64xbf16, #tpu.memory_space<vmem>>, vector<1x64x64xbf16>
    %211 = vector.shape_cast %210 : vector<1x64x64xbf16> to vector<64x64xbf16>
    %cst_175 = arith.constant dense<0.000000e+00> : vector<64x64xf32>
    %212 = tpu.matmul %209, %211, %cst_175 {dimension_numbers = #tpu.dot_dimension_numbers<[1], [0], [0], [1], [0, 0, 1, 1], [], []>} : vector<64x64xbf16>, vector<64x64xbf16>, vector<64x64xf32> -> vector<64x64xf32>
    %213 = arith.addf %206, %212 : vector<64x64xf32>
    %c1_176 = arith.constant 1 : index
    %c9_177 = arith.constant 9 : index
    %c0_178 = arith.constant 0 : index
    %214 = vector.load %arg15[%c1_176, %c9_177, %c0_178] : memref<10x24x64xf32, #tpu.memory_space<vmem>>, vector<8x8x64xf32>
    %215 = vector.shape_cast %214 : vector<8x8x64xf32> to vector<64x64xf32>
    %216 = arith.truncf %215 : vector<64x64xf32> to vector<64x64xbf16>
    %c5_179 = arith.constant 5 : index
    %c0_180 = arith.constant 0 : index
    %c0_181 = arith.constant 0 : index
    %217 = vector.load %arg5[%c5_179, %c0_180, %c0_181] : memref<9x64x64xbf16, #tpu.memory_space<vmem>>, vector<1x64x64xbf16>
    %218 = vector.shape_cast %217 : vector<1x64x64xbf16> to vector<64x64xbf16>
    %cst_182 = arith.constant dense<0.000000e+00> : vector<64x64xf32>
    %219 = tpu.matmul %216, %218, %cst_182 {dimension_numbers = #tpu.dot_dimension_numbers<[1], [0], [0], [1], [0, 0, 1, 1], [], []>} : vector<64x64xbf16>, vector<64x64xbf16>, vector<64x64xf32> -> vector<64x64xf32>
    %220 = arith.addf %213, %219 : vector<64x64xf32>
    %c2_183 = arith.constant 2 : index
    %c7_184 = arith.constant 7 : index
    %c0_185 = arith.constant 0 : index
    %221 = vector.load %arg15[%c2_183, %c7_184, %c0_185] : memref<10x24x64xf32, #tpu.memory_space<vmem>>, vector<8x8x64xf32>
    %222 = vector.shape_cast %221 : vector<8x8x64xf32> to vector<64x64xf32>
    %223 = arith.truncf %222 : vector<64x64xf32> to vector<64x64xbf16>
    %c6_186 = arith.constant 6 : index
    %c0_187 = arith.constant 0 : index
    %c0_188 = arith.constant 0 : index
    %224 = vector.load %arg5[%c6_186, %c0_187, %c0_188] : memref<9x64x64xbf16, #tpu.memory_space<vmem>>, vector<1x64x64xbf16>
    %225 = vector.shape_cast %224 : vector<1x64x64xbf16> to vector<64x64xbf16>
    %cst_189 = arith.constant dense<0.000000e+00> : vector<64x64xf32>
    %226 = tpu.matmul %223, %225, %cst_189 {dimension_numbers = #tpu.dot_dimension_numbers<[1], [0], [0], [1], [0, 0, 1, 1], [], []>} : vector<64x64xbf16>, vector<64x64xbf16>, vector<64x64xf32> -> vector<64x64xf32>
    %227 = arith.addf %220, %226 : vector<64x64xf32>
    %c2_190 = arith.constant 2 : index
    %c8_191 = arith.constant 8 : index
    %c0_192 = arith.constant 0 : index
    %228 = vector.load %arg15[%c2_190, %c8_191, %c0_192] : memref<10x24x64xf32, #tpu.memory_space<vmem>>, vector<8x8x64xf32>
    %229 = vector.shape_cast %228 : vector<8x8x64xf32> to vector<64x64xf32>
    %230 = arith.truncf %229 : vector<64x64xf32> to vector<64x64xbf16>
    %c7_193 = arith.constant 7 : index
    %c0_194 = arith.constant 0 : index
    %c0_195 = arith.constant 0 : index
    %231 = vector.load %arg5[%c7_193, %c0_194, %c0_195] : memref<9x64x64xbf16, #tpu.memory_space<vmem>>, vector<1x64x64xbf16>
    %232 = vector.shape_cast %231 : vector<1x64x64xbf16> to vector<64x64xbf16>
    %cst_196 = arith.constant dense<0.000000e+00> : vector<64x64xf32>
    %233 = tpu.matmul %230, %232, %cst_196 {dimension_numbers = #tpu.dot_dimension_numbers<[1], [0], [0], [1], [0, 0, 1, 1], [], []>} : vector<64x64xbf16>, vector<64x64xbf16>, vector<64x64xf32> -> vector<64x64xf32>
    %234 = arith.addf %227, %233 : vector<64x64xf32>
    %c2_197 = arith.constant 2 : index
    %c9_198 = arith.constant 9 : index
    %c0_199 = arith.constant 0 : index
    %235 = vector.load %arg15[%c2_197, %c9_198, %c0_199] : memref<10x24x64xf32, #tpu.memory_space<vmem>>, vector<8x8x64xf32>
    %236 = vector.shape_cast %235 : vector<8x8x64xf32> to vector<64x64xf32>
    %237 = arith.truncf %236 : vector<64x64xf32> to vector<64x64xbf16>
    %c8_200 = arith.constant 8 : index
    %c0_201 = arith.constant 0 : index
    %c0_202 = arith.constant 0 : index
    %238 = vector.load %arg5[%c8_200, %c0_201, %c0_202] : memref<9x64x64xbf16, #tpu.memory_space<vmem>>, vector<1x64x64xbf16>
    %239 = vector.shape_cast %238 : vector<1x64x64xbf16> to vector<64x64xbf16>
    %cst_203 = arith.constant dense<0.000000e+00> : vector<64x64xf32>
    %240 = tpu.matmul %237, %239, %cst_203 {dimension_numbers = #tpu.dot_dimension_numbers<[1], [0], [0], [1], [0, 0, 1, 1], [], []>} : vector<64x64xbf16>, vector<64x64xbf16>, vector<64x64xf32> -> vector<64x64xf32>
    %241 = arith.addf %234, %240 : vector<64x64xf32>
    %c1_204 = arith.constant 1 : index
    %c0_205 = arith.constant 0 : index
    %242 = vector.load %arg11[%c1_204, %c0_205] : memref<6x64xf32, #tpu.memory_space<vmem>>, vector<1x64xf32>
    %243 = vector.broadcast %242 : vector<1x64xf32> to vector<64x64xf32>
    %244 = arith.addf %241, %243 : vector<64x64xf32>
    %cst_206 = arith.constant 0.000000e+00 : f32
    %245 = vector.broadcast %cst_206 : f32 to vector<64x64xf32>
    %246 = arith.maximumf %244, %245 : vector<64x64xf32>
    %247 = vector.shape_cast %246 : vector<64x64xf32> to vector<8x8x64xf32>
    %c1_207 = arith.constant 1 : index
    %c8_208 = arith.constant 8 : index
    %c0_209 = arith.constant 0 : index
    %248 = vector.load %arg15[%c1_207, %c8_208, %c0_209] : memref<10x24x64xf32, #tpu.memory_space<vmem>>, vector<8x8x64xf32>
    tpu.vector_store %arg15[%c1_207, %c8_208, %c0_209], %247 {strides = array<i32>} : memref<10x24x64xf32, #tpu.memory_space<vmem>>, vector<8x8x64xf32>,
    %c0_210 = arith.constant 0 : index
    %c7_211 = arith.constant 7 : index
    %c0_212 = arith.constant 0 : index
    %249 = vector.load %arg15[%c0_210, %c7_211, %c0_212] : memref<10x24x64xf32, #tpu.memory_space<vmem>>, vector<8x8x64xf32>
    %250 = vector.shape_cast %249 : vector<8x8x64xf32> to vector<64x64xf32>
    %251 = arith.truncf %250 : vector<64x64xf32> to vector<64x64xbf16>
    %c0_213 = arith.constant 0 : index
    %c0_214 = arith.constant 0 : index
    %c0_215 = arith.constant 0 : index
    %252 = vector.load %arg6[%c0_213, %c0_214, %c0_215] : memref<9x64x64xbf16, #tpu.memory_space<vmem>>, vector<1x64x64xbf16>
    %253 = vector.shape_cast %252 : vector<1x64x64xbf16> to vector<64x64xbf16>
    %cst_216 = arith.constant dense<0.000000e+00> : vector<64x64xf32>
    %254 = tpu.matmul %251, %253, %cst_216 {dimension_numbers = #tpu.dot_dimension_numbers<[1], [0], [0], [1], [0, 0, 1, 1], [], []>} : vector<64x64xbf16>, vector<64x64xbf16>, vector<64x64xf32> -> vector<64x64xf32>
    %c0_217 = arith.constant 0 : index
    %c8_218 = arith.constant 8 : index
    %c0_219 = arith.constant 0 : index
    %255 = vector.load %arg15[%c0_217, %c8_218, %c0_219] : memref<10x24x64xf32, #tpu.memory_space<vmem>>, vector<8x8x64xf32>
    %256 = vector.shape_cast %255 : vector<8x8x64xf32> to vector<64x64xf32>
    %257 = arith.truncf %256 : vector<64x64xf32> to vector<64x64xbf16>
    %c1_220 = arith.constant 1 : index
    %c0_221 = arith.constant 0 : index
    %c0_222 = arith.constant 0 : index
    %258 = vector.load %arg6[%c1_220, %c0_221, %c0_222] : memref<9x64x64xbf16, #tpu.memory_space<vmem>>, vector<1x64x64xbf16>
    %259 = vector.shape_cast %258 : vector<1x64x64xbf16> to vector<64x64xbf16>
    %cst_223 = arith.constant dense<0.000000e+00> : vector<64x64xf32>
    %260 = tpu.matmul %257, %259, %cst_223 {dimension_numbers = #tpu.dot_dimension_numbers<[1], [0], [0], [1], [0, 0, 1, 1], [], []>} : vector<64x64xbf16>, vector<64x64xbf16>, vector<64x64xf32> -> vector<64x64xf32>
    %261 = arith.addf %254, %260 : vector<64x64xf32>
    %c0_224 = arith.constant 0 : index
    %c9_225 = arith.constant 9 : index
    %c0_226 = arith.constant 0 : index
    %262 = vector.load %arg15[%c0_224, %c9_225, %c0_226] : memref<10x24x64xf32, #tpu.memory_space<vmem>>, vector<8x8x64xf32>
    %263 = vector.shape_cast %262 : vector<8x8x64xf32> to vector<64x64xf32>
    %264 = arith.truncf %263 : vector<64x64xf32> to vector<64x64xbf16>
    %c2_227 = arith.constant 2 : index
    %c0_228 = arith.constant 0 : index
    %c0_229 = arith.constant 0 : index
    %265 = vector.load %arg6[%c2_227, %c0_228, %c0_229] : memref<9x64x64xbf16, #tpu.memory_space<vmem>>, vector<1x64x64xbf16>
    %266 = vector.shape_cast %265 : vector<1x64x64xbf16> to vector<64x64xbf16>
    %cst_230 = arith.constant dense<0.000000e+00> : vector<64x64xf32>
    %267 = tpu.matmul %264, %266, %cst_230 {dimension_numbers = #tpu.dot_dimension_numbers<[1], [0], [0], [1], [0, 0, 1, 1], [], []>} : vector<64x64xbf16>, vector<64x64xbf16>, vector<64x64xf32> -> vector<64x64xf32>
    %268 = arith.addf %261, %267 : vector<64x64xf32>
    %c1_231 = arith.constant 1 : index
    %c7_232 = arith.constant 7 : index
    %c0_233 = arith.constant 0 : index
    %269 = vector.load %arg15[%c1_231, %c7_232, %c0_233] : memref<10x24x64xf32, #tpu.memory_space<vmem>>, vector<8x8x64xf32>
    %270 = vector.shape_cast %269 : vector<8x8x64xf32> to vector<64x64xf32>
    %271 = arith.truncf %270 : vector<64x64xf32> to vector<64x64xbf16>
    %c3_234 = arith.constant 3 : index
    %c0_235 = arith.constant 0 : index
    %c0_236 = arith.constant 0 : index
    %272 = vector.load %arg6[%c3_234, %c0_235, %c0_236] : memref<9x64x64xbf16, #tpu.memory_space<vmem>>, vector<1x64x64xbf16>
    %273 = vector.shape_cast %272 : vector<1x64x64xbf16> to vector<64x64xbf16>
    %cst_237 = arith.constant dense<0.000000e+00> : vector<64x64xf32>
    %274 = tpu.matmul %271, %273, %cst_237 {dimension_numbers = #tpu.dot_dimension_numbers<[1], [0], [0], [1], [0, 0, 1, 1], [], []>} : vector<64x64xbf16>, vector<64x64xbf16>, vector<64x64xf32> -> vector<64x64xf32>
    %275 = arith.addf %268, %274 : vector<64x64xf32>
    %c1_238 = arith.constant 1 : index
    %c8_239 = arith.constant 8 : index
    %c0_240 = arith.constant 0 : index
    %276 = vector.load %arg15[%c1_238, %c8_239, %c0_240] : memref<10x24x64xf32, #tpu.memory_space<vmem>>, vector<8x8x64xf32>
    %277 = vector.shape_cast %276 : vector<8x8x64xf32> to vector<64x64xf32>
    %278 = arith.truncf %277 : vector<64x64xf32> to vector<64x64xbf16>
    %c4_241 = arith.constant 4 : index
    %c0_242 = arith.constant 0 : index
    %c0_243 = arith.constant 0 : index
    %279 = vector.load %arg6[%c4_241, %c0_242, %c0_243] : memref<9x64x64xbf16, #tpu.memory_space<vmem>>, vector<1x64x64xbf16>
    %280 = vector.shape_cast %279 : vector<1x64x64xbf16> to vector<64x64xbf16>
    %cst_244 = arith.constant dense<0.000000e+00> : vector<64x64xf32>
    %281 = tpu.matmul %278, %280, %cst_244 {dimension_numbers = #tpu.dot_dimension_numbers<[1], [0], [0], [1], [0, 0, 1, 1], [], []>} : vector<64x64xbf16>, vector<64x64xbf16>, vector<64x64xf32> -> vector<64x64xf32>
    %282 = arith.addf %275, %281 : vector<64x64xf32>
    %c1_245 = arith.constant 1 : index
    %c9_246 = arith.constant 9 : index
    %c0_247 = arith.constant 0 : index
    %283 = vector.load %arg15[%c1_245, %c9_246, %c0_247] : memref<10x24x64xf32, #tpu.memory_space<vmem>>, vector<8x8x64xf32>
    %284 = vector.shape_cast %283 : vector<8x8x64xf32> to vector<64x64xf32>
    %285 = arith.truncf %284 : vector<64x64xf32> to vector<64x64xbf16>
    %c5_248 = arith.constant 5 : index
    %c0_249 = arith.constant 0 : index
    %c0_250 = arith.constant 0 : index
    %286 = vector.load %arg6[%c5_248, %c0_249, %c0_250] : memref<9x64x64xbf16, #tpu.memory_space<vmem>>, vector<1x64x64xbf16>
    %287 = vector.shape_cast %286 : vector<1x64x64xbf16> to vector<64x64xbf16>
    %cst_251 = arith.constant dense<0.000000e+00> : vector<64x64xf32>
    %288 = tpu.matmul %285, %287, %cst_251 {dimension_numbers = #tpu.dot_dimension_numbers<[1], [0], [0], [1], [0, 0, 1, 1], [], []>} : vector<64x64xbf16>, vector<64x64xbf16>, vector<64x64xf32> -> vector<64x64xf32>
    %289 = arith.addf %282, %288 : vector<64x64xf32>
    %c2_252 = arith.constant 2 : index
    %c7_253 = arith.constant 7 : index
    %c0_254 = arith.constant 0 : index
    %290 = vector.load %arg15[%c2_252, %c7_253, %c0_254] : memref<10x24x64xf32, #tpu.memory_space<vmem>>, vector<8x8x64xf32>
    %291 = vector.shape_cast %290 : vector<8x8x64xf32> to vector<64x64xf32>
    %292 = arith.truncf %291 : vector<64x64xf32> to vector<64x64xbf16>
    %c6_255 = arith.constant 6 : index
    %c0_256 = arith.constant 0 : index
    %c0_257 = arith.constant 0 : index
    %293 = vector.load %arg6[%c6_255, %c0_256, %c0_257] : memref<9x64x64xbf16, #tpu.memory_space<vmem>>, vector<1x64x64xbf16>
    %294 = vector.shape_cast %293 : vector<1x64x64xbf16> to vector<64x64xbf16>
    %cst_258 = arith.constant dense<0.000000e+00> : vector<64x64xf32>
    %295 = tpu.matmul %292, %294, %cst_258 {dimension_numbers = #tpu.dot_dimension_numbers<[1], [0], [0], [1], [0, 0, 1, 1], [], []>} : vector<64x64xbf16>, vector<64x64xbf16>, vector<64x64xf32> -> vector<64x64xf32>
    %296 = arith.addf %289, %295 : vector<64x64xf32>
    %c2_259 = arith.constant 2 : index
    %c8_260 = arith.constant 8 : index
    %c0_261 = arith.constant 0 : index
    %297 = vector.load %arg15[%c2_259, %c8_260, %c0_261] : memref<10x24x64xf32, #tpu.memory_space<vmem>>, vector<8x8x64xf32>
    %298 = vector.shape_cast %297 : vector<8x8x64xf32> to vector<64x64xf32>
    %299 = arith.truncf %298 : vector<64x64xf32> to vector<64x64xbf16>
    %c7_262 = arith.constant 7 : index
    %c0_263 = arith.constant 0 : index
    %c0_264 = arith.constant 0 : index
    %300 = vector.load %arg6[%c7_262, %c0_263, %c0_264] : memref<9x64x64xbf16, #tpu.memory_space<vmem>>, vector<1x64x64xbf16>
    %301 = vector.shape_cast %300 : vector<1x64x64xbf16> to vector<64x64xbf16>
    %cst_265 = arith.constant dense<0.000000e+00> : vector<64x64xf32>
    %302 = tpu.matmul %299, %301, %cst_265 {dimension_numbers = #tpu.dot_dimension_numbers<[1], [0], [0], [1], [0, 0, 1, 1], [], []>} : vector<64x64xbf16>, vector<64x64xbf16>, vector<64x64xf32> -> vector<64x64xf32>
    %303 = arith.addf %296, %302 : vector<64x64xf32>
    %c2_266 = arith.constant 2 : index
    %c9_267 = arith.constant 9 : index
    %c0_268 = arith.constant 0 : index
    %304 = vector.load %arg15[%c2_266, %c9_267, %c0_268] : memref<10x24x64xf32, #tpu.memory_space<vmem>>, vector<8x8x64xf32>
    %305 = vector.shape_cast %304 : vector<8x8x64xf32> to vector<64x64xf32>
    %306 = arith.truncf %305 : vector<64x64xf32> to vector<64x64xbf16>
    %c8_269 = arith.constant 8 : index
    %c0_270 = arith.constant 0 : index
    %c0_271 = arith.constant 0 : index
    %307 = vector.load %arg6[%c8_269, %c0_270, %c0_271] : memref<9x64x64xbf16, #tpu.memory_space<vmem>>, vector<1x64x64xbf16>
    %308 = vector.shape_cast %307 : vector<1x64x64xbf16> to vector<64x64xbf16>
    %cst_272 = arith.constant dense<0.000000e+00> : vector<64x64xf32>
    %309 = tpu.matmul %306, %308, %cst_272 {dimension_numbers = #tpu.dot_dimension_numbers<[1], [0], [0], [1], [0, 0, 1, 1], [], []>} : vector<64x64xbf16>, vector<64x64xbf16>, vector<64x64xf32> -> vector<64x64xf32>
    %310 = arith.addf %303, %309 : vector<64x64xf32>
    %c2_273 = arith.constant 2 : index
    %c0_274 = arith.constant 0 : index
    %311 = vector.load %arg11[%c2_273, %c0_274] : memref<6x64xf32, #tpu.memory_space<vmem>>, vector<1x64xf32>
    %312 = vector.broadcast %311 : vector<1x64xf32> to vector<64x64xf32>
    %313 = arith.addf %310, %312 : vector<64x64xf32>
    %cst_275 = arith.constant 0.000000e+00 : f32
    %314 = vector.broadcast %cst_275 : f32 to vector<64x64xf32>
    %315 = arith.maximumf %313, %314 : vector<64x64xf32>
    %c0_276 = arith.constant 0 : index
    %c0_277 = arith.constant 0 : index
    %c0_278 = arith.constant 0 : index
    %c0_279 = arith.constant 0 : index
    %316 = vector.load %arg1[%c0_276, %c0_277, %c0_278, %c0_279] : memref<1x8x8x64xf32, #tpu.memory_space<vmem>>, vector<1x8x8x64xf32>
    %317 = vector.shape_cast %316 : vector<1x8x8x64xf32> to vector<8x8x64xf32>
    %318 = vector.shape_cast %317 : vector<8x8x64xf32> to vector<64x64xf32>
    %319 = arith.addf %318, %315 : vector<64x64xf32>
    %cst_280 = arith.constant dense<0.000000e+00> : vector<64xf32>
    %320 = vector.multi_reduction <add>, %319, %cst_280 [0] : vector<64x64xf32> to vector<64xf32>
    %321 = vector.shape_cast %320 : vector<64xf32> to vector<1x64xf32>
    %cst_281 = arith.constant 6.400000e+01 : f32
    %322 = vector.broadcast %cst_281 : f32 to vector<1x64xf32>
    %323 = arith.divf %321, %322 : vector<1x64xf32>
    %324 = arith.truncf %323 : vector<1x64xf32> to vector<1x64xbf16>
    %c0_282 = arith.constant 0 : index
    %c0_283 = arith.constant 0 : index
    %325 = vector.load %arg7[%c0_282, %c0_283] : memref<64x64xbf16, #tpu.memory_space<vmem>>, vector<64x64xbf16>
    %cst_284 = arith.constant dense<0.000000e+00> : vector<1x64xf32>
    %326 = tpu.matmul %324, %325, %cst_284 {dimension_numbers = #tpu.dot_dimension_numbers<[1], [0], [0], [1], [0, 0, 1, 1], [], []>} : vector<1x64xbf16>, vector<64x64xbf16>, vector<1x64xf32> -> vector<1x64xf32>
    %327 = arith.negf %326 : vector<1x64xf32>
    %328 = math.exp %327 : vector<1x64xf32>
    %cst_285 = arith.constant 1.000000e+00 : f32
    %329 = vector.broadcast %cst_285 : f32 to vector<1x64xf32>
    %330 = arith.addf %329, %328 : vector<1x64xf32>
    %331 = arith.divf %329, %330 : vector<1x64xf32>
    %cst_286 = arith.constant 1.000000e+00 : f32
    %332 = vector.broadcast %cst_286 : f32 to vector<1x64xf32>
    %333 = arith.addf %332, %331 : vector<1x64xf32>
    %334 = vector.broadcast %333 : vector<1x64xf32> to vector<64x64xf32>
    %335 = arith.mulf %319, %334 : vector<64x64xf32>
    %336 = vector.shape_cast %335 : vector<64x64xf32> to vector<8x8x64xf32>
    %c1_287 = arith.constant 1 : index
    %c8_288 = arith.constant 8 : index
    %c0_289 = arith.constant 0 : index
    %337 = vector.load %arg15[%c1_287, %c8_288, %c0_289] : memref<10x24x64xf32, #tpu.memory_space<vmem>>, vector<8x8x64xf32>
    tpu.vector_store %arg15[%c1_287, %c8_288, %c0_289], %336 {strides = array<i32>} : memref<10x24x64xf32, #tpu.memory_space<vmem>>, vector<8x8x64xf32>,
    %c0_290 = arith.constant 0 : index
    %c7_291 = arith.constant 7 : index
    %c0_292 = arith.constant 0 : index
    %338 = vector.load %arg15[%c0_290, %c7_291, %c0_292] : memref<10x24x64xf32, #tpu.memory_space<vmem>>, vector<8x8x64xf32>
    %339 = vector.shape_cast %338 : vector<8x8x64xf32> to vector<64x64xf32>
    %340 = arith.truncf %339 : vector<64x64xf32> to vector<64x64xbf16>
    %c0_293 = arith.constant 0 : index
    %c0_294 = arith.constant 0 : index
    %c0_295 = arith.constant 0 : index
    %341 = vector.load %arg8[%c0_293, %c0_294, %c0_295] : memref<9x64x64xbf16, #tpu.memory_space<vmem>>, vector<1x64x64xbf16>
    %342 = vector.shape_cast %341 : vector<1x64x64xbf16> to vector<64x64xbf16>
    %cst_296 = arith.constant dense<0.000000e+00> : vector<64x64xf32>
    %343 = tpu.matmul %340, %342, %cst_296 {dimension_numbers = #tpu.dot_dimension_numbers<[1], [0], [0], [1], [0, 0, 1, 1], [], []>} : vector<64x64xbf16>, vector<64x64xbf16>, vector<64x64xf32> -> vector<64x64xf32>
    %c0_297 = arith.constant 0 : index
    %c8_298 = arith.constant 8 : index
    %c0_299 = arith.constant 0 : index
    %344 = vector.load %arg15[%c0_297, %c8_298, %c0_299] : memref<10x24x64xf32, #tpu.memory_space<vmem>>, vector<8x8x64xf32>
    %345 = vector.shape_cast %344 : vector<8x8x64xf32> to vector<64x64xf32>
    %346 = arith.truncf %345 : vector<64x64xf32> to vector<64x64xbf16>
    %c1_300 = arith.constant 1 : index
    %c0_301 = arith.constant 0 : index
    %c0_302 = arith.constant 0 : index
    %347 = vector.load %arg8[%c1_300, %c0_301, %c0_302] : memref<9x64x64xbf16, #tpu.memory_space<vmem>>, vector<1x64x64xbf16>
    %348 = vector.shape_cast %347 : vector<1x64x64xbf16> to vector<64x64xbf16>
    %cst_303 = arith.constant dense<0.000000e+00> : vector<64x64xf32>
    %349 = tpu.matmul %346, %348, %cst_303 {dimension_numbers = #tpu.dot_dimension_numbers<[1], [0], [0], [1], [0, 0, 1, 1], [], []>} : vector<64x64xbf16>, vector<64x64xbf16>, vector<64x64xf32> -> vector<64x64xf32>
    %350 = arith.addf %343, %349 : vector<64x64xf32>
    %c0_304 = arith.constant 0 : index
    %c9_305 = arith.constant 9 : index
    %c0_306 = arith.constant 0 : index
    %351 = vector.load %arg15[%c0_304, %c9_305, %c0_306] : memref<10x24x64xf32, #tpu.memory_space<vmem>>, vector<8x8x64xf32>
    %352 = vector.shape_cast %351 : vector<8x8x64xf32> to vector<64x64xf32>
    %353 = arith.truncf %352 : vector<64x64xf32> to vector<64x64xbf16>
    %c2_307 = arith.constant 2 : index
    %c0_308 = arith.constant 0 : index
    %c0_309 = arith.constant 0 : index
    %354 = vector.load %arg8[%c2_307, %c0_308, %c0_309] : memref<9x64x64xbf16, #tpu.memory_space<vmem>>, vector<1x64x64xbf16>
    %355 = vector.shape_cast %354 : vector<1x64x64xbf16> to vector<64x64xbf16>
    %cst_310 = arith.constant dense<0.000000e+00> : vector<64x64xf32>
    %356 = tpu.matmul %353, %355, %cst_310 {dimension_numbers = #tpu.dot_dimension_numbers<[1], [0], [0], [1], [0, 0, 1, 1], [], []>} : vector<64x64xbf16>, vector<64x64xbf16>, vector<64x64xf32> -> vector<64x64xf32>
    %357 = arith.addf %350, %356 : vector<64x64xf32>
    %c1_311 = arith.constant 1 : index
    %c7_312 = arith.constant 7 : index
    %c0_313 = arith.constant 0 : index
    %358 = vector.load %arg15[%c1_311, %c7_312, %c0_313] : memref<10x24x64xf32, #tpu.memory_space<vmem>>, vector<8x8x64xf32>
    %359 = vector.shape_cast %358 : vector<8x8x64xf32> to vector<64x64xf32>
    %360 = arith.truncf %359 : vector<64x64xf32> to vector<64x64xbf16>
    %c3_314 = arith.constant 3 : index
    %c0_315 = arith.constant 0 : index
    %c0_316 = arith.constant 0 : index
    %361 = vector.load %arg8[%c3_314, %c0_315, %c0_316] : memref<9x64x64xbf16, #tpu.memory_space<vmem>>, vector<1x64x64xbf16>
    %362 = vector.shape_cast %361 : vector<1x64x64xbf16> to vector<64x64xbf16>
    %cst_317 = arith.constant dense<0.000000e+00> : vector<64x64xf32>
    %363 = tpu.matmul %360, %362, %cst_317 {dimension_numbers = #tpu.dot_dimension_numbers<[1], [0], [0], [1], [0, 0, 1, 1], [], []>} : vector<64x64xbf16>, vector<64x64xbf16>, vector<64x64xf32> -> vector<64x64xf32>
    %364 = arith.addf %357, %363 : vector<64x64xf32>
    %c1_318 = arith.constant 1 : index
    %c8_319 = arith.constant 8 : index
    %c0_320 = arith.constant 0 : index
    %365 = vector.load %arg15[%c1_318, %c8_319, %c0_320] : memref<10x24x64xf32, #tpu.memory_space<vmem>>, vector<8x8x64xf32>
    %366 = vector.shape_cast %365 : vector<8x8x64xf32> to vector<64x64xf32>
    %367 = arith.truncf %366 : vector<64x64xf32> to vector<64x64xbf16>
    %c4_321 = arith.constant 4 : index
    %c0_322 = arith.constant 0 : index
    %c0_323 = arith.constant 0 : index
    %368 = vector.load %arg8[%c4_321, %c0_322, %c0_323] : memref<9x64x64xbf16, #tpu.memory_space<vmem>>, vector<1x64x64xbf16>
    %369 = vector.shape_cast %368 : vector<1x64x64xbf16> to vector<64x64xbf16>
    %cst_324 = arith.constant dense<0.000000e+00> : vector<64x64xf32>
    %370 = tpu.matmul %367, %369, %cst_324 {dimension_numbers = #tpu.dot_dimension_numbers<[1], [0], [0], [1], [0, 0, 1, 1], [], []>} : vector<64x64xbf16>, vector<64x64xbf16>, vector<64x64xf32> -> vector<64x64xf32>
    %371 = arith.addf %364, %370 : vector<64x64xf32>
    %c1_325 = arith.constant 1 : index
    %c9_326 = arith.constant 9 : index
    %c0_327 = arith.constant 0 : index
    %372 = vector.load %arg15[%c1_325, %c9_326, %c0_327] : memref<10x24x64xf32, #tpu.memory_space<vmem>>, vector<8x8x64xf32>
    %373 = vector.shape_cast %372 : vector<8x8x64xf32> to vector<64x64xf32>
    %374 = arith.truncf %373 : vector<64x64xf32> to vector<64x64xbf16>
    %c5_328 = arith.constant 5 : index
    %c0_329 = arith.constant 0 : index
    %c0_330 = arith.constant 0 : index
    %375 = vector.load %arg8[%c5_328, %c0_329, %c0_330] : memref<9x64x64xbf16, #tpu.memory_space<vmem>>, vector<1x64x64xbf16>
    %376 = vector.shape_cast %375 : vector<1x64x64xbf16> to vector<64x64xbf16>
    %cst_331 = arith.constant dense<0.000000e+00> : vector<64x64xf32>
    %377 = tpu.matmul %374, %376, %cst_331 {dimension_numbers = #tpu.dot_dimension_numbers<[1], [0], [0], [1], [0, 0, 1, 1], [], []>} : vector<64x64xbf16>, vector<64x64xbf16>, vector<64x64xf32> -> vector<64x64xf32>
    %378 = arith.addf %371, %377 : vector<64x64xf32>
    %c2_332 = arith.constant 2 : index
    %c7_333 = arith.constant 7 : index
    %c0_334 = arith.constant 0 : index
    %379 = vector.load %arg15[%c2_332, %c7_333, %c0_334] : memref<10x24x64xf32, #tpu.memory_space<vmem>>, vector<8x8x64xf32>
    %380 = vector.shape_cast %379 : vector<8x8x64xf32> to vector<64x64xf32>
    %381 = arith.truncf %380 : vector<64x64xf32> to vector<64x64xbf16>
    %c6_335 = arith.constant 6 : index
    %c0_336 = arith.constant 0 : index
    %c0_337 = arith.constant 0 : index
    %382 = vector.load %arg8[%c6_335, %c0_336, %c0_337] : memref<9x64x64xbf16, #tpu.memory_space<vmem>>, vector<1x64x64xbf16>
    %383 = vector.shape_cast %382 : vector<1x64x64xbf16> to vector<64x64xbf16>
    %cst_338 = arith.constant dense<0.000000e+00> : vector<64x64xf32>
    %384 = tpu.matmul %381, %383, %cst_338 {dimension_numbers = #tpu.dot_dimension_numbers<[1], [0], [0], [1], [0, 0, 1, 1], [], []>} : vector<64x64xbf16>, vector<64x64xbf16>, vector<64x64xf32> -> vector<64x64xf32>
    %385 = arith.addf %378, %384 : vector<64x64xf32>
    %c2_339 = arith.constant 2 : index
    %c8_340 = arith.constant 8 : index
    %c0_341 = arith.constant 0 : index
    %386 = vector.load %arg15[%c2_339, %c8_340, %c0_341] : memref<10x24x64xf32, #tpu.memory_space<vmem>>, vector<8x8x64xf32>
    %387 = vector.shape_cast %386 : vector<8x8x64xf32> to vector<64x64xf32>
    %388 = arith.truncf %387 : vector<64x64xf32> to vector<64x64xbf16>
    %c7_342 = arith.constant 7 : index
    %c0_343 = arith.constant 0 : index
    %c0_344 = arith.constant 0 : index
    %389 = vector.load %arg8[%c7_342, %c0_343, %c0_344] : memref<9x64x64xbf16, #tpu.memory_space<vmem>>, vector<1x64x64xbf16>
    %390 = vector.shape_cast %389 : vector<1x64x64xbf16> to vector<64x64xbf16>
    %cst_345 = arith.constant dense<0.000000e+00> : vector<64x64xf32>
    %391 = tpu.matmul %388, %390, %cst_345 {dimension_numbers = #tpu.dot_dimension_numbers<[1], [0], [0], [1], [0, 0, 1, 1], [], []>} : vector<64x64xbf16>, vector<64x64xbf16>, vector<64x64xf32> -> vector<64x64xf32>
    %392 = arith.addf %385, %391 : vector<64x64xf32>
    %c2_346 = arith.constant 2 : index
    %c9_347 = arith.constant 9 : index
    %c0_348 = arith.constant 0 : index
    %393 = vector.load %arg15[%c2_346, %c9_347, %c0_348] : memref<10x24x64xf32, #tpu.memory_space<vmem>>, vector<8x8x64xf32>
    %394 = vector.shape_cast %393 : vector<8x8x64xf32> to vector<64x64xf32>
    %395 = arith.truncf %394 : vector<64x64xf32> to vector<64x64xbf16>
    %c8_349 = arith.constant 8 : index
    %c0_350 = arith.constant 0 : index
    %c0_351 = arith.constant 0 : index
    %396 = vector.load %arg8[%c8_349, %c0_350, %c0_351] : memref<9x64x64xbf16, #tpu.memory_space<vmem>>, vector<1x64x64xbf16>
    %397 = vector.shape_cast %396 : vector<1x64x64xbf16> to vector<64x64xbf16>
    %cst_352 = arith.constant dense<0.000000e+00> : vector<64x64xf32>
    %398 = tpu.matmul %395, %397, %cst_352 {dimension_numbers = #tpu.dot_dimension_numbers<[1], [0], [0], [1], [0, 0, 1, 1], [], []>} : vector<64x64xbf16>, vector<64x64xbf16>, vector<64x64xf32> -> vector<64x64xf32>
    %399 = arith.addf %392, %398 : vector<64x64xf32>
    %c3_353 = arith.constant 3 : index
    %c0_354 = arith.constant 0 : index
    %400 = vector.load %arg11[%c3_353, %c0_354] : memref<6x64xf32, #tpu.memory_space<vmem>>, vector<1x64xf32>
    %401 = vector.broadcast %400 : vector<1x64xf32> to vector<64x64xf32>
    %402 = arith.addf %399, %401 : vector<64x64xf32>
    %cst_355 = arith.constant 0.000000e+00 : f32
    %403 = vector.broadcast %cst_355 : f32 to vector<64x64xf32>
    %404 = arith.maximumf %402, %403 : vector<64x64xf32>
    %405 = vector.shape_cast %404 : vector<64x64xf32> to vector<8x8x64xf32>
    %c1_356 = arith.constant 1 : index
    %c8_357 = arith.constant 8 : index
    %c0_358 = arith.constant 0 : index
    %406 = vector.load %arg15[%c1_356, %c8_357, %c0_358] : memref<10x24x64xf32, #tpu.memory_space<vmem>>, vector<8x8x64xf32>
    tpu.vector_store %arg15[%c1_356, %c8_357, %c0_358], %405 {strides = array<i32>} : memref<10x24x64xf32, #tpu.memory_space<vmem>>, vector<8x8x64xf32>,
    %c0_359 = arith.constant 0 : index
    %c7_360 = arith.constant 7 : index
    %c0_361 = arith.constant 0 : index
    %407 = vector.load %arg15[%c0_359, %c7_360, %c0_361] : memref<10x24x64xf32, #tpu.memory_space<vmem>>, vector<8x8x64xf32>
    %408 = vector.shape_cast %407 : vector<8x8x64xf32> to vector<64x64xf32>
    %409 = arith.truncf %408 : vector<64x64xf32> to vector<64x64xbf16>
    %c0_362 = arith.constant 0 : index
    %c0_363 = arith.constant 0 : index
    %c0_364 = arith.constant 0 : index
    %410 = vector.load %arg9[%c0_362, %c0_363, %c0_364] : memref<9x64x64xbf16, #tpu.memory_space<vmem>>, vector<1x64x64xbf16>
    %411 = vector.shape_cast %410 : vector<1x64x64xbf16> to vector<64x64xbf16>
    %cst_365 = arith.constant dense<0.000000e+00> : vector<64x64xf32>
    %412 = tpu.matmul %409, %411, %cst_365 {dimension_numbers = #tpu.dot_dimension_numbers<[1], [0], [0], [1], [0, 0, 1, 1], [], []>} : vector<64x64xbf16>, vector<64x64xbf16>, vector<64x64xf32> -> vector<64x64xf32>
    %c0_366 = arith.constant 0 : index
    %c8_367 = arith.constant 8 : index
    %c0_368 = arith.constant 0 : index
    %413 = vector.load %arg15[%c0_366, %c8_367, %c0_368] : memref<10x24x64xf32, #tpu.memory_space<vmem>>, vector<8x8x64xf32>
    %414 = vector.shape_cast %413 : vector<8x8x64xf32> to vector<64x64xf32>
    %415 = arith.truncf %414 : vector<64x64xf32> to vector<64x64xbf16>
    %c1_369 = arith.constant 1 : index
    %c0_370 = arith.constant 0 : index
    %c0_371 = arith.constant 0 : index
    %416 = vector.load %arg9[%c1_369, %c0_370, %c0_371] : memref<9x64x64xbf16, #tpu.memory_space<vmem>>, vector<1x64x64xbf16>
    %417 = vector.shape_cast %416 : vector<1x64x64xbf16> to vector<64x64xbf16>
    %cst_372 = arith.constant dense<0.000000e+00> : vector<64x64xf32>
    %418 = tpu.matmul %415, %417, %cst_372 {dimension_numbers = #tpu.dot_dimension_numbers<[1], [0], [0], [1], [0, 0, 1, 1], [], []>} : vector<64x64xbf16>, vector<64x64xbf16>, vector<64x64xf32> -> vector<64x64xf32>
    %419 = arith.addf %412, %418 : vector<64x64xf32>
    %c0_373 = arith.constant 0 : index
    %c9_374 = arith.constant 9 : index
    %c0_375 = arith.constant 0 : index
    %420 = vector.load %arg15[%c0_373, %c9_374, %c0_375] : memref<10x24x64xf32, #tpu.memory_space<vmem>>, vector<8x8x64xf32>
    %421 = vector.shape_cast %420 : vector<8x8x64xf32> to vector<64x64xf32>
    %422 = arith.truncf %421 : vector<64x64xf32> to vector<64x64xbf16>
    %c2_376 = arith.constant 2 : index
    %c0_377 = arith.constant 0 : index
    %c0_378 = arith.constant 0 : index
    %423 = vector.load %arg9[%c2_376, %c0_377, %c0_378] : memref<9x64x64xbf16, #tpu.memory_space<vmem>>, vector<1x64x64xbf16>
    %424 = vector.shape_cast %423 : vector<1x64x64xbf16> to vector<64x64xbf16>
    %cst_379 = arith.constant dense<0.000000e+00> : vector<64x64xf32>
    %425 = tpu.matmul %422, %424, %cst_379 {dimension_numbers = #tpu.dot_dimension_numbers<[1], [0], [0], [1], [0, 0, 1, 1], [], []>} : vector<64x64xbf16>, vector<64x64xbf16>, vector<64x64xf32> -> vector<64x64xf32>
    %426 = arith.addf %419, %425 : vector<64x64xf32>
    %c1_380 = arith.constant 1 : index
    %c7_381 = arith.constant 7 : index
    %c0_382 = arith.constant 0 : index
    %427 = vector.load %arg15[%c1_380, %c7_381, %c0_382] : memref<10x24x64xf32, #tpu.memory_space<vmem>>, vector<8x8x64xf32>
    %428 = vector.shape_cast %427 : vector<8x8x64xf32> to vector<64x64xf32>
    %429 = arith.truncf %428 : vector<64x64xf32> to vector<64x64xbf16>
    %c3_383 = arith.constant 3 : index
    %c0_384 = arith.constant 0 : index
    %c0_385 = arith.constant 0 : index
    %430 = vector.load %arg9[%c3_383, %c0_384, %c0_385] : memref<9x64x64xbf16, #tpu.memory_space<vmem>>, vector<1x64x64xbf16>
    %431 = vector.shape_cast %430 : vector<1x64x64xbf16> to vector<64x64xbf16>
    %cst_386 = arith.constant dense<0.000000e+00> : vector<64x64xf32>
    %432 = tpu.matmul %429, %431, %cst_386 {dimension_numbers = #tpu.dot_dimension_numbers<[1], [0], [0], [1], [0, 0, 1, 1], [], []>} : vector<64x64xbf16>, vector<64x64xbf16>, vector<64x64xf32> -> vector<64x64xf32>
    %433 = arith.addf %426, %432 : vector<64x64xf32>
    %c1_387 = arith.constant 1 : index
    %c8_388 = arith.constant 8 : index
    %c0_389 = arith.constant 0 : index
    %434 = vector.load %arg15[%c1_387, %c8_388, %c0_389] : memref<10x24x64xf32, #tpu.memory_space<vmem>>, vector<8x8x64xf32>
    %435 = vector.shape_cast %434 : vector<8x8x64xf32> to vector<64x64xf32>
    %436 = arith.truncf %435 : vector<64x64xf32> to vector<64x64xbf16>
    %c4_390 = arith.constant 4 : index
    %c0_391 = arith.constant 0 : index
    %c0_392 = arith.constant 0 : index
    %437 = vector.load %arg9[%c4_390, %c0_391, %c0_392] : memref<9x64x64xbf16, #tpu.memory_space<vmem>>, vector<1x64x64xbf16>
    %438 = vector.shape_cast %437 : vector<1x64x64xbf16> to vector<64x64xbf16>
    %cst_393 = arith.constant dense<0.000000e+00> : vector<64x64xf32>
    %439 = tpu.matmul %436, %438, %cst_393 {dimension_numbers = #tpu.dot_dimension_numbers<[1], [0], [0], [1], [0, 0, 1, 1], [], []>} : vector<64x64xbf16>, vector<64x64xbf16>, vector<64x64xf32> -> vector<64x64xf32>
    %440 = arith.addf %433, %439 : vector<64x64xf32>
    %c1_394 = arith.constant 1 : index
    %c9_395 = arith.constant 9 : index
    %c0_396 = arith.constant 0 : index
    %441 = vector.load %arg15[%c1_394, %c9_395, %c0_396] : memref<10x24x64xf32, #tpu.memory_space<vmem>>, vector<8x8x64xf32>
    %442 = vector.shape_cast %441 : vector<8x8x64xf32> to vector<64x64xf32>
    %443 = arith.truncf %442 : vector<64x64xf32> to vector<64x64xbf16>
    %c5_397 = arith.constant 5 : index
    %c0_398 = arith.constant 0 : index
    %c0_399 = arith.constant 0 : index
    %444 = vector.load %arg9[%c5_397, %c0_398, %c0_399] : memref<9x64x64xbf16, #tpu.memory_space<vmem>>, vector<1x64x64xbf16>
    %445 = vector.shape_cast %444 : vector<1x64x64xbf16> to vector<64x64xbf16>
    %cst_400 = arith.constant dense<0.000000e+00> : vector<64x64xf32>
    %446 = tpu.matmul %443, %445, %cst_400 {dimension_numbers = #tpu.dot_dimension_numbers<[1], [0], [0], [1], [0, 0, 1, 1], [], []>} : vector<64x64xbf16>, vector<64x64xbf16>, vector<64x64xf32> -> vector<64x64xf32>
    %447 = arith.addf %440, %446 : vector<64x64xf32>
    %c2_401 = arith.constant 2 : index
    %c7_402 = arith.constant 7 : index
    %c0_403 = arith.constant 0 : index
    %448 = vector.load %arg15[%c2_401, %c7_402, %c0_403] : memref<10x24x64xf32, #tpu.memory_space<vmem>>, vector<8x8x64xf32>
    %449 = vector.shape_cast %448 : vector<8x8x64xf32> to vector<64x64xf32>
    %450 = arith.truncf %449 : vector<64x64xf32> to vector<64x64xbf16>
    %c6_404 = arith.constant 6 : index
    %c0_405 = arith.constant 0 : index
    %c0_406 = arith.constant 0 : index
    %451 = vector.load %arg9[%c6_404, %c0_405, %c0_406] : memref<9x64x64xbf16, #tpu.memory_space<vmem>>, vector<1x64x64xbf16>
    %452 = vector.shape_cast %451 : vector<1x64x64xbf16> to vector<64x64xbf16>
    %cst_407 = arith.constant dense<0.000000e+00> : vector<64x64xf32>
    %453 = tpu.matmul %450, %452, %cst_407 {dimension_numbers = #tpu.dot_dimension_numbers<[1], [0], [0], [1], [0, 0, 1, 1], [], []>} : vector<64x64xbf16>, vector<64x64xbf16>, vector<64x64xf32> -> vector<64x64xf32>
    %454 = arith.addf %447, %453 : vector<64x64xf32>
    %c2_408 = arith.constant 2 : index
    %c8_409 = arith.constant 8 : index
    %c0_410 = arith.constant 0 : index
    %455 = vector.load %arg15[%c2_408, %c8_409, %c0_410] : memref<10x24x64xf32, #tpu.memory_space<vmem>>, vector<8x8x64xf32>
    %456 = vector.shape_cast %455 : vector<8x8x64xf32> to vector<64x64xf32>
    %457 = arith.truncf %456 : vector<64x64xf32> to vector<64x64xbf16>
    %c7_411 = arith.constant 7 : index
    %c0_412 = arith.constant 0 : index
    %c0_413 = arith.constant 0 : index
    %458 = vector.load %arg9[%c7_411, %c0_412, %c0_413] : memref<9x64x64xbf16, #tpu.memory_space<vmem>>, vector<1x64x64xbf16>
    %459 = vector.shape_cast %458 : vector<1x64x64xbf16> to vector<64x64xbf16>
    %cst_414 = arith.constant dense<0.000000e+00> : vector<64x64xf32>
    %460 = tpu.matmul %457, %459, %cst_414 {dimension_numbers = #tpu.dot_dimension_numbers<[1], [0], [0], [1], [0, 0, 1, 1], [], []>} : vector<64x64xbf16>, vector<64x64xbf16>, vector<64x64xf32> -> vector<64x64xf32>
    %461 = arith.addf %454, %460 : vector<64x64xf32>
    %c2_415 = arith.constant 2 : index
    %c9_416 = arith.constant 9 : index
    %c0_417 = arith.constant 0 : index
    %462 = vector.load %arg15[%c2_415, %c9_416, %c0_417] : memref<10x24x64xf32, #tpu.memory_space<vmem>>, vector<8x8x64xf32>
    %463 = vector.shape_cast %462 : vector<8x8x64xf32> to vector<64x64xf32>
    %464 = arith.truncf %463 : vector<64x64xf32> to vector<64x64xbf16>
    %c8_418 = arith.constant 8 : index
    %c0_419 = arith.constant 0 : index
    %c0_420 = arith.constant 0 : index
    %465 = vector.load %arg9[%c8_418, %c0_419, %c0_420] : memref<9x64x64xbf16, #tpu.memory_space<vmem>>, vector<1x64x64xbf16>
    %466 = vector.shape_cast %465 : vector<1x64x64xbf16> to vector<64x64xbf16>
    %cst_421 = arith.constant dense<0.000000e+00> : vector<64x64xf32>
    %467 = tpu.matmul %464, %466, %cst_421 {dimension_numbers = #tpu.dot_dimension_numbers<[1], [0], [0], [1], [0, 0, 1, 1], [], []>} : vector<64x64xbf16>, vector<64x64xbf16>, vector<64x64xf32> -> vector<64x64xf32>
    %468 = arith.addf %461, %467 : vector<64x64xf32>
    %c4_422 = arith.constant 4 : index
    %c0_423 = arith.constant 0 : index
    %469 = vector.load %arg11[%c4_422, %c0_423] : memref<6x64xf32, #tpu.memory_space<vmem>>, vector<1x64xf32>
    %470 = vector.broadcast %469 : vector<1x64xf32> to vector<64x64xf32>
    %471 = arith.addf %468, %470 : vector<64x64xf32>
    %cst_424 = arith.constant 0.000000e+00 : f32
    %472 = vector.broadcast %cst_424 : f32 to vector<64x64xf32>
    %473 = arith.maximumf %471, %472 : vector<64x64xf32>
    %474 = vector.shape_cast %473 : vector<64x64xf32> to vector<8x8x64xf32>
    %c1_425 = arith.constant 1 : index
    %c8_426 = arith.constant 8 : index
    %c0_427 = arith.constant 0 : index
    %475 = vector.load %arg15[%c1_425, %c8_426, %c0_427] : memref<10x24x64xf32, #tpu.memory_space<vmem>>, vector<8x8x64xf32>
    tpu.vector_store %arg15[%c1_425, %c8_426, %c0_427], %474 {strides = array<i32>} : memref<10x24x64xf32, #tpu.memory_space<vmem>>, vector<8x8x64xf32>,
    %c0_428 = arith.constant 0 : index
    %c7_429 = arith.constant 7 : index
    %c0_430 = arith.constant 0 : index
    %476 = vector.load %arg15[%c0_428, %c7_429, %c0_430] : memref<10x24x64xf32, #tpu.memory_space<vmem>>, vector<8x8x64xf32>
    %c0_431 = arith.constant 0 : index
    %c0_432 = arith.constant 0 : index
    %477 = vector.load %arg10[%c0_431, %c0_432] : memref<9x64xf32, #tpu.memory_space<vmem>>, vector<1x64xf32>
    %478 = vector.shape_cast %477 : vector<1x64xf32> to vector<1x1x64xf32>
    %479 = vector.broadcast %478 : vector<1x1x64xf32> to vector<8x8x64xf32>
    %480 = arith.mulf %476, %479 : vector<8x8x64xf32>
    %cst_433 = arith.constant dense<0.000000e+00> : vector<8x8xf32>
    %481 = vector.multi_reduction <add>, %480, %cst_433 [2] : vector<8x8x64xf32> to vector<8x8xf32>
    %c0_434 = arith.constant 0 : index
    %c8_435 = arith.constant 8 : index
    %c0_436 = arith.constant 0 : index
    %482 = vector.load %arg15[%c0_434, %c8_435, %c0_436] : memref<10x24x64xf32, #tpu.memory_space<vmem>>, vector<8x8x64xf32>
    %c1_437 = arith.constant 1 : index
    %c0_438 = arith.constant 0 : index
    %483 = vector.load %arg10[%c1_437, %c0_438] : memref<9x64xf32, #tpu.memory_space<vmem>>, vector<1x64xf32>
    %484 = vector.shape_cast %483 : vector<1x64xf32> to vector<1x1x64xf32>
    %485 = vector.broadcast %484 : vector<1x1x64xf32> to vector<8x8x64xf32>
    %486 = arith.mulf %482, %485 : vector<8x8x64xf32>
    %cst_439 = arith.constant dense<0.000000e+00> : vector<8x8xf32>
    %487 = vector.multi_reduction <add>, %486, %cst_439 [2] : vector<8x8x64xf32> to vector<8x8xf32>
    %488 = arith.addf %481, %487 : vector<8x8xf32>
    %c0_440 = arith.constant 0 : index
    %c9_441 = arith.constant 9 : index
    %c0_442 = arith.constant 0 : index
    %489 = vector.load %arg15[%c0_440, %c9_441, %c0_442] : memref<10x24x64xf32, #tpu.memory_space<vmem>>, vector<8x8x64xf32>
    %c2_443 = arith.constant 2 : index
    %c0_444 = arith.constant 0 : index
    %490 = vector.load %arg10[%c2_443, %c0_444] : memref<9x64xf32, #tpu.memory_space<vmem>>, vector<1x64xf32>
    %491 = vector.shape_cast %490 : vector<1x64xf32> to vector<1x1x64xf32>
    %492 = vector.broadcast %491 : vector<1x1x64xf32> to vector<8x8x64xf32>
    %493 = arith.mulf %489, %492 : vector<8x8x64xf32>
    %cst_445 = arith.constant dense<0.000000e+00> : vector<8x8xf32>
    %494 = vector.multi_reduction <add>, %493, %cst_445 [2] : vector<8x8x64xf32> to vector<8x8xf32>
    %495 = arith.addf %488, %494 : vector<8x8xf32>
    %c1_446 = arith.constant 1 : index
    %c7_447 = arith.constant 7 : index
    %c0_448 = arith.constant 0 : index
    %496 = vector.load %arg15[%c1_446, %c7_447, %c0_448] : memref<10x24x64xf32, #tpu.memory_space<vmem>>, vector<8x8x64xf32>
    %c3_449 = arith.constant 3 : index
    %c0_450 = arith.constant 0 : index
    %497 = vector.load %arg10[%c3_449, %c0_450] : memref<9x64xf32, #tpu.memory_space<vmem>>, vector<1x64xf32>
    %498 = vector.shape_cast %497 : vector<1x64xf32> to vector<1x1x64xf32>
    %499 = vector.broadcast %498 : vector<1x1x64xf32> to vector<8x8x64xf32>
    %500 = arith.mulf %496, %499 : vector<8x8x64xf32>
    %cst_451 = arith.constant dense<0.000000e+00> : vector<8x8xf32>
    %501 = vector.multi_reduction <add>, %500, %cst_451 [2] : vector<8x8x64xf32> to vector<8x8xf32>
    %502 = arith.addf %495, %501 : vector<8x8xf32>
    %c1_452 = arith.constant 1 : index
    %c8_453 = arith.constant 8 : index
    %c0_454 = arith.constant 0 : index
    %503 = vector.load %arg15[%c1_452, %c8_453, %c0_454] : memref<10x24x64xf32, #tpu.memory_space<vmem>>, vector<8x8x64xf32>
    %c4_455 = arith.constant 4 : index
    %c0_456 = arith.constant 0 : index
    %504 = vector.load %arg10[%c4_455, %c0_456] : memref<9x64xf32, #tpu.memory_space<vmem>>, vector<1x64xf32>
    %505 = vector.shape_cast %504 : vector<1x64xf32> to vector<1x1x64xf32>
    %506 = vector.broadcast %505 : vector<1x1x64xf32> to vector<8x8x64xf32>
    %507 = arith.mulf %503, %506 : vector<8x8x64xf32>
    %cst_457 = arith.constant dense<0.000000e+00> : vector<8x8xf32>
    %508 = vector.multi_reduction <add>, %507, %cst_457 [2] : vector<8x8x64xf32> to vector<8x8xf32>
    %509 = arith.addf %502, %508 : vector<8x8xf32>
    %c1_458 = arith.constant 1 : index
    %c9_459 = arith.constant 9 : index
    %c0_460 = arith.constant 0 : index
    %510 = vector.load %arg15[%c1_458, %c9_459, %c0_460] : memref<10x24x64xf32, #tpu.memory_space<vmem>>, vector<8x8x64xf32>
    %c5_461 = arith.constant 5 : index
    %c0_462 = arith.constant 0 : index
    %511 = vector.load %arg10[%c5_461, %c0_462] : memref<9x64xf32, #tpu.memory_space<vmem>>, vector<1x64xf32>
    %512 = vector.shape_cast %511 : vector<1x64xf32> to vector<1x1x64xf32>
    %513 = vector.broadcast %512 : vector<1x1x64xf32> to vector<8x8x64xf32>
    %514 = arith.mulf %510, %513 : vector<8x8x64xf32>
    %cst_463 = arith.constant dense<0.000000e+00> : vector<8x8xf32>
    %515 = vector.multi_reduction <add>, %514, %cst_463 [2] : vector<8x8x64xf32> to vector<8x8xf32>
    %516 = arith.addf %509, %515 : vector<8x8xf32>
    %c2_464 = arith.constant 2 : index
    %c7_465 = arith.constant 7 : index
    %c0_466 = arith.constant 0 : index
    %517 = vector.load %arg15[%c2_464, %c7_465, %c0_466] : memref<10x24x64xf32, #tpu.memory_space<vmem>>, vector<8x8x64xf32>
    %c6_467 = arith.constant 6 : index
    %c0_468 = arith.constant 0 : index
    %518 = vector.load %arg10[%c6_467, %c0_468] : memref<9x64xf32, #tpu.memory_space<vmem>>, vector<1x64xf32>
    %519 = vector.shape_cast %518 : vector<1x64xf32> to vector<1x1x64xf32>
    %520 = vector.broadcast %519 : vector<1x1x64xf32> to vector<8x8x64xf32>
    %521 = arith.mulf %517, %520 : vector<8x8x64xf32>
    %cst_469 = arith.constant dense<0.000000e+00> : vector<8x8xf32>
    %522 = vector.multi_reduction <add>, %521, %cst_469 [2] : vector<8x8x64xf32> to vector<8x8xf32>
    %523 = arith.addf %516, %522 : vector<8x8xf32>
    %c2_470 = arith.constant 2 : index
    %c8_471 = arith.constant 8 : index
    %c0_472 = arith.constant 0 : index
    %524 = vector.load %arg15[%c2_470, %c8_471, %c0_472] : memref<10x24x64xf32, #tpu.memory_space<vmem>>, vector<8x8x64xf32>
    %c7_473 = arith.constant 7 : index
    %c0_474 = arith.constant 0 : index
    %525 = vector.load %arg10[%c7_473, %c0_474] : memref<9x64xf32, #tpu.memory_space<vmem>>, vector<1x64xf32>
    %526 = vector.shape_cast %525 : vector<1x64xf32> to vector<1x1x64xf32>
    %527 = vector.broadcast %526 : vector<1x1x64xf32> to vector<8x8x64xf32>
    %528 = arith.mulf %524, %527 : vector<8x8x64xf32>
    %cst_475 = arith.constant dense<0.000000e+00> : vector<8x8xf32>
    %529 = vector.multi_reduction <add>, %528, %cst_475 [2] : vector<8x8x64xf32> to vector<8x8xf32>
    %530 = arith.addf %523, %529 : vector<8x8xf32>
    %c2_476 = arith.constant 2 : index
    %c9_477 = arith.constant 9 : index
    %c0_478 = arith.constant 0 : index
    %531 = vector.load %arg15[%c2_476, %c9_477, %c0_478] : memref<10x24x64xf32, #tpu.memory_space<vmem>>, vector<8x8x64xf32>
    %c8_479 = arith.constant 8 : index
    %c0_480 = arith.constant 0 : index
    %532 = vector.load %arg10[%c8_479, %c0_480] : memref<9x64xf32, #tpu.memory_space<vmem>>, vector<1x64xf32>
    %533 = vector.shape_cast %532 : vector<1x64xf32> to vector<1x1x64xf32>
    %534 = vector.broadcast %533 : vector<1x1x64xf32> to vector<8x8x64xf32>
    %535 = arith.mulf %531, %534 : vector<8x8x64xf32>
    %cst_481 = arith.constant dense<0.000000e+00> : vector<8x8xf32>
    %536 = vector.multi_reduction <add>, %535, %cst_481 [2] : vector<8x8x64xf32> to vector<8x8xf32>
    %537 = arith.addf %530, %536 : vector<8x8xf32>
    %c5_482 = arith.constant 5 : index
    %c0_483 = arith.constant 0 : index
    %538 = vector.load %arg11[%c5_482, %c0_483] : memref<6x64xf32, #tpu.memory_space<vmem>>, vector<1x1xf32>
    %539 = vector.broadcast %538 : vector<1x1xf32> to vector<8x8xf32>
    %540 = arith.addf %537, %539 : vector<8x8xf32>
    %c0_484 = arith.constant 0 : index
    %c0_485 = arith.constant 0 : index
    %541 = vector.load %arg12[%c0_484, %c0_485] : memref<16x8xf32, #tpu.memory_space<vmem>>, vector<16x8xf32>
    %cst_486 = arith.constant dense<0.000000e+00> : vector<16x8xf32>
    %542 = tpu.matmul %541, %540, %cst_486 {dimension_numbers = #tpu.dot_dimension_numbers<[1], [0], [0], [1], [0, 0, 1, 1], [], []>} : vector<16x8xf32>, vector<8x8xf32>, vector<16x8xf32> -> vector<16x8xf32>
    %c0_487 = arith.constant 0 : index
    %c0_488 = arith.constant 0 : index
    %543 = vector.load %arg13[%c0_487, %c0_488] : memref<8x16xf32, #tpu.memory_space<vmem>>, vector<8x16xf32>
    %cst_489 = arith.constant dense<0.000000e+00> : vector<16x16xf32>
    %544 = tpu.matmul %542, %543, %cst_489 {dimension_numbers = #tpu.dot_dimension_numbers<[1], [0], [0], [1], [0, 0, 1, 1], [], []>} : vector<16x8xf32>, vector<8x16xf32>, vector<16x16xf32> -> vector<16x16xf32>
    %c0_490 = arith.constant 0 : index
    %c0_491 = arith.constant 0 : index
    %c0_492 = arith.constant 0 : index
    %545 = vector.load %arg14[%c0_490, %c0_491, %c0_492] : memref<1x16x16xf32, #tpu.memory_space<vmem>>, vector<1x16x16xf32>
    %546 = vector.shape_cast %545 : vector<1x16x16xf32> to vector<16x16xf32>
    %547 = vector.shape_cast %544 : vector<16x16xf32> to vector<1x16x16xf32>
    tpu.vector_store %arg14[%c0_490, %c0_491, %c0_492], %547 {strides = array<i32>} : memref<1x16x16xf32, #tpu.memory_space<vmem>>, vector<1x16x16xf32>,
    return
  }
  func.func @transform_0(%arg0: i32) -> (i32, i32, i32, i32) {
    %c0_i32 = arith.constant 0 : i32
    %c0_i32_0 = arith.constant 0 : i32
    %c0_i32_1 = arith.constant 0 : i32
    %c0_i32_2 = arith.constant 0 : i32
    return %arg0, %c0_i32, %c0_i32_0, %c0_i32_1 : i32, i32, i32, i32
  }
  func.func @transform_1(%arg0: i32) -> (i32, i32, i32, i32) {
    %c0_i32 = arith.constant 0 : i32
    %c0_i32_0 = arith.constant 0 : i32
    %c0_i32_1 = arith.constant 0 : i32
    %c0_i32_2 = arith.constant 0 : i32
    return %arg0, %c0_i32, %c0_i32_0, %c0_i32_1 : i32, i32, i32, i32
  }
  func.func @transform_2(%arg0: i32) -> (i32, i32, i32, i32) {
    %c0_i32 = arith.constant 0 : i32
    %c0_i32_0 = arith.constant 0 : i32
    %c0_i32_1 = arith.constant 0 : i32
    %c0_i32_2 = arith.constant 0 : i32
    return %arg0, %c0_i32, %c0_i32_0, %c0_i32_1 : i32, i32, i32, i32
  }
  func.func @transform_3(%arg0: i32) -> (i32, i32) {
    %c0_i32 = arith.constant 0 : i32
    %c0_i32_0 = arith.constant 0 : i32
    %c0_i32_1 = arith.constant 0 : i32
    return %c0_i32, %c0_i32_0 : i32, i32
  }
  func.func @transform_4(%arg0: i32) -> (i32, i32, i32) {
    %c0_i32 = arith.constant 0 : i32
    %c0_i32_0 = arith.constant 0 : i32
    %c0_i32_1 = arith.constant 0 : i32
    %c0_i32_2 = arith.constant 0 : i32
    return %c0_i32, %c0_i32_0, %c0_i32_1 : i32, i32, i32
  }
  func.func @transform_5(%arg0: i32) -> (i32, i32, i32) {
    %c0_i32 = arith.constant 0 : i32
    %c0_i32_0 = arith.constant 0 : i32
    %c0_i32_1 = arith.constant 0 : i32
    %c0_i32_2 = arith.constant 0 : i32
    return %c0_i32, %c0_i32_0, %c0_i32_1 : i32, i32, i32
  }
  func.func @transform_6(%arg0: i32) -> (i32, i32) {
    %c0_i32 = arith.constant 0 : i32
    %c0_i32_0 = arith.constant 0 : i32
    %c0_i32_1 = arith.constant 0 : i32
    return %c0_i32, %c0_i32_0 : i32, i32
  }
  func.func @transform_7(%arg0: i32) -> (i32, i32, i32) {
    %c0_i32 = arith.constant 0 : i32
    %c0_i32_0 = arith.constant 0 : i32
    %c0_i32_1 = arith.constant 0 : i32
    %c0_i32_2 = arith.constant 0 : i32
    return %c0_i32, %c0_i32_0, %c0_i32_1 : i32, i32, i32
  }
  func.func @transform_8(%arg0: i32) -> (i32, i32, i32) {
    %c0_i32 = arith.constant 0 : i32
    %c0_i32_0 = arith.constant 0 : i32
    %c0_i32_1 = arith.constant 0 : i32
    %c0_i32_2 = arith.constant 0 : i32
    return %c0_i32, %c0_i32_0, %c0_i32_1 : i32, i32, i32
  }
  func.func @transform_9(%arg0: i32) -> (i32, i32) {
    %c0_i32 = arith.constant 0 : i32
    %c0_i32_0 = arith.constant 0 : i32
    %c0_i32_1 = arith.constant 0 : i32
    return %c0_i32, %c0_i32_0 : i32, i32
  }
  func.func @transform_10(%arg0: i32) -> (i32, i32) {
    %c0_i32 = arith.constant 0 : i32
    %c0_i32_0 = arith.constant 0 : i32
    %c0_i32_1 = arith.constant 0 : i32
    return %c0_i32, %c0_i32_0 : i32, i32
  }
  func.func @transform_11(%arg0: i32) -> (i32, i32) {
    %c0_i32 = arith.constant 0 : i32
    %c0_i32_0 = arith.constant 0 : i32
    %c0_i32_1 = arith.constant 0 : i32
    return %c0_i32, %c0_i32_0 : i32, i32
  }
  func.func @transform_12(%arg0: i32) -> (i32, i32) {
    %c0_i32 = arith.constant 0 : i32
    %c0_i32_0 = arith.constant 0 : i32
    %c0_i32_1 = arith.constant 0 : i32
    return %c0_i32, %c0_i32_0 : i32, i32
  }
  func.func @transform_13(%arg0: i32) -> (i32, i32, i32) {
    %c0_i32 = arith.constant 0 : i32
    %c0_i32_0 = arith.constant 0 : i32
    %c0_i32_1 = arith.constant 0 : i32
    return %arg0, %c0_i32, %c0_i32_0 : i32, i32, i32
  }
}

</mosaic_0001>

<llo_original>
// kernel: tpu_custom_call.1
$region0: #{tpu_custom_call.1}
  #allocation0 [shape = 'u32[]', space=smem, size = 0x4, offset = 0x4, fixed_abs, tag = 'smem constant byte address 0x4 - core index']
  #allocation1 [shape = 'u32[72,128]{1,0:T(1,128)}', space=vmem, size = 0x9000, scoped, tag = 'internal scratch']
  #allocation2 [shape = 'f32[10,24,64]{2,1,0:T(8,128)}', space=vmem, size = 0x1e000, scoped, tag = 'scratch operand']
  #allocation3 [shape = 'f32[8,4,64]{2,1,0:T(4,128)}', space=vmem, size = 0x4000, scoped, tag = 'scratch operand']
  #allocation4 [shape = 'f32[8,8,64]{2,1,0:T(8,128)}', space=vmem, size = 0x8000, scoped, tag = 'scratch operand']
  %s0 = inlined_call_operand.hbm [shape: f32[2,8,8,64], index: 0, kind: input, shape index: {}]
  %s1 = inlined_call_operand.vmem [shape: f32[2,4,4,64], index: 1, kind: input, shape index: {}]
  %s2 = inlined_call_operand.hbm [shape: f32[2,8,8,128], index: 2, kind: input, shape index: {}]
  %s3 = inlined_call_operand.vmem [shape: bf16[128,64], index: 3, kind: input, shape index: {}]
  %s4 = inlined_call_operand.hbm [shape: bf16[9,64,64], index: 4, kind: input, shape index: {}]
  %s5 = inlined_call_operand.hbm [shape: bf16[9,64,64], index: 5, kind: input, shape index: {}]
  %s6 = inlined_call_operand.vmem [shape: bf16[64,64], index: 6, kind: input, shape index: {}]
  %s7 = inlined_call_operand.hbm [shape: bf16[9,64,64], index: 7, kind: input, shape index: {}]
  %s8 = inlined_call_operand.hbm [shape: bf16[9,64,64], index: 8, kind: input, shape index: {}]
  %s9 = inlined_call_operand.vmem [shape: f32[9,64], index: 9, kind: input, shape index: {}]
  %s10 = inlined_call_operand.vmem [shape: f32[6,64], index: 10, kind: input, shape index: {}]
  %s11 = inlined_call_operand.vmem [shape: f32[16,8], index: 11, kind: input, shape index: {}]
  %s12 = inlined_call_operand.vmem [shape: f32[8,16], index: 12, kind: input, shape index: {}]
  %s13 = inlined_call_operand.hbm [shape: f32[2,16,16], index: 13, kind: output, shape index: {}]
  %s14 = sld [smem:[#allocation0]]
  $region109: #{tpu_custom_call.1} parent=0
    _
  %s16 = ssub.s32 1, %s14
  %s17 = scalar_select 0, %s16, %s14
  $region1: #{tpu_custom_call.1} parent=0
    #allocation5 [shape = 'u8[65536]{0}', space=vmem, size = 0x10000, scoped, tag = 'input window, operand 0']
    #allocation6 [shape = 's32[2]{0}', space=sflag, size = 0x8, scoped, tag = 'scoped memory for tpu_custom_call.1']
    #allocation7 [shape = 's32[2]{0}', space=sflag, size = 0x8, scoped, tag = 'scoped memory for tpu_custom_call.1']
    #allocation8 [shape = 'u8[65536]{0}', space=vmem, size = 0x10000, scoped, tag = 'input window, operand 2']
    #allocation9 [shape = 's32[2]{0}', space=sflag, size = 0x8, scoped, tag = 'scoped memory for tpu_custom_call.1']
    #allocation10 [shape = 'u8[147456]{0}', space=vmem, size = 0x24000, scoped, tag = 'input window, operand 4, single buffered']
    #allocation11 [shape = 'u8[147456]{0}', space=vmem, size = 0x24000, scoped, tag = 'input window, operand 5, single buffered']
    #allocation12 [shape = 's32[1]{0}', space=sflag, size = 0x4, scoped, tag = 'scoped memory for tpu_custom_call.1']
    #allocation13 [shape = 'u8[147456]{0}', space=vmem, size = 0x24000, scoped, tag = 'input window, operand 7, single buffered']
    #allocation14 [shape = 'u8[147456]{0}', space=vmem, size = 0x24000, scoped, tag = 'input window, operand 8, single buffered']
    #allocation15 [shape = 's32[1]{0}', space=sflag, size = 0x4, scoped, tag = 'scoped memory for tpu_custom_call.1']
    #allocation16 [shape = 'u8[16384]{0}', space=vmem, size = 0x4000, scoped, tag = 'output window, operand 0']
    %18 = vsyncpa [#allocation6], 0
    %s19 = scalar_lea.sflag [#allocation6], 1
    %20 = vsyncpa %s19, 0
    %21 = vsyncpa [#allocation9], 0
    %s22 = scalar_lea.sflag [#allocation9], 1
    %23 = vsyncpa %s22, 0
    %24 = vsyncpa [#allocation12], 0
    %25 = vsyncpa [#allocation15], 0
    %26 = vsyncpa [#allocation7], 0
    %s27 = scalar_lea.sflag [#allocation7], 1
    %28 = vsyncpa %s27, 0
    loop: start=0, step=1, limit=4
    $region2: #{tpu_custom_call.1} parent=1 // loop_pre_header
      _
    $region3: #{tpu_custom_call.1} parent=1 // loop_header
      %s30 = sphi 0, %s34
      %p31 = scmp.ge.s32.totalorder %s30, 4
      %s40 = sphi 0, %s42
      %s43 = sphi 0, %s40
      %s44 = sphi 0, %s43
      %s60 = sphi 0, %s44
      %s66 = sphi 0, %s68
      %s69 = sphi 0, %s66
      %s70 = sphi 0, %s69
      %s86 = sphi 0, %s70
      %s92 = sphi 0, %s94
      %s95 = sphi 0, %s92
      %s96 = sphi 0, %s95
      %s112 = sphi 0, %s96
      %s116 = sphi 0, %s116
      %s118 = sphi 0, %s116
      %s119 = sphi 0, %s118
      %s133 = sphi 0, %s119
      %s137 = sphi 0, %s137
      %s139 = sphi 0, %s137
      %s140 = sphi 0, %s139
      %s154 = sphi 0, %s140
      %s158 = sphi 0, %s158
      %s160 = sphi 0, %s158
      %s161 = sphi 0, %s160
      %s175 = sphi 0, %s161
      %s179 = sphi 0, %s179
      %s181 = sphi 0, %s179
      %s182 = sphi 0, %s181
      %s196 = sphi 0, %s182
      %s200 = sphi 0, %s200
      %s202 = sphi 0, %s200
      %s203 = sphi 0, %s202
      %s217 = sphi 0, %s203
      %s221 = sphi 0, %s221
      %s223 = sphi 0, %s221
      %s224 = sphi 0, %s223
      %s238 = sphi 0, %s224
      %s242 = sphi 0, %s242
      %s244 = sphi 0, %s242
      %s245 = sphi 0, %s244
      %s259 = sphi 0, %s245
      %s263 = sphi 0, %s263
      %s265 = sphi 0, %s263
      %s266 = sphi 0, %s265
      %s280 = sphi 0, %s266
      %s284 = sphi 0, %s284
      %s286 = sphi 0, %s284
      %s287 = sphi 0, %s286
      %s301 = sphi 0, %s287
      %s305 = sphi 0, %s305
      %s307 = sphi 0, %s305
      %s308 = sphi 0, %s307
      %s322 = sphi 0, %s308
      %s328 = sphi 0, %s330
      %s331 = sphi 0, %s328
      %s332 = sphi 0, %s331
      %s348 = sphi 0, %s332
    $region4: #{tpu_custom_call.1} parent=1 // loop_header_branch
      %33 = sbr.rel (%p31) target = $region8
    $region5: #{tpu_custom_call.1} parent=1 // loop_body
      %s35 = ssub.s32 %s30, 1
      %s36 = ssub.s32 %s30, 2
      %s37 = sadd.s32 %s30, 1
      %s38 = ssub.s32 %s30, %s37
      %p39 = scmp.eq.s32.totalorder %s38, 0
      %s41 = sadd.s32 %s40, 1
      %s42 = scalar_select %p39, %s40, %s41
      %p45 = pneg %p39
      %p46 = scmp.eq.s32.totalorder %s30, 1
      %p47 = por %p45, %p46
      %p48 = scmp.ne.s32.totalorder %s40, %s43
      %p49 = scmp.eq.s32.totalorder %s30, 0
      %p50 = por %p48, %p49
      %p51 = scmp.ne.s32.totalorder %s40, %s43
      %p52 = scmp.eq.s32.totalorder %s35, 1
      %p53 = por %p51, %p52
      %p54 = scmp.ne.s32.totalorder %s43, %s44
      %p55 = scmp.eq.s32.totalorder %s35, 0
      %p56 = por %p54, %p55
      %p57 = scmp.ne.s32.totalorder %s43, %s44
      %p58 = scmp.eq.s32.totalorder %s36, 1
      %p59 = por %p57, %p58
      %p61 = scmp.ne.s32.totalorder %s44, %s60
      %p62 = scmp.eq.s32.totalorder %s36, 0
      %p63 = por %p61, %p62
      %s64 = ssub.s32 %s30, %s37
      %p65 = scmp.eq.s32.totalorder %s64, 0
      %s67 = sadd.s32 %s66, 1
      %s68 = scalar_select %p65, %s66, %s67
      %p71 = pneg %p65
      %p72 = scmp.eq.s32.totalorder %s30, 1
      %p73 = por %p71, %p72
      %p74 = scmp.ne.s32.totalorder %s66, %s69
      %p75 = scmp.eq.s32.totalorder %s30, 0
      %p76 = por %p74, %p75
      %p77 = scmp.ne.s32.totalorder %s66, %s69
      %p78 = scmp.eq.s32.totalorder %s35, 1
      %p79 = por %p77, %p78
      %p80 = scmp.ne.s32.totalorder %s69, %s70
      %p81 = scmp.eq.s32.totalorder %s35, 0
      %p82 = por %p80, %p81
      %p83 = scmp.ne.s32.totalorder %s69, %s70
      %p84 = scmp.eq.s32.totalorder %s36, 1
      %p85 = por %p83, %p84
      %p87 = scmp.ne.s32.totalorder %s70, %s86
      %p88 = scmp.eq.s32.totalorder %s36, 0
      %p89 = por %p87, %p88
      %s90 = ssub.s32 %s30, %s37
      %p91 = scmp.eq.s32.totalorder %s90, 0
      %s93 = sadd.s32 %s92, 1
      %s94 = scalar_select %p91, %s92, %s93
      %p97 = pneg %p91
      %p98 = scmp.eq.s32.totalorder %s30, 1
      %p99 = por %p97, %p98
      %p100 = scmp.ne.s32.totalorder %s92, %s95
      %p101 = scmp.eq.s32.totalorder %s30, 0
      %p102 = por %p100, %p101
      %p103 = scmp.ne.s32.totalorder %s92, %s95
      %p104 = scmp.eq.s32.totalorder %s35, 1
      %p105 = por %p103, %p104
      %p106 = scmp.ne.s32.totalorder %s95, %s96
      %p107 = scmp.eq.s32.totalorder %s35, 0
      %p108 = por %p106, %p107
      %p109 = scmp.ne.s32.totalorder %s95, %s96
      %p110 = scmp.eq.s32.totalorder %s36, 1
      %p111 = por %p109, %p110
      %p113 = scmp.ne.s32.totalorder %s96, %s112
      %p114 = scmp.eq.s32.totalorder %s36, 0
      %p115 = por %p113, %p114
      %s117 = sadd.s32 %s116, 1
      %p120 = scmp.eq.s32.totalorder %s30, 1
      %p121 = scmp.ne.s32.totalorder %s116, %s118
      %p122 = scmp.eq.s32.totalorder %s30, 0
      %p123 = por %p121, %p122
      %p124 = scmp.ne.s32.totalorder %s116, %s118
      %p125 = scmp.eq.s32.totalorder %s35, 1
      %p126 = por %p124, %p125
      %p127 = scmp.ne.s32.totalorder %s118, %s119
      %p128 = scmp.eq.s32.totalorder %s35, 0
      %p129 = por %p127, %p128
      %p130 = scmp.ne.s32.totalorder %s118, %s119
      %p131 = scmp.eq.s32.totalorder %s36, 1
      %p132 = por %p130, %p131
      %p134 = scmp.ne.s32.totalorder %s119, %s133
      %p135 = scmp.eq.s32.totalorder %s36, 0
      %p136 = por %p134, %p135
      %s138 = sadd.s32 %s137, 1
      %p141 = scmp.eq.s32.totalorder %s30, 1
      %p142 = scmp.ne.s32.totalorder %s137, %s139
      %p143 = scmp.eq.s32.totalorder %s30, 0
      %p144 = por %p142, %p143
      %p145 = scmp.ne.s32.totalorder %s137, %s139
      %p146 = scmp.eq.s32.totalorder %s35, 1
      %p147 = por %p145, %p146
      %p148 = scmp.ne.s32.totalorder %s139, %s140
      %p149 = scmp.eq.s32.totalorder %s35, 0
      %p150 = por %p148, %p149
      %p151 = scmp.ne.s32.totalorder %s139, %s140
      %p152 = scmp.eq.s32.totalorder %s36, 1
      %p153 = por %p151, %p152
      %p155 = scmp.ne.s32.totalorder %s140, %s154
      %p156 = scmp.eq.s32.totalorder %s36, 0
      %p157 = por %p155, %p156
      %s159 = sadd.s32 %s158, 1
      %p162 = scmp.eq.s32.totalorder %s30, 1
      %p163 = scmp.ne.s32.totalorder %s158, %s160
      %p164 = scmp.eq.s32.totalorder %s30, 0
      %p165 = por %p163, %p164
      %p166 = scmp.ne.s32.totalorder %s158, %s160
      %p167 = scmp.eq.s32.totalorder %s35, 1
      %p168 = por %p166, %p167
      %p169 = scmp.ne.s32.totalorder %s160, %s161
      %p170 = scmp.eq.s32.totalorder %s35, 0
      %p171 = por %p169, %p170
      %p172 = scmp.ne.s32.totalorder %s160, %s161
      %p173 = scmp.eq.s32.totalorder %s36, 1
      %p174 = por %p172, %p173
      %p176 = scmp.ne.s32.totalorder %s161, %s175
      %p177 = scmp.eq.s32.totalorder %s36, 0
      %p178 = por %p176, %p177
      %s180 = sadd.s32 %s179, 1
      %p183 = scmp.eq.s32.totalorder %s30, 1
      %p184 = scmp.ne.s32.totalorder %s179, %s181
      %p185 = scmp.eq.s32.totalorder %s30, 0
      %p186 = por %p184, %p185
      %p187 = scmp.ne.s32.totalorder %s179, %s181
      %p188 = scmp.eq.s32.totalorder %s35, 1
      %p189 = por %p187, %p188
      %p190 = scmp.ne.s32.totalorder %s181, %s182
      %p191 = scmp.eq.s32.totalorder %s35, 0
      %p192 = por %p190, %p191
      %p193 = scmp.ne.s32.totalorder %s181, %s182
      %p194 = scmp.eq.s32.totalorder %s36, 1
      %p195 = por %p193, %p194
      %p197 = scmp.ne.s32.totalorder %s182, %s196
      %p198 = scmp.eq.s32.totalorder %s36, 0
      %p199 = por %p197, %p198
      %s201 = sadd.s32 %s200, 1
      %p204 = scmp.eq.s32.totalorder %s30, 1
      %p205 = scmp.ne.s32.totalorder %s200, %s202
      %p206 = scmp.eq.s32.totalorder %s30, 0
      %p207 = por %p205, %p206
      %p208 = scmp.ne.s32.totalorder %s200, %s202
      %p209 = scmp.eq.s32.totalorder %s35, 1
      %p210 = por %p208, %p209
      %p211 = scmp.ne.s32.totalorder %s202, %s203
      %p212 = scmp.eq.s32.totalorder %s35, 0
      %p213 = por %p211, %p212
      %p214 = scmp.ne.s32.totalorder %s202, %s203
      %p215 = scmp.eq.s32.totalorder %s36, 1
      %p216 = por %p214, %p215
      %p218 = scmp.ne.s32.totalorder %s203, %s217
      %p219 = scmp.eq.s32.totalorder %s36, 0
      %p220 = por %p218, %p219
      %s222 = sadd.s32 %s221, 1
      %p225 = scmp.eq.s32.totalorder %s30, 1
      %p226 = scmp.ne.s32.totalorder %s221, %s223
      %p227 = scmp.eq.s32.totalorder %s30, 0
      %p228 = por %p226, %p227
      %p229 = scmp.ne.s32.totalorder %s221, %s223
      %p230 = scmp.eq.s32.totalorder %s35, 1
      %p231 = por %p229, %p230
      %p232 = scmp.ne.s32.totalorder %s223, %s224
      %p233 = scmp.eq.s32.totalorder %s35, 0
      %p234 = por %p232, %p233
      %p235 = scmp.ne.s32.totalorder %s223, %s224
      %p236 = scmp.eq.s32.totalorder %s36, 1
      %p237 = por %p235, %p236
      %p239 = scmp.ne.s32.totalorder %s224, %s238
      %p240 = scmp.eq.s32.totalorder %s36, 0
      %p241 = por %p239, %p240
      %s243 = sadd.s32 %s242, 1
      %p246 = scmp.eq.s32.totalorder %s30, 1
      %p247 = scmp.ne.s32.totalorder %s242, %s244
      %p248 = scmp.eq.s32.totalorder %s30, 0
      %p249 = por %p247, %p248
      %p250 = scmp.ne.s32.totalorder %s242, %s244
      %p251 = scmp.eq.s32.totalorder %s35, 1
      %p252 = por %p250, %p251
      %p253 = scmp.ne.s32.totalorder %s244, %s245
      %p254 = scmp.eq.s32.totalorder %s35, 0
      %p255 = por %p253, %p254
      %p256 = scmp.ne.s32.totalorder %s244, %s245
      %p257 = scmp.eq.s32.totalorder %s36, 1
      %p258 = por %p256, %p257
      %p260 = scmp.ne.s32.totalorder %s245, %s259
      %p261 = scmp.eq.s32.totalorder %s36, 0
      %p262 = por %p260, %p261
      %s264 = sadd.s32 %s263, 1
      %p267 = scmp.eq.s32.totalorder %s30, 1
      %p268 = scmp.ne.s32.totalorder %s263, %s265
      %p269 = scmp.eq.s32.totalorder %s30, 0
      %p270 = por %p268, %p269
      %p271 = scmp.ne.s32.totalorder %s263, %s265
      %p272 = scmp.eq.s32.totalorder %s35, 1
      %p273 = por %p271, %p272
      %p274 = scmp.ne.s32.totalorder %s265, %s266
      %p275 = scmp.eq.s32.totalorder %s35, 0
      %p276 = por %p274, %p275
      %p277 = scmp.ne.s32.totalorder %s265, %s266
      %p278 = scmp.eq.s32.totalorder %s36, 1
      %p279 = por %p277, %p278
      %p281 = scmp.ne.s32.totalorder %s266, %s280
      %p282 = scmp.eq.s32.totalorder %s36, 0
      %p283 = por %p281, %p282
      %s285 = sadd.s32 %s284, 1
      %p288 = scmp.eq.s32.totalorder %s30, 1
      %p289 = scmp.ne.s32.totalorder %s284, %s286
      %p290 = scmp.eq.s32.totalorder %s30, 0
      %p291 = por %p289, %p290
      %p292 = scmp.ne.s32.totalorder %s284, %s286
      %p293 = scmp.eq.s32.totalorder %s35, 1
      %p294 = por %p292, %p293
      %p295 = scmp.ne.s32.totalorder %s286, %s287
      %p296 = scmp.eq.s32.totalorder %s35, 0
      %p297 = por %p295, %p296
      %p298 = scmp.ne.s32.totalorder %s286, %s287
      %p299 = scmp.eq.s32.totalorder %s36, 1
      %p300 = por %p298, %p299
      %p302 = scmp.ne.s32.totalorder %s287, %s301
      %p303 = scmp.eq.s32.totalorder %s36, 0
      %p304 = por %p302, %p303
      %s306 = sadd.s32 %s305, 1
      %p309 = scmp.eq.s32.totalorder %s30, 1
      %p310 = scmp.ne.s32.totalorder %s305, %s307
      %p311 = scmp.eq.s32.totalorder %s30, 0
      %p312 = por %p310, %p311
      %p313 = scmp.ne.s32.totalorder %s305, %s307
      %p314 = scmp.eq.s32.totalorder %s35, 1
      %p315 = por %p313, %p314
      %p316 = scmp.ne.s32.totalorder %s307, %s308
      %p317 = scmp.eq.s32.totalorder %s35, 0
      %p318 = por %p316, %p317
      %p319 = scmp.ne.s32.totalorder %s307, %s308
      %p320 = scmp.eq.s32.totalorder %s36, 1
      %p321 = por %p319, %p320
      %p323 = scmp.ne.s32.totalorder %s308, %s322
      %p324 = scmp.eq.s32.totalorder %s36, 0
      %p325 = por %p323, %p324
      %s326 = ssub.s32 %s30, %s37
      %p327 = scmp.eq.s32.totalorder %s326, 0
      %s329 = sadd.s32 %s328, 1
      %s330 = scalar_select %p327, %s328, %s329
      %p333 = pneg %p327
      %p334 = scmp.eq.s32.totalorder %s30, 1
      %p335 = por %p333, %p334
      %p336 = scmp.ne.s32.totalorder %s328, %s331
      %p337 = scmp.eq.s32.totalorder %s30, 0
      %p338 = por %p336, %p337
      %p339 = scmp.ne.s32.totalorder %s328, %s331
      %p340 = scmp.eq.s32.totalorder %s35, 1
      %p341 = por %p339, %p340
      %p342 = scmp.ne.s32.totalorder %s331, %s332
      %p343 = scmp.eq.s32.totalorder %s35, 0
      %p344 = por %p342, %p343
      %p345 = scmp.ne.s32.totalorder %s331, %s332
      %p346 = scmp.eq.s32.totalorder %s36, 1
      %p347 = por %p345, %p346
      %p349 = scmp.ne.s32.totalorder %s332, %s348
      %p350 = scmp.eq.s32.totalorder %s36, 0
      %p351 = por %p349, %p350
      %p352 = scmp.le.s32.totalorder 1, %s30
      %p353 = scmp.lt.s32.totalorder %s30, 3
      %p354 = pnand %p352, %p353
      %p355 = pneg %p354
      // Predicated region
      $region9: #{tpu_custom_call.1} parent=5 // pred_check
        _
      $region10: #{tpu_custom_call.1} parent=5 // pred_check_branch
        %357 = sbr.rel (%p354) target = $region12
      $region11: #{tpu_custom_call.1} parent=5 // pred_region
        %s358 = ssub.s32 %s30, 1
        // Predicated region
        $region13: #{tpu_custom_call.1} parent=11 // pred_check
          %p359 = pneg %p129
        $region14: #{tpu_custom_call.1} parent=11 // pred_check_branch
          %361 = sbr.rel (%p359) target = $region16
        $region15: #{tpu_custom_call.1} parent=11 // pred_region
          _
        $region16: #{tpu_custom_call.1} parent=11 // pred_fallthru
          _
        // Predicated region
        $region17: #{tpu_custom_call.1} parent=11 // pred_check
          %p362 = pneg %p150
        $region18: #{tpu_custom_call.1} parent=11 // pred_check_branch
          %364 = sbr.rel (%p362) target = $region20
        $region19: #{tpu_custom_call.1} parent=11 // pred_region
          %366 = vsyncadd [#allocation9], 0
          %s367 = sshll.u32 %s4, 4
          %s368 = int_to_ptr.hbm [resolvable:$true] %s367
          %s369 = sshll.u32 [#allocation10], 4
          %s370 = int_to_ptr.vmem [resolvable:$true] %s369
          %375 = dma.hbm_to_vmem [thread:$0]  %s368, 4608, %s370, [#allocation9], 64, 64, 4
        $region20: #{tpu_custom_call.1} parent=11 // pred_fallthru
          _
        // Predicated region
        $region21: #{tpu_custom_call.1} parent=11 // pred_check
          %p376 = pneg %p171
        $region22: #{tpu_custom_call.1} parent=11 // pred_check_branch
          %378 = sbr.rel (%p376) target = $region24
        $region23: #{tpu_custom_call.1} parent=11 // pred_region
          %380 = vsyncadd [#allocation12], 0
          %s381 = sshll.u32 %s5, 4
          %s382 = int_to_ptr.hbm [resolvable:$true] %s381
          %s383 = sshll.u32 [#allocation11], 4
          %s384 = int_to_ptr.vmem [resolvable:$true] %s383
          %389 = dma.hbm_to_vmem [thread:$0]  %s382, 4608, %s384, [#allocation12], 64, 64, 4
        $region24: #{tpu_custom_call.1} parent=11 // pred_fallthru
          _
        // Predicated region
        $region25: #{tpu_custom_call.1} parent=11 // pred_check
          %p390 = pneg %p192
        $region26: #{tpu_custom_call.1} parent=11 // pred_check_branch
          %392 = sbr.rel (%p390) target = $region28
        $region27: #{tpu_custom_call.1} parent=11 // pred_region
          _
        $region28: #{tpu_custom_call.1} parent=11 // pred_fallthru
          _
        // Predicated region
        $region29: #{tpu_custom_call.1} parent=11 // pred_check
          %p393 = pneg %p213
        $region30: #{tpu_custom_call.1} parent=11 // pred_check_branch
          %395 = sbr.rel (%p393) target = $region32
        $region31: #{tpu_custom_call.1} parent=11 // pred_region
          %397 = vsyncadd [#allocation12], 0
          %s398 = sshll.u32 %s7, 4
          %s399 = int_to_ptr.hbm [resolvable:$true] %s398
          %s400 = sshll.u32 [#allocation13], 4
          %s401 = int_to_ptr.vmem [resolvable:$true] %s400
          %406 = dma.hbm_to_vmem [thread:$0]  %s399, 4608, %s401, [#allocation12], 64, 64, 4
        $region32: #{tpu_custom_call.1} parent=11 // pred_fallthru
          _
        // Predicated region
        $region33: #{tpu_custom_call.1} parent=11 // pred_check
          %p407 = pneg %p234
        $region34: #{tpu_custom_call.1} parent=11 // pred_check_branch
          %409 = sbr.rel (%p407) target = $region36
        $region35: #{tpu_custom_call.1} parent=11 // pred_region
          %411 = vsyncadd [#allocation15], 0
          %s412 = sshll.u32 %s8, 4
          %s413 = int_to_ptr.hbm [resolvable:$true] %s412
          %s414 = sshll.u32 [#allocation14], 4
          %s415 = int_to_ptr.vmem [resolvable:$true] %s414
          %420 = dma.hbm_to_vmem [thread:$0]  %s413, 4608, %s415, [#allocation15], 64, 64, 4
        $region36: #{tpu_custom_call.1} parent=11 // pred_fallthru
          _
        // Predicated region
        $region37: #{tpu_custom_call.1} parent=11 // pred_check
          %p421 = pneg %p255
        $region38: #{tpu_custom_call.1} parent=11 // pred_check_branch
          %423 = sbr.rel (%p421) target = $region40
        $region39: #{tpu_custom_call.1} parent=11 // pred_region
          _
        $region40: #{tpu_custom_call.1} parent=11 // pred_fallthru
          _
        // Predicated region
        $region41: #{tpu_custom_call.1} parent=11 // pred_check
          %p424 = pneg %p276
        $region42: #{tpu_custom_call.1} parent=11 // pred_check_branch
          %426 = sbr.rel (%p424) target = $region44
        $region43: #{tpu_custom_call.1} parent=11 // pred_region
          _
        $region44: #{tpu_custom_call.1} parent=11 // pred_fallthru
          _
        // Predicated region
        $region45: #{tpu_custom_call.1} parent=11 // pred_check
          %p427 = pneg %p297
        $region46: #{tpu_custom_call.1} parent=11 // pred_check_branch
          %429 = sbr.rel (%p427) target = $region48
        $region47: #{tpu_custom_call.1} parent=11 // pred_region
          _
        $region48: #{tpu_custom_call.1} parent=11 // pred_fallthru
          _
        // Predicated region
        $region49: #{tpu_custom_call.1} parent=11 // pred_check
          %p430 = pneg %p318
        $region50: #{tpu_custom_call.1} parent=11 // pred_check_branch
          %432 = sbr.rel (%p430) target = $region52
        $region51: #{tpu_custom_call.1} parent=11 // pred_region
          _
        $region52: #{tpu_custom_call.1} parent=11 // pred_fallthru
          _
      $region12: #{tpu_custom_call.1} parent=5 // pred_fallthru
        _
      %p433 = scmp.lt.s32.totalorder %s30, 2
      // Predicated region
      $region53: #{tpu_custom_call.1} parent=5 // pred_check
        %p434 = pneg %p433
      $region54: #{tpu_custom_call.1} parent=5 // pred_check_branch
        %436 = sbr.rel (%p434) target = $region56
      $region55: #{tpu_custom_call.1} parent=5 // pred_region
        // Predicated region
        $region57: #{tpu_custom_call.1} parent=55 // pred_check
          %p437 = pneg %p50
        $region58: #{tpu_custom_call.1} parent=55 // pred_check_branch
          %439 = sbr.rel (%p437) target = $region60
        $region59: #{tpu_custom_call.1} parent=55 // pred_region
          %s440 = sand.u32 %s40, 1
          %s441 = scalar_lea.sflag [#allocation6], %s440
          %s442 = sand.u32 %s40, 1
          %s443 = smul.addr %s442, 64
          %s444 = scalar_lea.vmem [#allocation5], %s443
          %446 = vsyncadd %s441, 0
          %s447 = smul.addr %s30, 8
          %s448 = smul.addr %s447, 8
          %s449 = scalar_lea.hbm %s0, %s448
          %s450 = sshll.u32 %s449, 4
          %s451 = int_to_ptr.hbm [resolvable:$true] %s450
          %s452 = sshll.u32 %s444, 4
          %s453 = int_to_ptr.vmem [resolvable:$true] %s452
          %458 = dma.hbm_to_vmem [thread:$0]  %s451, 1024, %s453, %s441, 128, 128, 8
        $region60: #{tpu_custom_call.1} parent=55 // pred_fallthru
          _
        // Predicated region
        $region61: #{tpu_custom_call.1} parent=55 // pred_check
          %p459 = pneg %p76
        $region62: #{tpu_custom_call.1} parent=55 // pred_check_branch
          %461 = sbr.rel (%p459) target = $region64
        $region63: #{tpu_custom_call.1} parent=55 // pred_region
          %p462 = scmp.lt.s32.totalorder %s30, 1
          %s463 = scalar_select %p462, %s30, 1
          %s464 = smul.addr %s463, 4
          %s465 = smul.addr %s464, 4
          %s466 = scalar_lea.vmem %s1, %s465
        $region64: #{tpu_custom_call.1} parent=55 // pred_fallthru
          _
        // Predicated region
        $region65: #{tpu_custom_call.1} parent=55 // pred_check
          %p467 = pneg %p102
        $region66: #{tpu_custom_call.1} parent=55 // pred_check_branch
          %469 = sbr.rel (%p467) target = $region68
        $region67: #{tpu_custom_call.1} parent=55 // pred_region
          %s470 = sand.u32 %s30, 1
          %s471 = scalar_lea.sflag [#allocation9], %s470
          %s472 = sand.u32 %s92, 1
          %s473 = smul.addr %s472, 64
          %s474 = scalar_lea.vmem [#allocation8], %s473
          %476 = vsyncadd %s471, 0
          %s477 = smul.addr %s30, 8
          %s478 = smul.addr %s477, 8
          %s479 = scalar_lea.hbm %s2, %s478
          %s480 = sshll.u32 %s479, 4
          %s481 = int_to_ptr.hbm [resolvable:$true] %s480
          %s482 = sshll.u32 %s474, 4
          %s483 = int_to_ptr.vmem [resolvable:$true] %s482
          %488 = dma.hbm_to_vmem [thread:$0]  %s481, 1024, %s483, %s471, 128, 128, 8
        $region68: #{tpu_custom_call.1} parent=55 // pred_fallthru
          _
      $region56: #{tpu_custom_call.1} parent=5 // pred_fallthru
        _
      %p489 = scmp.le.s32.totalorder 1, %s30
      %p490 = scmp.lt.s32.totalorder %s30, 3
      %p491 = pnand %p489, %p490
      %p492 = pneg %p491
      // Predicated region
      $region69: #{tpu_custom_call.1} parent=5 // pred_check
        _
      $region70: #{tpu_custom_call.1} parent=5 // pred_check_branch
        %494 = sbr.rel (%p491) target = $region72
      $region71: #{tpu_custom_call.1} parent=5 // pred_region
        %s495 = ssub.s32 %s30, 1
        %s496 = sand.u32 %s43, 1
        %s497 = scalar_lea.sflag [#allocation6], %s496
        %s498 = sand.u32 %s43, 1
        %s499 = smul.addr %s498, 64
        %s500 = scalar_lea.vmem [#allocation5], %s499
        // Predicated region
        $region73: #{tpu_custom_call.1} parent=71 // pred_check
          %p501 = pneg %p56
        $region74: #{tpu_custom_call.1} parent=71 // pred_check_branch
          %503 = sbr.rel (%p501) target = $region76
        $region75: #{tpu_custom_call.1} parent=71 // pred_region
          %505 = dma.done %s497, 1024
        $region76: #{tpu_custom_call.1} parent=71 // pred_fallthru
          _
        %s506 = sand.u32 %s35, 1
        %s507 = scalar_lea.sflag [#allocation9], %s506
        %s508 = sand.u32 %s95, 1
        %s509 = smul.addr %s508, 64
        %s510 = scalar_lea.vmem [#allocation8], %s509
        // Predicated region
        $region77: #{tpu_custom_call.1} parent=71 // pred_check
          %p511 = pneg %p108
        $region78: #{tpu_custom_call.1} parent=71 // pred_check_branch
          %513 = sbr.rel (%p511) target = $region80
        $region79: #{tpu_custom_call.1} parent=71 // pred_region
          %515 = dma.done %s507, 1024
        $region80: #{tpu_custom_call.1} parent=71 // pred_fallthru
          _
        // Predicated region
        $region81: #{tpu_custom_call.1} parent=71 // pred_check
          %p516 = pneg %p150
        $region82: #{tpu_custom_call.1} parent=71 // pred_check_branch
          %518 = sbr.rel (%p516) target = $region84
        $region83: #{tpu_custom_call.1} parent=71 // pred_region
          %520 = dma.done [#allocation9], 4608
        $region84: #{tpu_custom_call.1} parent=71 // pred_fallthru
          _
        // Predicated region
        $region85: #{tpu_custom_call.1} parent=71 // pred_check
          %p521 = pneg %p171
        $region86: #{tpu_custom_call.1} parent=71 // pred_check_branch
          %523 = sbr.rel (%p521) target = $region88
        $region87: #{tpu_custom_call.1} parent=71 // pred_region
          %525 = dma.done [#allocation12], 4608
        $region88: #{tpu_custom_call.1} parent=71 // pred_fallthru
          _
        // Predicated region
        $region89: #{tpu_custom_call.1} parent=71 // pred_check
          %p526 = pneg %p213
        $region90: #{tpu_custom_call.1} parent=71 // pred_check_branch
          %528 = sbr.rel (%p526) target = $region92
        $region91: #{tpu_custom_call.1} parent=71 // pred_region
          %530 = dma.done [#allocation12], 4608
        $region92: #{tpu_custom_call.1} parent=71 // pred_fallthru
          _
        // Predicated region
        $region93: #{tpu_custom_call.1} parent=71 // pred_check
          %p531 = pneg %p234
        $region94: #{tpu_custom_call.1} parent=71 // pred_check_branch
          %533 = sbr.rel (%p531) target = $region96
        $region95: #{tpu_custom_call.1} parent=71 // pred_region
          %535 = dma.done [#allocation15], 4608
        $region96: #{tpu_custom_call.1} parent=71 // pred_fallthru
          _
        %s536 = sand.u32 %s43, 1
        %s537 = scalar_lea.sflag [#allocation6], %s536
        %s538 = sand.u32 %s43, 1
        %s539 = smul.addr %s538, 64
        %s540 = scalar_lea.vmem [#allocation5], %s539
        %p541 = pneg %p56
        %p542 = pneg %p53
        %p543 = scmp.lt.s32.totalorder %s35, 1
        %s544 = scalar_select %p543, %s35, 1
        %s545 = smul.addr %s544, 4
        %s546 = smul.addr %s545, 4
        %s547 = scalar_lea.vmem %s1, %s546
        %p548 = pneg %p82
        %p549 = pneg %p79
        %s550 = sand.u32 %s35, 1
        %s551 = scalar_lea.sflag [#allocation9], %s550
        %s552 = sand.u32 %s95, 1
        %s553 = smul.addr %s552, 64
        %s554 = scalar_lea.vmem [#allocation8], %s553
        %p555 = pneg %p108
        %p556 = pneg %p105
        %p557 = pneg %p129
        %p558 = pneg %p126
        %p559 = pneg %p150
        %p560 = pneg %p147
        %p561 = pneg %p171
        %p562 = pneg %p168
        %p563 = pneg %p192
        %p564 = pneg %p189
        %p565 = pneg %p213
        %p566 = pneg %p210
        %p567 = pneg %p234
        %p568 = pneg %p231
        %p569 = pneg %p255
        %p570 = pneg %p252
        %p571 = pneg %p276
        %p572 = pneg %p273
        %p573 = pneg %p297
        %p574 = pneg %p294
        %p575 = pneg %p318
        %p576 = pneg %p315
        %p577 = pneg %p344
        %p578 = pneg %p341
        %s579 = sand.u32 %s331, 1
        %s580 = scalar_lea.sflag [#allocation7], %s579
        %s581 = sand.u32 %s331, 1
        %s582 = smul.addr %s581, 16
        %s583 = scalar_lea.vmem [#allocation16], %s582
        %p584 = scmp.lt.s32.totalorder %s35, 1
        %s585 = scalar_select %p584, %s35, 1
        %s586 = smul.addr %s585, 4
        %s587 = smul.addr %s586, 4
        %s588 = scalar_lea.vmem %s1, %s587
        %vm590 = vcmask 523264
        %591 = vst.msk [vmem:[#allocation2] sm:$0xff] %vm590, 0.0
        %592 = vst.msk [vmem:[#allocation2 + $0x8] sm:$0xff] %vm590, 0.0
        %593 = vst.msk [vmem:[#allocation2 + $0x10] sm:$0xff] %vm590, 0.0
        %594 = vst.msk [vmem:[#allocation2 + $0x18] sm:$0xff] %vm590, 0.0
        %595 = vst.msk [vmem:[#allocation2 + $0x20] sm:$0xff] %vm590, 0.0
        %596 = vst.msk [vmem:[#allocation2 + $0x28] sm:$0xff] %vm590, 0.0
        %597 = vst.msk [vmem:[#allocation2 + $0x30] sm:$0xff] %vm590, 0.0
        %598 = vst.msk [vmem:[#allocation2 + $0x38] sm:$0xff] %vm590, 0.0
        %599 = vst.msk [vmem:[#allocation2 + $0x40] sm:$0xff] %vm590, 0.0
        %600 = vst.msk [vmem:[#allocation2 + $0x48] sm:$0xff] %vm590, 0.0
        %601 = vst.msk [vmem:[#allocation2 + $0x50] sm:$0xff] %vm590, 0.0
        %602 = vst.msk [vmem:[#allocation2 + $0x58] sm:$0xff] %vm590, 0.0
        %603 = vst.msk [vmem:[#allocation2 + $0x60] sm:$0xff] %vm590, 0.0
        %604 = vst.msk [vmem:[#allocation2 + $0x68] sm:$0xff] %vm590, 0.0
        %605 = vst.msk [vmem:[#allocation2 + $0x70] sm:$0xff] %vm590, 0.0
        %606 = vst.msk [vmem:[#allocation2 + $0x78] sm:$0xff] %vm590, 0.0
        %607 = vst.msk [vmem:[#allocation2 + $0x80] sm:$0xff] %vm590, 0.0
        %608 = vst.msk [vmem:[#allocation2 + $0x88] sm:$0xff] %vm590, 0.0
        %609 = vst.msk [vmem:[#allocation2 + $0x90] sm:$0xff] %vm590, 0.0
        %610 = vst.msk [vmem:[#allocation2 + $0x98] sm:$0xff] %vm590, 0.0
        %611 = vst.msk [vmem:[#allocation2 + $0xa0] sm:$0xff] %vm590, 0.0
        %612 = vst.msk [vmem:[#allocation2 + $0xa8] sm:$0xff] %vm590, 0.0
        %613 = vst.msk [vmem:[#allocation2 + $0xb0] sm:$0xff] %vm590, 0.0
        %614 = vst.msk [vmem:[#allocation2 + $0xb8] sm:$0xff] %vm590, 0.0
        %615 = vst.msk [vmem:[#allocation2 + $0xc0] sm:$0xff] %vm590, 0.0
        %616 = vst.msk [vmem:[#allocation2 + $0xc8] sm:$0xff] %vm590, 0.0
        %617 = vst.msk [vmem:[#allocation2 + $0xd0] sm:$0xff] %vm590, 0.0
        %618 = vst.msk [vmem:[#allocation2 + $0xd8] sm:$0xff] %vm590, 0.0
        %619 = vst.msk [vmem:[#allocation2 + $0xe0] sm:$0xff] %vm590, 0.0
        %620 = vst.msk [vmem:[#allocation2 + $0xe8] sm:$0xff] %vm590, 0.0
        %v621 = vld [vmem:[%s510] sm:$0xff]
        %v622 = vld [vmem:[%s510 + $0x8] sm:$0xff]
        %v623 = vld [vmem:[%s510 + $0x10] sm:$0xff]
        %v624 = vld [vmem:[%s510 + $0x18] sm:$0xff]
        %v625 = vld [vmem:[%s510 + $0x20] sm:$0xff]
        %v626 = vld [vmem:[%s510 + $0x28] sm:$0xff]
        %v627 = vld [vmem:[%s510 + $0x30] sm:$0xff]
        %v628 = vld [vmem:[%s510 + $0x38] sm:$0xff]
        %v629 = vpack.c.bf16 %v622, %v621
        %v630 = vpack.c.bf16 %v624, %v623
        %v631 = vpack.c.bf16 %v626, %v625
        %v632 = vpack.c.bf16 %v628, %v627
        %v633 = vld [vmem:[%s3] sm:$0xf]
        %v634 = vld [vmem:[%s3 + $0x4] sm:$0xf]
        %v635 = vld [vmem:[%s3 + $0x8] sm:$0xf]
        %v636 = vld [vmem:[%s3 + $0xc] sm:$0xf]
        %v637 = vld [vmem:[%s3 + $0x10] sm:$0xf]
        %v638 = vld [vmem:[%s3 + $0x14] sm:$0xf]
        %v639 = vld [vmem:[%s3 + $0x18] sm:$0xf]
        %v640 = vld [vmem:[%s3 + $0x1c] sm:$0xf]
        %v641 = vld [vmem:[%s3 + $0x20] sm:$0xf]
        %v642 = vld [vmem:[%s3 + $0x24] sm:$0xf]
        %v643 = vld [vmem:[%s3 + $0x28] sm:$0xf]
        %v644 = vld [vmem:[%s3 + $0x2c] sm:$0xf]
        %v645 = vld [vmem:[%s3 + $0x30] sm:$0xf]
        %v646 = vld [vmem:[%s3 + $0x34] sm:$0xf]
        %v647 = vld [vmem:[%s3 + $0x38] sm:$0xf]
        %v648 = vld [vmem:[%s3 + $0x3c] sm:$0xf]
        %v649 = vld [vmem:[%s10] sm:$0x1]
        %v650 = vperm.slane %v649, 0
        %v667 = vunpack.c.l.b16 %v633
        %v668 = vunpack.c.l.b16 %v634
        %v669 = vunpack.c.l.b16 %v635
        %v670 = vunpack.c.l.b16 %v636
        %v671 = vunpack.c.l.b16 %v637
        %v672 = vunpack.c.l.b16 %v638
        %v673 = vunpack.c.l.b16 %v639
        %v674 = vunpack.c.l.b16 %v640
        %v675 = vunpack.c.l.b16 %v641
        %v676 = vunpack.c.l.b16 %v642
        %v677 = vunpack.c.l.b16 %v643
        %v678 = vunpack.c.l.b16 %v644
        %v679 = vunpack.c.l.b16 %v645
        %v680 = vunpack.c.l.b16 %v646
        %v681 = vunpack.c.l.b16 %v647
        %v682 = vunpack.c.l.b16 %v648
        %v683 = vpack.c.b16 %v668, %v667
        %v684 = vpack.c.b16 %v670, %v669
        %v685 = vpack.c.b16 %v672, %v671
        %v686 = vpack.c.b16 %v674, %v673
        %v687 = vpack.c.b16 %v676, %v675
        %v688 = vpack.c.b16 %v678, %v677
        %v689 = vpack.c.b16 %v680, %v679
        %v690 = vpack.c.b16 %v682, %v681
        %699 = vmatpush.bf16.msra.mxu0 %v690
        %700 = vmatpush.bf16.msra.mxu0 %v689
        %701 = vmatpush.bf16.msra.mxu0 %v688
        %702 = vmatpush.bf16.msra.mxu0 %v687
        %703 = vmatpush.bf16.msra.mxu0 %v686
        %704 = vmatpush.bf16.msra.mxu0 %v685
        %705 = vmatpush.bf16.msra.mxu0 %v684
        %706 = vmatpush.bf16.msra.mxu0 %v683
        %707 = vmatmul.bf16.gmra.mxu0 %v629
        %v708 = vpop.f32.mrf.mxu0
        %v709 = vadd.f32 %v650, %v708
        %v710 = vpop.f32.mrf.mxu0
        %v711 = vadd.f32 %v650, %v710
        %712 = vmatmul.bf16.gmra.mxu0 %v630
        %v713 = vpop.f32.mrf.mxu0
        %v714 = vadd.f32 %v650, %v713
        %v715 = vpop.f32.mrf.mxu0
        %v716 = vadd.f32 %v650, %v715
        %717 = vmatmul.bf16.gmra.mxu0 %v631
        %v718 = vpop.f32.mrf.mxu0
        %v719 = vadd.f32 %v650, %v718
        %v720 = vpop.f32.mrf.mxu0
        %v721 = vadd.f32 %v650, %v720
        %722 = vmatmul.bf16.gmra.mxu0 %v632
        %v723 = vpop.f32.mrf.mxu0
        %v724 = vadd.f32 %v650, %v723
        %v725 = vpop.f32.mrf.mxu0
        %v726 = vadd.f32 %v650, %v725
        %727 = vdwg.mxu0
        %v728 = vmax.f32 %v709, 0.0
        %v729 = vmax.f32 %v711, 0.0
        %v730 = vmax.f32 %v714, 0.0
        %v731 = vmax.f32 %v716, 0.0
        %v732 = vmax.f32 %v719, 0.0
        %v733 = vmax.f32 %v721, 0.0
        %v734 = vmax.f32 %v724, 0.0
        %v735 = vmax.f32 %v726, 0.0
        %v736 = vld [vmem:[%s588] sm:$0xf]
        %v737 = vld [vmem:[%s588 + $0x4] sm:$0xf]
        %v738 = vld [vmem:[%s588 + $0x8] sm:$0xf]
        %v739 = vld [vmem:[%s588 + $0xc] sm:$0xf]
        %v740 = vmul.f32 %v737, 0.0
        %v741 = vadd.f32 %v736, %v740
        %vm742 = vcmask 519168
        %743 = vst.msk [vmem:[#allocation3] sm:$0xf] %vm742, %v741
        %v744 = vmul.f32 %v736, 0.5714286
        %v745 = vmul.f32 %v737, 0.42857143
        %v746 = vadd.f32 %v744, %v745
        %s747 = scalar_lea.vmem [#allocation3], 4
        %748 = vst.msk [vmem:[%s747] sm:$0xf] %vm742, %v746
        %v749 = vmul.f32 %v736, 0.14285715
        %v750 = vmul.f32 %v737, 0.85714287
        %v751 = vadd.f32 %v749, %v750
        %s752 = scalar_lea.vmem [#allocation3], 8
        %753 = vst.msk [vmem:[%s752] sm:$0xf] %vm742, %v751
        %v754 = vmul.f32 %v737, 0.71428573
        %v755 = vmul.f32 %v738, 0.2857143
        %v756 = vadd.f32 %v754, %v755
        %s757 = scalar_lea.vmem [#allocation3], 12
        %758 = vst.msk [vmem:[%s757] sm:$0xf] %vm742, %v756
        %v759 = vmul.f32 %v737, 0.2857143
        %v760 = vmul.f32 %v738, 0.71428573
        %v761 = vadd.f32 %v759, %v760
        %s762 = scalar_lea.vmem [#allocation3], 16
        %763 = vst.msk [vmem:[%s762] sm:$0xf] %vm742, %v761
        %v764 = vmul.f32 %v738, 0.85714287
        %v765 = vmul.f32 %v739, 0.14285715
        %v766 = vadd.f32 %v764, %v765
        %s767 = scalar_lea.vmem [#allocation3], 20
        %768 = vst.msk [vmem:[%s767] sm:$0xf] %vm742, %v766
        %v769 = vmul.f32 %v738, 0.42857143
        %v770 = vmul.f32 %v739, 0.5714286
        %v771 = vadd.f32 %v769, %v770
        %s772 = scalar_lea.vmem [#allocation3], 24
        %773 = vst.msk [vmem:[%s772] sm:$0xf] %vm742, %v771
        %v774 = vmul.f32 %v738, 0.0
        %v775 = vadd.f32 %v774, %v739
        %s776 = scalar_lea.vmem [#allocation3], 28
        %777 = vst.msk [vmem:[%s776] sm:$0xf] %vm742, %v775
        %v778 = vld [vmem:[#allocation3] sm:$0x1]
        %v779 = vld [vmem:[#allocation3 + $0x4] sm:$0x1]
        %v780 = vld [vmem:[#allocation3 + $0x8] sm:$0x1]
        %v781 = vld [vmem:[#allocation3 + $0xc] sm:$0x1]
        %v782 = vld [vmem:[#allocation3 + $0x10] sm:$0x1]
        %v783 = vld [vmem:[#allocation3 + $0x14] sm:$0x1]
        %v784 = vld [vmem:[#allocation3 + $0x18] sm:$0x1]
        %v785 = vld [vmem:[#allocation3 + $0x1c] sm:$0x1]
        %v786 = vld [vmem:[#allocation3 + $0x1] sm:$0x1]
        %v787 = vld [vmem:[#allocation3 + $0x5] sm:$0x1]
        %v788 = vld [vmem:[#allocation3 + $0x9] sm:$0x1]
        %v789 = vld [vmem:[#allocation3 + $0xd] sm:$0x1]
        %v790 = vld [vmem:[#allocation3 + $0x11] sm:$0x1]
        %v791 = vld [vmem:[#allocation3 + $0x15] sm:$0x1]
        %v792 = vld [vmem:[#allocation3 + $0x19] sm:$0x1]
        %v793 = vld [vmem:[#allocation3 + $0x1d] sm:$0x1]
        %v794 = vmul.f32 %v786, 0.0
        %v795 = vmul.f32 %v787, 0.0
        %v796 = vmul.f32 %v788, 0.0
        %v797 = vmul.f32 %v789, 0.0
        %v798 = vmul.f32 %v790, 0.0
        %v799 = vmul.f32 %v791, 0.0
        %v800 = vmul.f32 %v792, 0.0
        %v801 = vmul.f32 %v793, 0.0
        %v802 = vadd.f32 %v778, %v794
        %v803 = vadd.f32 %v779, %v795
        %v804 = vadd.f32 %v780, %v796
        %v805 = vadd.f32 %v781, %v797
        %v806 = vadd.f32 %v782, %v798
        %v807 = vadd.f32 %v783, %v799
        %v808 = vadd.f32 %v784, %v800
        %v809 = vadd.f32 %v785, %v801
        %vm810 = vcmask 516096
        %811 = vst.msk [vmem:[#allocation4] sm:$0x1] %vm810, %v802
        %812 = vst.msk [vmem:[#allocation4 + $0x8] sm:$0x1] %vm810, %v803
        %813 = vst.msk [vmem:[#allocation4 + $0x10] sm:$0x1] %vm810, %v804
        %814 = vst.msk [vmem:[#allocation4 + $0x18] sm:$0x1] %vm810, %v805
        %815 = vst.msk [vmem:[#allocation4 + $0x20] sm:$0x1] %vm810, %v806
        %816 = vst.msk [vmem:[#allocation4 + $0x28] sm:$0x1] %vm810, %v807
        %817 = vst.msk [vmem:[#allocation4 + $0x30] sm:$0x1] %vm810, %v808
        %818 = vst.msk [vmem:[#allocation4 + $0x38] sm:$0x1] %vm810, %v809
        %v819 = vld [vmem:[#allocation3] sm:$0x1]
        %v820 = vld [vmem:[#allocation3 + $0x4] sm:$0x1]
        %v821 = vld [vmem:[#allocation3 + $0x8] sm:$0x1]
        %v822 = vld [vmem:[#allocation3 + $0xc] sm:$0x1]
        %v823 = vld [vmem:[#allocation3 + $0x10] sm:$0x1]
        %v824 = vld [vmem:[#allocation3 + $0x14] sm:$0x1]
        %v825 = vld [vmem:[#allocation3 + $0x18] sm:$0x1]
        %v826 = vld [vmem:[#allocation3 + $0x1c] sm:$0x1]
        %v827 = vld [vmem:[#allocation3 + $0x1] sm:$0x1]
        %v828 = vld [vmem:[#allocation3 + $0x5] sm:$0x1]
        %v829 = vld [vmem:[#allocation3 + $0x9] sm:$0x1]
        %v830 = vld [vmem:[#allocation3 + $0xd] sm:$0x1]
        %v831 = vld [vmem:[#allocation3 + $0x11] sm:$0x1]
        %v832 = vld [vmem:[#allocation3 + $0x15] sm:$0x1]
        %v833 = vld [vmem:[#allocation3 + $0x19] sm:$0x1]
        %v834 = vld [vmem:[#allocation3 + $0x1d] sm:$0x1]
        %v835 = vmul.f32 %v819, 0.5714286
        %v836 = vmul.f32 %v820, 0.5714286
        %v837 = vmul.f32 %v821, 0.5714286
        %v838 = vmul.f32 %v822, 0.5714286
        %v839 = vmul.f32 %v823, 0.5714286
        %v840 = vmul.f32 %v824, 0.5714286
        %v841 = vmul.f32 %v825, 0.5714286
        %v842 = vmul.f32 %v826, 0.5714286
        %v843 = vmul.f32 %v827, 0.42857143
        %v844 = vmul.f32 %v828, 0.42857143
        %v845 = vmul.f32 %v829, 0.42857143
        %v846 = vmul.f32 %v830, 0.42857143
        %v847 = vmul.f32 %v831, 0.42857143
        %v848 = vmul.f32 %v832, 0.42857143
        %v849 = vmul.f32 %v833, 0.42857143
        %v850 = vmul.f32 %v834, 0.42857143
        %v851 = vadd.f32 %v835, %v843
        %v852 = vadd.f32 %v836, %v844
        %v853 = vadd.f32 %v837, %v845
        %v854 = vadd.f32 %v838, %v846
        %v855 = vadd.f32 %v839, %v847
        %v856 = vadd.f32 %v840, %v848
        %v857 = vadd.f32 %v841, %v849
        %v858 = vadd.f32 %v842, %v850
        %859 = vst.msk [vmem:[#allocation4 + $0x1] sm:$0x1] %vm810, %v851
        %860 = vst.msk [vmem:[#allocation4 + $0x9] sm:$0x1] %vm810, %v852
        %861 = vst.msk [vmem:[#allocation4 + $0x11] sm:$0x1] %vm810, %v853
        %862 = vst.msk [vmem:[#allocation4 + $0x19] sm:$0x1] %vm810, %v854
        %863 = vst.msk [vmem:[#allocation4 + $0x21] sm:$0x1] %vm810, %v855
        %864 = vst.msk [vmem:[#allocation4 + $0x29] sm:$0x1] %vm810, %v856
        %865 = vst.msk [vmem:[#allocation4 + $0x31] sm:$0x1] %vm810, %v857
        %866 = vst.msk [vmem:[#allocation4 + $0x39] sm:$0x1] %vm810, %v858
        %v867 = vld [vmem:[#allocation3] sm:$0x1]
        %v868 = vld [vmem:[#allocation3 + $0x4] sm:$0x1]
        %v869 = vld [vmem:[#allocation3 + $0x8] sm:$0x1]
        %v870 = vld [vmem:[#allocation3 + $0xc] sm:$0x1]
        %v871 = vld [vmem:[#allocation3 + $0x10] sm:$0x1]
        %v872 = vld [vmem:[#allocation3 + $0x14] sm:$0x1]
        %v873 = vld [vmem:[#allocation3 + $0x18] sm:$0x1]
        %v874 = vld [vmem:[#allocation3 + $0x1c] sm:$0x1]
        %v875 = vld [vmem:[#allocation3 + $0x1] sm:$0x1]
        %v876 = vld [vmem:[#allocation3 + $0x5] sm:$0x1]
        %v877 = vld [vmem:[#allocation3 + $0x9] sm:$0x1]
        %v878 = vld [vmem:[#allocation3 + $0xd] sm:$0x1]
        %v879 = vld [vmem:[#allocation3 + $0x11] sm:$0x1]
        %v880 = vld [vmem:[#allocation3 + $0x15] sm:$0x1]
        %v881 = vld [vmem:[#allocation3 + $0x19] sm:$0x1]
        %v882 = vld [vmem:[#allocation3 + $0x1d] sm:$0x1]
        %v883 = vmul.f32 %v867, 0.14285715
        %v884 = vmul.f32 %v868, 0.14285715
        %v885 = vmul.f32 %v869, 0.14285715
        %v886 = vmul.f32 %v870, 0.14285715
        %v887 = vmul.f32 %v871, 0.14285715
        %v888 = vmul.f32 %v872, 0.14285715
        %v889 = vmul.f32 %v873, 0.14285715
        %v890 = vmul.f32 %v874, 0.14285715
        %v891 = vmul.f32 %v875, 0.85714287
        %v892 = vmul.f32 %v876, 0.85714287
        %v893 = vmul.f32 %v877, 0.85714287
        %v894 = vmul.f32 %v878, 0.85714287
        %v895 = vmul.f32 %v879, 0.85714287
        %v896 = vmul.f32 %v880, 0.85714287
        %v897 = vmul.f32 %v881, 0.85714287
        %v898 = vmul.f32 %v882, 0.85714287
        %v899 = vadd.f32 %v883, %v891
        %v900 = vadd.f32 %v884, %v892
        %v901 = vadd.f32 %v885, %v893
        %v902 = vadd.f32 %v886, %v894
        %v903 = vadd.f32 %v887, %v895
        %v904 = vadd.f32 %v888, %v896
        %v905 = vadd.f32 %v889, %v897
        %v906 = vadd.f32 %v890, %v898
        %907 = vst.msk [vmem:[#allocation4 + $0x2] sm:$0x1] %vm810, %v899
        %908 = vst.msk [vmem:[#allocation4 + $0xa] sm:$0x1] %vm810, %v900
        %909 = vst.msk [vmem:[#allocation4 + $0x12] sm:$0x1] %vm810, %v901
        %910 = vst.msk [vmem:[#allocation4 + $0x1a] sm:$0x1] %vm810, %v902
        %911 = vst.msk [vmem:[#allocation4 + $0x22] sm:$0x1] %vm810, %v903
        %912 = vst.msk [vmem:[#allocation4 + $0x2a] sm:$0x1] %vm810, %v904
        %913 = vst.msk [vmem:[#allocation4 + $0x32] sm:$0x1] %vm810, %v905
        %914 = vst.msk [vmem:[#allocation4 + $0x3a] sm:$0x1] %vm810, %v906
        %v915 = vld [vmem:[#allocation3 + $0x1] sm:$0x1]
        %v916 = vld [vmem:[#allocation3 + $0x5] sm:$0x1]
        %v917 = vld [vmem:[#allocation3 + $0x9] sm:$0x1]
        %v918 = vld [vmem:[#allocation3 + $0xd] sm:$0x1]
        %v919 = vld [vmem:[#allocation3 + $0x11] sm:$0x1]
        %v920 = vld [vmem:[#allocation3 + $0x15] sm:$0x1]
        %v921 = vld [vmem:[#allocation3 + $0x19] sm:$0x1]
        %v922 = vld [vmem:[#allocation3 + $0x1d] sm:$0x1]
        %v923 = vld [vmem:[#allocation3 + $0x2] sm:$0x1]
        %v924 = vld [vmem:[#allocation3 + $0x6] sm:$0x1]
        %v925 = vld [vmem:[#allocation3 + $0xa] sm:$0x1]
        %v926 = vld [vmem:[#allocation3 + $0xe] sm:$0x1]
        %v927 = vld [vmem:[#allocation3 + $0x12] sm:$0x1]
        %v928 = vld [vmem:[#allocation3 + $0x16] sm:$0x1]
        %v929 = vld [vmem:[#allocation3 + $0x1a] sm:$0x1]
        %v930 = vld [vmem:[#allocation3 + $0x1e] sm:$0x1]
        %v931 = vmul.f32 %v915, 0.71428573
        %v932 = vmul.f32 %v916, 0.71428573
        %v933 = vmul.f32 %v917, 0.71428573
        %v934 = vmul.f32 %v918, 0.71428573
        %v935 = vmul.f32 %v919, 0.71428573
        %v936 = vmul.f32 %v920, 0.71428573
        %v937 = vmul.f32 %v921, 0.71428573
        %v938 = vmul.f32 %v922, 0.71428573
        %v939 = vmul.f32 %v923, 0.2857143
        %v940 = vmul.f32 %v924, 0.2857143
        %v941 = vmul.f32 %v925, 0.2857143
        %v942 = vmul.f32 %v926, 0.2857143
        %v943 = vmul.f32 %v927, 0.2857143
        %v944 = vmul.f32 %v928, 0.2857143
        %v945 = vmul.f32 %v929, 0.2857143
        %v946 = vmul.f32 %v930, 0.2857143
        %v947 = vadd.f32 %v931, %v939
        %v948 = vadd.f32 %v932, %v940
        %v949 = vadd.f32 %v933, %v941
        %v950 = vadd.f32 %v934, %v942
        %v951 = vadd.f32 %v935, %v943
        %v952 = vadd.f32 %v936, %v944
        %v953 = vadd.f32 %v937, %v945
        %v954 = vadd.f32 %v938, %v946
        %955 = vst.msk [vmem:[#allocation4 + $0x3] sm:$0x1] %vm810, %v947
        %956 = vst.msk [vmem:[#allocation4 + $0xb] sm:$0x1] %vm810, %v948
        %957 = vst.msk [vmem:[#allocation4 + $0x13] sm:$0x1] %vm810, %v949
        %958 = vst.msk [vmem:[#allocation4 + $0x1b] sm:$0x1] %vm810, %v950
        %959 = vst.msk [vmem:[#allocation4 + $0x23] sm:$0x1] %vm810, %v951
        %960 = vst.msk [vmem:[#allocation4 + $0x2b] sm:$0x1] %vm810, %v952
        %961 = vst.msk [vmem:[#allocation4 + $0x33] sm:$0x1] %vm810, %v953
        %962 = vst.msk [vmem:[#allocation4 + $0x3b] sm:$0x1] %vm810, %v954
        %v963 = vld [vmem:[#allocation3 + $0x1] sm:$0x1]
        %v964 = vld [vmem:[#allocation3 + $0x5] sm:$0x1]
        %v965 = vld [vmem:[#allocation3 + $0x9] sm:$0x1]
        %v966 = vld [vmem:[#allocation3 + $0xd] sm:$0x1]
        %v967 = vld [vmem:[#allocation3 + $0x11] sm:$0x1]
        %v968 = vld [vmem:[#allocation3 + $0x15] sm:$0x1]
        %v969 = vld [vmem:[#allocation3 + $0x19] sm:$0x1]
        %v970 = vld [vmem:[#allocation3 + $0x1d] sm:$0x1]
        %v971 = vld [vmem:[#allocation3 + $0x2] sm:$0x1]
        %v972 = vld [vmem:[#allocation3 + $0x6] sm:$0x1]
        %v973 = vld [vmem:[#allocation3 + $0xa] sm:$0x1]
        %v974 = vld [vmem:[#allocation3 + $0xe] sm:$0x1]
        %v975 = vld [vmem:[#allocation3 + $0x12] sm:$0x1]
        %v976 = vld [vmem:[#allocation3 + $0x16] sm:$0x1]
        %v977 = vld [vmem:[#allocation3 + $0x1a] sm:$0x1]
        %v978 = vld [vmem:[#allocation3 + $0x1e] sm:$0x1]
        %v979 = vmul.f32 %v963, 0.2857143
        %v980 = vmul.f32 %v964, 0.2857143
        %v981 = vmul.f32 %v965, 0.2857143
        %v982 = vmul.f32 %v966, 0.2857143
        %v983 = vmul.f32 %v967, 0.2857143
        %v984 = vmul.f32 %v968, 0.2857143
        %v985 = vmul.f32 %v969, 0.2857143
        %v986 = vmul.f32 %v970, 0.2857143
        %v987 = vmul.f32 %v971, 0.71428573
        %v988 = vmul.f32 %v972, 0.71428573
        %v989 = vmul.f32 %v973, 0.71428573
        %v990 = vmul.f32 %v974, 0.71428573
        %v991 = vmul.f32 %v975, 0.71428573
        %v992 = vmul.f32 %v976, 0.71428573
        %v993 = vmul.f32 %v977, 0.71428573
        %v994 = vmul.f32 %v978, 0.71428573
        %v995 = vadd.f32 %v979, %v987
        %v996 = vadd.f32 %v980, %v988
        %v997 = vadd.f32 %v981, %v989
        %v998 = vadd.f32 %v982, %v990
        %v999 = vadd.f32 %v983, %v991
        %v1000 = vadd.f32 %v984, %v992
        %v1001 = vadd.f32 %v985, %v993
        %v1002 = vadd.f32 %v986, %v994
        %1003 = vst.msk [vmem:[#allocation4 + $0x4] sm:$0x1] %vm810, %v995
        %1004 = vst.msk [vmem:[#allocation4 + $0xc] sm:$0x1] %vm810, %v996
        %1005 = vst.msk [vmem:[#allocation4 + $0x14] sm:$0x1] %vm810, %v997
        %1006 = vst.msk [vmem:[#allocation4 + $0x1c] sm:$0x1] %vm810, %v998
        %1007 = vst.msk [vmem:[#allocation4 + $0x24] sm:$0x1] %vm810, %v999
        %1008 = vst.msk [vmem:[#allocation4 + $0x2c] sm:$0x1] %vm810, %v1000
        %1009 = vst.msk [vmem:[#allocation4 + $0x34] sm:$0x1] %vm810, %v1001
        %1010 = vst.msk [vmem:[#allocation4 + $0x3c] sm:$0x1] %vm810, %v1002
        %v1011 = vld [vmem:[#allocation3 + $0x2] sm:$0x1]
        %v1012 = vld [vmem:[#allocation3 + $0x6] sm:$0x1]
        %v1013 = vld [vmem:[#allocation3 + $0xa] sm:$0x1]
        %v1014 = vld [vmem:[#allocation3 + $0xe] sm:$0x1]
        %v1015 = vld [vmem:[#allocation3 + $0x12] sm:$0x1]
        %v1016 = vld [vmem:[#allocation3 + $0x16] sm:$0x1]
        %v1017 = vld [vmem:[#allocation3 + $0x1a] sm:$0x1]
        %v1018 = vld [vmem:[#allocation3 + $0x1e] sm:$0x1]
        %v1019 = vld [vmem:[#allocation3 + $0x3] sm:$0x1]
        %v1020 = vld [vmem:[#allocation3 + $0x7] sm:$0x1]
        %v1021 = vld [vmem:[#allocation3 + $0xb] sm:$0x1]
        %v1022 = vld [vmem:[#allocation3 + $0xf] sm:$0x1]
        %v1023 = vld [vmem:[#allocation3 + $0x13] sm:$0x1]
        %v1024 = vld [vmem:[#allocation3 + $0x17] sm:$0x1]
        %v1025 = vld [vmem:[#allocation3 + $0x1b] sm:$0x1]
        %v1026 = vld [vmem:[#allocation3 + $0x1f] sm:$0x1]
        %v1027 = vmul.f32 %v1011, 0.85714287
        %v1028 = vmul.f32 %v1012, 0.85714287
        %v1029 = vmul.f32 %v1013, 0.85714287
        %v1030 = vmul.f32 %v1014, 0.85714287
        %v1031 = vmul.f32 %v1015, 0.85714287
        %v1032 = vmul.f32 %v1016, 0.85714287
        %v1033 = vmul.f32 %v1017, 0.85714287
        %v1034 = vmul.f32 %v1018, 0.85714287
        %v1035 = vmul.f32 %v1019, 0.14285715
        %v1036 = vmul.f32 %v1020, 0.14285715
        %v1037 = vmul.f32 %v1021, 0.14285715
        %v1038 = vmul.f32 %v1022, 0.14285715
        %v1039 = vmul.f32 %v1023, 0.14285715
        %v1040 = vmul.f32 %v1024, 0.14285715
        %v1041 = vmul.f32 %v1025, 0.14285715
        %v1042 = vmul.f32 %v1026, 0.14285715
        %v1043 = vadd.f32 %v1027, %v1035
        %v1044 = vadd.f32 %v1028, %v1036
        %v1045 = vadd.f32 %v1029, %v1037
        %v1046 = vadd.f32 %v1030, %v1038
        %v1047 = vadd.f32 %v1031, %v1039
        %v1048 = vadd.f32 %v1032, %v1040
        %v1049 = vadd.f32 %v1033, %v1041
        %v1050 = vadd.f32 %v1034, %v1042
        %1051 = vst.msk [vmem:[#allocation4 + $0x5] sm:$0x1] %vm810, %v1043
        %1052 = vst.msk [vmem:[#allocation4 + $0xd] sm:$0x1] %vm810, %v1044
        %1053 = vst.msk [vmem:[#allocation4 + $0x15] sm:$0x1] %vm810, %v1045
        %1054 = vst.msk [vmem:[#allocation4 + $0x1d] sm:$0x1] %vm810, %v1046
        %1055 = vst.msk [vmem:[#allocation4 + $0x25] sm:$0x1] %vm810, %v1047
        %1056 = vst.msk [vmem:[#allocation4 + $0x2d] sm:$0x1] %vm810, %v1048
        %1057 = vst.msk [vmem:[#allocation4 + $0x35] sm:$0x1] %vm810, %v1049
        %1058 = vst.msk [vmem:[#allocation4 + $0x3d] sm:$0x1] %vm810, %v1050
        %v1059 = vld [vmem:[#allocation3 + $0x2] sm:$0x1]
        %v1060 = vld [vmem:[#allocation3 + $0x6] sm:$0x1]
        %v1061 = vld [vmem:[#allocation3 + $0xa] sm:$0x1]
        %v1062 = vld [vmem:[#allocation3 + $0xe] sm:$0x1]
        %v1063 = vld [vmem:[#allocation3 + $0x12] sm:$0x1]
        %v1064 = vld [vmem:[#allocation3 + $0x16] sm:$0x1]
        %v1065 = vld [vmem:[#allocation3 + $0x1a] sm:$0x1]
        %v1066 = vld [vmem:[#allocation3 + $0x1e] sm:$0x1]
        %v1067 = vld [vmem:[#allocation3 + $0x3] sm:$0x1]
        %v1068 = vld [vmem:[#allocation3 + $0x7] sm:$0x1]
        %v1069 = vld [vmem:[#allocation3 + $0xb] sm:$0x1]
        %v1070 = vld [vmem:[#allocation3 + $0xf] sm:$0x1]
        %v1071 = vld [vmem:[#allocation3 + $0x13] sm:$0x1]
        %v1072 = vld [vmem:[#allocation3 + $0x17] sm:$0x1]
        %v1073 = vld [vmem:[#allocation3 + $0x1b] sm:$0x1]
        %v1074 = vld [vmem:[#allocation3 + $0x1f] sm:$0x1]
        %v1075 = vmul.f32 %v1059, 0.42857143
        %v1076 = vmul.f32 %v1060, 0.42857143
        %v1077 = vmul.f32 %v1061, 0.42857143
        %v1078 = vmul.f32 %v1062, 0.42857143
        %v1079 = vmul.f32 %v1063, 0.42857143
        %v1080 = vmul.f32 %v1064, 0.42857143
        %v1081 = vmul.f32 %v1065, 0.42857143
        %v1082 = vmul.f32 %v1066, 0.42857143
        %v1083 = vmul.f32 %v1067, 0.5714286
        %v1084 = vmul.f32 %v1068, 0.5714286
        %v1085 = vmul.f32 %v1069, 0.5714286
        %v1086 = vmul.f32 %v1070, 0.5714286
        %v1087 = vmul.f32 %v1071, 0.5714286
        %v1088 = vmul.f32 %v1072, 0.5714286
        %v1089 = vmul.f32 %v1073, 0.5714286
        %v1090 = vmul.f32 %v1074, 0.5714286
        %v1091 = vadd.f32 %v1075, %v1083
        %v1092 = vadd.f32 %v1076, %v1084
        %v1093 = vadd.f32 %v1077, %v1085
        %v1094 = vadd.f32 %v1078, %v1086
        %v1095 = vadd.f32 %v1079, %v1087
        %v1096 = vadd.f32 %v1080, %v1088
        %v1097 = vadd.f32 %v1081, %v1089
        %v1098 = vadd.f32 %v1082, %v1090
        %1099 = vst.msk [vmem:[#allocation4 + $0x6] sm:$0x1] %vm810, %v1091
        %1100 = vst.msk [vmem:[#allocation4 + $0xe] sm:$0x1] %vm810, %v1092
        %1101 = vst.msk [vmem:[#allocation4 + $0x16] sm:$0x1] %vm810, %v1093
        %1102 = vst.msk [vmem:[#allocation4 + $0x1e] sm:$0x1] %vm810, %v1094
        %1103 = vst.msk [vmem:[#allocation4 + $0x26] sm:$0x1] %vm810, %v1095
        %1104 = vst.msk [vmem:[#allocation4 + $0x2e] sm:$0x1] %vm810, %v1096
        %1105 = vst.msk [vmem:[#allocation4 + $0x36] sm:$0x1] %vm810, %v1097
        %1106 = vst.msk [vmem:[#allocation4 + $0x3e] sm:$0x1] %vm810, %v1098
        %v1107 = vld [vmem:[#allocation3 + $0x2] sm:$0x1]
        %v1108 = vld [vmem:[#allocation3 + $0x6] sm:$0x1]
        %v1109 = vld [vmem:[#allocation3 + $0xa] sm:$0x1]
        %v1110 = vld [vmem:[#allocation3 + $0xe] sm:$0x1]
        %v1111 = vld [vmem:[#allocation3 + $0x12] sm:$0x1]
        %v1112 = vld [vmem:[#allocation3 + $0x16] sm:$0x1]
        %v1113 = vld [vmem:[#allocation3 + $0x1a] sm:$0x1]
        %v1114 = vld [vmem:[#allocation3 + $0x1e] sm:$0x1]
        %v1115 = vld [vmem:[#allocation3 + $0x3] sm:$0x1]
        %v1116 = vld [vmem:[#allocation3 + $0x7] sm:$0x1]
        %v1117 = vld [vmem:[#allocation3 + $0xb] sm:$0x1]
        %v1118 = vld [vmem:[#allocation3 + $0xf] sm:$0x1]
        %v1119 = vld [vmem:[#allocation3 + $0x13] sm:$0x1]
        %v1120 = vld [vmem:[#allocation3 + $0x17] sm:$0x1]
        %v1121 = vld [vmem:[#allocation3 + $0x1b] sm:$0x1]
        %v1122 = vld [vmem:[#allocation3 + $0x1f] sm:$0x1]
        %v1123 = vmul.f32 %v1107, 0.0
        %v1124 = vmul.f32 %v1108, 0.0
        %v1125 = vmul.f32 %v1109, 0.0
        %v1126 = vmul.f32 %v1110, 0.0
        %v1127 = vmul.f32 %v1111, 0.0
        %v1128 = vmul.f32 %v1112, 0.0
        %v1129 = vmul.f32 %v1113, 0.0
        %v1130 = vmul.f32 %v1114, 0.0
        %v1131 = vadd.f32 %v1123, %v1115
        %v1132 = vadd.f32 %v1124, %v1116
        %v1133 = vadd.f32 %v1125, %v1117
        %v1134 = vadd.f32 %v1126, %v1118
        %v1135 = vadd.f32 %v1127, %v1119
        %v1136 = vadd.f32 %v1128, %v1120
        %v1137 = vadd.f32 %v1129, %v1121
        %v1138 = vadd.f32 %v1130, %v1122
        %1139 = vst.msk [vmem:[#allocation4 + $0x7] sm:$0x1] %vm810, %v1131
        %1140 = vst.msk [vmem:[#allocation4 + $0xf] sm:$0x1] %vm810, %v1132
        %1141 = vst.msk [vmem:[#allocation4 + $0x17] sm:$0x1] %vm810, %v1133
        %1142 = vst.msk [vmem:[#allocation4 + $0x1f] sm:$0x1] %vm810, %v1134
        %1143 = vst.msk [vmem:[#allocation4 + $0x27] sm:$0x1] %vm810, %v1135
        %1144 = vst.msk [vmem:[#allocation4 + $0x2f] sm:$0x1] %vm810, %v1136
        %1145 = vst.msk [vmem:[#allocation4 + $0x37] sm:$0x1] %vm810, %v1137
        %1146 = vst.msk [vmem:[#allocation4 + $0x3f] sm:$0x1] %vm810, %v1138
        %v1147 = vld [vmem:[#allocation4] sm:$0xff]
        %v1148 = vld [vmem:[#allocation4 + $0x8] sm:$0xff]
        %v1149 = vld [vmem:[#allocation4 + $0x10] sm:$0xff]
        %v1150 = vld [vmem:[#allocation4 + $0x18] sm:$0xff]
        %v1151 = vld [vmem:[#allocation4 + $0x20] sm:$0xff]
        %v1152 = vld [vmem:[#allocation4 + $0x28] sm:$0xff]
        %v1153 = vld [vmem:[#allocation4 + $0x30] sm:$0xff]
        %v1154 = vld [vmem:[#allocation4 + $0x38] sm:$0xff]
        %v1155 = vmul.f32 %v728, %v1147
        %v1156 = vmul.f32 %v729, %v1148
        %v1157 = vmul.f32 %v730, %v1149
        %v1158 = vmul.f32 %v731, %v1150
        %v1159 = vmul.f32 %v732, %v1151
        %v1160 = vmul.f32 %v733, %v1152
        %v1161 = vmul.f32 %v734, %v1153
        %v1162 = vmul.f32 %v735, %v1154
        %s1163 = scalar_lea.vmem [#allocation2], 24
        %1164 = vst.msk [vmem:[%s1163 + $0x8] sm:$0xff] %vm590, %v1155
        %1165 = vst.msk [vmem:[%s1163 + $0x20] sm:$0xff] %vm590, %v1156
        %1166 = vst.msk [vmem:[%s1163 + $0x38] sm:$0xff] %vm590, %v1157
        %1167 = vst.msk [vmem:[%s1163 + $0x50] sm:$0xff] %vm590, %v1158
        %1168 = vst.msk [vmem:[%s1163 + $0x68] sm:$0xff] %vm590, %v1159
        %1169 = vst.msk [vmem:[%s1163 + $0x80] sm:$0xff] %vm590, %v1160
        %1170 = vst.msk [vmem:[%s1163 + $0x98] sm:$0xff] %vm590, %v1161
        %1171 = vst.msk [vmem:[%s1163 + $0xb0] sm:$0xff] %vm590, %v1162
        %v1172 = vld [vmem:[#allocation2 + $0x7] sm:$0xff]
        %v1173 = vld [vmem:[#allocation2 + $0x1f] sm:$0xff]
        %v1174 = vld [vmem:[#allocation2 + $0x37] sm:$0xff]
        %v1175 = vld [vmem:[#allocation2 + $0x4f] sm:$0xff]
        %v1176 = vld [vmem:[#allocation2 + $0x67] sm:$0xff]
        %v1177 = vld [vmem:[#allocation2 + $0x7f] sm:$0xff]
        %v1178 = vld [vmem:[#allocation2 + $0x97] sm:$0xff]
        %v1179 = vld [vmem:[#allocation2 + $0xaf] sm:$0xff]
        %v1180 = vpack.c.bf16 %v1173, %v1172
        %v1181 = vpack.c.bf16 %v1175, %v1174
        %v1182 = vpack.c.bf16 %v1177, %v1176
        %v1183 = vpack.c.bf16 %v1179, %v1178
        %v1184 = vld [vmem:[#allocation10] sm:$0xf]
        %v1185 = vld [vmem:[#allocation10 + $0x4] sm:$0xf]
        %v1186 = vld [vmem:[#allocation10 + $0x8] sm:$0xf]
        %v1187 = vld [vmem:[#allocation10 + $0xc] sm:$0xf]
        %v1188 = vld [vmem:[#allocation10 + $0x10] sm:$0xf]
        %v1189 = vld [vmem:[#allocation10 + $0x14] sm:$0xf]
        %v1190 = vld [vmem:[#allocation10 + $0x18] sm:$0xf]
        %v1191 = vld [vmem:[#allocation10 + $0x1c] sm:$0xf]
        %v1192 = vld [vmem:[#allocation2 + $0x8] sm:$0xff]
        %v1193 = vld [vmem:[#allocation2 + $0x20] sm:$0xff]
        %v1194 = vld [vmem:[#allocation2 + $0x38] sm:$0xff]
        %v1195 = vld [vmem:[#allocation2 + $0x50] sm:$0xff]
        %v1196 = vld [vmem:[#allocation2 + $0x68] sm:$0xff]
        %v1197 = vld [vmem:[#allocation2 + $0x80] sm:$0xff]
        %v1198 = vld [vmem:[#allocation2 + $0x98] sm:$0xff]
        %v1199 = vld [vmem:[#allocation2 + $0xb0] sm:$0xff]
        %v1200 = vpack.c.bf16 %v1193, %v1192
        %v1201 = vpack.c.bf16 %v1195, %v1194
        %v1202 = vpack.c.bf16 %v1197, %v1196
        %v1203 = vpack.c.bf16 %v1199, %v1198
        %s1204 = scalar_lea.vmem [#allocation10], 32
        %v1205 = vld [vmem:[%s1204] sm:$0xf]
        %v1206 = vld [vmem:[%s1204 + $0x4] sm:$0xf]
        %v1207 = vld [vmem:[%s1204 + $0x8] sm:$0xf]
        %v1208 = vld [vmem:[%s1204 + $0xc] sm:$0xf]
        %v1209 = vld [vmem:[%s1204 + $0x10] sm:$0xf]
        %v1210 = vld [vmem:[%s1204 + $0x14] sm:$0xf]
        %v1211 = vld [vmem:[%s1204 + $0x18] sm:$0xf]
        %v1212 = vld [vmem:[%s1204 + $0x1c] sm:$0xf]
        %v1221 = vunpack.c.l.b16 %v1205
        %v1222 = vunpack.c.l.b16 %v1206
        %v1223 = vunpack.c.l.b16 %v1207
        %v1224 = vunpack.c.l.b16 %v1208
        %v1225 = vunpack.c.l.b16 %v1209
        %v1226 = vunpack.c.l.b16 %v1210
        %v1227 = vunpack.c.l.b16 %v1211
        %v1228 = vunpack.c.l.b16 %v1212
        %v1229 = vpack.c.b16 %v1222, %v1221
        %v1230 = vpack.c.b16 %v1224, %v1223
        %v1231 = vpack.c.b16 %v1226, %v1225
        %v1232 = vpack.c.b16 %v1228, %v1227
        %v1238 = vsel %vm590, %v1200, 0
        %v1241 = vsel %vm590, %v1201, 0
        %v1244 = vsel %vm590, %v1202, 0
        %v1247 = vsel %vm590, %v1203, 0
        %1249 = vmatpush.bf16.msra.mxu0 0
        %1250 = vmatpush.bf16.msra.mxu0 0
        %1251 = vmatpush.bf16.msra.mxu0 0
        %1252 = vmatpush.bf16.msra.mxu0 0
        %1253 = vmatpush.bf16.msra.mxu0 %v1232
        %1254 = vmatpush.bf16.msra.mxu0 %v1231
        %1255 = vmatpush.bf16.msra.mxu0 %v1230
        %1256 = vmatpush.bf16.msra.mxu0 %v1229
        %1257 = vmatmul.bf16.gmra.mxu0 %v1238
        %v1258 = vpop.f32.mrf.mxu0
        %v1259 = vadd.f32 0.0, %v1258
        %v1260 = vpop.f32.mrf.mxu0
        %v1261 = vadd.f32 0.0, %v1260
        %1262 = vmatmul.bf16.gmra.mxu0 %v1241
        %v1263 = vpop.f32.mrf.mxu0
        %v1264 = vadd.f32 0.0, %v1263
        %v1265 = vpop.f32.mrf.mxu0
        %v1266 = vadd.f32 0.0, %v1265
        %1267 = vmatmul.bf16.gmra.mxu0 %v1244
        %v1268 = vpop.f32.mrf.mxu0
        %v1269 = vadd.f32 0.0, %v1268
        %v1270 = vpop.f32.mrf.mxu0
        %v1271 = vadd.f32 0.0, %v1270
        %1272 = vmatmul.bf16.gmra.mxu0 %v1247
        %v1273 = vpop.f32.mrf.mxu0
        %v1274 = vadd.f32 0.0, %v1273
        %v1275 = vpop.f32.mrf.mxu0
        %v1276 = vadd.f32 0.0, %v1275
        %1277 = vdwg.mxu0
        %v1286 = vunpack.c.l.b16 %v1184
        %v1287 = vunpack.c.l.b16 %v1185
        %v1288 = vunpack.c.l.b16 %v1186
        %v1289 = vunpack.c.l.b16 %v1187
        %v1290 = vunpack.c.l.b16 %v1188
        %v1291 = vunpack.c.l.b16 %v1189
        %v1292 = vunpack.c.l.b16 %v1190
        %v1293 = vunpack.c.l.b16 %v1191
        %v1294 = vpack.c.b16 %v1287, %v1286
        %v1295 = vpack.c.b16 %v1289, %v1288
        %v1296 = vpack.c.b16 %v1291, %v1290
        %v1297 = vpack.c.b16 %v1293, %v1292
        %v1303 = vsel %vm590, %v1180, 0
        %v1306 = vsel %vm590, %v1181, 0
        %v1309 = vsel %vm590, %v1182, 0
        %v1312 = vsel %vm590, %v1183, 0
        %1314 = vmatpush.bf16.msra.mxu0 0
        %1315 = vmatpush.bf16.msra.mxu0 0
        %1316 = vmatpush.bf16.msra.mxu0 0
        %1317 = vmatpush.bf16.msra.mxu0 0
        %1318 = vmatpush.bf16.msra.mxu0 %v1297
        %1319 = vmatpush.bf16.msra.mxu0 %v1296
        %1320 = vmatpush.bf16.msra.mxu0 %v1295
        %1321 = vmatpush.bf16.msra.mxu0 %v1294
        %1322 = vmatmul.bf16.gmra.mxu0 %v1303
        %v1323 = vpop.f32.mrf.mxu0
        %v1324 = vadd.f32 %v1259, %v1323
        %v1325 = vpop.f32.mrf.mxu0
        %v1326 = vadd.f32 %v1261, %v1325
        %1327 = vmatmul.bf16.gmra.mxu0 %v1306
        %v1328 = vpop.f32.mrf.mxu0
        %v1329 = vadd.f32 %v1264, %v1328
        %v1330 = vpop.f32.mrf.mxu0
        %v1331 = vadd.f32 %v1266, %v1330
        %1332 = vmatmul.bf16.gmra.mxu0 %v1309
        %v1333 = vpop.f32.mrf.mxu0
        %v1334 = vadd.f32 %v1269, %v1333
        %v1335 = vpop.f32.mrf.mxu0
        %v1336 = vadd.f32 %v1271, %v1335
        %1337 = vmatmul.bf16.gmra.mxu0 %v1312
        %v1338 = vpop.f32.mrf.mxu0
        %v1339 = vadd.f32 %v1274, %v1338
        %v1340 = vpop.f32.mrf.mxu0
        %v1341 = vadd.f32 %v1276, %v1340
        %1342 = vdwg.mxu0
        %v1343 = vld [vmem:[#allocation2 + $0x9] sm:$0xff]
        %v1344 = vld [vmem:[#allocation2 + $0x21] sm:$0xff]
        %v1345 = vld [vmem:[#allocation2 + $0x39] sm:$0xff]
        %v1346 = vld [vmem:[#allocation2 + $0x51] sm:$0xff]
        %v1347 = vld [vmem:[#allocation2 + $0x69] sm:$0xff]
        %v1348 = vld [vmem:[#allocation2 + $0x81] sm:$0xff]
        %v1349 = vld [vmem:[#allocation2 + $0x99] sm:$0xff]
        %v1350 = vld [vmem:[#allocation2 + $0xb1] sm:$0xff]
        %v1351 = vpack.c.bf16 %v1344, %v1343
        %v1352 = vpack.c.bf16 %v1346, %v1345
        %v1353 = vpack.c.bf16 %v1348, %v1347
        %v1354 = vpack.c.bf16 %v1350, %v1349
        %s1355 = scalar_lea.vmem [#allocation10], 64
        %v1356 = vld [vmem:[%s1355] sm:$0xf]
        %v1357 = vld [vmem:[%s1355 + $0x4] sm:$0xf]
        %v1358 = vld [vmem:[%s1355 + $0x8] sm:$0xf]
        %v1359 = vld [vmem:[%s1355 + $0xc] sm:$0xf]
        %v1360 = vld [vmem:[%s1355 + $0x10] sm:$0xf]
        %v1361 = vld [vmem:[%s1355 + $0x14] sm:$0xf]
        %v1362 = vld [vmem:[%s1355 + $0x18] sm:$0xf]
        %v1363 = vld [vmem:[%s1355 + $0x1c] sm:$0xf]
        %v1372 = vunpack.c.l.b16 %v1356
        %v1373 = vunpack.c.l.b16 %v1357
        %v1374 = vunpack.c.l.b16 %v1358
        %v1375 = vunpack.c.l.b16 %v1359
        %v1376 = vunpack.c.l.b16 %v1360
        %v1377 = vunpack.c.l.b16 %v1361
        %v1378 = vunpack.c.l.b16 %v1362
        %v1379 = vunpack.c.l.b16 %v1363
        %v1380 = vpack.c.b16 %v1373, %v1372
        %v1381 = vpack.c.b16 %v1375, %v1374
        %v1382 = vpack.c.b16 %v1377, %v1376
        %v1383 = vpack.c.b16 %v1379, %v1378
        %v1389 = vsel %vm590, %v1351, 0
        %v1392 = vsel %vm590, %v1352, 0
        %v1395 = vsel %vm590, %v1353, 0
        %v1398 = vsel %vm590, %v1354, 0
        %1400 = vmatpush.bf16.msra.mxu0 0
        %1401 = vmatpush.bf16.msra.mxu0 0
        %1402 = vmatpush.bf16.msra.mxu0 0
        %1403 = vmatpush.bf16.msra.mxu0 0
        %1404 = vmatpush.bf16.msra.mxu0 %v1383
        %1405 = vmatpush.bf16.msra.mxu0 %v1382
        %1406 = vmatpush.bf16.msra.mxu0 %v1381
        %1407 = vmatpush.bf16.msra.mxu0 %v1380
        %1408 = vmatmul.bf16.gmra.mxu0 %v1389
        %v1409 = vpop.f32.mrf.mxu0
        %v1410 = vadd.f32 0.0, %v1409
        %v1411 = vpop.f32.mrf.mxu0
        %v1412 = vadd.f32 0.0, %v1411
        %1413 = vmatmul.bf16.gmra.mxu0 %v1392
        %v1414 = vpop.f32.mrf.mxu0
        %v1415 = vadd.f32 0.0, %v1414
        %v1416 = vpop.f32.mrf.mxu0
        %v1417 = vadd.f32 0.0, %v1416
        %1418 = vmatmul.bf16.gmra.mxu0 %v1395
        %v1419 = vpop.f32.mrf.mxu0
        %v1420 = vadd.f32 0.0, %v1419
        %v1421 = vpop.f32.mrf.mxu0
        %v1422 = vadd.f32 0.0, %v1421
        %1423 = vmatmul.bf16.gmra.mxu0 %v1398
        %v1424 = vpop.f32.mrf.mxu0
        %v1425 = vadd.f32 0.0, %v1424
        %v1426 = vpop.f32.mrf.mxu0
        %v1427 = vadd.f32 0.0, %v1426
        %1428 = vdwg.mxu0
        %v1429 = vadd.f32 %v1324, %v1410
        %v1430 = vadd.f32 %v1326, %v1412
        %v1431 = vadd.f32 %v1329, %v1415
        %v1432 = vadd.f32 %v1331, %v1417
        %v1433 = vadd.f32 %v1334, %v1420
        %v1434 = vadd.f32 %v1336, %v1422
        %v1435 = vadd.f32 %v1339, %v1425
        %v1436 = vadd.f32 %v1341, %v1427
        %v1437 = vld [vmem:[%s1163 + $0x7] sm:$0xff]
        %v1438 = vld [vmem:[%s1163 + $0x1f] sm:$0xff]
        %v1439 = vld [vmem:[%s1163 + $0x37] sm:$0xff]
        %v1440 = vld [vmem:[%s1163 + $0x4f] sm:$0xff]
        %v1441 = vld [vmem:[%s1163 + $0x67] sm:$0xff]
        %v1442 = vld [vmem:[%s1163 + $0x7f] sm:$0xff]
        %v1443 = vld [vmem:[%s1163 + $0x97] sm:$0xff]
        %v1444 = vld [vmem:[%s1163 + $0xaf] sm:$0xff]
        %v1445 = vpack.c.bf16 %v1438, %v1437
        %v1446 = vpack.c.bf16 %v1440, %v1439
        %v1447 = vpack.c.bf16 %v1442, %v1441
        %v1448 = vpack.c.bf16 %v1444, %v1443
        %s1449 = scalar_lea.vmem [#allocation10], 96
        %v1450 = vld [vmem:[%s1449] sm:$0xf]
        %v1451 = vld [vmem:[%s1449 + $0x4] sm:$0xf]
        %v1452 = vld [vmem:[%s1449 + $0x8] sm:$0xf]
        %v1453 = vld [vmem:[%s1449 + $0xc] sm:$0xf]
        %v1454 = vld [vmem:[%s1449 + $0x10] sm:$0xf]
        %v1455 = vld [vmem:[%s1449 + $0x14] sm:$0xf]
        %v1456 = vld [vmem:[%s1449 + $0x18] sm:$0xf]
        %v1457 = vld [vmem:[%s1449 + $0x1c] sm:$0xf]
        %v1466 = vunpack.c.l.b16 %v1450
        %v1467 = vunpack.c.l.b16 %v1451
        %v1468 = vunpack.c.l.b16 %v1452
        %v1469 = vunpack.c.l.b16 %v1453
        %v1470 = vunpack.c.l.b16 %v1454
        %v1471 = vunpack.c.l.b16 %v1455
        %v1472 = vunpack.c.l.b16 %v1456
        %v1473 = vunpack.c.l.b16 %v1457
        %v1474 = vpack.c.b16 %v1467, %v1466
        %v1475 = vpack.c.b16 %v1469, %v1468
        %v1476 = vpack.c.b16 %v1471, %v1470
        %v1477 = vpack.c.b16 %v1473, %v1472
        %v1483 = vsel %vm590, %v1445, 0
        %v1486 = vsel %vm590, %v1446, 0
        %v1489 = vsel %vm590, %v1447, 0
        %v1492 = vsel %vm590, %v1448, 0
        %1494 = vmatpush.bf16.msra.mxu0 0
        %1495 = vmatpush.bf16.msra.mxu0 0
        %1496 = vmatpush.bf16.msra.mxu0 0
        %1497 = vmatpush.bf16.msra.mxu0 0
        %1498 = vmatpush.bf16.msra.mxu0 %v1477
        %1499 = vmatpush.bf16.msra.mxu0 %v1476
        %1500 = vmatpush.bf16.msra.mxu0 %v1475
        %1501 = vmatpush.bf16.msra.mxu0 %v1474
        %1502 = vmatmul.bf16.gmra.mxu0 %v1483
        %v1503 = vpop.f32.mrf.mxu0
        %v1504 = vadd.f32 0.0, %v1503
        %v1505 = vpop.f32.mrf.mxu0
        %v1506 = vadd.f32 0.0, %v1505
        %1507 = vmatmul.bf16.gmra.mxu0 %v1486
        %v1508 = vpop.f32.mrf.mxu0
        %v1509 = vadd.f32 0.0, %v1508
        %v1510 = vpop.f32.mrf.mxu0
        %v1511 = vadd.f32 0.0, %v1510
        %1512 = vmatmul.bf16.gmra.mxu0 %v1489
        %v1513 = vpop.f32.mrf.mxu0
        %v1514 = vadd.f32 0.0, %v1513
        %v1515 = vpop.f32.mrf.mxu0
        %v1516 = vadd.f32 0.0, %v1515
        %1517 = vmatmul.bf16.gmra.mxu0 %v1492
        %v1518 = vpop.f32.mrf.mxu0
        %v1519 = vadd.f32 0.0, %v1518
        %v1520 = vpop.f32.mrf.mxu0
        %v1521 = vadd.f32 0.0, %v1520
        %1522 = vdwg.mxu0
        %v1523 = vadd.f32 %v1429, %v1504
        %v1524 = vadd.f32 %v1430, %v1506
        %v1525 = vadd.f32 %v1431, %v1509
        %v1526 = vadd.f32 %v1432, %v1511
        %v1527 = vadd.f32 %v1433, %v1514
        %v1528 = vadd.f32 %v1434, %v1516
        %v1529 = vadd.f32 %v1435, %v1519
        %v1530 = vadd.f32 %v1436, %v1521
        %v1531 = vld [vmem:[%s1163 + $0x8] sm:$0xff]
        %v1532 = vld [vmem:[%s1163 + $0x20] sm:$0xff]
        %v1533 = vld [vmem:[%s1163 + $0x38] sm:$0xff]
        %v1534 = vld [vmem:[%s1163 + $0x50] sm:$0xff]
        %v1535 = vld [vmem:[%s1163 + $0x68] sm:$0xff]
        %v1536 = vld [vmem:[%s1163 + $0x80] sm:$0xff]
        %v1537 = vld [vmem:[%s1163 + $0x98] sm:$0xff]
        %v1538 = vld [vmem:[%s1163 + $0xb0] sm:$0xff]
        %v1539 = vpack.c.bf16 %v1532, %v1531
        %v1540 = vpack.c.bf16 %v1534, %v1533
        %v1541 = vpack.c.bf16 %v1536, %v1535
        %v1542 = vpack.c.bf16 %v1538, %v1537
        %s1543 = scalar_lea.vmem [#allocation10], 128
        %v1544 = vld [vmem:[%s1543] sm:$0xf]
        %v1545 = vld [vmem:[%s1543 + $0x4] sm:$0xf]
        %v1546 = vld [vmem:[%s1543 + $0x8] sm:$0xf]
        %v1547 = vld [vmem:[%s1543 + $0xc] sm:$0xf]
        %v1548 = vld [vmem:[%s1543 + $0x10] sm:$0xf]
        %v1549 = vld [vmem:[%s1543 + $0x14] sm:$0xf]
        %v1550 = vld [vmem:[%s1543 + $0x18] sm:$0xf]
        %v1551 = vld [vmem:[%s1543 + $0x1c] sm:$0xf]
        %v1560 = vunpack.c.l.b16 %v1544
        %v1561 = vunpack.c.l.b16 %v1545
        %v1562 = vunpack.c.l.b16 %v1546
        %v1563 = vunpack.c.l.b16 %v1547
        %v1564 = vunpack.c.l.b16 %v1548
        %v1565 = vunpack.c.l.b16 %v1549
        %v1566 = vunpack.c.l.b16 %v1550
        %v1567 = vunpack.c.l.b16 %v1551
        %v1568 = vpack.c.b16 %v1561, %v1560
        %v1569 = vpack.c.b16 %v1563, %v1562
        %v1570 = vpack.c.b16 %v1565, %v1564
        %v1571 = vpack.c.b16 %v1567, %v1566
        %v1577 = vsel %vm590, %v1539, 0
        %v1580 = vsel %vm590, %v1540, 0
        %v1583 = vsel %vm590, %v1541, 0
        %v1586 = vsel %vm590, %v1542, 0
        %1588 = vmatpush.bf16.msra.mxu0 0
        %1589 = vmatpush.bf16.msra.mxu0 0
        %1590 = vmatpush.bf16.msra.mxu0 0
        %1591 = vmatpush.bf16.msra.mxu0 0
        %1592 = vmatpush.bf16.msra.mxu0 %v1571
        %1593 = vmatpush.bf16.msra.mxu0 %v1570
        %1594 = vmatpush.bf16.msra.mxu0 %v1569
        %1595 = vmatpush.bf16.msra.mxu0 %v1568
        %1596 = vmatmul.bf16.gmra.mxu0 %v1577
        %v1597 = vpop.f32.mrf.mxu0
        %v1598 = vadd.f32 0.0, %v1597
        %v1599 = vpop.f32.mrf.mxu0
        %v1600 = vadd.f32 0.0, %v1599
        %1601 = vmatmul.bf16.gmra.mxu0 %v1580
        %v1602 = vpop.f32.mrf.mxu0
        %v1603 = vadd.f32 0.0, %v1602
        %v1604 = vpop.f32.mrf.mxu0
        %v1605 = vadd.f32 0.0, %v1604
        %1606 = vmatmul.bf16.gmra.mxu0 %v1583
        %v1607 = vpop.f32.mrf.mxu0
        %v1608 = vadd.f32 0.0, %v1607
        %v1609 = vpop.f32.mrf.mxu0
        %v1610 = vadd.f32 0.0, %v1609
        %1611 = vmatmul.bf16.gmra.mxu0 %v1586
        %v1612 = vpop.f32.mrf.mxu0
        %v1613 = vadd.f32 0.0, %v1612
        %v1614 = vpop.f32.mrf.mxu0
        %v1615 = vadd.f32 0.0, %v1614
        %1616 = vdwg.mxu0
        %v1617 = vadd.f32 %v1523, %v1598
        %v1618 = vadd.f32 %v1524, %v1600
        %v1619 = vadd.f32 %v1525, %v1603
        %v1620 = vadd.f32 %v1526, %v1605
        %v1621 = vadd.f32 %v1527, %v1608
        %v1622 = vadd.f32 %v1528, %v1610
        %v1623 = vadd.f32 %v1529, %v1613
        %v1624 = vadd.f32 %v1530, %v1615
        %v1625 = vld [vmem:[%s1163 + $0x9] sm:$0xff]
        %v1626 = vld [vmem:[%s1163 + $0x21] sm:$0xff]
        %v1627 = vld [vmem:[%s1163 + $0x39] sm:$0xff]
        %v1628 = vld [vmem:[%s1163 + $0x51] sm:$0xff]
        %v1629 = vld [vmem:[%s1163 + $0x69] sm:$0xff]
        %v1630 = vld [vmem:[%s1163 + $0x81] sm:$0xff]
        %v1631 = vld [vmem:[%s1163 + $0x99] sm:$0xff]
        %v1632 = vld [vmem:[%s1163 + $0xb1] sm:$0xff]
        %v1633 = vpack.c.bf16 %v1626, %v1625
        %v1634 = vpack.c.bf16 %v1628, %v1627
        %v1635 = vpack.c.bf16 %v1630, %v1629
        %v1636 = vpack.c.bf16 %v1632, %v1631
        %s1637 = scalar_lea.vmem [#allocation10], 160
        %v1638 = vld [vmem:[%s1637] sm:$0xf]
        %v1639 = vld [vmem:[%s1637 + $0x4] sm:$0xf]
        %v1640 = vld [vmem:[%s1637 + $0x8] sm:$0xf]
        %v1641 = vld [vmem:[%s1637 + $0xc] sm:$0xf]
        %v1642 = vld [vmem:[%s1637 + $0x10] sm:$0xf]
        %v1643 = vld [vmem:[%s1637 + $0x14] sm:$0xf]
        %v1644 = vld [vmem:[%s1637 + $0x18] sm:$0xf]
        %v1645 = vld [vmem:[%s1637 + $0x1c] sm:$0xf]
        %v1654 = vunpack.c.l.b16 %v1638
        %v1655 = vunpack.c.l.b16 %v1639
        %v1656 = vunpack.c.l.b16 %v1640
        %v1657 = vunpack.c.l.b16 %v1641
        %v1658 = vunpack.c.l.b16 %v1642
        %v1659 = vunpack.c.l.b16 %v1643
        %v1660 = vunpack.c.l.b16 %v1644
        %v1661 = vunpack.c.l.b16 %v1645
        %v1662 = vpack.c.b16 %v1655, %v1654
        %v1663 = vpack.c.b16 %v1657, %v1656
        %v1664 = vpack.c.b16 %v1659, %v1658
        %v1665 = vpack.c.b16 %v1661, %v1660
        %v1671 = vsel %vm590, %v1633, 0
        %v1674 = vsel %vm590, %v1634, 0
        %v1677 = vsel %vm590, %v1635, 0
        %v1680 = vsel %vm590, %v1636, 0
        %1682 = vmatpush.bf16.msra.mxu0 0
        %1683 = vmatpush.bf16.msra.mxu0 0
        %1684 = vmatpush.bf16.msra.mxu0 0
        %1685 = vmatpush.bf16.msra.mxu0 0
        %1686 = vmatpush.bf16.msra.mxu0 %v1665
        %1687 = vmatpush.bf16.msra.mxu0 %v1664
        %1688 = vmatpush.bf16.msra.mxu0 %v1663
        %1689 = vmatpush.bf16.msra.mxu0 %v1662
        %1690 = vmatmul.bf16.gmra.mxu0 %v1671
        %v1691 = vpop.f32.mrf.mxu0
        %v1692 = vadd.f32 0.0, %v1691
        %v1693 = vpop.f32.mrf.mxu0
        %v1694 = vadd.f32 0.0, %v1693
        %1695 = vmatmul.bf16.gmra.mxu0 %v1674
        %v1696 = vpop.f32.mrf.mxu0
        %v1697 = vadd.f32 0.0, %v1696
        %v1698 = vpop.f32.mrf.mxu0
        %v1699 = vadd.f32 0.0, %v1698
        %1700 = vmatmul.bf16.gmra.mxu0 %v1677
        %v1701 = vpop.f32.mrf.mxu0
        %v1702 = vadd.f32 0.0, %v1701
        %v1703 = vpop.f32.mrf.mxu0
        %v1704 = vadd.f32 0.0, %v1703
        %1705 = vmatmul.bf16.gmra.mxu0 %v1680
        %v1706 = vpop.f32.mrf.mxu0
        %v1707 = vadd.f32 0.0, %v1706
        %v1708 = vpop.f32.mrf.mxu0
        %v1709 = vadd.f32 0.0, %v1708
        %1710 = vdwg.mxu0
        %v1711 = vadd.f32 %v1617, %v1692
        %v1712 = vadd.f32 %v1618, %v1694
        %v1713 = vadd.f32 %v1619, %v1697
        %v1714 = vadd.f32 %v1620, %v1699
        %v1715 = vadd.f32 %v1621, %v1702
        %v1716 = vadd.f32 %v1622, %v1704
        %v1717 = vadd.f32 %v1623, %v1707
        %v1718 = vadd.f32 %v1624, %v1709
        %s1719 = scalar_lea.vmem [#allocation2], 48
        %v1720 = vld [vmem:[%s1719 + $0x7] sm:$0xff]
        %v1721 = vld [vmem:[%s1719 + $0x1f] sm:$0xff]
        %v1722 = vld [vmem:[%s1719 + $0x37] sm:$0xff]
        %v1723 = vld [vmem:[%s1719 + $0x4f] sm:$0xff]
        %v1724 = vld [vmem:[%s1719 + $0x67] sm:$0xff]
        %v1725 = vld [vmem:[%s1719 + $0x7f] sm:$0xff]
        %v1726 = vld [vmem:[%s1719 + $0x97] sm:$0xff]
        %v1727 = vld [vmem:[%s1719 + $0xaf] sm:$0xff]
        %v1728 = vpack.c.bf16 %v1721, %v1720
        %v1729 = vpack.c.bf16 %v1723, %v1722
        %v1730 = vpack.c.bf16 %v1725, %v1724
        %v1731 = vpack.c.bf16 %v1727, %v1726
        %s1732 = scalar_lea.vmem [#allocation10], 192
        %v1733 = vld [vmem:[%s1732] sm:$0xf]
        %v1734 = vld [vmem:[%s1732 + $0x4] sm:$0xf]
        %v1735 = vld [vmem:[%s1732 + $0x8] sm:$0xf]
        %v1736 = vld [vmem:[%s1732 + $0xc] sm:$0xf]
        %v1737 = vld [vmem:[%s1732 + $0x10] sm:$0xf]
        %v1738 = vld [vmem:[%s1732 + $0x14] sm:$0xf]
        %v1739 = vld [vmem:[%s1732 + $0x18] sm:$0xf]
        %v1740 = vld [vmem:[%s1732 + $0x1c] sm:$0xf]
        %v1749 = vunpack.c.l.b16 %v1733
        %v1750 = vunpack.c.l.b16 %v1734
        %v1751 = vunpack.c.l.b16 %v1735
        %v1752 = vunpack.c.l.b16 %v1736
        %v1753 = vunpack.c.l.b16 %v1737
        %v1754 = vunpack.c.l.b16 %v1738
        %v1755 = vunpack.c.l.b16 %v1739
        %v1756 = vunpack.c.l.b16 %v1740
        %v1757 = vpack.c.b16 %v1750, %v1749
        %v1758 = vpack.c.b16 %v1752, %v1751
        %v1759 = vpack.c.b16 %v1754, %v1753
        %v1760 = vpack.c.b16 %v1756, %v1755
        %v1766 = vsel %vm590, %v1728, 0
        %v1769 = vsel %vm590, %v1729, 0
        %v1772 = vsel %vm590, %v1730, 0
        %v1775 = vsel %vm590, %v1731, 0
        %1777 = vmatpush.bf16.msra.mxu0 0
        %1778 = vmatpush.bf16.msra.mxu0 0
        %1779 = vmatpush.bf16.msra.mxu0 0
        %1780 = vmatpush.bf16.msra.mxu0 0
        %1781 = vmatpush.bf16.msra.mxu0 %v1760
        %1782 = vmatpush.bf16.msra.mxu0 %v1759
        %1783 = vmatpush.bf16.msra.mxu0 %v1758
        %1784 = vmatpush.bf16.msra.mxu0 %v1757
        %1785 = vmatmul.bf16.gmra.mxu0 %v1766
        %v1786 = vpop.f32.mrf.mxu0
        %v1787 = vadd.f32 0.0, %v1786
        %v1788 = vpop.f32.mrf.mxu0
        %v1789 = vadd.f32 0.0, %v1788
        %1790 = vmatmul.bf16.gmra.mxu0 %v1769
        %v1791 = vpop.f32.mrf.mxu0
        %v1792 = vadd.f32 0.0, %v1791
        %v1793 = vpop.f32.mrf.mxu0
        %v1794 = vadd.f32 0.0, %v1793
        %1795 = vmatmul.bf16.gmra.mxu0 %v1772
        %v1796 = vpop.f32.mrf.mxu0
        %v1797 = vadd.f32 0.0, %v1796
        %v1798 = vpop.f32.mrf.mxu0
        %v1799 = vadd.f32 0.0, %v1798
        %1800 = vmatmul.bf16.gmra.mxu0 %v1775
        %v1801 = vpop.f32.mrf.mxu0
        %v1802 = vadd.f32 0.0, %v1801
        %v1803 = vpop.f32.mrf.mxu0
        %v1804 = vadd.f32 0.0, %v1803
        %1805 = vdwg.mxu0
        %v1806 = vadd.f32 %v1711, %v1787
        %v1807 = vadd.f32 %v1712, %v1789
        %v1808 = vadd.f32 %v1713, %v1792
        %v1809 = vadd.f32 %v1714, %v1794
        %v1810 = vadd.f32 %v1715, %v1797
        %v1811 = vadd.f32 %v1716, %v1799
        %v1812 = vadd.f32 %v1717, %v1802
        %v1813 = vadd.f32 %v1718, %v1804
        %v1814 = vld [vmem:[%s1719 + $0x8] sm:$0xff]
        %v1815 = vld [vmem:[%s1719 + $0x20] sm:$0xff]
        %v1816 = vld [vmem:[%s1719 + $0x38] sm:$0xff]
        %v1817 = vld [vmem:[%s1719 + $0x50] sm:$0xff]
        %v1818 = vld [vmem:[%s1719 + $0x68] sm:$0xff]
        %v1819 = vld [vmem:[%s1719 + $0x80] sm:$0xff]
        %v1820 = vld [vmem:[%s1719 + $0x98] sm:$0xff]
        %v1821 = vld [vmem:[%s1719 + $0xb0] sm:$0xff]
        %v1822 = vpack.c.bf16 %v1815, %v1814
        %v1823 = vpack.c.bf16 %v1817, %v1816
        %v1824 = vpack.c.bf16 %v1819, %v1818
        %v1825 = vpack.c.bf16 %v1821, %v1820
        %s1826 = scalar_lea.vmem [#allocation10], 224
        %v1827 = vld [vmem:[%s1826] sm:$0xf]
        %v1828 = vld [vmem:[%s1826 + $0x4] sm:$0xf]
        %v1829 = vld [vmem:[%s1826 + $0x8] sm:$0xf]
        %v1830 = vld [vmem:[%s1826 + $0xc] sm:$0xf]
        %v1831 = vld [vmem:[%s1826 + $0x10] sm:$0xf]
        %v1832 = vld [vmem:[%s1826 + $0x14] sm:$0xf]
        %v1833 = vld [vmem:[%s1826 + $0x18] sm:$0xf]
        %v1834 = vld [vmem:[%s1826 + $0x1c] sm:$0xf]
        %v1843 = vunpack.c.l.b16 %v1827
        %v1844 = vunpack.c.l.b16 %v1828
        %v1845 = vunpack.c.l.b16 %v1829
        %v1846 = vunpack.c.l.b16 %v1830
        %v1847 = vunpack.c.l.b16 %v1831
        %v1848 = vunpack.c.l.b16 %v1832
        %v1849 = vunpack.c.l.b16 %v1833
        %v1850 = vunpack.c.l.b16 %v1834
        %v1851 = vpack.c.b16 %v1844, %v1843
        %v1852 = vpack.c.b16 %v1846, %v1845
        %v1853 = vpack.c.b16 %v1848, %v1847
        %v1854 = vpack.c.b16 %v1850, %v1849
        %v1860 = vsel %vm590, %v1822, 0
        %v1863 = vsel %vm590, %v1823, 0
        %v1866 = vsel %vm590, %v1824, 0
        %v1869 = vsel %vm590, %v1825, 0
        %1871 = vmatpush.bf16.msra.mxu0 0
        %1872 = vmatpush.bf16.msra.mxu0 0
        %1873 = vmatpush.bf16.msra.mxu0 0
        %1874 = vmatpush.bf16.msra.mxu0 0
        %1875 = vmatpush.bf16.msra.mxu0 %v1854
        %1876 = vmatpush.bf16.msra.mxu0 %v1853
        %1877 = vmatpush.bf16.msra.mxu0 %v1852
        %1878 = vmatpush.bf16.msra.mxu0 %v1851
        %1879 = vmatmul.bf16.gmra.mxu0 %v1860
        %v1880 = vpop.f32.mrf.mxu0
        %v1881 = vadd.f32 0.0, %v1880
        %v1882 = vpop.f32.mrf.mxu0
        %v1883 = vadd.f32 0.0, %v1882
        %1884 = vmatmul.bf16.gmra.mxu0 %v1863
        %v1885 = vpop.f32.mrf.mxu0
        %v1886 = vadd.f32 0.0, %v1885
        %v1887 = vpop.f32.mrf.mxu0
        %v1888 = vadd.f32 0.0, %v1887
        %1889 = vmatmul.bf16.gmra.mxu0 %v1866
        %v1890 = vpop.f32.mrf.mxu0
        %v1891 = vadd.f32 0.0, %v1890
        %v1892 = vpop.f32.mrf.mxu0
        %v1893 = vadd.f32 0.0, %v1892
        %1894 = vmatmul.bf16.gmra.mxu0 %v1869
        %v1895 = vpop.f32.mrf.mxu0
        %v1896 = vadd.f32 0.0, %v1895
        %v1897 = vpop.f32.mrf.mxu0
        %v1898 = vadd.f32 0.0, %v1897
        %1899 = vdwg.mxu0
        %v1900 = vadd.f32 %v1806, %v1881
        %v1901 = vadd.f32 %v1807, %v1883
        %v1902 = vadd.f32 %v1808, %v1886
        %v1903 = vadd.f32 %v1809, %v1888
        %v1904 = vadd.f32 %v1810, %v1891
        %v1905 = vadd.f32 %v1811, %v1893
        %v1906 = vadd.f32 %v1812, %v1896
        %v1907 = vadd.f32 %v1813, %v1898
        %v1908 = vld [vmem:[%s1719 + $0x9] sm:$0xff]
        %v1909 = vld [vmem:[%s1719 + $0x21] sm:$0xff]
        %v1910 = vld [vmem:[%s1719 + $0x39] sm:$0xff]
        %v1911 = vld [vmem:[%s1719 + $0x51] sm:$0xff]
        %v1912 = vld [vmem:[%s1719 + $0x69] sm:$0xff]
        %v1913 = vld [vmem:[%s1719 + $0x81] sm:$0xff]
        %v1914 = vld [vmem:[%s1719 + $0x99] sm:$0xff]
        %v1915 = vld [vmem:[%s1719 + $0xb1] sm:$0xff]
        %v1916 = vpack.c.bf16 %v1909, %v1908
        %v1917 = vpack.c.bf16 %v1911, %v1910
        %v1918 = vpack.c.bf16 %v1913, %v1912
        %v1919 = vpack.c.bf16 %v1915, %v1914
        %s1920 = scalar_lea.vmem [#allocation10], 256
        %v1921 = vld [vmem:[%s1920] sm:$0xf]
        %v1922 = vld [vmem:[%s1920 + $0x4] sm:$0xf]
        %v1923 = vld [vmem:[%s1920 + $0x8] sm:$0xf]
        %v1924 = vld [vmem:[%s1920 + $0xc] sm:$0xf]
        %v1925 = vld [vmem:[%s1920 + $0x10] sm:$0xf]
        %v1926 = vld [vmem:[%s1920 + $0x14] sm:$0xf]
        %v1927 = vld [vmem:[%s1920 + $0x18] sm:$0xf]
        %v1928 = vld [vmem:[%s1920 + $0x1c] sm:$0xf]
        %v1937 = vunpack.c.l.b16 %v1921
        %v1938 = vunpack.c.l.b16 %v1922
        %v1939 = vunpack.c.l.b16 %v1923
        %v1940 = vunpack.c.l.b16 %v1924
        %v1941 = vunpack.c.l.b16 %v1925
        %v1942 = vunpack.c.l.b16 %v1926
        %v1943 = vunpack.c.l.b16 %v1927
        %v1944 = vunpack.c.l.b16 %v1928
        %v1945 = vpack.c.b16 %v1938, %v1937
        %v1946 = vpack.c.b16 %v1940, %v1939
        %v1947 = vpack.c.b16 %v1942, %v1941
        %v1948 = vpack.c.b16 %v1944, %v1943
        %v1954 = vsel %vm590, %v1916, 0
        %v1957 = vsel %vm590, %v1917, 0
        %v1960 = vsel %vm590, %v1918, 0
        %v1963 = vsel %vm590, %v1919, 0
        %1965 = vmatpush.bf16.msra.mxu0 0
        %1966 = vmatpush.bf16.msra.mxu0 0
        %1967 = vmatpush.bf16.msra.mxu0 0
        %1968 = vmatpush.bf16.msra.mxu0 0
        %1969 = vmatpush.bf16.msra.mxu0 %v1948
        %1970 = vmatpush.bf16.msra.mxu0 %v1947
        %1971 = vmatpush.bf16.msra.mxu0 %v1946
        %1972 = vmatpush.bf16.msra.mxu0 %v1945
        %1973 = vmatmul.bf16.gmra.mxu0 %v1954
        %v1974 = vpop.f32.mrf.mxu0
        %v1975 = vadd.f32 0.0, %v1974
        %v1976 = vpop.f32.mrf.mxu0
        %v1977 = vadd.f32 0.0, %v1976
        %1978 = vmatmul.bf16.gmra.mxu0 %v1957
        %v1979 = vpop.f32.mrf.mxu0
        %v1980 = vadd.f32 0.0, %v1979
        %v1981 = vpop.f32.mrf.mxu0
        %v1982 = vadd.f32 0.0, %v1981
        %1983 = vmatmul.bf16.gmra.mxu0 %v1960
        %v1984 = vpop.f32.mrf.mxu0
        %v1985 = vadd.f32 0.0, %v1984
        %v1986 = vpop.f32.mrf.mxu0
        %v1987 = vadd.f32 0.0, %v1986
        %1988 = vmatmul.bf16.gmra.mxu0 %v1963
        %v1989 = vpop.f32.mrf.mxu0
        %v1990 = vadd.f32 0.0, %v1989
        %v1991 = vpop.f32.mrf.mxu0
        %v1992 = vadd.f32 0.0, %v1991
        %1993 = vdwg.mxu0
        %v1994 = vadd.f32 %v1900, %v1975
        %v1995 = vadd.f32 %v1901, %v1977
        %v1996 = vadd.f32 %v1902, %v1980
        %v1997 = vadd.f32 %v1903, %v1982
        %v1998 = vadd.f32 %v1904, %v1985
        %v1999 = vadd.f32 %v1905, %v1987
        %v2000 = vadd.f32 %v1906, %v1990
        %v2001 = vadd.f32 %v1907, %v1992
        %v2002 = vld [vmem:[%s10 + $0x1] sm:$0x1]
        %v2003 = vperm.slane %v2002, 0
        %v2004 = vadd.f32 %v1994, %v2003
        %v2005 = vadd.f32 %v1995, %v2003
        %v2006 = vadd.f32 %v1996, %v2003
        %v2007 = vadd.f32 %v1997, %v2003
        %v2008 = vadd.f32 %v1998, %v2003
        %v2009 = vadd.f32 %v1999, %v2003
        %v2010 = vadd.f32 %v2000, %v2003
        %v2011 = vadd.f32 %v2001, %v2003
        %v2012 = vmax.f32 %v2004, 0.0
        %v2013 = vmax.f32 %v2005, 0.0
        %v2014 = vmax.f32 %v2006, 0.0
        %v2015 = vmax.f32 %v2007, 0.0
        %v2016 = vmax.f32 %v2008, 0.0
        %v2017 = vmax.f32 %v2009, 0.0
        %v2018 = vmax.f32 %v2010, 0.0
        %v2019 = vmax.f32 %v2011, 0.0
        %2020 = vst.msk [vmem:[%s1163 + $0x8] sm:$0xff] %vm590, %v2012
        %2021 = vst.msk [vmem:[%s1163 + $0x20] sm:$0xff] %vm590, %v2013
        %2022 = vst.msk [vmem:[%s1163 + $0x38] sm:$0xff] %vm590, %v2014
        %2023 = vst.msk [vmem:[%s1163 + $0x50] sm:$0xff] %vm590, %v2015
        %2024 = vst.msk [vmem:[%s1163 + $0x68] sm:$0xff] %vm590, %v2016
        %2025 = vst.msk [vmem:[%s1163 + $0x80] sm:$0xff] %vm590, %v2017
        %2026 = vst.msk [vmem:[%s1163 + $0x98] sm:$0xff] %vm590, %v2018
        %2027 = vst.msk [vmem:[%s1163 + $0xb0] sm:$0xff] %vm590, %v2019
        %v2028 = vld [vmem:[#allocation2 + $0x7] sm:$0xff]
        %v2029 = vld [vmem:[#allocation2 + $0x1f] sm:$0xff]
        %v2030 = vld [vmem:[#allocation2 + $0x37] sm:$0xff]
        %v2031 = vld [vmem:[#allocation2 + $0x4f] sm:$0xff]
        %v2032 = vld [vmem:[#allocation2 + $0x67] sm:$0xff]
        %v2033 = vld [vmem:[#allocation2 + $0x7f] sm:$0xff]
        %v2034 = vld [vmem:[#allocation2 + $0x97] sm:$0xff]
        %v2035 = vld [vmem:[#allocation2 + $0xaf] sm:$0xff]
        %v2036 = vpack.c.bf16 %v2029, %v2028
        %v2037 = vpack.c.bf16 %v2031, %v2030
        %v2038 = vpack.c.bf16 %v2033, %v2032
        %v2039 = vpack.c.bf16 %v2035, %v2034
        %v2040 = vld [vmem:[#allocation11] sm:$0xf]
        %v2041 = vld [vmem:[#allocation11 + $0x4] sm:$0xf]
        %v2042 = vld [vmem:[#allocation11 + $0x8] sm:$0xf]
        %v2043 = vld [vmem:[#allocation11 + $0xc] sm:$0xf]
        %v2044 = vld [vmem:[#allocation11 + $0x10] sm:$0xf]
        %v2045 = vld [vmem:[#allocation11 + $0x14] sm:$0xf]
        %v2046 = vld [vmem:[#allocation11 + $0x18] sm:$0xf]
        %v2047 = vld [vmem:[#allocation11 + $0x1c] sm:$0xf]
        %v2048 = vld [vmem:[#allocation2 + $0x8] sm:$0xff]
        %v2049 = vld [vmem:[#allocation2 + $0x20] sm:$0xff]
        %v2050 = vld [vmem:[#allocation2 + $0x38] sm:$0xff]
        %v2051 = vld [vmem:[#allocation2 + $0x50] sm:$0xff]
        %v2052 = vld [vmem:[#allocation2 + $0x68] sm:$0xff]
        %v2053 = vld [vmem:[#allocation2 + $0x80] sm:$0xff]
        %v2054 = vld [vmem:[#allocation2 + $0x98] sm:$0xff]
        %v2055 = vld [vmem:[#allocation2 + $0xb0] sm:$0xff]
        %v2056 = vpack.c.bf16 %v2049, %v2048
        %v2057 = vpack.c.bf16 %v2051, %v2050
        %v2058 = vpack.c.bf16 %v2053, %v2052
        %v2059 = vpack.c.bf16 %v2055, %v2054
        %s2060 = scalar_lea.vmem [#allocation11], 32
        %v2061 = vld [vmem:[%s2060] sm:$0xf]
        %v2062 = vld [vmem:[%s2060 + $0x4] sm:$0xf]
        %v2063 = vld [vmem:[%s2060 + $0x8] sm:$0xf]
        %v2064 = vld [vmem:[%s2060 + $0xc] sm:$0xf]
        %v2065 = vld [vmem:[%s2060 + $0x10] sm:$0xf]
        %v2066 = vld [vmem:[%s2060 + $0x14] sm:$0xf]
        %v2067 = vld [vmem:[%s2060 + $0x18] sm:$0xf]
        %v2068 = vld [vmem:[%s2060 + $0x1c] sm:$0xf]
        %v2077 = vunpack.c.l.b16 %v2061
        %v2078 = vunpack.c.l.b16 %v2062
        %v2079 = vunpack.c.l.b16 %v2063
        %v2080 = vunpack.c.l.b16 %v2064
        %v2081 = vunpack.c.l.b16 %v2065
        %v2082 = vunpack.c.l.b16 %v2066
        %v2083 = vunpack.c.l.b16 %v2067
        %v2084 = vunpack.c.l.b16 %v2068
        %v2085 = vpack.c.b16 %v2078, %v2077
        %v2086 = vpack.c.b16 %v2080, %v2079
        %v2087 = vpack.c.b16 %v2082, %v2081
        %v2088 = vpack.c.b16 %v2084, %v2083
        %v2094 = vsel %vm590, %v2056, 0
        %v2097 = vsel %vm590, %v2057, 0
        %v2100 = vsel %vm590, %v2058, 0
        %v2103 = vsel %vm590, %v2059, 0
        %2105 = vmatpush.bf16.msra.mxu0 0
        %2106 = vmatpush.bf16.msra.mxu0 0
        %2107 = vmatpush.bf16.msra.mxu0 0
        %2108 = vmatpush.bf16.msra.mxu0 0
        %2109 = vmatpush.bf16.msra.mxu0 %v2088
        %2110 = vmatpush.bf16.msra.mxu0 %v2087
        %2111 = vmatpush.bf16.msra.mxu0 %v2086
        %2112 = vmatpush.bf16.msra.mxu0 %v2085
        %2113 = vmatmul.bf16.gmra.mxu0 %v2094
        %v2114 = vpop.f32.mrf.mxu0
        %v2115 = vadd.f32 0.0, %v2114
        %v2116 = vpop.f32.mrf.mxu0
        %v2117 = vadd.f32 0.0, %v2116
        %2118 = vmatmul.bf16.gmra.mxu0 %v2097
        %v2119 = vpop.f32.mrf.mxu0
        %v2120 = vadd.f32 0.0, %v2119
        %v2121 = vpop.f32.mrf.mxu0
        %v2122 = vadd.f32 0.0, %v2121
        %2123 = vmatmul.bf16.gmra.mxu0 %v2100
        %v2124 = vpop.f32.mrf.mxu0
        %v2125 = vadd.f32 0.0, %v2124
        %v2126 = vpop.f32.mrf.mxu0
        %v2127 = vadd.f32 0.0, %v2126
        %2128 = vmatmul.bf16.gmra.mxu0 %v2103
        %v2129 = vpop.f32.mrf.mxu0
        %v2130 = vadd.f32 0.0, %v2129
        %v2131 = vpop.f32.mrf.mxu0
        %v2132 = vadd.f32 0.0, %v2131
        %2133 = vdwg.mxu0
        %v2142 = vunpack.c.l.b16 %v2040
        %v2143 = vunpack.c.l.b16 %v2041
        %v2144 = vunpack.c.l.b16 %v2042
        %v2145 = vunpack.c.l.b16 %v2043
        %v2146 = vunpack.c.l.b16 %v2044
        %v2147 = vunpack.c.l.b16 %v2045
        %v2148 = vunpack.c.l.b16 %v2046
        %v2149 = vunpack.c.l.b16 %v2047
        %v2150 = vpack.c.b16 %v2143, %v2142
        %v2151 = vpack.c.b16 %v2145, %v2144
        %v2152 = vpack.c.b16 %v2147, %v2146
        %v2153 = vpack.c.b16 %v2149, %v2148
        %v2159 = vsel %vm590, %v2036, 0
        %v2162 = vsel %vm590, %v2037, 0
        %v2165 = vsel %vm590, %v2038, 0
        %v2168 = vsel %vm590, %v2039, 0
        %2170 = vmatpush.bf16.msra.mxu0 0
        %2171 = vmatpush.bf16.msra.mxu0 0
        %2172 = vmatpush.bf16.msra.mxu0 0
        %2173 = vmatpush.bf16.msra.mxu0 0
        %2174 = vmatpush.bf16.msra.mxu0 %v2153
        %2175 = vmatpush.bf16.msra.mxu0 %v2152
        %2176 = vmatpush.bf16.msra.mxu0 %v2151
        %2177 = vmatpush.bf16.msra.mxu0 %v2150
        %2178 = vmatmul.bf16.gmra.mxu0 %v2159
        %v2179 = vpop.f32.mrf.mxu0
        %v2180 = vadd.f32 %v2115, %v2179
        %v2181 = vpop.f32.mrf.mxu0
        %v2182 = vadd.f32 %v2117, %v2181
        %2183 = vmatmul.bf16.gmra.mxu0 %v2162
        %v2184 = vpop.f32.mrf.mxu0
        %v2185 = vadd.f32 %v2120, %v2184
        %v2186 = vpop.f32.mrf.mxu0
        %v2187 = vadd.f32 %v2122, %v2186
        %2188 = vmatmul.bf16.gmra.mxu0 %v2165
        %v2189 = vpop.f32.mrf.mxu0
        %v2190 = vadd.f32 %v2125, %v2189
        %v2191 = vpop.f32.mrf.mxu0
        %v2192 = vadd.f32 %v2127, %v2191
        %2193 = vmatmul.bf16.gmra.mxu0 %v2168
        %v2194 = vpop.f32.mrf.mxu0
        %v2195 = vadd.f32 %v2130, %v2194
        %v2196 = vpop.f32.mrf.mxu0
        %v2197 = vadd.f32 %v2132, %v2196
        %2198 = vdwg.mxu0
        %v2199 = vld [vmem:[#allocation2 + $0x9] sm:$0xff]
        %v2200 = vld [vmem:[#allocation2 + $0x21] sm:$0xff]
        %v2201 = vld [vmem:[#allocation2 + $0x39] sm:$0xff]
        %v2202 = vld [vmem:[#allocation2 + $0x51] sm:$0xff]
        %v2203 = vld [vmem:[#allocation2 + $0x69] sm:$0xff]
        %v2204 = vld [vmem:[#allocation2 + $0x81] sm:$0xff]
        %v2205 = vld [vmem:[#allocation2 + $0x99] sm:$0xff]
        %v2206 = vld [vmem:[#allocation2 + $0xb1] sm:$0xff]
        %v2207 = vpack.c.bf16 %v2200, %v2199
        %v2208 = vpack.c.bf16 %v2202, %v2201
        %v2209 = vpack.c.bf16 %v2204, %v2203
        %v2210 = vpack.c.bf16 %v2206, %v2205
        %s2211 = scalar_lea.vmem [#allocation11], 64
        %v2212 = vld [vmem:[%s2211] sm:$0xf]
        %v2213 = vld [vmem:[%s2211 + $0x4] sm:$0xf]
        %v2214 = vld [vmem:[%s2211 + $0x8] sm:$0xf]
        %v2215 = vld [vmem:[%s2211 + $0xc] sm:$0xf]
        %v2216 = vld [vmem:[%s2211 + $0x10] sm:$0xf]
        %v2217 = vld [vmem:[%s2211 + $0x14] sm:$0xf]
        %v2218 = vld [vmem:[%s2211 + $0x18] sm:$0xf]
        %v2219 = vld [vmem:[%s2211 + $0x1c] sm:$0xf]
        %v2228 = vunpack.c.l.b16 %v2212
        %v2229 = vunpack.c.l.b16 %v2213
        %v2230 = vunpack.c.l.b16 %v2214
        %v2231 = vunpack.c.l.b16 %v2215
        %v2232 = vunpack.c.l.b16 %v2216
        %v2233 = vunpack.c.l.b16 %v2217
        %v2234 = vunpack.c.l.b16 %v2218
        %v2235 = vunpack.c.l.b16 %v2219
        %v2236 = vpack.c.b16 %v2229, %v2228
        %v2237 = vpack.c.b16 %v2231, %v2230
        %v2238 = vpack.c.b16 %v2233, %v2232
        %v2239 = vpack.c.b16 %v2235, %v2234
        %v2245 = vsel %vm590, %v2207, 0
        %v2248 = vsel %vm590, %v2208, 0
        %v2251 = vsel %vm590, %v2209, 0
        %v2254 = vsel %vm590, %v2210, 0
        %2256 = vmatpush.bf16.msra.mxu0 0
        %2257 = vmatpush.bf16.msra.mxu0 0
        %2258 = vmatpush.bf16.msra.mxu0 0
        %2259 = vmatpush.bf16.msra.mxu0 0
        %2260 = vmatpush.bf16.msra.mxu0 %v2239
        %2261 = vmatpush.bf16.msra.mxu0 %v2238
        %2262 = vmatpush.bf16.msra.mxu0 %v2237
        %2263 = vmatpush.bf16.msra.mxu0 %v2236
        %2264 = vmatmul.bf16.gmra.mxu0 %v2245
        %v2265 = vpop.f32.mrf.mxu0
        %v2266 = vadd.f32 0.0, %v2265
        %v2267 = vpop.f32.mrf.mxu0
        %v2268 = vadd.f32 0.0, %v2267
        %2269 = vmatmul.bf16.gmra.mxu0 %v2248
        %v2270 = vpop.f32.mrf.mxu0
        %v2271 = vadd.f32 0.0, %v2270
        %v2272 = vpop.f32.mrf.mxu0
        %v2273 = vadd.f32 0.0, %v2272
        %2274 = vmatmul.bf16.gmra.mxu0 %v2251
        %v2275 = vpop.f32.mrf.mxu0
        %v2276 = vadd.f32 0.0, %v2275
        %v2277 = vpop.f32.mrf.mxu0
        %v2278 = vadd.f32 0.0, %v2277
        %2279 = vmatmul.bf16.gmra.mxu0 %v2254
        %v2280 = vpop.f32.mrf.mxu0
        %v2281 = vadd.f32 0.0, %v2280
        %v2282 = vpop.f32.mrf.mxu0
        %v2283 = vadd.f32 0.0, %v2282
        %2284 = vdwg.mxu0
        %v2285 = vadd.f32 %v2180, %v2266
        %v2286 = vadd.f32 %v2182, %v2268
        %v2287 = vadd.f32 %v2185, %v2271
        %v2288 = vadd.f32 %v2187, %v2273
        %v2289 = vadd.f32 %v2190, %v2276
        %v2290 = vadd.f32 %v2192, %v2278
        %v2291 = vadd.f32 %v2195, %v2281
        %v2292 = vadd.f32 %v2197, %v2283
        %v2293 = vld [vmem:[%s1163 + $0x7] sm:$0xff]
        %v2294 = vld [vmem:[%s1163 + $0x1f] sm:$0xff]
        %v2295 = vld [vmem:[%s1163 + $0x37] sm:$0xff]
        %v2296 = vld [vmem:[%s1163 + $0x4f] sm:$0xff]
        %v2297 = vld [vmem:[%s1163 + $0x67] sm:$0xff]
        %v2298 = vld [vmem:[%s1163 + $0x7f] sm:$0xff]
        %v2299 = vld [vmem:[%s1163 + $0x97] sm:$0xff]
        %v2300 = vld [vmem:[%s1163 + $0xaf] sm:$0xff]
        %v2301 = vpack.c.bf16 %v2294, %v2293
        %v2302 = vpack.c.bf16 %v2296, %v2295
        %v2303 = vpack.c.bf16 %v2298, %v2297
        %v2304 = vpack.c.bf16 %v2300, %v2299
        %s2305 = scalar_lea.vmem [#allocation11], 96
        %v2306 = vld [vmem:[%s2305] sm:$0xf]
        %v2307 = vld [vmem:[%s2305 + $0x4] sm:$0xf]
        %v2308 = vld [vmem:[%s2305 + $0x8] sm:$0xf]
        %v2309 = vld [vmem:[%s2305 + $0xc] sm:$0xf]
        %v2310 = vld [vmem:[%s2305 + $0x10] sm:$0xf]
        %v2311 = vld [vmem:[%s2305 + $0x14] sm:$0xf]
        %v2312 = vld [vmem:[%s2305 + $0x18] sm:$0xf]
        %v2313 = vld [vmem:[%s2305 + $0x1c] sm:$0xf]
        %v2322 = vunpack.c.l.b16 %v2306
        %v2323 = vunpack.c.l.b16 %v2307
        %v2324 = vunpack.c.l.b16 %v2308
        %v2325 = vunpack.c.l.b16 %v2309
        %v2326 = vunpack.c.l.b16 %v2310
        %v2327 = vunpack.c.l.b16 %v2311
        %v2328 = vunpack.c.l.b16 %v2312
        %v2329 = vunpack.c.l.b16 %v2313
        %v2330 = vpack.c.b16 %v2323, %v2322
        %v2331 = vpack.c.b16 %v2325, %v2324
        %v2332 = vpack.c.b16 %v2327, %v2326
        %v2333 = vpack.c.b16 %v2329, %v2328
        %v2339 = vsel %vm590, %v2301, 0
        %v2342 = vsel %vm590, %v2302, 0
        %v2345 = vsel %vm590, %v2303, 0
        %v2348 = vsel %vm590, %v2304, 0
        %2350 = vmatpush.bf16.msra.mxu0 0
        %2351 = vmatpush.bf16.msra.mxu0 0
        %2352 = vmatpush.bf16.msra.mxu0 0
        %2353 = vmatpush.bf16.msra.mxu0 0
        %2354 = vmatpush.bf16.msra.mxu0 %v2333
        %2355 = vmatpush.bf16.msra.mxu0 %v2332
        %2356 = vmatpush.bf16.msra.mxu0 %v2331
        %2357 = vmatpush.bf16.msra.mxu0 %v2330
        %2358 = vmatmul.bf16.gmra.mxu0 %v2339
        %v2359 = vpop.f32.mrf.mxu0
        %v2360 = vadd.f32 0.0, %v2359
        %v2361 = vpop.f32.mrf.mxu0
        %v2362 = vadd.f32 0.0, %v2361
        %2363 = vmatmul.bf16.gmra.mxu0 %v2342
        %v2364 = vpop.f32.mrf.mxu0
        %v2365 = vadd.f32 0.0, %v2364
        %v2366 = vpop.f32.mrf.mxu0
        %v2367 = vadd.f32 0.0, %v2366
        %2368 = vmatmul.bf16.gmra.mxu0 %v2345
        %v2369 = vpop.f32.mrf.mxu0
        %v2370 = vadd.f32 0.0, %v2369
        %v2371 = vpop.f32.mrf.mxu0
        %v2372 = vadd.f32 0.0, %v2371
        %2373 = vmatmul.bf16.gmra.mxu0 %v2348
        %v2374 = vpop.f32.mrf.mxu0
        %v2375 = vadd.f32 0.0, %v2374
        %v2376 = vpop.f32.mrf.mxu0
        %v2377 = vadd.f32 0.0, %v2376
        %2378 = vdwg.mxu0
        %v2379 = vadd.f32 %v2285, %v2360
        %v2380 = vadd.f32 %v2286, %v2362
        %v2381 = vadd.f32 %v2287, %v2365
        %v2382 = vadd.f32 %v2288, %v2367
        %v2383 = vadd.f32 %v2289, %v2370
        %v2384 = vadd.f32 %v2290, %v2372
        %v2385 = vadd.f32 %v2291, %v2375
        %v2386 = vadd.f32 %v2292, %v2377
        %v2387 = vld [vmem:[%s1163 + $0x8] sm:$0xff]
        %v2388 = vld [vmem:[%s1163 + $0x20] sm:$0xff]
        %v2389 = vld [vmem:[%s1163 + $0x38] sm:$0xff]
        %v2390 = vld [vmem:[%s1163 + $0x50] sm:$0xff]
        %v2391 = vld [vmem:[%s1163 + $0x68] sm:$0xff]
        %v2392 = vld [vmem:[%s1163 + $0x80] sm:$0xff]
        %v2393 = vld [vmem:[%s1163 + $0x98] sm:$0xff]
        %v2394 = vld [vmem:[%s1163 + $0xb0] sm:$0xff]
        %v2395 = vpack.c.bf16 %v2388, %v2387
        %v2396 = vpack.c.bf16 %v2390, %v2389
        %v2397 = vpack.c.bf16 %v2392, %v2391
        %v2398 = vpack.c.bf16 %v2394, %v2393
        %s2399 = scalar_lea.vmem [#allocation11], 128
        %v2400 = vld [vmem:[%s2399] sm:$0xf]
        %v2401 = vld [vmem:[%s2399 + $0x4] sm:$0xf]
        %v2402 = vld [vmem:[%s2399 + $0x8] sm:$0xf]
        %v2403 = vld [vmem:[%s2399 + $0xc] sm:$0xf]
        %v2404 = vld [vmem:[%s2399 + $0x10] sm:$0xf]
        %v2405 = vld [vmem:[%s2399 + $0x14] sm:$0xf]
        %v2406 = vld [vmem:[%s2399 + $0x18] sm:$0xf]
        %v2407 = vld [vmem:[%s2399 + $0x1c] sm:$0xf]
        %v2416 = vunpack.c.l.b16 %v2400
        %v2417 = vunpack.c.l.b16 %v2401
        %v2418 = vunpack.c.l.b16 %v2402
        %v2419 = vunpack.c.l.b16 %v2403
        %v2420 = vunpack.c.l.b16 %v2404
        %v2421 = vunpack.c.l.b16 %v2405
        %v2422 = vunpack.c.l.b16 %v2406
        %v2423 = vunpack.c.l.b16 %v2407
        %v2424 = vpack.c.b16 %v2417, %v2416
        %v2425 = vpack.c.b16 %v2419, %v2418
        %v2426 = vpack.c.b16 %v2421, %v2420
        %v2427 = vpack.c.b16 %v2423, %v2422
        %v2433 = vsel %vm590, %v2395, 0
        %v2436 = vsel %vm590, %v2396, 0
        %v2439 = vsel %vm590, %v2397, 0
        %v2442 = vsel %vm590, %v2398, 0
        %2444 = vmatpush.bf16.msra.mxu0 0
        %2445 = vmatpush.bf16.msra.mxu0 0
        %2446 = vmatpush.bf16.msra.mxu0 0
        %2447 = vmatpush.bf16.msra.mxu0 0
        %2448 = vmatpush.bf16.msra.mxu0 %v2427
        %2449 = vmatpush.bf16.msra.mxu0 %v2426
        %2450 = vmatpush.bf16.msra.mxu0 %v2425
        %2451 = vmatpush.bf16.msra.mxu0 %v2424
        %2452 = vmatmul.bf16.gmra.mxu0 %v2433
        %v2453 = vpop.f32.mrf.mxu0
        %v2454 = vadd.f32 0.0, %v2453
        %v2455 = vpop.f32.mrf.mxu0
        %v2456 = vadd.f32 0.0, %v2455
        %2457 = vmatmul.bf16.gmra.mxu0 %v2436
        %v2458 = vpop.f32.mrf.mxu0
        %v2459 = vadd.f32 0.0, %v2458
        %v2460 = vpop.f32.mrf.mxu0
        %v2461 = vadd.f32 0.0, %v2460
        %2462 = vmatmul.bf16.gmra.mxu0 %v2439
        %v2463 = vpop.f32.mrf.mxu0
        %v2464 = vadd.f32 0.0, %v2463
        %v2465 = vpop.f32.mrf.mxu0
        %v2466 = vadd.f32 0.0, %v2465
        %2467 = vmatmul.bf16.gmra.mxu0 %v2442
        %v2468 = vpop.f32.mrf.mxu0
        %v2469 = vadd.f32 0.0, %v2468
        %v2470 = vpop.f32.mrf.mxu0
        %v2471 = vadd.f32 0.0, %v2470
        %2472 = vdwg.mxu0
        %v2473 = vadd.f32 %v2379, %v2454
        %v2474 = vadd.f32 %v2380, %v2456
        %v2475 = vadd.f32 %v2381, %v2459
        %v2476 = vadd.f32 %v2382, %v2461
        %v2477 = vadd.f32 %v2383, %v2464
        %v2478 = vadd.f32 %v2384, %v2466
        %v2479 = vadd.f32 %v2385, %v2469
        %v2480 = vadd.f32 %v2386, %v2471
        %v2481 = vld [vmem:[%s1163 + $0x9] sm:$0xff]
        %v2482 = vld [vmem:[%s1163 + $0x21] sm:$0xff]
        %v2483 = vld [vmem:[%s1163 + $0x39] sm:$0xff]
        %v2484 = vld [vmem:[%s1163 + $0x51] sm:$0xff]
        %v2485 = vld [vmem:[%s1163 + $0x69] sm:$0xff]
        %v2486 = vld [vmem:[%s1163 + $0x81] sm:$0xff]
        %v2487 = vld [vmem:[%s1163 + $0x99] sm:$0xff]
        %v2488 = vld [vmem:[%s1163 + $0xb1] sm:$0xff]
        %v2489 = vpack.c.bf16 %v2482, %v2481
        %v2490 = vpack.c.bf16 %v2484, %v2483
        %v2491 = vpack.c.bf16 %v2486, %v2485
        %v2492 = vpack.c.bf16 %v2488, %v2487
        %s2493 = scalar_lea.vmem [#allocation11], 160
        %v2494 = vld [vmem:[%s2493] sm:$0xf]
        %v2495 = vld [vmem:[%s2493 + $0x4] sm:$0xf]
        %v2496 = vld [vmem:[%s2493 + $0x8] sm:$0xf]
        %v2497 = vld [vmem:[%s2493 + $0xc] sm:$0xf]
        %v2498 = vld [vmem:[%s2493 + $0x10] sm:$0xf]
        %v2499 = vld [vmem:[%s2493 + $0x14] sm:$0xf]
        %v2500 = vld [vmem:[%s2493 + $0x18] sm:$0xf]
        %v2501 = vld [vmem:[%s2493 + $0x1c] sm:$0xf]
        %v2510 = vunpack.c.l.b16 %v2494
        %v2511 = vunpack.c.l.b16 %v2495
        %v2512 = vunpack.c.l.b16 %v2496
        %v2513 = vunpack.c.l.b16 %v2497
        %v2514 = vunpack.c.l.b16 %v2498
        %v2515 = vunpack.c.l.b16 %v2499
        %v2516 = vunpack.c.l.b16 %v2500
        %v2517 = vunpack.c.l.b16 %v2501
        %v2518 = vpack.c.b16 %v2511, %v2510
        %v2519 = vpack.c.b16 %v2513, %v2512
        %v2520 = vpack.c.b16 %v2515, %v2514
        %v2521 = vpack.c.b16 %v2517, %v2516
        %v2527 = vsel %vm590, %v2489, 0
        %v2530 = vsel %vm590, %v2490, 0
        %v2533 = vsel %vm590, %v2491, 0
        %v2536 = vsel %vm590, %v2492, 0
        %2538 = vmatpush.bf16.msra.mxu0 0
        %2539 = vmatpush.bf16.msra.mxu0 0
        %2540 = vmatpush.bf16.msra.mxu0 0
        %2541 = vmatpush.bf16.msra.mxu0 0
        %2542 = vmatpush.bf16.msra.mxu0 %v2521
        %2543 = vmatpush.bf16.msra.mxu0 %v2520
        %2544 = vmatpush.bf16.msra.mxu0 %v2519
        %2545 = vmatpush.bf16.msra.mxu0 %v2518
        %2546 = vmatmul.bf16.gmra.mxu0 %v2527
        %v2547 = vpop.f32.mrf.mxu0
        %v2548 = vadd.f32 0.0, %v2547
        %v2549 = vpop.f32.mrf.mxu0
        %v2550 = vadd.f32 0.0, %v2549
        %2551 = vmatmul.bf16.gmra.mxu0 %v2530
        %v2552 = vpop.f32.mrf.mxu0
        %v2553 = vadd.f32 0.0, %v2552
        %v2554 = vpop.f32.mrf.mxu0
        %v2555 = vadd.f32 0.0, %v2554
        %2556 = vmatmul.bf16.gmra.mxu0 %v2533
        %v2557 = vpop.f32.mrf.mxu0
        %v2558 = vadd.f32 0.0, %v2557
        %v2559 = vpop.f32.mrf.mxu0
        %v2560 = vadd.f32 0.0, %v2559
        %2561 = vmatmul.bf16.gmra.mxu0 %v2536
        %v2562 = vpop.f32.mrf.mxu0
        %v2563 = vadd.f32 0.0, %v2562
        %v2564 = vpop.f32.mrf.mxu0
        %v2565 = vadd.f32 0.0, %v2564
        %2566 = vdwg.mxu0
        %v2567 = vadd.f32 %v2473, %v2548
        %v2568 = vadd.f32 %v2474, %v2550
        %v2569 = vadd.f32 %v2475, %v2553
        %v2570 = vadd.f32 %v2476, %v2555
        %v2571 = vadd.f32 %v2477, %v2558
        %v2572 = vadd.f32 %v2478, %v2560
        %v2573 = vadd.f32 %v2479, %v2563
        %v2574 = vadd.f32 %v2480, %v2565
        %v2575 = vld [vmem:[%s1719 + $0x7] sm:$0xff]
        %v2576 = vld [vmem:[%s1719 + $0x1f] sm:$0xff]
        %v2577 = vld [vmem:[%s1719 + $0x37] sm:$0xff]
        %v2578 = vld [vmem:[%s1719 + $0x4f] sm:$0xff]
        %v2579 = vld [vmem:[%s1719 + $0x67] sm:$0xff]
        %v2580 = vld [vmem:[%s1719 + $0x7f] sm:$0xff]
        %v2581 = vld [vmem:[%s1719 + $0x97] sm:$0xff]
        %v2582 = vld [vmem:[%s1719 + $0xaf] sm:$0xff]
        %v2583 = vpack.c.bf16 %v2576, %v2575
        %v2584 = vpack.c.bf16 %v2578, %v2577
        %v2585 = vpack.c.bf16 %v2580, %v2579
        %v2586 = vpack.c.bf16 %v2582, %v2581
        %s2587 = scalar_lea.vmem [#allocation11], 192
        %v2588 = vld [vmem:[%s2587] sm:$0xf]
        %v2589 = vld [vmem:[%s2587 + $0x4] sm:$0xf]
        %v2590 = vld [vmem:[%s2587 + $0x8] sm:$0xf]
        %v2591 = vld [vmem:[%s2587 + $0xc] sm:$0xf]
        %v2592 = vld [vmem:[%s2587 + $0x10] sm:$0xf]
        %v2593 = vld [vmem:[%s2587 + $0x14] sm:$0xf]
        %v2594 = vld [vmem:[%s2587 + $0x18] sm:$0xf]
        %v2595 = vld [vmem:[%s2587 + $0x1c] sm:$0xf]
        %v2604 = vunpack.c.l.b16 %v2588
        %v2605 = vunpack.c.l.b16 %v2589
        %v2606 = vunpack.c.l.b16 %v2590
        %v2607 = vunpack.c.l.b16 %v2591
        %v2608 = vunpack.c.l.b16 %v2592
        %v2609 = vunpack.c.l.b16 %v2593
        %v2610 = vunpack.c.l.b16 %v2594
        %v2611 = vunpack.c.l.b16 %v2595
        %v2612 = vpack.c.b16 %v2605, %v2604
        %v2613 = vpack.c.b16 %v2607, %v2606
        %v2614 = vpack.c.b16 %v2609, %v2608
        %v2615 = vpack.c.b16 %v2611, %v2610
        %v2621 = vsel %vm590, %v2583, 0
        %v2624 = vsel %vm590, %v2584, 0
        %v2627 = vsel %vm590, %v2585, 0
        %v2630 = vsel %vm590, %v2586, 0
        %2632 = vmatpush.bf16.msra.mxu0 0
        %2633 = vmatpush.bf16.msra.mxu0 0
        %2634 = vmatpush.bf16.msra.mxu0 0
        %2635 = vmatpush.bf16.msra.mxu0 0
        %2636 = vmatpush.bf16.msra.mxu0 %v2615
        %2637 = vmatpush.bf16.msra.mxu0 %v2614
        %2638 = vmatpush.bf16.msra.mxu0 %v2613
        %2639 = vmatpush.bf16.msra.mxu0 %v2612
        %2640 = vmatmul.bf16.gmra.mxu0 %v2621
        %v2641 = vpop.f32.mrf.mxu0
        %v2642 = vadd.f32 0.0, %v2641
        %v2643 = vpop.f32.mrf.mxu0
        %v2644 = vadd.f32 0.0, %v2643
        %2645 = vmatmul.bf16.gmra.mxu0 %v2624
        %v2646 = vpop.f32.mrf.mxu0
        %v2647 = vadd.f32 0.0, %v2646
        %v2648 = vpop.f32.mrf.mxu0
        %v2649 = vadd.f32 0.0, %v2648
        %2650 = vmatmul.bf16.gmra.mxu0 %v2627
        %v2651 = vpop.f32.mrf.mxu0
        %v2652 = vadd.f32 0.0, %v2651
        %v2653 = vpop.f32.mrf.mxu0
        %v2654 = vadd.f32 0.0, %v2653
        %2655 = vmatmul.bf16.gmra.mxu0 %v2630
        %v2656 = vpop.f32.mrf.mxu0
        %v2657 = vadd.f32 0.0, %v2656
        %v2658 = vpop.f32.mrf.mxu0
        %v2659 = vadd.f32 0.0, %v2658
        %2660 = vdwg.mxu0
        %v2661 = vadd.f32 %v2567, %v2642
        %v2662 = vadd.f32 %v2568, %v2644
        %v2663 = vadd.f32 %v2569, %v2647
        %v2664 = vadd.f32 %v2570, %v2649
        %v2665 = vadd.f32 %v2571, %v2652
        %v2666 = vadd.f32 %v2572, %v2654
        %v2667 = vadd.f32 %v2573, %v2657
        %v2668 = vadd.f32 %v2574, %v2659
        %v2669 = vld [vmem:[%s1719 + $0x8] sm:$0xff]
        %v2670 = vld [vmem:[%s1719 + $0x20] sm:$0xff]
        %v2671 = vld [vmem:[%s1719 + $0x38] sm:$0xff]
        %v2672 = vld [vmem:[%s1719 + $0x50] sm:$0xff]
        %v2673 = vld [vmem:[%s1719 + $0x68] sm:$0xff]
        %v2674 = vld [vmem:[%s1719 + $0x80] sm:$0xff]
        %v2675 = vld [vmem:[%s1719 + $0x98] sm:$0xff]
        %v2676 = vld [vmem:[%s1719 + $0xb0] sm:$0xff]
        %v2677 = vpack.c.bf16 %v2670, %v2669
        %v2678 = vpack.c.bf16 %v2672, %v2671
        %v2679 = vpack.c.bf16 %v2674, %v2673
        %v2680 = vpack.c.bf16 %v2676, %v2675
        %s2681 = scalar_lea.vmem [#allocation11], 224
        %v2682 = vld [vmem:[%s2681] sm:$0xf]
        %v2683 = vld [vmem:[%s2681 + $0x4] sm:$0xf]
        %v2684 = vld [vmem:[%s2681 + $0x8] sm:$0xf]
        %v2685 = vld [vmem:[%s2681 + $0xc] sm:$0xf]
        %v2686 = vld [vmem:[%s2681 + $0x10] sm:$0xf]
        %v2687 = vld [vmem:[%s2681 + $0x14] sm:$0xf]
        %v2688 = vld [vmem:[%s2681 + $0x18] sm:$0xf]
        %v2689 = vld [vmem:[%s2681 + $0x1c] sm:$0xf]
        %v2698 = vunpack.c.l.b16 %v2682
        %v2699 = vunpack.c.l.b16 %v2683
        %v2700 = vunpack.c.l.b16 %v2684
        %v2701 = vunpack.c.l.b16 %v2685
        %v2702 = vunpack.c.l.b16 %v2686
        %v2703 = vunpack.c.l.b16 %v2687
        %v2704 = vunpack.c.l.b16 %v2688
        %v2705 = vunpack.c.l.b16 %v2689
        %v2706 = vpack.c.b16 %v2699, %v2698
        %v2707 = vpack.c.b16 %v2701, %v2700
        %v2708 = vpack.c.b16 %v2703, %v2702
        %v2709 = vpack.c.b16 %v2705, %v2704
        %v2715 = vsel %vm590, %v2677, 0
        %v2718 = vsel %vm590, %v2678, 0
        %v2721 = vsel %vm590, %v2679, 0
        %v2724 = vsel %vm590, %v2680, 0
        %2726 = vmatpush.bf16.msra.mxu0 0
        %2727 = vmatpush.bf16.msra.mxu0 0
        %2728 = vmatpush.bf16.msra.mxu0 0
        %2729 = vmatpush.bf16.msra.mxu0 0
        %2730 = vmatpush.bf16.msra.mxu0 %v2709
        %2731 = vmatpush.bf16.msra.mxu0 %v2708
        %2732 = vmatpush.bf16.msra.mxu0 %v2707
        %2733 = vmatpush.bf16.msra.mxu0 %v2706
        %2734 = vmatmul.bf16.gmra.mxu0 %v2715
        %v2735 = vpop.f32.mrf.mxu0
        %v2736 = vadd.f32 0.0, %v2735
        %v2737 = vpop.f32.mrf.mxu0
        %v2738 = vadd.f32 0.0, %v2737
        %2739 = vmatmul.bf16.gmra.mxu0 %v2718
        %v2740 = vpop.f32.mrf.mxu0
        %v2741 = vadd.f32 0.0, %v2740
        %v2742 = vpop.f32.mrf.mxu0
        %v2743 = vadd.f32 0.0, %v2742
        %2744 = vmatmul.bf16.gmra.mxu0 %v2721
        %v2745 = vpop.f32.mrf.mxu0
        %v2746 = vadd.f32 0.0, %v2745
        %v2747 = vpop.f32.mrf.mxu0
        %v2748 = vadd.f32 0.0, %v2747
        %2749 = vmatmul.bf16.gmra.mxu0 %v2724
        %v2750 = vpop.f32.mrf.mxu0
        %v2751 = vadd.f32 0.0, %v2750
        %v2752 = vpop.f32.mrf.mxu0
        %v2753 = vadd.f32 0.0, %v2752
        %2754 = vdwg.mxu0
        %v2755 = vadd.f32 %v2661, %v2736
        %v2756 = vadd.f32 %v2662, %v2738
        %v2757 = vadd.f32 %v2663, %v2741
        %v2758 = vadd.f32 %v2664, %v2743
        %v2759 = vadd.f32 %v2665, %v2746
        %v2760 = vadd.f32 %v2666, %v2748
        %v2761 = vadd.f32 %v2667, %v2751
        %v2762 = vadd.f32 %v2668, %v2753
        %v2763 = vld [vmem:[%s1719 + $0x9] sm:$0xff]
        %v2764 = vld [vmem:[%s1719 + $0x21] sm:$0xff]
        %v2765 = vld [vmem:[%s1719 + $0x39] sm:$0xff]
        %v2766 = vld [vmem:[%s1719 + $0x51] sm:$0xff]
        %v2767 = vld [vmem:[%s1719 + $0x69] sm:$0xff]
        %v2768 = vld [vmem:[%s1719 + $0x81] sm:$0xff]
        %v2769 = vld [vmem:[%s1719 + $0x99] sm:$0xff]
        %v2770 = vld [vmem:[%s1719 + $0xb1] sm:$0xff]
        %v2771 = vpack.c.bf16 %v2764, %v2763
        %v2772 = vpack.c.bf16 %v2766, %v2765
        %v2773 = vpack.c.bf16 %v2768, %v2767
        %v2774 = vpack.c.bf16 %v2770, %v2769
        %s2775 = scalar_lea.vmem [#allocation11], 256
        %v2776 = vld [vmem:[%s2775] sm:$0xf]
        %v2777 = vld [vmem:[%s2775 + $0x4] sm:$0xf]
        %v2778 = vld [vmem:[%s2775 + $0x8] sm:$0xf]
        %v2779 = vld [vmem:[%s2775 + $0xc] sm:$0xf]
        %v2780 = vld [vmem:[%s2775 + $0x10] sm:$0xf]
        %v2781 = vld [vmem:[%s2775 + $0x14] sm:$0xf]
        %v2782 = vld [vmem:[%s2775 + $0x18] sm:$0xf]
        %v2783 = vld [vmem:[%s2775 + $0x1c] sm:$0xf]
        %v2792 = vunpack.c.l.b16 %v2776
        %v2793 = vunpack.c.l.b16 %v2777
        %v2794 = vunpack.c.l.b16 %v2778
        %v2795 = vunpack.c.l.b16 %v2779
        %v2796 = vunpack.c.l.b16 %v2780
        %v2797 = vunpack.c.l.b16 %v2781
        %v2798 = vunpack.c.l.b16 %v2782
        %v2799 = vunpack.c.l.b16 %v2783
        %v2800 = vpack.c.b16 %v2793, %v2792
        %v2801 = vpack.c.b16 %v2795, %v2794
        %v2802 = vpack.c.b16 %v2797, %v2796
        %v2803 = vpack.c.b16 %v2799, %v2798
        %v2809 = vsel %vm590, %v2771, 0
        %v2812 = vsel %vm590, %v2772, 0
        %v2815 = vsel %vm590, %v2773, 0
        %v2818 = vsel %vm590, %v2774, 0
        %2820 = vmatpush.bf16.msra.mxu0 0
        %2821 = vmatpush.bf16.msra.mxu0 0
        %2822 = vmatpush.bf16.msra.mxu0 0
        %2823 = vmatpush.bf16.msra.mxu0 0
        %2824 = vmatpush.bf16.msra.mxu0 %v2803
        %2825 = vmatpush.bf16.msra.mxu0 %v2802
        %2826 = vmatpush.bf16.msra.mxu0 %v2801
        %2827 = vmatpush.bf16.msra.mxu0 %v2800
        %2828 = vmatmul.bf16.gmra.mxu0 %v2809
        %v2829 = vpop.f32.mrf.mxu0
        %v2830 = vadd.f32 0.0, %v2829
        %v2831 = vpop.f32.mrf.mxu0
        %v2832 = vadd.f32 0.0, %v2831
        %2833 = vmatmul.bf16.gmra.mxu0 %v2812
        %v2834 = vpop.f32.mrf.mxu0
        %v2835 = vadd.f32 0.0, %v2834
        %v2836 = vpop.f32.mrf.mxu0
        %v2837 = vadd.f32 0.0, %v2836
        %2838 = vmatmul.bf16.gmra.mxu0 %v2815
        %v2839 = vpop.f32.mrf.mxu0
        %v2840 = vadd.f32 0.0, %v2839
        %v2841 = vpop.f32.mrf.mxu0
        %v2842 = vadd.f32 0.0, %v2841
        %2843 = vmatmul.bf16.gmra.mxu0 %v2818
        %v2844 = vpop.f32.mrf.mxu0
        %v2845 = vadd.f32 0.0, %v2844
        %v2846 = vpop.f32.mrf.mxu0
        %v2847 = vadd.f32 0.0, %v2846
        %2848 = vdwg.mxu0
        %v2849 = vadd.f32 %v2755, %v2830
        %v2850 = vadd.f32 %v2756, %v2832
        %v2851 = vadd.f32 %v2757, %v2835
        %v2852 = vadd.f32 %v2758, %v2837
        %v2853 = vadd.f32 %v2759, %v2840
        %v2854 = vadd.f32 %v2760, %v2842
        %v2855 = vadd.f32 %v2761, %v2845
        %v2856 = vadd.f32 %v2762, %v2847
        %v2857 = vld [vmem:[%s10 + $0x2] sm:$0x1]
        %v2858 = vperm.slane %v2857, 0
        %v2859 = vadd.f32 %v2849, %v2858
        %v2860 = vadd.f32 %v2850, %v2858
        %v2861 = vadd.f32 %v2851, %v2858
        %v2862 = vadd.f32 %v2852, %v2858
        %v2863 = vadd.f32 %v2853, %v2858
        %v2864 = vadd.f32 %v2854, %v2858
        %v2865 = vadd.f32 %v2855, %v2858
        %v2866 = vadd.f32 %v2856, %v2858
        %v2867 = vmax.f32 %v2859, 0.0
        %v2868 = vmax.f32 %v2860, 0.0
        %v2869 = vmax.f32 %v2861, 0.0
        %v2870 = vmax.f32 %v2862, 0.0
        %v2871 = vmax.f32 %v2863, 0.0
        %v2872 = vmax.f32 %v2864, 0.0
        %v2873 = vmax.f32 %v2865, 0.0
        %v2874 = vmax.f32 %v2866, 0.0
        %v2875 = vld [vmem:[%s500] sm:$0xff]
        %v2876 = vld [vmem:[%s500 + $0x8] sm:$0xff]
        %v2877 = vld [vmem:[%s500 + $0x10] sm:$0xff]
        %v2878 = vld [vmem:[%s500 + $0x18] sm:$0xff]
        %v2879 = vld [vmem:[%s500 + $0x20] sm:$0xff]
        %v2880 = vld [vmem:[%s500 + $0x28] sm:$0xff]
        %v2881 = vld [vmem:[%s500 + $0x30] sm:$0xff]
        %v2882 = vld [vmem:[%s500 + $0x38] sm:$0xff]
        %v2883 = vadd.f32 %v2875, %v2867
        %v2884 = vadd.f32 %v2876, %v2868
        %v2885 = vadd.f32 %v2877, %v2869
        %v2886 = vadd.f32 %v2878, %v2870
        %v2887 = vadd.f32 %v2879, %v2871
        %v2888 = vadd.f32 %v2880, %v2872
        %v2889 = vadd.f32 %v2881, %v2873
        %v2890 = vadd.f32 %v2882, %v2874
        %v2891 = vsel %vm590, %v2883, 0.0
        %v2892 = vsel %vm590, %v2884, 0.0
        %v2893 = vadd.f32 %v2891, %v2892
        %v2894 = vsel %vm590, %v2885, 0.0
        %v2895 = vadd.f32 %v2893, %v2894
        %v2896 = vsel %vm590, %v2886, 0.0
        %v2897 = vadd.f32 %v2895, %v2896
        %v2898 = vsel %vm590, %v2887, 0.0
        %v2899 = vadd.f32 %v2897, %v2898
        %v2900 = vsel %vm590, %v2888, 0.0
        %v2901 = vadd.f32 %v2899, %v2900
        %v2902 = vsel %vm590, %v2889, 0.0
        %v2903 = vadd.f32 %v2901, %v2902
        %v2904 = vsel %vm590, %v2890, 0.0
        %v2905 = vadd.f32 %v2903, %v2904
        %v2906 = vrot.slane %v2905, 4
        %v2907 = vadd.f32 %v2905, %v2906
        %v2908 = vrot.slane %v2907, 2
        %v2909 = vadd.f32 %v2907, %v2908
        %v2910 = vrot.slane %v2909, 1
        %v2911 = vadd.f32 %v2909, %v2910
        %v2912 = vrcp.pop 64.0
        %v2913 = vmul.f32 64.0, %v2912
        %v2914 = vsub.f32 1.0, %v2913
        %v2915 = vmul.f32 %v2912, %v2914
        %v2916 = vadd.f32 %v2912, %v2915
        %vm2917 = vweird.f32 %v2912
        %v2918 = vsel %vm2917, %v2912, %v2916
        %v2919 = vmul.f32 %v2911, %v2918
        %v2920 = vpack.c.bf16 %v2919, %v2919
        %v2921 = vld [vmem:[%s6] sm:$0xf]
        %v2922 = vld [vmem:[%s6 + $0x4] sm:$0xf]
        %v2923 = vld [vmem:[%s6 + $0x8] sm:$0xf]
        %v2924 = vld [vmem:[%s6 + $0xc] sm:$0xf]
        %v2925 = vld [vmem:[%s6 + $0x10] sm:$0xf]
        %v2926 = vld [vmem:[%s6 + $0x14] sm:$0xf]
        %v2927 = vld [vmem:[%s6 + $0x18] sm:$0xf]
        %v2928 = vld [vmem:[%s6 + $0x1c] sm:$0xf]
        %v2937 = vunpack.c.l.b16 %v2921
        %v2938 = vunpack.c.l.b16 %v2922
        %v2939 = vunpack.c.l.b16 %v2923
        %v2940 = vunpack.c.l.b16 %v2924
        %v2941 = vunpack.c.l.b16 %v2925
        %v2942 = vunpack.c.l.b16 %v2926
        %v2943 = vunpack.c.l.b16 %v2927
        %v2944 = vunpack.c.l.b16 %v2928
        %v2945 = vpack.c.b16 %v2938, %v2937
        %v2946 = vpack.c.b16 %v2940, %v2939
        %v2947 = vpack.c.b16 %v2942, %v2941
        %v2948 = vpack.c.b16 %v2944, %v2943
        %v2954 = vsel %vm590, %v2920, 0
        %2956 = vmatpush.bf16.msra.mxu0 0
        %2957 = vmatpush.bf16.msra.mxu0 0
        %2958 = vmatpush.bf16.msra.mxu0 0
        %2959 = vmatpush.bf16.msra.mxu0 0
        %2960 = vmatpush.bf16.msra.mxu0 %v2948
        %2961 = vmatpush.bf16.msra.mxu0 %v2947
        %2962 = vmatpush.bf16.msra.mxu0 %v2946
        %2963 = vmatpush.bf16.msra.mxu0 %v2945
        %2964 = vmatmul.bf16.gmra.mxu0 %v2954
        %v2965 = vpop.f32.mrf.mxu0
        %v2966 = vadd.f32 0.0, %v2965
        %v2967 = vpop.f32.mrf.mxu0
        %2968 = vdwg.mxu0
        %v2969 = vxor.u32 %v2966, 2147483648
        %v2970 = vmul.f32 %v2969, 1.442695
        %v2971 = vpow.pop %v2970
        %v2972 = vadd.f32 %v2971, 1.0
        %v2973 = vrcp.pop %v2972
        %v2974 = vmul.f32 %v2972, %v2973
        %v2975 = vsub.f32 1.0, %v2974
        %v2976 = vmul.f32 %v2973, %v2975
        %v2977 = vadd.f32 %v2973, %v2976
        %vm2978 = vweird.f32 %v2972
        %vm2979 = vweird.f32 %v2973
        %vm2980 = vmor %vm2978, %vm2979
        %v2981 = vsel %vm2980, %v2973, %v2977
        %v2982 = vand.u32 2147483647, %v2972
        %vm2983 = vcmp.eq.f32.partialorder %v2982, 8.507059e+37
        %v2984 = vand.u32 %v2972, 2147483648
        %v2985 = vor.u32 1.1754944e-38, %v2984
        %v2986 = vsel %vm2983, %v2985, %v2981
        %v2987 = vmul.f32 1.0, %v2986
        %v2988 = vadd.f32 %v2987, 1.0
        %v2989 = vperm.slane %v2988, 0
        %v2990 = vmul.f32 %v2883, %v2989
        %v2991 = vmul.f32 %v2884, %v2989
        %v2992 = vmul.f32 %v2885, %v2989
        %v2993 = vmul.f32 %v2886, %v2989
        %v2994 = vmul.f32 %v2887, %v2989
        %v2995 = vmul.f32 %v2888, %v2989
        %v2996 = vmul.f32 %v2889, %v2989
        %v2997 = vmul.f32 %v2890, %v2989
        %2998 = vst.msk [vmem:[%s1163 + $0x8] sm:$0xff] %vm590, %v2990
        %2999 = vst.msk [vmem:[%s1163 + $0x20] sm:$0xff] %vm590, %v2991
        %3000 = vst.msk [vmem:[%s1163 + $0x38] sm:$0xff] %vm590, %v2992
        %3001 = vst.msk [vmem:[%s1163 + $0x50] sm:$0xff] %vm590, %v2993
        %3002 = vst.msk [vmem:[%s1163 + $0x68] sm:$0xff] %vm590, %v2994
        %3003 = vst.msk [vmem:[%s1163 + $0x80] sm:$0xff] %vm590, %v2995
        %3004 = vst.msk [vmem:[%s1163 + $0x98] sm:$0xff] %vm590, %v2996
        %3005 = vst.msk [vmem:[%s1163 + $0xb0] sm:$0xff] %vm590, %v2997
        %v3006 = vld [vmem:[#allocation2 + $0x7] sm:$0xff]
        %v3007 = vld [vmem:[#allocation2 + $0x1f] sm:$0xff]
        %v3008 = vld [vmem:[#allocation2 + $0x37] sm:$0xff]
        %v3009 = vld [vmem:[#allocation2 + $0x4f] sm:$0xff]
        %v3010 = vld [vmem:[#allocation2 + $0x67] sm:$0xff]
        %v3011 = vld [vmem:[#allocation2 + $0x7f] sm:$0xff]
        %v3012 = vld [vmem:[#allocation2 + $0x97] sm:$0xff]
        %v3013 = vld [vmem:[#allocation2 + $0xaf] sm:$0xff]
        %v3014 = vpack.c.bf16 %v3007, %v3006
        %v3015 = vpack.c.bf16 %v3009, %v3008
        %v3016 = vpack.c.bf16 %v3011, %v3010
        %v3017 = vpack.c.bf16 %v3013, %v3012
        %v3018 = vld [vmem:[#allocation13] sm:$0xf]
        %v3019 = vld [vmem:[#allocation13 + $0x4] sm:$0xf]
        %v3020 = vld [vmem:[#allocation13 + $0x8] sm:$0xf]
        %v3021 = vld [vmem:[#allocation13 + $0xc] sm:$0xf]
        %v3022 = vld [vmem:[#allocation13 + $0x10] sm:$0xf]
        %v3023 = vld [vmem:[#allocation13 + $0x14] sm:$0xf]
        %v3024 = vld [vmem:[#allocation13 + $0x18] sm:$0xf]
        %v3025 = vld [vmem:[#allocation13 + $0x1c] sm:$0xf]
        %v3026 = vld [vmem:[#allocation2 + $0x8] sm:$0xff]
        %v3027 = vld [vmem:[#allocation2 + $0x20] sm:$0xff]
        %v3028 = vld [vmem:[#allocation2 + $0x38] sm:$0xff]
        %v3029 = vld [vmem:[#allocation2 + $0x50] sm:$0xff]
        %v3030 = vld [vmem:[#allocation2 + $0x68] sm:$0xff]
        %v3031 = vld [vmem:[#allocation2 + $0x80] sm:$0xff]
        %v3032 = vld [vmem:[#allocation2 + $0x98] sm:$0xff]
        %v3033 = vld [vmem:[#allocation2 + $0xb0] sm:$0xff]
        %v3034 = vpack.c.bf16 %v3027, %v3026
        %v3035 = vpack.c.bf16 %v3029, %v3028
        %v3036 = vpack.c.bf16 %v3031, %v3030
        %v3037 = vpack.c.bf16 %v3033, %v3032
        %s3038 = scalar_lea.vmem [#allocation13], 32
        %v3039 = vld [vmem:[%s3038] sm:$0xf]
        %v3040 = vld [vmem:[%s3038 + $0x4] sm:$0xf]
        %v3041 = vld [vmem:[%s3038 + $0x8] sm:$0xf]
        %v3042 = vld [vmem:[%s3038 + $0xc] sm:$0xf]
        %v3043 = vld [vmem:[%s3038 + $0x10] sm:$0xf]
        %v3044 = vld [vmem:[%s3038 + $0x14] sm:$0xf]
        %v3045 = vld [vmem:[%s3038 + $0x18] sm:$0xf]
        %v3046 = vld [vmem:[%s3038 + $0x1c] sm:$0xf]
        %v3055 = vunpack.c.l.b16 %v3039
        %v3056 = vunpack.c.l.b16 %v3040
        %v3057 = vunpack.c.l.b16 %v3041
        %v3058 = vunpack.c.l.b16 %v3042
        %v3059 = vunpack.c.l.b16 %v3043
        %v3060 = vunpack.c.l.b16 %v3044
        %v3061 = vunpack.c.l.b16 %v3045
        %v3062 = vunpack.c.l.b16 %v3046
        %v3063 = vpack.c.b16 %v3056, %v3055
        %v3064 = vpack.c.b16 %v3058, %v3057
        %v3065 = vpack.c.b16 %v3060, %v3059
        %v3066 = vpack.c.b16 %v3062, %v3061
        %v3072 = vsel %vm590, %v3034, 0
        %v3075 = vsel %vm590, %v3035, 0
        %v3078 = vsel %vm590, %v3036, 0
        %v3081 = vsel %vm590, %v3037, 0
        %3083 = vmatpush.bf16.msra.mxu0 0
        %3084 = vmatpush.bf16.msra.mxu0 0
        %3085 = vmatpush.bf16.msra.mxu0 0
        %3086 = vmatpush.bf16.msra.mxu0 0
        %3087 = vmatpush.bf16.msra.mxu0 %v3066
        %3088 = vmatpush.bf16.msra.mxu0 %v3065
        %3089 = vmatpush.bf16.msra.mxu0 %v3064
        %3090 = vmatpush.bf16.msra.mxu0 %v3063
        %3091 = vmatmul.bf16.gmra.mxu0 %v3072
        %v3092 = vpop.f32.mrf.mxu0
        %v3093 = vadd.f32 0.0, %v3092
        %v3094 = vpop.f32.mrf.mxu0
        %v3095 = vadd.f32 0.0, %v3094
        %3096 = vmatmul.bf16.gmra.mxu0 %v3075
        %v3097 = vpop.f32.mrf.mxu0
        %v3098 = vadd.f32 0.0, %v3097
        %v3099 = vpop.f32.mrf.mxu0
        %v3100 = vadd.f32 0.0, %v3099
        %3101 = vmatmul.bf16.gmra.mxu0 %v3078
        %v3102 = vpop.f32.mrf.mxu0
        %v3103 = vadd.f32 0.0, %v3102
        %v3104 = vpop.f32.mrf.mxu0
        %v3105 = vadd.f32 0.0, %v3104
        %3106 = vmatmul.bf16.gmra.mxu0 %v3081
        %v3107 = vpop.f32.mrf.mxu0
        %v3108 = vadd.f32 0.0, %v3107
        %v3109 = vpop.f32.mrf.mxu0
        %v3110 = vadd.f32 0.0, %v3109
        %3111 = vdwg.mxu0
        %v3120 = vunpack.c.l.b16 %v3018
        %v3121 = vunpack.c.l.b16 %v3019
        %v3122 = vunpack.c.l.b16 %v3020
        %v3123 = vunpack.c.l.b16 %v3021
        %v3124 = vunpack.c.l.b16 %v3022
        %v3125 = vunpack.c.l.b16 %v3023
        %v3126 = vunpack.c.l.b16 %v3024
        %v3127 = vunpack.c.l.b16 %v3025
        %v3128 = vpack.c.b16 %v3121, %v3120
        %v3129 = vpack.c.b16 %v3123, %v3122
        %v3130 = vpack.c.b16 %v3125, %v3124
        %v3131 = vpack.c.b16 %v3127, %v3126
        %v3137 = vsel %vm590, %v3014, 0
        %v3140 = vsel %vm590, %v3015, 0
        %v3143 = vsel %vm590, %v3016, 0
        %v3146 = vsel %vm590, %v3017, 0
        %3148 = vmatpush.bf16.msra.mxu0 0
        %3149 = vmatpush.bf16.msra.mxu0 0
        %3150 = vmatpush.bf16.msra.mxu0 0
        %3151 = vmatpush.bf16.msra.mxu0 0
        %3152 = vmatpush.bf16.msra.mxu0 %v3131
        %3153 = vmatpush.bf16.msra.mxu0 %v3130
        %3154 = vmatpush.bf16.msra.mxu0 %v3129
        %3155 = vmatpush.bf16.msra.mxu0 %v3128
        %3156 = vmatmul.bf16.gmra.mxu0 %v3137
        %v3157 = vpop.f32.mrf.mxu0
        %v3158 = vadd.f32 %v3093, %v3157
        %v3159 = vpop.f32.mrf.mxu0
        %v3160 = vadd.f32 %v3095, %v3159
        %3161 = vmatmul.bf16.gmra.mxu0 %v3140
        %v3162 = vpop.f32.mrf.mxu0
        %v3163 = vadd.f32 %v3098, %v3162
        %v3164 = vpop.f32.mrf.mxu0
        %v3165 = vadd.f32 %v3100, %v3164
        %3166 = vmatmul.bf16.gmra.mxu0 %v3143
        %v3167 = vpop.f32.mrf.mxu0
        %v3168 = vadd.f32 %v3103, %v3167
        %v3169 = vpop.f32.mrf.mxu0
        %v3170 = vadd.f32 %v3105, %v3169
        %3171 = vmatmul.bf16.gmra.mxu0 %v3146
        %v3172 = vpop.f32.mrf.mxu0
        %v3173 = vadd.f32 %v3108, %v3172
        %v3174 = vpop.f32.mrf.mxu0
        %v3175 = vadd.f32 %v3110, %v3174
        %3176 = vdwg.mxu0
        %v3177 = vld [vmem:[#allocation2 + $0x9] sm:$0xff]
        %v3178 = vld [vmem:[#allocation2 + $0x21] sm:$0xff]
        %v3179 = vld [vmem:[#allocation2 + $0x39] sm:$0xff]
        %v3180 = vld [vmem:[#allocation2 + $0x51] sm:$0xff]
        %v3181 = vld [vmem:[#allocation2 + $0x69] sm:$0xff]
        %v3182 = vld [vmem:[#allocation2 + $0x81] sm:$0xff]
        %v3183 = vld [vmem:[#allocation2 + $0x99] sm:$0xff]
        %v3184 = vld [vmem:[#allocation2 + $0xb1] sm:$0xff]
        %v3185 = vpack.c.bf16 %v3178, %v3177
        %v3186 = vpack.c.bf16 %v3180, %v3179
        %v3187 = vpack.c.bf16 %v3182, %v3181
        %v3188 = vpack.c.bf16 %v3184, %v3183
        %s3189 = scalar_lea.vmem [#allocation13], 64
        %v3190 = vld [vmem:[%s3189] sm:$0xf]
        %v3191 = vld [vmem:[%s3189 + $0x4] sm:$0xf]
        %v3192 = vld [vmem:[%s3189 + $0x8] sm:$0xf]
        %v3193 = vld [vmem:[%s3189 + $0xc] sm:$0xf]
        %v3194 = vld [vmem:[%s3189 + $0x10] sm:$0xf]
        %v3195 = vld [vmem:[%s3189 + $0x14] sm:$0xf]
        %v3196 = vld [vmem:[%s3189 + $0x18] sm:$0xf]
        %v3197 = vld [vmem:[%s3189 + $0x1c] sm:$0xf]
        %v3206 = vunpack.c.l.b16 %v3190
        %v3207 = vunpack.c.l.b16 %v3191
        %v3208 = vunpack.c.l.b16 %v3192
        %v3209 = vunpack.c.l.b16 %v3193
        %v3210 = vunpack.c.l.b16 %v3194
        %v3211 = vunpack.c.l.b16 %v3195
        %v3212 = vunpack.c.l.b16 %v3196
        %v3213 = vunpack.c.l.b16 %v3197
        %v3214 = vpack.c.b16 %v3207, %v3206
        %v3215 = vpack.c.b16 %v3209, %v3208
        %v3216 = vpack.c.b16 %v3211, %v3210
        %v3217 = vpack.c.b16 %v3213, %v3212
        %v3223 = vsel %vm590, %v3185, 0
        %v3226 = vsel %vm590, %v3186, 0
        %v3229 = vsel %vm590, %v3187, 0
        %v3232 = vsel %vm590, %v3188, 0
        %3234 = vmatpush.bf16.msra.mxu0 0
        %3235 = vmatpush.bf16.msra.mxu0 0
        %3236 = vmatpush.bf16.msra.mxu0 0
        %3237 = vmatpush.bf16.msra.mxu0 0
        %3238 = vmatpush.bf16.msra.mxu0 %v3217
        %3239 = vmatpush.bf16.msra.mxu0 %v3216
        %3240 = vmatpush.bf16.msra.mxu0 %v3215
        %3241 = vmatpush.bf16.msra.mxu0 %v3214
        %3242 = vmatmul.bf16.gmra.mxu0 %v3223
        %v3243 = vpop.f32.mrf.mxu0
        %v3244 = vadd.f32 0.0, %v3243
        %v3245 = vpop.f32.mrf.mxu0
        %v3246 = vadd.f32 0.0, %v3245
        %3247 = vmatmul.bf16.gmra.mxu0 %v3226
        %v3248 = vpop.f32.mrf.mxu0
        %v3249 = vadd.f32 0.0, %v3248
        %v3250 = vpop.f32.mrf.mxu0
        %v3251 = vadd.f32 0.0, %v3250
        %3252 = vmatmul.bf16.gmra.mxu0 %v3229
        %v3253 = vpop.f32.mrf.mxu0
        %v3254 = vadd.f32 0.0, %v3253
        %v3255 = vpop.f32.mrf.mxu0
        %v3256 = vadd.f32 0.0, %v3255
        %3257 = vmatmul.bf16.gmra.mxu0 %v3232
        %v3258 = vpop.f32.mrf.mxu0
        %v3259 = vadd.f32 0.0, %v3258
        %v3260 = vpop.f32.mrf.mxu0
        %v3261 = vadd.f32 0.0, %v3260
        %3262 = vdwg.mxu0
        %v3263 = vadd.f32 %v3158, %v3244
        %v3264 = vadd.f32 %v3160, %v3246
        %v3265 = vadd.f32 %v3163, %v3249
        %v3266 = vadd.f32 %v3165, %v3251
        %v3267 = vadd.f32 %v3168, %v3254
        %v3268 = vadd.f32 %v3170, %v3256
        %v3269 = vadd.f32 %v3173, %v3259
        %v3270 = vadd.f32 %v3175, %v3261
        %v3271 = vld [vmem:[%s1163 + $0x7] sm:$0xff]
        %v3272 = vld [vmem:[%s1163 + $0x1f] sm:$0xff]
        %v3273 = vld [vmem:[%s1163 + $0x37] sm:$0xff]
        %v3274 = vld [vmem:[%s1163 + $0x4f] sm:$0xff]
        %v3275 = vld [vmem:[%s1163 + $0x67] sm:$0xff]
        %v3276 = vld [vmem:[%s1163 + $0x7f] sm:$0xff]
        %v3277 = vld [vmem:[%s1163 + $0x97] sm:$0xff]
        %v3278 = vld [vmem:[%s1163 + $0xaf] sm:$0xff]
        %v3279 = vpack.c.bf16 %v3272, %v3271
        %v3280 = vpack.c.bf16 %v3274, %v3273
        %v3281 = vpack.c.bf16 %v3276, %v3275
        %v3282 = vpack.c.bf16 %v3278, %v3277
        %s3283 = scalar_lea.vmem [#allocation13], 96
        %v3284 = vld [vmem:[%s3283] sm:$0xf]
        %v3285 = vld [vmem:[%s3283 + $0x4] sm:$0xf]
        %v3286 = vld [vmem:[%s3283 + $0x8] sm:$0xf]
        %v3287 = vld [vmem:[%s3283 + $0xc] sm:$0xf]
        %v3288 = vld [vmem:[%s3283 + $0x10] sm:$0xf]
        %v3289 = vld [vmem:[%s3283 + $0x14] sm:$0xf]
        %v3290 = vld [vmem:[%s3283 + $0x18] sm:$0xf]
        %v3291 = vld [vmem:[%s3283 + $0x1c] sm:$0xf]
        %v3300 = vunpack.c.l.b16 %v3284
        %v3301 = vunpack.c.l.b16 %v3285
        %v3302 = vunpack.c.l.b16 %v3286
        %v3303 = vunpack.c.l.b16 %v3287
        %v3304 = vunpack.c.l.b16 %v3288
        %v3305 = vunpack.c.l.b16 %v3289
        %v3306 = vunpack.c.l.b16 %v3290
        %v3307 = vunpack.c.l.b16 %v3291
        %v3308 = vpack.c.b16 %v3301, %v3300
        %v3309 = vpack.c.b16 %v3303, %v3302
        %v3310 = vpack.c.b16 %v3305, %v3304
        %v3311 = vpack.c.b16 %v3307, %v3306
        %v3317 = vsel %vm590, %v3279, 0
        %v3320 = vsel %vm590, %v3280, 0
        %v3323 = vsel %vm590, %v3281, 0
        %v3326 = vsel %vm590, %v3282, 0
        %3328 = vmatpush.bf16.msra.mxu0 0
        %3329 = vmatpush.bf16.msra.mxu0 0
        %3330 = vmatpush.bf16.msra.mxu0 0
        %3331 = vmatpush.bf16.msra.mxu0 0
        %3332 = vmatpush.bf16.msra.mxu0 %v3311
        %3333 = vmatpush.bf16.msra.mxu0 %v3310
        %3334 = vmatpush.bf16.msra.mxu0 %v3309
        %3335 = vmatpush.bf16.msra.mxu0 %v3308
        %3336 = vmatmul.bf16.gmra.mxu0 %v3317
        %v3337 = vpop.f32.mrf.mxu0
        %v3338 = vadd.f32 0.0, %v3337
        %v3339 = vpop.f32.mrf.mxu0
        %v3340 = vadd.f32 0.0, %v3339
        %3341 = vmatmul.bf16.gmra.mxu0 %v3320
        %v3342 = vpop.f32.mrf.mxu0
        %v3343 = vadd.f32 0.0, %v3342
        %v3344 = vpop.f32.mrf.mxu0
        %v3345 = vadd.f32 0.0, %v3344
        %3346 = vmatmul.bf16.gmra.mxu0 %v3323
        %v3347 = vpop.f32.mrf.mxu0
        %v3348 = vadd.f32 0.0, %v3347
        %v3349 = vpop.f32.mrf.mxu0
        %v3350 = vadd.f32 0.0, %v3349
        %3351 = vmatmul.bf16.gmra.mxu0 %v3326
        %v3352 = vpop.f32.mrf.mxu0
        %v3353 = vadd.f32 0.0, %v3352
        %v3354 = vpop.f32.mrf.mxu0
        %v3355 = vadd.f32 0.0, %v3354
        %3356 = vdwg.mxu0
        %v3357 = vadd.f32 %v3263, %v3338
        %v3358 = vadd.f32 %v3264, %v3340
        %v3359 = vadd.f32 %v3265, %v3343
        %v3360 = vadd.f32 %v3266, %v3345
        %v3361 = vadd.f32 %v3267, %v3348
        %v3362 = vadd.f32 %v3268, %v3350
        %v3363 = vadd.f32 %v3269, %v3353
        %v3364 = vadd.f32 %v3270, %v3355
        %v3365 = vld [vmem:[%s1163 + $0x8] sm:$0xff]
        %v3366 = vld [vmem:[%s1163 + $0x20] sm:$0xff]
        %v3367 = vld [vmem:[%s1163 + $0x38] sm:$0xff]
        %v3368 = vld [vmem:[%s1163 + $0x50] sm:$0xff]
        %v3369 = vld [vmem:[%s1163 + $0x68] sm:$0xff]
        %v3370 = vld [vmem:[%s1163 + $0x80] sm:$0xff]
        %v3371 = vld [vmem:[%s1163 + $0x98] sm:$0xff]
        %v3372 = vld [vmem:[%s1163 + $0xb0] sm:$0xff]
        %v3373 = vpack.c.bf16 %v3366, %v3365
        %v3374 = vpack.c.bf16 %v3368, %v3367
        %v3375 = vpack.c.bf16 %v3370, %v3369
        %v3376 = vpack.c.bf16 %v3372, %v3371
        %s3377 = scalar_lea.vmem [#allocation13], 128
        %v3378 = vld [vmem:[%s3377] sm:$0xf]
        %v3379 = vld [vmem:[%s3377 + $0x4] sm:$0xf]
        %v3380 = vld [vmem:[%s3377 + $0x8] sm:$0xf]
        %v3381 = vld [vmem:[%s3377 + $0xc] sm:$0xf]
        %v3382 = vld [vmem:[%s3377 + $0x10] sm:$0xf]
        %v3383 = vld [vmem:[%s3377 + $0x14] sm:$0xf]
        %v3384 = vld [vmem:[%s3377 + $0x18] sm:$0xf]
        %v3385 = vld [vmem:[%s3377 + $0x1c] sm:$0xf]
        %v3394 = vunpack.c.l.b16 %v3378
        %v3395 = vunpack.c.l.b16 %v3379
        %v3396 = vunpack.c.l.b16 %v3380
        %v3397 = vunpack.c.l.b16 %v3381
        %v3398 = vunpack.c.l.b16 %v3382
        %v3399 = vunpack.c.l.b16 %v3383
        %v3400 = vunpack.c.l.b16 %v3384
        %v3401 = vunpack.c.l.b16 %v3385
        %v3402 = vpack.c.b16 %v3395, %v3394
        %v3403 = vpack.c.b16 %v3397, %v3396
        %v3404 = vpack.c.b16 %v3399, %v3398
        %v3405 = vpack.c.b16 %v3401, %v3400
        %v3411 = vsel %vm590, %v3373, 0
        %v3414 = vsel %vm590, %v3374, 0
        %v3417 = vsel %vm590, %v3375, 0
        %v3420 = vsel %vm590, %v3376, 0
        %3422 = vmatpush.bf16.msra.mxu0 0
        %3423 = vmatpush.bf16.msra.mxu0 0
        %3424 = vmatpush.bf16.msra.mxu0 0
        %3425 = vmatpush.bf16.msra.mxu0 0
        %3426 = vmatpush.bf16.msra.mxu0 %v3405
        %3427 = vmatpush.bf16.msra.mxu0 %v3404
        %3428 = vmatpush.bf16.msra.mxu0 %v3403
        %3429 = vmatpush.bf16.msra.mxu0 %v3402
        %3430 = vmatmul.bf16.gmra.mxu0 %v3411
        %v3431 = vpop.f32.mrf.mxu0
        %v3432 = vadd.f32 0.0, %v3431
        %v3433 = vpop.f32.mrf.mxu0
        %v3434 = vadd.f32 0.0, %v3433
        %3435 = vmatmul.bf16.gmra.mxu0 %v3414
        %v3436 = vpop.f32.mrf.mxu0
        %v3437 = vadd.f32 0.0, %v3436
        %v3438 = vpop.f32.mrf.mxu0
        %v3439 = vadd.f32 0.0, %v3438
        %3440 = vmatmul.bf16.gmra.mxu0 %v3417
        %v3441 = vpop.f32.mrf.mxu0
        %v3442 = vadd.f32 0.0, %v3441
        %v3443 = vpop.f32.mrf.mxu0
        %v3444 = vadd.f32 0.0, %v3443
        %3445 = vmatmul.bf16.gmra.mxu0 %v3420
        %v3446 = vpop.f32.mrf.mxu0
        %v3447 = vadd.f32 0.0, %v3446
        %v3448 = vpop.f32.mrf.mxu0
        %v3449 = vadd.f32 0.0, %v3448
        %3450 = vdwg.mxu0
        %v3451 = vadd.f32 %v3357, %v3432
        %v3452 = vadd.f32 %v3358, %v3434
        %v3453 = vadd.f32 %v3359, %v3437
        %v3454 = vadd.f32 %v3360, %v3439
        %v3455 = vadd.f32 %v3361, %v3442
        %v3456 = vadd.f32 %v3362, %v3444
        %v3457 = vadd.f32 %v3363, %v3447
        %v3458 = vadd.f32 %v3364, %v3449
        %v3459 = vld [vmem:[%s1163 + $0x9] sm:$0xff]
        %v3460 = vld [vmem:[%s1163 + $0x21] sm:$0xff]
        %v3461 = vld [vmem:[%s1163 + $0x39] sm:$0xff]
        %v3462 = vld [vmem:[%s1163 + $0x51] sm:$0xff]
        %v3463 = vld [vmem:[%s1163 + $0x69] sm:$0xff]
        %v3464 = vld [vmem:[%s1163 + $0x81] sm:$0xff]
        %v3465 = vld [vmem:[%s1163 + $0x99] sm:$0xff]
        %v3466 = vld [vmem:[%s1163 + $0xb1] sm:$0xff]
        %v3467 = vpack.c.bf16 %v3460, %v3459
        %v3468 = vpack.c.bf16 %v3462, %v3461
        %v3469 = vpack.c.bf16 %v3464, %v3463
        %v3470 = vpack.c.bf16 %v3466, %v3465
        %s3471 = scalar_lea.vmem [#allocation13], 160
        %v3472 = vld [vmem:[%s3471] sm:$0xf]
        %v3473 = vld [vmem:[%s3471 + $0x4] sm:$0xf]
        %v3474 = vld [vmem:[%s3471 + $0x8] sm:$0xf]
        %v3475 = vld [vmem:[%s3471 + $0xc] sm:$0xf]
        %v3476 = vld [vmem:[%s3471 + $0x10] sm:$0xf]
        %v3477 = vld [vmem:[%s3471 + $0x14] sm:$0xf]
        %v3478 = vld [vmem:[%s3471 + $0x18] sm:$0xf]
        %v3479 = vld [vmem:[%s3471 + $0x1c] sm:$0xf]
        %v3488 = vunpack.c.l.b16 %v3472
        %v3489 = vunpack.c.l.b16 %v3473
        %v3490 = vunpack.c.l.b16 %v3474
        %v3491 = vunpack.c.l.b16 %v3475
        %v3492 = vunpack.c.l.b16 %v3476
        %v3493 = vunpack.c.l.b16 %v3477
        %v3494 = vunpack.c.l.b16 %v3478
        %v3495 = vunpack.c.l.b16 %v3479
        %v3496 = vpack.c.b16 %v3489, %v3488
        %v3497 = vpack.c.b16 %v3491, %v3490
        %v3498 = vpack.c.b16 %v3493, %v3492
        %v3499 = vpack.c.b16 %v3495, %v3494
        %v3505 = vsel %vm590, %v3467, 0
        %v3508 = vsel %vm590, %v3468, 0
        %v3511 = vsel %vm590, %v3469, 0
        %v3514 = vsel %vm590, %v3470, 0
        %3516 = vmatpush.bf16.msra.mxu0 0
        %3517 = vmatpush.bf16.msra.mxu0 0
        %3518 = vmatpush.bf16.msra.mxu0 0
        %3519 = vmatpush.bf16.msra.mxu0 0
        %3520 = vmatpush.bf16.msra.mxu0 %v3499
        %3521 = vmatpush.bf16.msra.mxu0 %v3498
        %3522 = vmatpush.bf16.msra.mxu0 %v3497
        %3523 = vmatpush.bf16.msra.mxu0 %v3496
        %3524 = vmatmul.bf16.gmra.mxu0 %v3505
        %v3525 = vpop.f32.mrf.mxu0
        %v3526 = vadd.f32 0.0, %v3525
        %v3527 = vpop.f32.mrf.mxu0
        %v3528 = vadd.f32 0.0, %v3527
        %3529 = vmatmul.bf16.gmra.mxu0 %v3508
        %v3530 = vpop.f32.mrf.mxu0
        %v3531 = vadd.f32 0.0, %v3530
        %v3532 = vpop.f32.mrf.mxu0
        %v3533 = vadd.f32 0.0, %v3532
        %3534 = vmatmul.bf16.gmra.mxu0 %v3511
        %v3535 = vpop.f32.mrf.mxu0
        %v3536 = vadd.f32 0.0, %v3535
        %v3537 = vpop.f32.mrf.mxu0
        %v3538 = vadd.f32 0.0, %v3537
        %3539 = vmatmul.bf16.gmra.mxu0 %v3514
        %v3540 = vpop.f32.mrf.mxu0
        %v3541 = vadd.f32 0.0, %v3540
        %v3542 = vpop.f32.mrf.mxu0
        %v3543 = vadd.f32 0.0, %v3542
        %3544 = vdwg.mxu0
        %v3545 = vadd.f32 %v3451, %v3526
        %v3546 = vadd.f32 %v3452, %v3528
        %v3547 = vadd.f32 %v3453, %v3531
        %v3548 = vadd.f32 %v3454, %v3533
        %v3549 = vadd.f32 %v3455, %v3536
        %v3550 = vadd.f32 %v3456, %v3538
        %v3551 = vadd.f32 %v3457, %v3541
        %v3552 = vadd.f32 %v3458, %v3543
        %v3553 = vld [vmem:[%s1719 + $0x7] sm:$0xff]
        %v3554 = vld [vmem:[%s1719 + $0x1f] sm:$0xff]
        %v3555 = vld [vmem:[%s1719 + $0x37] sm:$0xff]
        %v3556 = vld [vmem:[%s1719 + $0x4f] sm:$0xff]
        %v3557 = vld [vmem:[%s1719 + $0x67] sm:$0xff]
        %v3558 = vld [vmem:[%s1719 + $0x7f] sm:$0xff]
        %v3559 = vld [vmem:[%s1719 + $0x97] sm:$0xff]
        %v3560 = vld [vmem:[%s1719 + $0xaf] sm:$0xff]
        %v3561 = vpack.c.bf16 %v3554, %v3553
        %v3562 = vpack.c.bf16 %v3556, %v3555
        %v3563 = vpack.c.bf16 %v3558, %v3557
        %v3564 = vpack.c.bf16 %v3560, %v3559
        %s3565 = scalar_lea.vmem [#allocation13], 192
        %v3566 = vld [vmem:[%s3565] sm:$0xf]
        %v3567 = vld [vmem:[%s3565 + $0x4] sm:$0xf]
        %v3568 = vld [vmem:[%s3565 + $0x8] sm:$0xf]
        %v3569 = vld [vmem:[%s3565 + $0xc] sm:$0xf]
        %v3570 = vld [vmem:[%s3565 + $0x10] sm:$0xf]
        %v3571 = vld [vmem:[%s3565 + $0x14] sm:$0xf]
        %v3572 = vld [vmem:[%s3565 + $0x18] sm:$0xf]
        %v3573 = vld [vmem:[%s3565 + $0x1c] sm:$0xf]
        %v3582 = vunpack.c.l.b16 %v3566
        %v3583 = vunpack.c.l.b16 %v3567
        %v3584 = vunpack.c.l.b16 %v3568
        %v3585 = vunpack.c.l.b16 %v3569
        %v3586 = vunpack.c.l.b16 %v3570
        %v3587 = vunpack.c.l.b16 %v3571
        %v3588 = vunpack.c.l.b16 %v3572
        %v3589 = vunpack.c.l.b16 %v3573
        %v3590 = vpack.c.b16 %v3583, %v3582
        %v3591 = vpack.c.b16 %v3585, %v3584
        %v3592 = vpack.c.b16 %v3587, %v3586
        %v3593 = vpack.c.b16 %v3589, %v3588
        %v3599 = vsel %vm590, %v3561, 0
        %v3602 = vsel %vm590, %v3562, 0
        %v3605 = vsel %vm590, %v3563, 0
        %v3608 = vsel %vm590, %v3564, 0
        %3610 = vmatpush.bf16.msra.mxu0 0
        %3611 = vmatpush.bf16.msra.mxu0 0
        %3612 = vmatpush.bf16.msra.mxu0 0
        %3613 = vmatpush.bf16.msra.mxu0 0
        %3614 = vmatpush.bf16.msra.mxu0 %v3593
        %3615 = vmatpush.bf16.msra.mxu0 %v3592
        %3616 = vmatpush.bf16.msra.mxu0 %v3591
        %3617 = vmatpush.bf16.msra.mxu0 %v3590
        %3618 = vmatmul.bf16.gmra.mxu0 %v3599
        %v3619 = vpop.f32.mrf.mxu0
        %v3620 = vadd.f32 0.0, %v3619
        %v3621 = vpop.f32.mrf.mxu0
        %v3622 = vadd.f32 0.0, %v3621
        %3623 = vmatmul.bf16.gmra.mxu0 %v3602
        %v3624 = vpop.f32.mrf.mxu0
        %v3625 = vadd.f32 0.0, %v3624
        %v3626 = vpop.f32.mrf.mxu0
        %v3627 = vadd.f32 0.0, %v3626
        %3628 = vmatmul.bf16.gmra.mxu0 %v3605
        %v3629 = vpop.f32.mrf.mxu0
        %v3630 = vadd.f32 0.0, %v3629
        %v3631 = vpop.f32.mrf.mxu0
        %v3632 = vadd.f32 0.0, %v3631
        %3633 = vmatmul.bf16.gmra.mxu0 %v3608
        %v3634 = vpop.f32.mrf.mxu0
        %v3635 = vadd.f32 0.0, %v3634
        %v3636 = vpop.f32.mrf.mxu0
        %v3637 = vadd.f32 0.0, %v3636
        %3638 = vdwg.mxu0
        %v3639 = vadd.f32 %v3545, %v3620
        %v3640 = vadd.f32 %v3546, %v3622
        %v3641 = vadd.f32 %v3547, %v3625
        %v3642 = vadd.f32 %v3548, %v3627
        %v3643 = vadd.f32 %v3549, %v3630
        %v3644 = vadd.f32 %v3550, %v3632
        %v3645 = vadd.f32 %v3551, %v3635
        %v3646 = vadd.f32 %v3552, %v3637
        %v3647 = vld [vmem:[%s1719 + $0x8] sm:$0xff]
        %v3648 = vld [vmem:[%s1719 + $0x20] sm:$0xff]
        %v3649 = vld [vmem:[%s1719 + $0x38] sm:$0xff]
        %v3650 = vld [vmem:[%s1719 + $0x50] sm:$0xff]
        %v3651 = vld [vmem:[%s1719 + $0x68] sm:$0xff]
        %v3652 = vld [vmem:[%s1719 + $0x80] sm:$0xff]
        %v3653 = vld [vmem:[%s1719 + $0x98] sm:$0xff]
        %v3654 = vld [vmem:[%s1719 + $0xb0] sm:$0xff]
        %v3655 = vpack.c.bf16 %v3648, %v3647
        %v3656 = vpack.c.bf16 %v3650, %v3649
        %v3657 = vpack.c.bf16 %v3652, %v3651
        %v3658 = vpack.c.bf16 %v3654, %v3653
        %s3659 = scalar_lea.vmem [#allocation13], 224
        %v3660 = vld [vmem:[%s3659] sm:$0xf]
        %v3661 = vld [vmem:[%s3659 + $0x4] sm:$0xf]
        %v3662 = vld [vmem:[%s3659 + $0x8] sm:$0xf]
        %v3663 = vld [vmem:[%s3659 + $0xc] sm:$0xf]
        %v3664 = vld [vmem:[%s3659 + $0x10] sm:$0xf]
        %v3665 = vld [vmem:[%s3659 + $0x14] sm:$0xf]
        %v3666 = vld [vmem:[%s3659 + $0x18] sm:$0xf]
        %v3667 = vld [vmem:[%s3659 + $0x1c] sm:$0xf]
        %v3676 = vunpack.c.l.b16 %v3660
        %v3677 = vunpack.c.l.b16 %v3661
        %v3678 = vunpack.c.l.b16 %v3662
        %v3679 = vunpack.c.l.b16 %v3663
        %v3680 = vunpack.c.l.b16 %v3664
        %v3681 = vunpack.c.l.b16 %v3665
        %v3682 = vunpack.c.l.b16 %v3666
        %v3683 = vunpack.c.l.b16 %v3667
        %v3684 = vpack.c.b16 %v3677, %v3676
        %v3685 = vpack.c.b16 %v3679, %v3678
        %v3686 = vpack.c.b16 %v3681, %v3680
        %v3687 = vpack.c.b16 %v3683, %v3682
        %v3693 = vsel %vm590, %v3655, 0
        %v3696 = vsel %vm590, %v3656, 0
        %v3699 = vsel %vm590, %v3657, 0
        %v3702 = vsel %vm590, %v3658, 0
        %3704 = vmatpush.bf16.msra.mxu0 0
        %3705 = vmatpush.bf16.msra.mxu0 0
        %3706 = vmatpush.bf16.msra.mxu0 0
        %3707 = vmatpush.bf16.msra.mxu0 0
        %3708 = vmatpush.bf16.msra.mxu0 %v3687
        %3709 = vmatpush.bf16.msra.mxu0 %v3686
        %3710 = vmatpush.bf16.msra.mxu0 %v3685
        %3711 = vmatpush.bf16.msra.mxu0 %v3684
        %3712 = vmatmul.bf16.gmra.mxu0 %v3693
        %v3713 = vpop.f32.mrf.mxu0
        %v3714 = vadd.f32 0.0, %v3713
        %v3715 = vpop.f32.mrf.mxu0
        %v3716 = vadd.f32 0.0, %v3715
        %3717 = vmatmul.bf16.gmra.mxu0 %v3696
        %v3718 = vpop.f32.mrf.mxu0
        %v3719 = vadd.f32 0.0, %v3718
        %v3720 = vpop.f32.mrf.mxu0
        %v3721 = vadd.f32 0.0, %v3720
        %3722 = vmatmul.bf16.gmra.mxu0 %v3699
        %v3723 = vpop.f32.mrf.mxu0
        %v3724 = vadd.f32 0.0, %v3723
        %v3725 = vpop.f32.mrf.mxu0
        %v3726 = vadd.f32 0.0, %v3725
        %3727 = vmatmul.bf16.gmra.mxu0 %v3702
        %v3728 = vpop.f32.mrf.mxu0
        %v3729 = vadd.f32 0.0, %v3728
        %v3730 = vpop.f32.mrf.mxu0
        %v3731 = vadd.f32 0.0, %v3730
        %3732 = vdwg.mxu0
        %v3733 = vadd.f32 %v3639, %v3714
        %v3734 = vadd.f32 %v3640, %v3716
        %v3735 = vadd.f32 %v3641, %v3719
        %v3736 = vadd.f32 %v3642, %v3721
        %v3737 = vadd.f32 %v3643, %v3724
        %v3738 = vadd.f32 %v3644, %v3726
        %v3739 = vadd.f32 %v3645, %v3729
        %v3740 = vadd.f32 %v3646, %v3731
        %v3741 = vld [vmem:[%s1719 + $0x9] sm:$0xff]
        %v3742 = vld [vmem:[%s1719 + $0x21] sm:$0xff]
        %v3743 = vld [vmem:[%s1719 + $0x39] sm:$0xff]
        %v3744 = vld [vmem:[%s1719 + $0x51] sm:$0xff]
        %v3745 = vld [vmem:[%s1719 + $0x69] sm:$0xff]
        %v3746 = vld [vmem:[%s1719 + $0x81] sm:$0xff]
        %v3747 = vld [vmem:[%s1719 + $0x99] sm:$0xff]
        %v3748 = vld [vmem:[%s1719 + $0xb1] sm:$0xff]
        %v3749 = vpack.c.bf16 %v3742, %v3741
        %v3750 = vpack.c.bf16 %v3744, %v3743
        %v3751 = vpack.c.bf16 %v3746, %v3745
        %v3752 = vpack.c.bf16 %v3748, %v3747
        %s3753 = scalar_lea.vmem [#allocation13], 256
        %v3754 = vld [vmem:[%s3753] sm:$0xf]
        %v3755 = vld [vmem:[%s3753 + $0x4] sm:$0xf]
        %v3756 = vld [vmem:[%s3753 + $0x8] sm:$0xf]
        %v3757 = vld [vmem:[%s3753 + $0xc] sm:$0xf]
        %v3758 = vld [vmem:[%s3753 + $0x10] sm:$0xf]
        %v3759 = vld [vmem:[%s3753 + $0x14] sm:$0xf]
        %v3760 = vld [vmem:[%s3753 + $0x18] sm:$0xf]
        %v3761 = vld [vmem:[%s3753 + $0x1c] sm:$0xf]
        %v3770 = vunpack.c.l.b16 %v3754
        %v3771 = vunpack.c.l.b16 %v3755
        %v3772 = vunpack.c.l.b16 %v3756
        %v3773 = vunpack.c.l.b16 %v3757
        %v3774 = vunpack.c.l.b16 %v3758
        %v3775 = vunpack.c.l.b16 %v3759
        %v3776 = vunpack.c.l.b16 %v3760
        %v3777 = vunpack.c.l.b16 %v3761
        %v3778 = vpack.c.b16 %v3771, %v3770
        %v3779 = vpack.c.b16 %v3773, %v3772
        %v3780 = vpack.c.b16 %v3775, %v3774
        %v3781 = vpack.c.b16 %v3777, %v3776
        %v3787 = vsel %vm590, %v3749, 0
        %v3790 = vsel %vm590, %v3750, 0
        %v3793 = vsel %vm590, %v3751, 0
        %v3796 = vsel %vm590, %v3752, 0
        %3798 = vmatpush.bf16.msra.mxu0 0
        %3799 = vmatpush.bf16.msra.mxu0 0
        %3800 = vmatpush.bf16.msra.mxu0 0
        %3801 = vmatpush.bf16.msra.mxu0 0
        %3802 = vmatpush.bf16.msra.mxu0 %v3781
        %3803 = vmatpush.bf16.msra.mxu0 %v3780
        %3804 = vmatpush.bf16.msra.mxu0 %v3779
        %3805 = vmatpush.bf16.msra.mxu0 %v3778
        %3806 = vmatmul.bf16.gmra.mxu0 %v3787
        %v3807 = vpop.f32.mrf.mxu0
        %v3808 = vadd.f32 0.0, %v3807
        %v3809 = vpop.f32.mrf.mxu0
        %v3810 = vadd.f32 0.0, %v3809
        %3811 = vmatmul.bf16.gmra.mxu0 %v3790
        %v3812 = vpop.f32.mrf.mxu0
        %v3813 = vadd.f32 0.0, %v3812
        %v3814 = vpop.f32.mrf.mxu0
        %v3815 = vadd.f32 0.0, %v3814
        %3816 = vmatmul.bf16.gmra.mxu0 %v3793
        %v3817 = vpop.f32.mrf.mxu0
        %v3818 = vadd.f32 0.0, %v3817
        %v3819 = vpop.f32.mrf.mxu0
        %v3820 = vadd.f32 0.0, %v3819
        %3821 = vmatmul.bf16.gmra.mxu0 %v3796
        %v3822 = vpop.f32.mrf.mxu0
        %v3823 = vadd.f32 0.0, %v3822
        %v3824 = vpop.f32.mrf.mxu0
        %v3825 = vadd.f32 0.0, %v3824
        %3826 = vdwg.mxu0
        %v3827 = vadd.f32 %v3733, %v3808
        %v3828 = vadd.f32 %v3734, %v3810
        %v3829 = vadd.f32 %v3735, %v3813
        %v3830 = vadd.f32 %v3736, %v3815
        %v3831 = vadd.f32 %v3737, %v3818
        %v3832 = vadd.f32 %v3738, %v3820
        %v3833 = vadd.f32 %v3739, %v3823
        %v3834 = vadd.f32 %v3740, %v3825
        %v3835 = vld [vmem:[%s10 + $0x3] sm:$0x1]
        %v3836 = vperm.slane %v3835, 0
        %v3837 = vadd.f32 %v3827, %v3836
        %v3838 = vadd.f32 %v3828, %v3836
        %v3839 = vadd.f32 %v3829, %v3836
        %v3840 = vadd.f32 %v3830, %v3836
        %v3841 = vadd.f32 %v3831, %v3836
        %v3842 = vadd.f32 %v3832, %v3836
        %v3843 = vadd.f32 %v3833, %v3836
        %v3844 = vadd.f32 %v3834, %v3836
        %v3845 = vmax.f32 %v3837, 0.0
        %v3846 = vmax.f32 %v3838, 0.0
        %v3847 = vmax.f32 %v3839, 0.0
        %v3848 = vmax.f32 %v3840, 0.0
        %v3849 = vmax.f32 %v3841, 0.0
        %v3850 = vmax.f32 %v3842, 0.0
        %v3851 = vmax.f32 %v3843, 0.0
        %v3852 = vmax.f32 %v3844, 0.0
        %3853 = vst.msk [vmem:[%s1163 + $0x8] sm:$0xff] %vm590, %v3845
        %3854 = vst.msk [vmem:[%s1163 + $0x20] sm:$0xff] %vm590, %v3846
        %3855 = vst.msk [vmem:[%s1163 + $0x38] sm:$0xff] %vm590, %v3847
        %3856 = vst.msk [vmem:[%s1163 + $0x50] sm:$0xff] %vm590, %v3848
        %3857 = vst.msk [vmem:[%s1163 + $0x68] sm:$0xff] %vm590, %v3849
        %3858 = vst.msk [vmem:[%s1163 + $0x80] sm:$0xff] %vm590, %v3850
        %3859 = vst.msk [vmem:[%s1163 + $0x98] sm:$0xff] %vm590, %v3851
        %3860 = vst.msk [vmem:[%s1163 + $0xb0] sm:$0xff] %vm590, %v3852
        %v3861 = vld [vmem:[#allocation2 + $0x7] sm:$0xff]
        %v3862 = vld [vmem:[#allocation2 + $0x1f] sm:$0xff]
        %v3863 = vld [vmem:[#allocation2 + $0x37] sm:$0xff]
        %v3864 = vld [vmem:[#allocation2 + $0x4f] sm:$0xff]
        %v3865 = vld [vmem:[#allocation2 + $0x67] sm:$0xff]
        %v3866 = vld [vmem:[#allocation2 + $0x7f] sm:$0xff]
        %v3867 = vld [vmem:[#allocation2 + $0x97] sm:$0xff]
        %v3868 = vld [vmem:[#allocation2 + $0xaf] sm:$0xff]
        %v3869 = vpack.c.bf16 %v3862, %v3861
        %v3870 = vpack.c.bf16 %v3864, %v3863
        %v3871 = vpack.c.bf16 %v3866, %v3865
        %v3872 = vpack.c.bf16 %v3868, %v3867
        %v3873 = vld [vmem:[#allocation14] sm:$0xf]
        %v3874 = vld [vmem:[#allocation14 + $0x4] sm:$0xf]
        %v3875 = vld [vmem:[#allocation14 + $0x8] sm:$0xf]
        %v3876 = vld [vmem:[#allocation14 + $0xc] sm:$0xf]
        %v3877 = vld [vmem:[#allocation14 + $0x10] sm:$0xf]
        %v3878 = vld [vmem:[#allocation14 + $0x14] sm:$0xf]
        %v3879 = vld [vmem:[#allocation14 + $0x18] sm:$0xf]
        %v3880 = vld [vmem:[#allocation14 + $0x1c] sm:$0xf]
        %v3881 = vld [vmem:[#allocation2 + $0x8] sm:$0xff]
        %v3882 = vld [vmem:[#allocation2 + $0x20] sm:$0xff]
        %v3883 = vld [vmem:[#allocation2 + $0x38] sm:$0xff]
        %v3884 = vld [vmem:[#allocation2 + $0x50] sm:$0xff]
        %v3885 = vld [vmem:[#allocation2 + $0x68] sm:$0xff]
        %v3886 = vld [vmem:[#allocation2 + $0x80] sm:$0xff]
        %v3887 = vld [vmem:[#allocation2 + $0x98] sm:$0xff]
        %v3888 = vld [vmem:[#allocation2 + $0xb0] sm:$0xff]
        %v3889 = vpack.c.bf16 %v3882, %v3881
        %v3890 = vpack.c.bf16 %v3884, %v3883
        %v3891 = vpack.c.bf16 %v3886, %v3885
        %v3892 = vpack.c.bf16 %v3888, %v3887
        %s3893 = scalar_lea.vmem [#allocation14], 32
        %v3894 = vld [vmem:[%s3893] sm:$0xf]
        %v3895 = vld [vmem:[%s3893 + $0x4] sm:$0xf]
        %v3896 = vld [vmem:[%s3893 + $0x8] sm:$0xf]
        %v3897 = vld [vmem:[%s3893 + $0xc] sm:$0xf]
        %v3898 = vld [vmem:[%s3893 + $0x10] sm:$0xf]
        %v3899 = vld [vmem:[%s3893 + $0x14] sm:$0xf]
        %v3900 = vld [vmem:[%s3893 + $0x18] sm:$0xf]
        %v3901 = vld [vmem:[%s3893 + $0x1c] sm:$0xf]
        %v3910 = vunpack.c.l.b16 %v3894
        %v3911 = vunpack.c.l.b16 %v3895
        %v3912 = vunpack.c.l.b16 %v3896
        %v3913 = vunpack.c.l.b16 %v3897
        %v3914 = vunpack.c.l.b16 %v3898
        %v3915 = vunpack.c.l.b16 %v3899
        %v3916 = vunpack.c.l.b16 %v3900
        %v3917 = vunpack.c.l.b16 %v3901
        %v3918 = vpack.c.b16 %v3911, %v3910
        %v3919 = vpack.c.b16 %v3913, %v3912
        %v3920 = vpack.c.b16 %v3915, %v3914
        %v3921 = vpack.c.b16 %v3917, %v3916
        %v3927 = vsel %vm590, %v3889, 0
        %v3930 = vsel %vm590, %v3890, 0
        %v3933 = vsel %vm590, %v3891, 0
        %v3936 = vsel %vm590, %v3892, 0
        %3938 = vmatpush.bf16.msra.mxu0 0
        %3939 = vmatpush.bf16.msra.mxu0 0
        %3940 = vmatpush.bf16.msra.mxu0 0
        %3941 = vmatpush.bf16.msra.mxu0 0
        %3942 = vmatpush.bf16.msra.mxu0 %v3921
        %3943 = vmatpush.bf16.msra.mxu0 %v3920
        %3944 = vmatpush.bf16.msra.mxu0 %v3919
        %3945 = vmatpush.bf16.msra.mxu0 %v3918
        %3946 = vmatmul.bf16.gmra.mxu0 %v3927
        %v3947 = vpop.f32.mrf.mxu0
        %v3948 = vadd.f32 0.0, %v3947
        %v3949 = vpop.f32.mrf.mxu0
        %v3950 = vadd.f32 0.0, %v3949
        %3951 = vmatmul.bf16.gmra.mxu0 %v3930
        %v3952 = vpop.f32.mrf.mxu0
        %v3953 = vadd.f32 0.0, %v3952
        %v3954 = vpop.f32.mrf.mxu0
        %v3955 = vadd.f32 0.0, %v3954
        %3956 = vmatmul.bf16.gmra.mxu0 %v3933
        %v3957 = vpop.f32.mrf.mxu0
        %v3958 = vadd.f32 0.0, %v3957
        %v3959 = vpop.f32.mrf.mxu0
        %v3960 = vadd.f32 0.0, %v3959
        %3961 = vmatmul.bf16.gmra.mxu0 %v3936
        %v3962 = vpop.f32.mrf.mxu0
        %v3963 = vadd.f32 0.0, %v3962
        %v3964 = vpop.f32.mrf.mxu0
        %v3965 = vadd.f32 0.0, %v3964
        %3966 = vdwg.mxu0
        %v3975 = vunpack.c.l.b16 %v3873
        %v3976 = vunpack.c.l.b16 %v3874
        %v3977 = vunpack.c.l.b16 %v3875
        %v3978 = vunpack.c.l.b16 %v3876
        %v3979 = vunpack.c.l.b16 %v3877
        %v3980 = vunpack.c.l.b16 %v3878
        %v3981 = vunpack.c.l.b16 %v3879
        %v3982 = vunpack.c.l.b16 %v3880
        %v3983 = vpack.c.b16 %v3976, %v3975
        %v3984 = vpack.c.b16 %v3978, %v3977
        %v3985 = vpack.c.b16 %v3980, %v3979
        %v3986 = vpack.c.b16 %v3982, %v3981
        %v3992 = vsel %vm590, %v3869, 0
        %v3995 = vsel %vm590, %v3870, 0
        %v3998 = vsel %vm590, %v3871, 0
        %v4001 = vsel %vm590, %v3872, 0
        %4003 = vmatpush.bf16.msra.mxu0 0
        %4004 = vmatpush.bf16.msra.mxu0 0
        %4005 = vmatpush.bf16.msra.mxu0 0
        %4006 = vmatpush.bf16.msra.mxu0 0
        %4007 = vmatpush.bf16.msra.mxu0 %v3986
        %4008 = vmatpush.bf16.msra.mxu0 %v3985
        %4009 = vmatpush.bf16.msra.mxu0 %v3984
        %4010 = vmatpush.bf16.msra.mxu0 %v3983
        %4011 = vmatmul.bf16.gmra.mxu0 %v3992
        %v4012 = vpop.f32.mrf.mxu0
        %v4013 = vadd.f32 %v3948, %v4012
        %v4014 = vpop.f32.mrf.mxu0
        %v4015 = vadd.f32 %v3950, %v4014
        %4016 = vmatmul.bf16.gmra.mxu0 %v3995
        %v4017 = vpop.f32.mrf.mxu0
        %v4018 = vadd.f32 %v3953, %v4017
        %v4019 = vpop.f32.mrf.mxu0
        %v4020 = vadd.f32 %v3955, %v4019
        %4021 = vmatmul.bf16.gmra.mxu0 %v3998
        %v4022 = vpop.f32.mrf.mxu0
        %v4023 = vadd.f32 %v3958, %v4022
        %v4024 = vpop.f32.mrf.mxu0
        %v4025 = vadd.f32 %v3960, %v4024
        %4026 = vmatmul.bf16.gmra.mxu0 %v4001
        %v4027 = vpop.f32.mrf.mxu0
        %v4028 = vadd.f32 %v3963, %v4027
        %v4029 = vpop.f32.mrf.mxu0
        %v4030 = vadd.f32 %v3965, %v4029
        %4031 = vdwg.mxu0
        %v4032 = vld [vmem:[#allocation2 + $0x9] sm:$0xff]
        %v4033 = vld [vmem:[#allocation2 + $0x21] sm:$0xff]
        %v4034 = vld [vmem:[#allocation2 + $0x39] sm:$0xff]
        %v4035 = vld [vmem:[#allocation2 + $0x51] sm:$0xff]
        %v4036 = vld [vmem:[#allocation2 + $0x69] sm:$0xff]
        %v4037 = vld [vmem:[#allocation2 + $0x81] sm:$0xff]
        %v4038 = vld [vmem:[#allocation2 + $0x99] sm:$0xff]
        %v4039 = vld [vmem:[#allocation2 + $0xb1] sm:$0xff]
        %v4040 = vpack.c.bf16 %v4033, %v4032
        %v4041 = vpack.c.bf16 %v4035, %v4034
        %v4042 = vpack.c.bf16 %v4037, %v4036
        %v4043 = vpack.c.bf16 %v4039, %v4038
        %s4044 = scalar_lea.vmem [#allocation14], 64
        %v4045 = vld [vmem:[%s4044] sm:$0xf]
        %v4046 = vld [vmem:[%s4044 + $0x4] sm:$0xf]
        %v4047 = vld [vmem:[%s4044 + $0x8] sm:$0xf]
        %v4048 = vld [vmem:[%s4044 + $0xc] sm:$0xf]
        %v4049 = vld [vmem:[%s4044 + $0x10] sm:$0xf]
        %v4050 = vld [vmem:[%s4044 + $0x14] sm:$0xf]
        %v4051 = vld [vmem:[%s4044 + $0x18] sm:$0xf]
        %v4052 = vld [vmem:[%s4044 + $0x1c] sm:$0xf]
        %v4061 = vunpack.c.l.b16 %v4045
        %v4062 = vunpack.c.l.b16 %v4046
        %v4063 = vunpack.c.l.b16 %v4047
        %v4064 = vunpack.c.l.b16 %v4048
        %v4065 = vunpack.c.l.b16 %v4049
        %v4066 = vunpack.c.l.b16 %v4050
        %v4067 = vunpack.c.l.b16 %v4051
        %v4068 = vunpack.c.l.b16 %v4052
        %v4069 = vpack.c.b16 %v4062, %v4061
        %v4070 = vpack.c.b16 %v4064, %v4063
        %v4071 = vpack.c.b16 %v4066, %v4065
        %v4072 = vpack.c.b16 %v4068, %v4067
        %v4078 = vsel %vm590, %v4040, 0
        %v4081 = vsel %vm590, %v4041, 0
        %v4084 = vsel %vm590, %v4042, 0
        %v4087 = vsel %vm590, %v4043, 0
        %4089 = vmatpush.bf16.msra.mxu0 0
        %4090 = vmatpush.bf16.msra.mxu0 0
        %4091 = vmatpush.bf16.msra.mxu0 0
        %4092 = vmatpush.bf16.msra.mxu0 0
        %4093 = vmatpush.bf16.msra.mxu0 %v4072
        %4094 = vmatpush.bf16.msra.mxu0 %v4071
        %4095 = vmatpush.bf16.msra.mxu0 %v4070
        %4096 = vmatpush.bf16.msra.mxu0 %v4069
        %4097 = vmatmul.bf16.gmra.mxu0 %v4078
        %v4098 = vpop.f32.mrf.mxu0
        %v4099 = vadd.f32 0.0, %v4098
        %v4100 = vpop.f32.mrf.mxu0
        %v4101 = vadd.f32 0.0, %v4100
        %4102 = vmatmul.bf16.gmra.mxu0 %v4081
        %v4103 = vpop.f32.mrf.mxu0
        %v4104 = vadd.f32 0.0, %v4103
        %v4105 = vpop.f32.mrf.mxu0
        %v4106 = vadd.f32 0.0, %v4105
        %4107 = vmatmul.bf16.gmra.mxu0 %v4084
        %v4108 = vpop.f32.mrf.mxu0
        %v4109 = vadd.f32 0.0, %v4108
        %v4110 = vpop.f32.mrf.mxu0
        %v4111 = vadd.f32 0.0, %v4110
        %4112 = vmatmul.bf16.gmra.mxu0 %v4087
        %v4113 = vpop.f32.mrf.mxu0
        %v4114 = vadd.f32 0.0, %v4113
        %v4115 = vpop.f32.mrf.mxu0
        %v4116 = vadd.f32 0.0, %v4115
        %4117 = vdwg.mxu0
        %v4118 = vadd.f32 %v4013, %v4099
        %v4119 = vadd.f32 %v4015, %v4101
        %v4120 = vadd.f32 %v4018, %v4104
        %v4121 = vadd.f32 %v4020, %v4106
        %v4122 = vadd.f32 %v4023, %v4109
        %v4123 = vadd.f32 %v4025, %v4111
        %v4124 = vadd.f32 %v4028, %v4114
        %v4125 = vadd.f32 %v4030, %v4116
        %v4126 = vld [vmem:[%s1163 + $0x7] sm:$0xff]
        %v4127 = vld [vmem:[%s1163 + $0x1f] sm:$0xff]
        %v4128 = vld [vmem:[%s1163 + $0x37] sm:$0xff]
        %v4129 = vld [vmem:[%s1163 + $0x4f] sm:$0xff]
        %v4130 = vld [vmem:[%s1163 + $0x67] sm:$0xff]
        %v4131 = vld [vmem:[%s1163 + $0x7f] sm:$0xff]
        %v4132 = vld [vmem:[%s1163 + $0x97] sm:$0xff]
        %v4133 = vld [vmem:[%s1163 + $0xaf] sm:$0xff]
        %v4134 = vpack.c.bf16 %v4127, %v4126
        %v4135 = vpack.c.bf16 %v4129, %v4128
        %v4136 = vpack.c.bf16 %v4131, %v4130
        %v4137 = vpack.c.bf16 %v4133, %v4132
        %s4138 = scalar_lea.vmem [#allocation14], 96
        %v4139 = vld [vmem:[%s4138] sm:$0xf]
        %v4140 = vld [vmem:[%s4138 + $0x4] sm:$0xf]
        %v4141 = vld [vmem:[%s4138 + $0x8] sm:$0xf]
        %v4142 = vld [vmem:[%s4138 + $0xc] sm:$0xf]
        %v4143 = vld [vmem:[%s4138 + $0x10] sm:$0xf]
        %v4144 = vld [vmem:[%s4138 + $0x14] sm:$0xf]
        %v4145 = vld [vmem:[%s4138 + $0x18] sm:$0xf]
        %v4146 = vld [vmem:[%s4138 + $0x1c] sm:$0xf]
        %v4155 = vunpack.c.l.b16 %v4139
        %v4156 = vunpack.c.l.b16 %v4140
        %v4157 = vunpack.c.l.b16 %v4141
        %v4158 = vunpack.c.l.b16 %v4142
        %v4159 = vunpack.c.l.b16 %v4143
        %v4160 = vunpack.c.l.b16 %v4144
        %v4161 = vunpack.c.l.b16 %v4145
        %v4162 = vunpack.c.l.b16 %v4146
        %v4163 = vpack.c.b16 %v4156, %v4155
        %v4164 = vpack.c.b16 %v4158, %v4157
        %v4165 = vpack.c.b16 %v4160, %v4159
        %v4166 = vpack.c.b16 %v4162, %v4161
        %v4172 = vsel %vm590, %v4134, 0
        %v4175 = vsel %vm590, %v4135, 0
        %v4178 = vsel %vm590, %v4136, 0
        %v4181 = vsel %vm590, %v4137, 0
        %4183 = vmatpush.bf16.msra.mxu0 0
        %4184 = vmatpush.bf16.msra.mxu0 0
        %4185 = vmatpush.bf16.msra.mxu0 0
        %4186 = vmatpush.bf16.msra.mxu0 0
        %4187 = vmatpush.bf16.msra.mxu0 %v4166
        %4188 = vmatpush.bf16.msra.mxu0 %v4165
        %4189 = vmatpush.bf16.msra.mxu0 %v4164
        %4190 = vmatpush.bf16.msra.mxu0 %v4163
        %4191 = vmatmul.bf16.gmra.mxu0 %v4172
        %v4192 = vpop.f32.mrf.mxu0
        %v4193 = vadd.f32 0.0, %v4192
        %v4194 = vpop.f32.mrf.mxu0
        %v4195 = vadd.f32 0.0, %v4194
        %4196 = vmatmul.bf16.gmra.mxu0 %v4175
        %v4197 = vpop.f32.mrf.mxu0
        %v4198 = vadd.f32 0.0, %v4197
        %v4199 = vpop.f32.mrf.mxu0
        %v4200 = vadd.f32 0.0, %v4199
        %4201 = vmatmul.bf16.gmra.mxu0 %v4178
        %v4202 = vpop.f32.mrf.mxu0
        %v4203 = vadd.f32 0.0, %v4202
        %v4204 = vpop.f32.mrf.mxu0
        %v4205 = vadd.f32 0.0, %v4204
        %4206 = vmatmul.bf16.gmra.mxu0 %v4181
        %v4207 = vpop.f32.mrf.mxu0
        %v4208 = vadd.f32 0.0, %v4207
        %v4209 = vpop.f32.mrf.mxu0
        %v4210 = vadd.f32 0.0, %v4209
        %4211 = vdwg.mxu0
        %v4212 = vadd.f32 %v4118, %v4193
        %v4213 = vadd.f32 %v4119, %v4195
        %v4214 = vadd.f32 %v4120, %v4198
        %v4215 = vadd.f32 %v4121, %v4200
        %v4216 = vadd.f32 %v4122, %v4203
        %v4217 = vadd.f32 %v4123, %v4205
        %v4218 = vadd.f32 %v4124, %v4208
        %v4219 = vadd.f32 %v4125, %v4210
        %v4220 = vld [vmem:[%s1163 + $0x8] sm:$0xff]
        %v4221 = vld [vmem:[%s1163 + $0x20] sm:$0xff]
        %v4222 = vld [vmem:[%s1163 + $0x38] sm:$0xff]
        %v4223 = vld [vmem:[%s1163 + $0x50] sm:$0xff]
        %v4224 = vld [vmem:[%s1163 + $0x68] sm:$0xff]
        %v4225 = vld [vmem:[%s1163 + $0x80] sm:$0xff]
        %v4226 = vld [vmem:[%s1163 + $0x98] sm:$0xff]
        %v4227 = vld [vmem:[%s1163 + $0xb0] sm:$0xff]
        %v4228 = vpack.c.bf16 %v4221, %v4220
        %v4229 = vpack.c.bf16 %v4223, %v4222
        %v4230 = vpack.c.bf16 %v4225, %v4224
        %v4231 = vpack.c.bf16 %v4227, %v4226
        %s4232 = scalar_lea.vmem [#allocation14], 128
        %v4233 = vld [vmem:[%s4232] sm:$0xf]
        %v4234 = vld [vmem:[%s4232 + $0x4] sm:$0xf]
        %v4235 = vld [vmem:[%s4232 + $0x8] sm:$0xf]
        %v4236 = vld [vmem:[%s4232 + $0xc] sm:$0xf]
        %v4237 = vld [vmem:[%s4232 + $0x10] sm:$0xf]
        %v4238 = vld [vmem:[%s4232 + $0x14] sm:$0xf]
        %v4239 = vld [vmem:[%s4232 + $0x18] sm:$0xf]
        %v4240 = vld [vmem:[%s4232 + $0x1c] sm:$0xf]
        %v4249 = vunpack.c.l.b16 %v4233
        %v4250 = vunpack.c.l.b16 %v4234
        %v4251 = vunpack.c.l.b16 %v4235
        %v4252 = vunpack.c.l.b16 %v4236
        %v4253 = vunpack.c.l.b16 %v4237
        %v4254 = vunpack.c.l.b16 %v4238
        %v4255 = vunpack.c.l.b16 %v4239
        %v4256 = vunpack.c.l.b16 %v4240
        %v4257 = vpack.c.b16 %v4250, %v4249
        %v4258 = vpack.c.b16 %v4252, %v4251
        %v4259 = vpack.c.b16 %v4254, %v4253
        %v4260 = vpack.c.b16 %v4256, %v4255
        %v4266 = vsel %vm590, %v4228, 0
        %v4269 = vsel %vm590, %v4229, 0
        %v4272 = vsel %vm590, %v4230, 0
        %v4275 = vsel %vm590, %v4231, 0
        %4277 = vmatpush.bf16.msra.mxu0 0
        %4278 = vmatpush.bf16.msra.mxu0 0
        %4279 = vmatpush.bf16.msra.mxu0 0
        %4280 = vmatpush.bf16.msra.mxu0 0
        %4281 = vmatpush.bf16.msra.mxu0 %v4260
        %4282 = vmatpush.bf16.msra.mxu0 %v4259
        %4283 = vmatpush.bf16.msra.mxu0 %v4258
        %4284 = vmatpush.bf16.msra.mxu0 %v4257
        %4285 = vmatmul.bf16.gmra.mxu0 %v4266
        %v4286 = vpop.f32.mrf.mxu0
        %v4287 = vadd.f32 0.0, %v4286
        %v4288 = vpop.f32.mrf.mxu0
        %v4289 = vadd.f32 0.0, %v4288
        %4290 = vmatmul.bf16.gmra.mxu0 %v4269
        %v4291 = vpop.f32.mrf.mxu0
        %v4292 = vadd.f32 0.0, %v4291
        %v4293 = vpop.f32.mrf.mxu0
        %v4294 = vadd.f32 0.0, %v4293
        %4295 = vmatmul.bf16.gmra.mxu0 %v4272
        %v4296 = vpop.f32.mrf.mxu0
        %v4297 = vadd.f32 0.0, %v4296
        %v4298 = vpop.f32.mrf.mxu0
        %v4299 = vadd.f32 0.0, %v4298
        %4300 = vmatmul.bf16.gmra.mxu0 %v4275
        %v4301 = vpop.f32.mrf.mxu0
        %v4302 = vadd.f32 0.0, %v4301
        %v4303 = vpop.f32.mrf.mxu0
        %v4304 = vadd.f32 0.0, %v4303
        %4305 = vdwg.mxu0
        %v4306 = vadd.f32 %v4212, %v4287
        %v4307 = vadd.f32 %v4213, %v4289
        %v4308 = vadd.f32 %v4214, %v4292
        %v4309 = vadd.f32 %v4215, %v4294
        %v4310 = vadd.f32 %v4216, %v4297
        %v4311 = vadd.f32 %v4217, %v4299
        %v4312 = vadd.f32 %v4218, %v4302
        %v4313 = vadd.f32 %v4219, %v4304
        %v4314 = vld [vmem:[%s1163 + $0x9] sm:$0xff]
        %v4315 = vld [vmem:[%s1163 + $0x21] sm:$0xff]
        %v4316 = vld [vmem:[%s1163 + $0x39] sm:$0xff]
        %v4317 = vld [vmem:[%s1163 + $0x51] sm:$0xff]
        %v4318 = vld [vmem:[%s1163 + $0x69] sm:$0xff]
        %v4319 = vld [vmem:[%s1163 + $0x81] sm:$0xff]
        %v4320 = vld [vmem:[%s1163 + $0x99] sm:$0xff]
        %v4321 = vld [vmem:[%s1163 + $0xb1] sm:$0xff]
        %v4322 = vpack.c.bf16 %v4315, %v4314
        %v4323 = vpack.c.bf16 %v4317, %v4316
        %v4324 = vpack.c.bf16 %v4319, %v4318
        %v4325 = vpack.c.bf16 %v4321, %v4320
        %s4326 = scalar_lea.vmem [#allocation14], 160
        %v4327 = vld [vmem:[%s4326] sm:$0xf]
        %v4328 = vld [vmem:[%s4326 + $0x4] sm:$0xf]
        %v4329 = vld [vmem:[%s4326 + $0x8] sm:$0xf]
        %v4330 = vld [vmem:[%s4326 + $0xc] sm:$0xf]
        %v4331 = vld [vmem:[%s4326 + $0x10] sm:$0xf]
        %v4332 = vld [vmem:[%s4326 + $0x14] sm:$0xf]
        %v4333 = vld [vmem:[%s4326 + $0x18] sm:$0xf]
        %v4334 = vld [vmem:[%s4326 + $0x1c] sm:$0xf]
        %v4343 = vunpack.c.l.b16 %v4327
        %v4344 = vunpack.c.l.b16 %v4328
        %v4345 = vunpack.c.l.b16 %v4329
        %v4346 = vunpack.c.l.b16 %v4330
        %v4347 = vunpack.c.l.b16 %v4331
        %v4348 = vunpack.c.l.b16 %v4332
        %v4349 = vunpack.c.l.b16 %v4333
        %v4350 = vunpack.c.l.b16 %v4334
        %v4351 = vpack.c.b16 %v4344, %v4343
        %v4352 = vpack.c.b16 %v4346, %v4345
        %v4353 = vpack.c.b16 %v4348, %v4347
        %v4354 = vpack.c.b16 %v4350, %v4349
        %v4360 = vsel %vm590, %v4322, 0
        %v4363 = vsel %vm590, %v4323, 0
        %v4366 = vsel %vm590, %v4324, 0
        %v4369 = vsel %vm590, %v4325, 0
        %4371 = vmatpush.bf16.msra.mxu0 0
        %4372 = vmatpush.bf16.msra.mxu0 0
        %4373 = vmatpush.bf16.msra.mxu0 0
        %4374 = vmatpush.bf16.msra.mxu0 0
        %4375 = vmatpush.bf16.msra.mxu0 %v4354
        %4376 = vmatpush.bf16.msra.mxu0 %v4353
        %4377 = vmatpush.bf16.msra.mxu0 %v4352
        %4378 = vmatpush.bf16.msra.mxu0 %v4351
        %4379 = vmatmul.bf16.gmra.mxu0 %v4360
        %v4380 = vpop.f32.mrf.mxu0
        %v4381 = vadd.f32 0.0, %v4380
        %v4382 = vpop.f32.mrf.mxu0
        %v4383 = vadd.f32 0.0, %v4382
        %4384 = vmatmul.bf16.gmra.mxu0 %v4363
        %v4385 = vpop.f32.mrf.mxu0
        %v4386 = vadd.f32 0.0, %v4385
        %v4387 = vpop.f32.mrf.mxu0
        %v4388 = vadd.f32 0.0, %v4387
        %4389 = vmatmul.bf16.gmra.mxu0 %v4366
        %v4390 = vpop.f32.mrf.mxu0
        %v4391 = vadd.f32 0.0, %v4390
        %v4392 = vpop.f32.mrf.mxu0
        %v4393 = vadd.f32 0.0, %v4392
        %4394 = vmatmul.bf16.gmra.mxu0 %v4369
        %v4395 = vpop.f32.mrf.mxu0
        %v4396 = vadd.f32 0.0, %v4395
        %v4397 = vpop.f32.mrf.mxu0
        %v4398 = vadd.f32 0.0, %v4397
        %4399 = vdwg.mxu0
        %v4400 = vadd.f32 %v4306, %v4381
        %v4401 = vadd.f32 %v4307, %v4383
        %v4402 = vadd.f32 %v4308, %v4386
        %v4403 = vadd.f32 %v4309, %v4388
        %v4404 = vadd.f32 %v4310, %v4391
        %v4405 = vadd.f32 %v4311, %v4393
        %v4406 = vadd.f32 %v4312, %v4396
        %v4407 = vadd.f32 %v4313, %v4398
        %v4408 = vld [vmem:[%s1719 + $0x7] sm:$0xff]
        %v4409 = vld [vmem:[%s1719 + $0x1f] sm:$0xff]
        %v4410 = vld [vmem:[%s1719 + $0x37] sm:$0xff]
        %v4411 = vld [vmem:[%s1719 + $0x4f] sm:$0xff]
        %v4412 = vld [vmem:[%s1719 + $0x67] sm:$0xff]
        %v4413 = vld [vmem:[%s1719 + $0x7f] sm:$0xff]
        %v4414 = vld [vmem:[%s1719 + $0x97] sm:$0xff]
        %v4415 = vld [vmem:[%s1719 + $0xaf] sm:$0xff]
        %v4416 = vpack.c.bf16 %v4409, %v4408
        %v4417 = vpack.c.bf16 %v4411, %v4410
        %v4418 = vpack.c.bf16 %v4413, %v4412
        %v4419 = vpack.c.bf16 %v4415, %v4414
        %s4420 = scalar_lea.vmem [#allocation14], 192
        %v4421 = vld [vmem:[%s4420] sm:$0xf]
        %v4422 = vld [vmem:[%s4420 + $0x4] sm:$0xf]
        %v4423 = vld [vmem:[%s4420 + $0x8] sm:$0xf]
        %v4424 = vld [vmem:[%s4420 + $0xc] sm:$0xf]
        %v4425 = vld [vmem:[%s4420 + $0x10] sm:$0xf]
        %v4426 = vld [vmem:[%s4420 + $0x14] sm:$0xf]
        %v4427 = vld [vmem:[%s4420 + $0x18] sm:$0xf]
        %v4428 = vld [vmem:[%s4420 + $0x1c] sm:$0xf]
        %v4437 = vunpack.c.l.b16 %v4421
        %v4438 = vunpack.c.l.b16 %v4422
        %v4439 = vunpack.c.l.b16 %v4423
        %v4440 = vunpack.c.l.b16 %v4424
        %v4441 = vunpack.c.l.b16 %v4425
        %v4442 = vunpack.c.l.b16 %v4426
        %v4443 = vunpack.c.l.b16 %v4427
        %v4444 = vunpack.c.l.b16 %v4428
        %v4445 = vpack.c.b16 %v4438, %v4437
        %v4446 = vpack.c.b16 %v4440, %v4439
        %v4447 = vpack.c.b16 %v4442, %v4441
        %v4448 = vpack.c.b16 %v4444, %v4443
        %v4454 = vsel %vm590, %v4416, 0
        %v4457 = vsel %vm590, %v4417, 0
        %v4460 = vsel %vm590, %v4418, 0
        %v4463 = vsel %vm590, %v4419, 0
        %4465 = vmatpush.bf16.msra.mxu0 0
        %4466 = vmatpush.bf16.msra.mxu0 0
        %4467 = vmatpush.bf16.msra.mxu0 0
        %4468 = vmatpush.bf16.msra.mxu0 0
        %4469 = vmatpush.bf16.msra.mxu0 %v4448
        %4470 = vmatpush.bf16.msra.mxu0 %v4447
        %4471 = vmatpush.bf16.msra.mxu0 %v4446
        %4472 = vmatpush.bf16.msra.mxu0 %v4445
        %4473 = vmatmul.bf16.gmra.mxu0 %v4454
        %v4474 = vpop.f32.mrf.mxu0
        %v4475 = vadd.f32 0.0, %v4474
        %v4476 = vpop.f32.mrf.mxu0
        %v4477 = vadd.f32 0.0, %v4476
        %4478 = vmatmul.bf16.gmra.mxu0 %v4457
        %v4479 = vpop.f32.mrf.mxu0
        %v4480 = vadd.f32 0.0, %v4479
        %v4481 = vpop.f32.mrf.mxu0
        %v4482 = vadd.f32 0.0, %v4481
        %4483 = vmatmul.bf16.gmra.mxu0 %v4460
        %v4484 = vpop.f32.mrf.mxu0
        %v4485 = vadd.f32 0.0, %v4484
        %v4486 = vpop.f32.mrf.mxu0
        %v4487 = vadd.f32 0.0, %v4486
        %4488 = vmatmul.bf16.gmra.mxu0 %v4463
        %v4489 = vpop.f32.mrf.mxu0
        %v4490 = vadd.f32 0.0, %v4489
        %v4491 = vpop.f32.mrf.mxu0
        %v4492 = vadd.f32 0.0, %v4491
        %4493 = vdwg.mxu0
        %v4494 = vadd.f32 %v4400, %v4475
        %v4495 = vadd.f32 %v4401, %v4477
        %v4496 = vadd.f32 %v4402, %v4480
        %v4497 = vadd.f32 %v4403, %v4482
        %v4498 = vadd.f32 %v4404, %v4485
        %v4499 = vadd.f32 %v4405, %v4487
        %v4500 = vadd.f32 %v4406, %v4490
        %v4501 = vadd.f32 %v4407, %v4492
        %v4502 = vld [vmem:[%s1719 + $0x8] sm:$0xff]
        %v4503 = vld [vmem:[%s1719 + $0x20] sm:$0xff]
        %v4504 = vld [vmem:[%s1719 + $0x38] sm:$0xff]
        %v4505 = vld [vmem:[%s1719 + $0x50] sm:$0xff]
        %v4506 = vld [vmem:[%s1719 + $0x68] sm:$0xff]
        %v4507 = vld [vmem:[%s1719 + $0x80] sm:$0xff]
        %v4508 = vld [vmem:[%s1719 + $0x98] sm:$0xff]
        %v4509 = vld [vmem:[%s1719 + $0xb0] sm:$0xff]
        %v4510 = vpack.c.bf16 %v4503, %v4502
        %v4511 = vpack.c.bf16 %v4505, %v4504
        %v4512 = vpack.c.bf16 %v4507, %v4506
        %v4513 = vpack.c.bf16 %v4509, %v4508
        %s4514 = scalar_lea.vmem [#allocation14], 224
        %v4515 = vld [vmem:[%s4514] sm:$0xf]
        %v4516 = vld [vmem:[%s4514 + $0x4] sm:$0xf]
        %v4517 = vld [vmem:[%s4514 + $0x8] sm:$0xf]
        %v4518 = vld [vmem:[%s4514 + $0xc] sm:$0xf]
        %v4519 = vld [vmem:[%s4514 + $0x10] sm:$0xf]
        %v4520 = vld [vmem:[%s4514 + $0x14] sm:$0xf]
        %v4521 = vld [vmem:[%s4514 + $0x18] sm:$0xf]
        %v4522 = vld [vmem:[%s4514 + $0x1c] sm:$0xf]
        %v4531 = vunpack.c.l.b16 %v4515
        %v4532 = vunpack.c.l.b16 %v4516
        %v4533 = vunpack.c.l.b16 %v4517
        %v4534 = vunpack.c.l.b16 %v4518
        %v4535 = vunpack.c.l.b16 %v4519
        %v4536 = vunpack.c.l.b16 %v4520
        %v4537 = vunpack.c.l.b16 %v4521
        %v4538 = vunpack.c.l.b16 %v4522
        %v4539 = vpack.c.b16 %v4532, %v4531
        %v4540 = vpack.c.b16 %v4534, %v4533
        %v4541 = vpack.c.b16 %v4536, %v4535
        %v4542 = vpack.c.b16 %v4538, %v4537
        %v4548 = vsel %vm590, %v4510, 0
        %v4551 = vsel %vm590, %v4511, 0
        %v4554 = vsel %vm590, %v4512, 0
        %v4557 = vsel %vm590, %v4513, 0
        %4559 = vmatpush.bf16.msra.mxu0 0
        %4560 = vmatpush.bf16.msra.mxu0 0
        %4561 = vmatpush.bf16.msra.mxu0 0
        %4562 = vmatpush.bf16.msra.mxu0 0
        %4563 = vmatpush.bf16.msra.mxu0 %v4542
        %4564 = vmatpush.bf16.msra.mxu0 %v4541
        %4565 = vmatpush.bf16.msra.mxu0 %v4540
        %4566 = vmatpush.bf16.msra.mxu0 %v4539
        %4567 = vmatmul.bf16.gmra.mxu0 %v4548
        %v4568 = vpop.f32.mrf.mxu0
        %v4569 = vadd.f32 0.0, %v4568
        %v4570 = vpop.f32.mrf.mxu0
        %v4571 = vadd.f32 0.0, %v4570
        %4572 = vmatmul.bf16.gmra.mxu0 %v4551
        %v4573 = vpop.f32.mrf.mxu0
        %v4574 = vadd.f32 0.0, %v4573
        %v4575 = vpop.f32.mrf.mxu0
        %v4576 = vadd.f32 0.0, %v4575
        %4577 = vmatmul.bf16.gmra.mxu0 %v4554
        %v4578 = vpop.f32.mrf.mxu0
        %v4579 = vadd.f32 0.0, %v4578
        %v4580 = vpop.f32.mrf.mxu0
        %v4581 = vadd.f32 0.0, %v4580
        %4582 = vmatmul.bf16.gmra.mxu0 %v4557
        %v4583 = vpop.f32.mrf.mxu0
        %v4584 = vadd.f32 0.0, %v4583
        %v4585 = vpop.f32.mrf.mxu0
        %v4586 = vadd.f32 0.0, %v4585
        %4587 = vdwg.mxu0
        %v4588 = vadd.f32 %v4494, %v4569
        %v4589 = vadd.f32 %v4495, %v4571
        %v4590 = vadd.f32 %v4496, %v4574
        %v4591 = vadd.f32 %v4497, %v4576
        %v4592 = vadd.f32 %v4498, %v4579
        %v4593 = vadd.f32 %v4499, %v4581
        %v4594 = vadd.f32 %v4500, %v4584
        %v4595 = vadd.f32 %v4501, %v4586
        %v4596 = vld [vmem:[%s1719 + $0x9] sm:$0xff]
        %v4597 = vld [vmem:[%s1719 + $0x21] sm:$0xff]
        %v4598 = vld [vmem:[%s1719 + $0x39] sm:$0xff]
        %v4599 = vld [vmem:[%s1719 + $0x51] sm:$0xff]
        %v4600 = vld [vmem:[%s1719 + $0x69] sm:$0xff]
        %v4601 = vld [vmem:[%s1719 + $0x81] sm:$0xff]
        %v4602 = vld [vmem:[%s1719 + $0x99] sm:$0xff]
        %v4603 = vld [vmem:[%s1719 + $0xb1] sm:$0xff]
        %v4604 = vpack.c.bf16 %v4597, %v4596
        %v4605 = vpack.c.bf16 %v4599, %v4598
        %v4606 = vpack.c.bf16 %v4601, %v4600
        %v4607 = vpack.c.bf16 %v4603, %v4602
        %s4608 = scalar_lea.vmem [#allocation14], 256
        %v4609 = vld [vmem:[%s4608] sm:$0xf]
        %v4610 = vld [vmem:[%s4608 + $0x4] sm:$0xf]
        %v4611 = vld [vmem:[%s4608 + $0x8] sm:$0xf]
        %v4612 = vld [vmem:[%s4608 + $0xc] sm:$0xf]
        %v4613 = vld [vmem:[%s4608 + $0x10] sm:$0xf]
        %v4614 = vld [vmem:[%s4608 + $0x14] sm:$0xf]
        %v4615 = vld [vmem:[%s4608 + $0x18] sm:$0xf]
        %v4616 = vld [vmem:[%s4608 + $0x1c] sm:$0xf]
        %v4625 = vunpack.c.l.b16 %v4609
        %v4626 = vunpack.c.l.b16 %v4610
        %v4627 = vunpack.c.l.b16 %v4611
        %v4628 = vunpack.c.l.b16 %v4612
        %v4629 = vunpack.c.l.b16 %v4613
        %v4630 = vunpack.c.l.b16 %v4614
        %v4631 = vunpack.c.l.b16 %v4615
        %v4632 = vunpack.c.l.b16 %v4616
        %v4633 = vpack.c.b16 %v4626, %v4625
        %v4634 = vpack.c.b16 %v4628, %v4627
        %v4635 = vpack.c.b16 %v4630, %v4629
        %v4636 = vpack.c.b16 %v4632, %v4631
        %v4642 = vsel %vm590, %v4604, 0
        %v4645 = vsel %vm590, %v4605, 0
        %v4648 = vsel %vm590, %v4606, 0
        %v4651 = vsel %vm590, %v4607, 0
        %4653 = vmatpush.bf16.msra.mxu0 0
        %4654 = vmatpush.bf16.msra.mxu0 0
        %4655 = vmatpush.bf16.msra.mxu0 0
        %4656 = vmatpush.bf16.msra.mxu0 0
        %4657 = vmatpush.bf16.msra.mxu0 %v4636
        %4658 = vmatpush.bf16.msra.mxu0 %v4635
        %4659 = vmatpush.bf16.msra.mxu0 %v4634
        %4660 = vmatpush.bf16.msra.mxu0 %v4633
        %4661 = vmatmul.bf16.gmra.mxu0 %v4642
        %v4662 = vpop.f32.mrf.mxu0
        %v4663 = vadd.f32 0.0, %v4662
        %v4664 = vpop.f32.mrf.mxu0
        %v4665 = vadd.f32 0.0, %v4664
        %4666 = vmatmul.bf16.gmra.mxu0 %v4645
        %v4667 = vpop.f32.mrf.mxu0
        %v4668 = vadd.f32 0.0, %v4667
        %v4669 = vpop.f32.mrf.mxu0
        %v4670 = vadd.f32 0.0, %v4669
        %4671 = vmatmul.bf16.gmra.mxu0 %v4648
        %v4672 = vpop.f32.mrf.mxu0
        %v4673 = vadd.f32 0.0, %v4672
        %v4674 = vpop.f32.mrf.mxu0
        %v4675 = vadd.f32 0.0, %v4674
        %4676 = vmatmul.bf16.gmra.mxu0 %v4651
        %v4677 = vpop.f32.mrf.mxu0
        %v4678 = vadd.f32 0.0, %v4677
        %v4679 = vpop.f32.mrf.mxu0
        %v4680 = vadd.f32 0.0, %v4679
        %4681 = vdwg.mxu0
        %v4682 = vadd.f32 %v4588, %v4663
        %v4683 = vadd.f32 %v4589, %v4665
        %v4684 = vadd.f32 %v4590, %v4668
        %v4685 = vadd.f32 %v4591, %v4670
        %v4686 = vadd.f32 %v4592, %v4673
        %v4687 = vadd.f32 %v4593, %v4675
        %v4688 = vadd.f32 %v4594, %v4678
        %v4689 = vadd.f32 %v4595, %v4680
        %v4690 = vld [vmem:[%s10 + $0x4] sm:$0x1]
        %v4691 = vperm.slane %v4690, 0
        %v4692 = vadd.f32 %v4682, %v4691
        %v4693 = vadd.f32 %v4683, %v4691
        %v4694 = vadd.f32 %v4684, %v4691
        %v4695 = vadd.f32 %v4685, %v4691
        %v4696 = vadd.f32 %v4686, %v4691
        %v4697 = vadd.f32 %v4687, %v4691
        %v4698 = vadd.f32 %v4688, %v4691
        %v4699 = vadd.f32 %v4689, %v4691
        %v4700 = vmax.f32 %v4692, 0.0
        %v4701 = vmax.f32 %v4693, 0.0
        %v4702 = vmax.f32 %v4694, 0.0
        %v4703 = vmax.f32 %v4695, 0.0
        %v4704 = vmax.f32 %v4696, 0.0
        %v4705 = vmax.f32 %v4697, 0.0
        %v4706 = vmax.f32 %v4698, 0.0
        %v4707 = vmax.f32 %v4699, 0.0
        %4708 = vst.msk [vmem:[%s1163 + $0x8] sm:$0xff] %vm590, %v4700
        %4709 = vst.msk [vmem:[%s1163 + $0x20] sm:$0xff] %vm590, %v4701
        %4710 = vst.msk [vmem:[%s1163 + $0x38] sm:$0xff] %vm590, %v4702
        %4711 = vst.msk [vmem:[%s1163 + $0x50] sm:$0xff] %vm590, %v4703
        %4712 = vst.msk [vmem:[%s1163 + $0x68] sm:$0xff] %vm590, %v4704
        %4713 = vst.msk [vmem:[%s1163 + $0x80] sm:$0xff] %vm590, %v4705
        %4714 = vst.msk [vmem:[%s1163 + $0x98] sm:$0xff] %vm590, %v4706
        %4715 = vst.msk [vmem:[%s1163 + $0xb0] sm:$0xff] %vm590, %v4707
        %v4716 = vld [vmem:[#allocation2 + $0x7] sm:$0xff]
        %v4717 = vld [vmem:[#allocation2 + $0x1f] sm:$0xff]
        %v4718 = vld [vmem:[#allocation2 + $0x37] sm:$0xff]
        %v4719 = vld [vmem:[#allocation2 + $0x4f] sm:$0xff]
        %v4720 = vld [vmem:[#allocation2 + $0x67] sm:$0xff]
        %v4721 = vld [vmem:[#allocation2 + $0x7f] sm:$0xff]
        %v4722 = vld [vmem:[#allocation2 + $0x97] sm:$0xff]
        %v4723 = vld [vmem:[#allocation2 + $0xaf] sm:$0xff]
        %v4724 = vld [vmem:[%s9] sm:$0x1]
        %v4725 = vperm.slane %v4724, 0
        %v4726 = vmul.f32 %v4716, %v4725
        %v4727 = vmul.f32 %v4717, %v4725
        %v4728 = vmul.f32 %v4718, %v4725
        %v4729 = vmul.f32 %v4719, %v4725
        %v4730 = vmul.f32 %v4720, %v4725
        %v4731 = vmul.f32 %v4721, %v4725
        %v4732 = vmul.f32 %v4722, %v4725
        %v4733 = vmul.f32 %v4723, %v4725
        %v4734 = vsel %vm590, %v4726, 0.0
        %4735 = vadd.xlane.f32.xlu0 %v4734
        %v4736 = vpop.xlane.xlu0 %4735
        %v4737 = vsel %vm590, %v4727, 0.0
        %4738 = vadd.xlane.f32.xlu0 %v4737
        %v4739 = vpop.xlane.xlu0 %4738
        %v4740 = vsel %vm590, %v4728, 0.0
        %4741 = vadd.xlane.f32.xlu0 %v4740
        %v4742 = vpop.xlane.xlu0 %4741
        %v4743 = vsel %vm590, %v4729, 0.0
        %4744 = vadd.xlane.f32.xlu0 %v4743
        %v4745 = vpop.xlane.xlu0 %4744
        %v4746 = vsel %vm590, %v4730, 0.0
        %4747 = vadd.xlane.f32.xlu0 %v4746
        %v4748 = vpop.xlane.xlu0 %4747
        %v4749 = vsel %vm590, %v4731, 0.0
        %4750 = vadd.xlane.f32.xlu0 %v4749
        %v4751 = vpop.xlane.xlu0 %4750
        %v4752 = vsel %vm590, %v4732, 0.0
        %4753 = vadd.xlane.f32.xlu0 %v4752
        %v4754 = vpop.xlane.xlu0 %4753
        %v4755 = vsel %vm590, %v4733, 0.0
        %4756 = vadd.xlane.f32.xlu0 %v4755
        %v4757 = vpop.xlane.xlu0 %4756
        %v4758 = vld [vmem:[#allocation2 + $0x8] sm:$0xff]
        %v4759 = vld [vmem:[#allocation2 + $0x20] sm:$0xff]
        %v4760 = vld [vmem:[#allocation2 + $0x38] sm:$0xff]
        %v4761 = vld [vmem:[#allocation2 + $0x50] sm:$0xff]
        %v4762 = vld [vmem:[#allocation2 + $0x68] sm:$0xff]
        %v4763 = vld [vmem:[#allocation2 + $0x80] sm:$0xff]
        %v4764 = vld [vmem:[#allocation2 + $0x98] sm:$0xff]
        %v4765 = vld [vmem:[#allocation2 + $0xb0] sm:$0xff]
        %v4766 = vld [vmem:[%s9 + $0x1] sm:$0x1]
        %v4767 = vperm.slane %v4766, 0
        %v4768 = vmul.f32 %v4758, %v4767
        %v4769 = vmul.f32 %v4759, %v4767
        %v4770 = vmul.f32 %v4760, %v4767
        %v4771 = vmul.f32 %v4761, %v4767
        %v4772 = vmul.f32 %v4762, %v4767
        %v4773 = vmul.f32 %v4763, %v4767
        %v4774 = vmul.f32 %v4764, %v4767
        %v4775 = vmul.f32 %v4765, %v4767
        %v4776 = vsel %vm590, %v4768, 0.0
        %4777 = vadd.xlane.f32.xlu0 %v4776
        %v4778 = vpop.xlane.xlu0 %4777
        %v4779 = vsel %vm590, %v4769, 0.0
        %4780 = vadd.xlane.f32.xlu0 %v4779
        %v4781 = vpop.xlane.xlu0 %4780
        %v4782 = vsel %vm590, %v4770, 0.0
        %4783 = vadd.xlane.f32.xlu0 %v4782
        %v4784 = vpop.xlane.xlu0 %4783
        %v4785 = vsel %vm590, %v4771, 0.0
        %4786 = vadd.xlane.f32.xlu0 %v4785
        %v4787 = vpop.xlane.xlu0 %4786
        %v4788 = vsel %vm590, %v4772, 0.0
        %4789 = vadd.xlane.f32.xlu0 %v4788
        %v4790 = vpop.xlane.xlu0 %4789
        %v4791 = vsel %vm590, %v4773, 0.0
        %4792 = vadd.xlane.f32.xlu0 %v4791
        %v4793 = vpop.xlane.xlu0 %4792
        %v4794 = vsel %vm590, %v4774, 0.0
        %4795 = vadd.xlane.f32.xlu0 %v4794
        %v4796 = vpop.xlane.xlu0 %4795
        %v4797 = vsel %vm590, %v4775, 0.0
        %4798 = vadd.xlane.f32.xlu0 %v4797
        %v4799 = vpop.xlane.xlu0 %4798
        %v4800 = vadd.f32 %v4736, %v4778
        %v4801 = vadd.f32 %v4739, %v4781
        %v4802 = vadd.f32 %v4742, %v4784
        %v4803 = vadd.f32 %v4745, %v4787
        %v4804 = vadd.f32 %v4748, %v4790
        %v4805 = vadd.f32 %v4751, %v4793
        %v4806 = vadd.f32 %v4754, %v4796
        %v4807 = vadd.f32 %v4757, %v4799
        %v4808 = vld [vmem:[#allocation2 + $0x9] sm:$0xff]
        %v4809 = vld [vmem:[#allocation2 + $0x21] sm:$0xff]
        %v4810 = vld [vmem:[#allocation2 + $0x39] sm:$0xff]
        %v4811 = vld [vmem:[#allocation2 + $0x51] sm:$0xff]
        %v4812 = vld [vmem:[#allocation2 + $0x69] sm:$0xff]
        %v4813 = vld [vmem:[#allocation2 + $0x81] sm:$0xff]
        %v4814 = vld [vmem:[#allocation2 + $0x99] sm:$0xff]
        %v4815 = vld [vmem:[#allocation2 + $0xb1] sm:$0xff]
        %v4816 = vld [vmem:[%s9 + $0x2] sm:$0x1]
        %v4817 = vperm.slane %v4816, 0
        %v4818 = vmul.f32 %v4808, %v4817
        %v4819 = vmul.f32 %v4809, %v4817
        %v4820 = vmul.f32 %v4810, %v4817
        %v4821 = vmul.f32 %v4811, %v4817
        %v4822 = vmul.f32 %v4812, %v4817
        %v4823 = vmul.f32 %v4813, %v4817
        %v4824 = vmul.f32 %v4814, %v4817
        %v4825 = vmul.f32 %v4815, %v4817
        %v4826 = vsel %vm590, %v4818, 0.0
        %4827 = vadd.xlane.f32.xlu0 %v4826
        %v4828 = vpop.xlane.xlu0 %4827
        %v4829 = vsel %vm590, %v4819, 0.0
        %4830 = vadd.xlane.f32.xlu0 %v4829
        %v4831 = vpop.xlane.xlu0 %4830
        %v4832 = vsel %vm590, %v4820, 0.0
        %4833 = vadd.xlane.f32.xlu0 %v4832
        %v4834 = vpop.xlane.xlu0 %4833
        %v4835 = vsel %vm590, %v4821, 0.0
        %4836 = vadd.xlane.f32.xlu0 %v4835
        %v4837 = vpop.xlane.xlu0 %4836
        %v4838 = vsel %vm590, %v4822, 0.0
        %4839 = vadd.xlane.f32.xlu0 %v4838
        %v4840 = vpop.xlane.xlu0 %4839
        %v4841 = vsel %vm590, %v4823, 0.0
        %4842 = vadd.xlane.f32.xlu0 %v4841
        %v4843 = vpop.xlane.xlu0 %4842
        %v4844 = vsel %vm590, %v4824, 0.0
        %4845 = vadd.xlane.f32.xlu0 %v4844
        %v4846 = vpop.xlane.xlu0 %4845
        %v4847 = vsel %vm590, %v4825, 0.0
        %4848 = vadd.xlane.f32.xlu0 %v4847
        %v4849 = vpop.xlane.xlu0 %4848
        %v4850 = vadd.f32 %v4800, %v4828
        %v4851 = vadd.f32 %v4801, %v4831
        %v4852 = vadd.f32 %v4802, %v4834
        %v4853 = vadd.f32 %v4803, %v4837
        %v4854 = vadd.f32 %v4804, %v4840
        %v4855 = vadd.f32 %v4805, %v4843
        %v4856 = vadd.f32 %v4806, %v4846
        %v4857 = vadd.f32 %v4807, %v4849
        %v4858 = vld [vmem:[%s1163 + $0x7] sm:$0xff]
        %v4859 = vld [vmem:[%s1163 + $0x1f] sm:$0xff]
        %v4860 = vld [vmem:[%s1163 + $0x37] sm:$0xff]
        %v4861 = vld [vmem:[%s1163 + $0x4f] sm:$0xff]
        %v4862 = vld [vmem:[%s1163 + $0x67] sm:$0xff]
        %v4863 = vld [vmem:[%s1163 + $0x7f] sm:$0xff]
        %v4864 = vld [vmem:[%s1163 + $0x97] sm:$0xff]
        %v4865 = vld [vmem:[%s1163 + $0xaf] sm:$0xff]
        %v4866 = vld [vmem:[%s9 + $0x3] sm:$0x1]
        %v4867 = vperm.slane %v4866, 0
        %v4868 = vmul.f32 %v4858, %v4867
        %v4869 = vmul.f32 %v4859, %v4867
        %v4870 = vmul.f32 %v4860, %v4867
        %v4871 = vmul.f32 %v4861, %v4867
        %v4872 = vmul.f32 %v4862, %v4867
        %v4873 = vmul.f32 %v4863, %v4867
        %v4874 = vmul.f32 %v4864, %v4867
        %v4875 = vmul.f32 %v4865, %v4867
        %v4876 = vsel %vm590, %v4868, 0.0
        %4877 = vadd.xlane.f32.xlu0 %v4876
        %v4878 = vpop.xlane.xlu0 %4877
        %v4879 = vsel %vm590, %v4869, 0.0
        %4880 = vadd.xlane.f32.xlu0 %v4879
        %v4881 = vpop.xlane.xlu0 %4880
        %v4882 = vsel %vm590, %v4870, 0.0
        %4883 = vadd.xlane.f32.xlu0 %v4882
        %v4884 = vpop.xlane.xlu0 %4883
        %v4885 = vsel %vm590, %v4871, 0.0
        %4886 = vadd.xlane.f32.xlu0 %v4885
        %v4887 = vpop.xlane.xlu0 %4886
        %v4888 = vsel %vm590, %v4872, 0.0
        %4889 = vadd.xlane.f32.xlu0 %v4888
        %v4890 = vpop.xlane.xlu0 %4889
        %v4891 = vsel %vm590, %v4873, 0.0
        %4892 = vadd.xlane.f32.xlu0 %v4891
        %v4893 = vpop.xlane.xlu0 %4892
        %v4894 = vsel %vm590, %v4874, 0.0
        %4895 = vadd.xlane.f32.xlu0 %v4894
        %v4896 = vpop.xlane.xlu0 %4895
        %v4897 = vsel %vm590, %v4875, 0.0
        %4898 = vadd.xlane.f32.xlu0 %v4897
        %v4899 = vpop.xlane.xlu0 %4898
        %v4900 = vadd.f32 %v4850, %v4878
        %v4901 = vadd.f32 %v4851, %v4881
        %v4902 = vadd.f32 %v4852, %v4884
        %v4903 = vadd.f32 %v4853, %v4887
        %v4904 = vadd.f32 %v4854, %v4890
        %v4905 = vadd.f32 %v4855, %v4893
        %v4906 = vadd.f32 %v4856, %v4896
        %v4907 = vadd.f32 %v4857, %v4899
        %v4908 = vld [vmem:[%s1163 + $0x8] sm:$0xff]
        %v4909 = vld [vmem:[%s1163 + $0x20] sm:$0xff]
        %v4910 = vld [vmem:[%s1163 + $0x38] sm:$0xff]
        %v4911 = vld [vmem:[%s1163 + $0x50] sm:$0xff]
        %v4912 = vld [vmem:[%s1163 + $0x68] sm:$0xff]
        %v4913 = vld [vmem:[%s1163 + $0x80] sm:$0xff]
        %v4914 = vld [vmem:[%s1163 + $0x98] sm:$0xff]
        %v4915 = vld [vmem:[%s1163 + $0xb0] sm:$0xff]
        %v4916 = vld [vmem:[%s9 + $0x4] sm:$0x1]
        %v4917 = vperm.slane %v4916, 0
        %v4918 = vmul.f32 %v4908, %v4917
        %v4919 = vmul.f32 %v4909, %v4917
        %v4920 = vmul.f32 %v4910, %v4917
        %v4921 = vmul.f32 %v4911, %v4917
        %v4922 = vmul.f32 %v4912, %v4917
        %v4923 = vmul.f32 %v4913, %v4917
        %v4924 = vmul.f32 %v4914, %v4917
        %v4925 = vmul.f32 %v4915, %v4917
        %v4926 = vsel %vm590, %v4918, 0.0
        %4927 = vadd.xlane.f32.xlu0 %v4926
        %v4928 = vpop.xlane.xlu0 %4927
        %v4929 = vsel %vm590, %v4919, 0.0
        %4930 = vadd.xlane.f32.xlu0 %v4929
        %v4931 = vpop.xlane.xlu0 %4930
        %v4932 = vsel %vm590, %v4920, 0.0
        %4933 = vadd.xlane.f32.xlu0 %v4932
        %v4934 = vpop.xlane.xlu0 %4933
        %v4935 = vsel %vm590, %v4921, 0.0
        %4936 = vadd.xlane.f32.xlu0 %v4935
        %v4937 = vpop.xlane.xlu0 %4936
        %v4938 = vsel %vm590, %v4922, 0.0
        %4939 = vadd.xlane.f32.xlu0 %v4938
        %v4940 = vpop.xlane.xlu0 %4939
        %v4941 = vsel %vm590, %v4923, 0.0
        %4942 = vadd.xlane.f32.xlu0 %v4941
        %v4943 = vpop.xlane.xlu0 %4942
        %v4944 = vsel %vm590, %v4924, 0.0
        %4945 = vadd.xlane.f32.xlu0 %v4944
        %v4946 = vpop.xlane.xlu0 %4945
        %v4947 = vsel %vm590, %v4925, 0.0
        %4948 = vadd.xlane.f32.xlu0 %v4947
        %v4949 = vpop.xlane.xlu0 %4948
        %v4950 = vadd.f32 %v4900, %v4928
        %v4951 = vadd.f32 %v4901, %v4931
        %v4952 = vadd.f32 %v4902, %v4934
        %v4953 = vadd.f32 %v4903, %v4937
        %v4954 = vadd.f32 %v4904, %v4940
        %v4955 = vadd.f32 %v4905, %v4943
        %v4956 = vadd.f32 %v4906, %v4946
        %v4957 = vadd.f32 %v4907, %v4949
        %v4958 = vld [vmem:[%s1163 + $0x9] sm:$0xff]
        %v4959 = vld [vmem:[%s1163 + $0x21] sm:$0xff]
        %v4960 = vld [vmem:[%s1163 + $0x39] sm:$0xff]
        %v4961 = vld [vmem:[%s1163 + $0x51] sm:$0xff]
        %v4962 = vld [vmem:[%s1163 + $0x69] sm:$0xff]
        %v4963 = vld [vmem:[%s1163 + $0x81] sm:$0xff]
        %v4964 = vld [vmem:[%s1163 + $0x99] sm:$0xff]
        %v4965 = vld [vmem:[%s1163 + $0xb1] sm:$0xff]
        %v4966 = vld [vmem:[%s9 + $0x5] sm:$0x1]
        %v4967 = vperm.slane %v4966, 0
        %v4968 = vmul.f32 %v4958, %v4967
        %v4969 = vmul.f32 %v4959, %v4967
        %v4970 = vmul.f32 %v4960, %v4967
        %v4971 = vmul.f32 %v4961, %v4967
        %v4972 = vmul.f32 %v4962, %v4967
        %v4973 = vmul.f32 %v4963, %v4967
        %v4974 = vmul.f32 %v4964, %v4967
        %v4975 = vmul.f32 %v4965, %v4967
        %v4976 = vsel %vm590, %v4968, 0.0
        %4977 = vadd.xlane.f32.xlu0 %v4976
        %v4978 = vpop.xlane.xlu0 %4977
        %v4979 = vsel %vm590, %v4969, 0.0
        %4980 = vadd.xlane.f32.xlu0 %v4979
        %v4981 = vpop.xlane.xlu0 %4980
        %v4982 = vsel %vm590, %v4970, 0.0
        %4983 = vadd.xlane.f32.xlu0 %v4982
        %v4984 = vpop.xlane.xlu0 %4983
        %v4985 = vsel %vm590, %v4971, 0.0
        %4986 = vadd.xlane.f32.xlu0 %v4985
        %v4987 = vpop.xlane.xlu0 %4986
        %v4988 = vsel %vm590, %v4972, 0.0
        %4989 = vadd.xlane.f32.xlu0 %v4988
        %v4990 = vpop.xlane.xlu0 %4989
        %v4991 = vsel %vm590, %v4973, 0.0
        %4992 = vadd.xlane.f32.xlu0 %v4991
        %v4993 = vpop.xlane.xlu0 %4992
        %v4994 = vsel %vm590, %v4974, 0.0
        %4995 = vadd.xlane.f32.xlu0 %v4994
        %v4996 = vpop.xlane.xlu0 %4995
        %v4997 = vsel %vm590, %v4975, 0.0
        %4998 = vadd.xlane.f32.xlu0 %v4997
        %v4999 = vpop.xlane.xlu0 %4998
        %v5000 = vadd.f32 %v4950, %v4978
        %v5001 = vadd.f32 %v4951, %v4981
        %v5002 = vadd.f32 %v4952, %v4984
        %v5003 = vadd.f32 %v4953, %v4987
        %v5004 = vadd.f32 %v4954, %v4990
        %v5005 = vadd.f32 %v4955, %v4993
        %v5006 = vadd.f32 %v4956, %v4996
        %v5007 = vadd.f32 %v4957, %v4999
        %v5008 = vld [vmem:[%s1719 + $0x7] sm:$0xff]
        %v5009 = vld [vmem:[%s1719 + $0x1f] sm:$0xff]
        %v5010 = vld [vmem:[%s1719 + $0x37] sm:$0xff]
        %v5011 = vld [vmem:[%s1719 + $0x4f] sm:$0xff]
        %v5012 = vld [vmem:[%s1719 + $0x67] sm:$0xff]
        %v5013 = vld [vmem:[%s1719 + $0x7f] sm:$0xff]
        %v5014 = vld [vmem:[%s1719 + $0x97] sm:$0xff]
        %v5015 = vld [vmem:[%s1719 + $0xaf] sm:$0xff]
        %v5016 = vld [vmem:[%s9 + $0x6] sm:$0x1]
        %v5017 = vperm.slane %v5016, 0
        %v5018 = vmul.f32 %v5008, %v5017
        %v5019 = vmul.f32 %v5009, %v5017
        %v5020 = vmul.f32 %v5010, %v5017
        %v5021 = vmul.f32 %v5011, %v5017
        %v5022 = vmul.f32 %v5012, %v5017
        %v5023 = vmul.f32 %v5013, %v5017
        %v5024 = vmul.f32 %v5014, %v5017
        %v5025 = vmul.f32 %v5015, %v5017
        %v5026 = vsel %vm590, %v5018, 0.0
        %5027 = vadd.xlane.f32.xlu0 %v5026
        %v5028 = vpop.xlane.xlu0 %5027
        %v5029 = vsel %vm590, %v5019, 0.0
        %5030 = vadd.xlane.f32.xlu0 %v5029
        %v5031 = vpop.xlane.xlu0 %5030
        %v5032 = vsel %vm590, %v5020, 0.0
        %5033 = vadd.xlane.f32.xlu0 %v5032
        %v5034 = vpop.xlane.xlu0 %5033
        %v5035 = vsel %vm590, %v5021, 0.0
        %5036 = vadd.xlane.f32.xlu0 %v5035
        %v5037 = vpop.xlane.xlu0 %5036
        %v5038 = vsel %vm590, %v5022, 0.0
        %5039 = vadd.xlane.f32.xlu0 %v5038
        %v5040 = vpop.xlane.xlu0 %5039
        %v5041 = vsel %vm590, %v5023, 0.0
        %5042 = vadd.xlane.f32.xlu0 %v5041
        %v5043 = vpop.xlane.xlu0 %5042
        %v5044 = vsel %vm590, %v5024, 0.0
        %5045 = vadd.xlane.f32.xlu0 %v5044
        %v5046 = vpop.xlane.xlu0 %5045
        %v5047 = vsel %vm590, %v5025, 0.0
        %5048 = vadd.xlane.f32.xlu0 %v5047
        %v5049 = vpop.xlane.xlu0 %5048
        %v5050 = vadd.f32 %v5000, %v5028
        %v5051 = vadd.f32 %v5001, %v5031
        %v5052 = vadd.f32 %v5002, %v5034
        %v5053 = vadd.f32 %v5003, %v5037
        %v5054 = vadd.f32 %v5004, %v5040
        %v5055 = vadd.f32 %v5005, %v5043
        %v5056 = vadd.f32 %v5006, %v5046
        %v5057 = vadd.f32 %v5007, %v5049
        %v5058 = vld [vmem:[%s1719 + $0x8] sm:$0xff]
        %v5059 = vld [vmem:[%s1719 + $0x20] sm:$0xff]
        %v5060 = vld [vmem:[%s1719 + $0x38] sm:$0xff]
        %v5061 = vld [vmem:[%s1719 + $0x50] sm:$0xff]
        %v5062 = vld [vmem:[%s1719 + $0x68] sm:$0xff]
        %v5063 = vld [vmem:[%s1719 + $0x80] sm:$0xff]
        %v5064 = vld [vmem:[%s1719 + $0x98] sm:$0xff]
        %v5065 = vld [vmem:[%s1719 + $0xb0] sm:$0xff]
        %v5066 = vld [vmem:[%s9 + $0x7] sm:$0x1]
        %v5067 = vperm.slane %v5066, 0
        %v5068 = vmul.f32 %v5058, %v5067
        %v5069 = vmul.f32 %v5059, %v5067
        %v5070 = vmul.f32 %v5060, %v5067
        %v5071 = vmul.f32 %v5061, %v5067
        %v5072 = vmul.f32 %v5062, %v5067
        %v5073 = vmul.f32 %v5063, %v5067
        %v5074 = vmul.f32 %v5064, %v5067
        %v5075 = vmul.f32 %v5065, %v5067
        %v5076 = vsel %vm590, %v5068, 0.0
        %5077 = vadd.xlane.f32.xlu0 %v5076
        %v5078 = vpop.xlane.xlu0 %5077
        %v5079 = vsel %vm590, %v5069, 0.0
        %5080 = vadd.xlane.f32.xlu0 %v5079
        %v5081 = vpop.xlane.xlu0 %5080
        %v5082 = vsel %vm590, %v5070, 0.0
        %5083 = vadd.xlane.f32.xlu0 %v5082
        %v5084 = vpop.xlane.xlu0 %5083
        %v5085 = vsel %vm590, %v5071, 0.0
        %5086 = vadd.xlane.f32.xlu0 %v5085
        %v5087 = vpop.xlane.xlu0 %5086
        %v5088 = vsel %vm590, %v5072, 0.0
        %5089 = vadd.xlane.f32.xlu0 %v5088
        %v5090 = vpop.xlane.xlu0 %5089
        %v5091 = vsel %vm590, %v5073, 0.0
        %5092 = vadd.xlane.f32.xlu0 %v5091
        %v5093 = vpop.xlane.xlu0 %5092
        %v5094 = vsel %vm590, %v5074, 0.0
        %5095 = vadd.xlane.f32.xlu0 %v5094
        %v5096 = vpop.xlane.xlu0 %5095
        %v5097 = vsel %vm590, %v5075, 0.0
        %5098 = vadd.xlane.f32.xlu0 %v5097
        %v5099 = vpop.xlane.xlu0 %5098
        %v5100 = vadd.f32 %v5050, %v5078
        %v5101 = vadd.f32 %v5051, %v5081
        %v5102 = vadd.f32 %v5052, %v5084
        %v5103 = vadd.f32 %v5053, %v5087
        %v5104 = vadd.f32 %v5054, %v5090
        %v5105 = vadd.f32 %v5055, %v5093
        %v5106 = vadd.f32 %v5056, %v5096
        %v5107 = vadd.f32 %v5057, %v5099
        %v5108 = vld [vmem:[%s1719 + $0x9] sm:$0xff]
        %v5109 = vld [vmem:[%s1719 + $0x21] sm:$0xff]
        %v5110 = vld [vmem:[%s1719 + $0x39] sm:$0xff]
        %v5111 = vld [vmem:[%s1719 + $0x51] sm:$0xff]
        %v5112 = vld [vmem:[%s1719 + $0x69] sm:$0xff]
        %v5113 = vld [vmem:[%s1719 + $0x81] sm:$0xff]
        %v5114 = vld [vmem:[%s1719 + $0x99] sm:$0xff]
        %v5115 = vld [vmem:[%s1719 + $0xb1] sm:$0xff]
        %v5116 = vld [vmem:[%s9 + $0x8] sm:$0x1]
        %v5117 = vperm.slane %v5116, 0
        %v5118 = vmul.f32 %v5108, %v5117
        %v5119 = vmul.f32 %v5109, %v5117
        %v5120 = vmul.f32 %v5110, %v5117
        %v5121 = vmul.f32 %v5111, %v5117
        %v5122 = vmul.f32 %v5112, %v5117
        %v5123 = vmul.f32 %v5113, %v5117
        %v5124 = vmul.f32 %v5114, %v5117
        %v5125 = vmul.f32 %v5115, %v5117
        %v5126 = vsel %vm590, %v5118, 0.0
        %5127 = vadd.xlane.f32.xlu0 %v5126
        %v5128 = vpop.xlane.xlu0 %5127
        %v5129 = vsel %vm590, %v5119, 0.0
        %5130 = vadd.xlane.f32.xlu0 %v5129
        %v5131 = vpop.xlane.xlu0 %5130
        %v5132 = vsel %vm590, %v5120, 0.0
        %5133 = vadd.xlane.f32.xlu0 %v5132
        %v5134 = vpop.xlane.xlu0 %5133
        %v5135 = vsel %vm590, %v5121, 0.0
        %5136 = vadd.xlane.f32.xlu0 %v5135
        %v5137 = vpop.xlane.xlu0 %5136
        %v5138 = vsel %vm590, %v5122, 0.0
        %5139 = vadd.xlane.f32.xlu0 %v5138
        %v5140 = vpop.xlane.xlu0 %5139
        %v5141 = vsel %vm590, %v5123, 0.0
        %5142 = vadd.xlane.f32.xlu0 %v5141
        %v5143 = vpop.xlane.xlu0 %5142
        %v5144 = vsel %vm590, %v5124, 0.0
        %5145 = vadd.xlane.f32.xlu0 %v5144
        %v5146 = vpop.xlane.xlu0 %5145
        %v5147 = vsel %vm590, %v5125, 0.0
        %5148 = vadd.xlane.f32.xlu0 %v5147
        %v5149 = vpop.xlane.xlu0 %5148
        %v5150 = vadd.f32 %v5100, %v5128
        %v5151 = vadd.f32 %v5101, %v5131
        %v5152 = vadd.f32 %v5102, %v5134
        %v5153 = vadd.f32 %v5103, %v5137
        %v5154 = vadd.f32 %v5104, %v5140
        %v5155 = vadd.f32 %v5105, %v5143
        %v5156 = vadd.f32 %v5106, %v5146
        %v5157 = vadd.f32 %v5107, %v5149
        %v5158 = vld [vmem:[%s10 + $0x5] sm:$0x1]
        %s5160 = vtos %v5158
        %v5161 = vstv %s5160
        %v5163 = vadd.f32 %v5150, %v5161
        %v5164 = vadd.f32 %v5151, %v5161
        %v5165 = vadd.f32 %v5152, %v5161
        %v5166 = vadd.f32 %v5153, %v5161
        %v5167 = vadd.f32 %v5154, %v5161
        %v5168 = vadd.f32 %v5155, %v5161
        %v5169 = vadd.f32 %v5156, %v5161
        %v5170 = vadd.f32 %v5157, %v5161
        %v5171 = vld [vmem:[%s11] sm:$0xff]
        %v5172 = vld [vmem:[%s11 + $0x8] sm:$0xff]
        %v5181 = vlaneseq
        %v5182 = vand.u32 %v5181, 127
        %v5183 = vperm.slane %v5163, %v5182
        %v5184 = vperm.slane %v5164, %v5182
        %v5185 = vperm.slane %v5165, %v5182
        %v5186 = vperm.slane %v5166, %v5182
        %v5187 = vperm.slane %v5167, %v5182
        %v5188 = vperm.slane %v5168, %v5182
        %v5189 = vperm.slane %v5169, %v5182
        %v5190 = vperm.slane %v5170, %v5182
        %vm5191 = vcmask 1041409
        %v5192 = vsel %vm5191, %v5184, %v5183
        %vm5193 = vcmask 1042434
        %v5194 = vsel %vm5193, %v5185, %v5192
        %vm5195 = vcmask 1043459
        %v5196 = vsel %vm5195, %v5186, %v5194
        %vm5197 = vcmask 1044484
        %v5198 = vsel %vm5197, %v5187, %v5196
        %vm5199 = vcmask 1045509
        %v5200 = vsel %vm5199, %v5188, %v5198
        %vm5201 = vcmask 1046534
        %v5202 = vsel %vm5201, %v5189, %v5200
        %vm5203 = vcmask 1047559
        %v5204 = vsel %vm5203, %v5190, %v5202
        %vm5206 = vcmask 64512
        %v5208 = vsel %vm5206, %v5171, 0
        %v5211 = vsel %vm5206, %v5172, 0
        %5213 = vmatpush.msra.mxu0 0.0
        %5214 = vmatpush.msra.mxu0 0.0
        %5215 = vmatpush.msra.mxu0 0.0
        %5216 = vmatpush.msra.mxu0 0.0
        %5217 = vmatpush.msra.mxu0 0.0
        %5218 = vmatpush.msra.mxu0 0.0
        %5219 = vmatpush.msra.mxu0 0.0
        %5220 = vmatpush.msra.mxu0 0.0
        %5221 = vmatpush.msra.mxu0 0.0
        %5222 = vmatpush.msra.mxu0 0.0
        %5223 = vmatpush.msra.mxu0 0.0
        %5224 = vmatpush.msra.mxu0 0.0
        %5225 = vmatpush.msra.mxu0 0.0
        %5226 = vmatpush.msra.mxu0 0.0
        %5227 = vmatpush.msra.mxu0 0.0
        %5228 = vmatpush.msra.mxu0 %v5204
        %5229 = vmatmul.f32.gmra.mxu0 %v5208
        %v5230 = vpop.f32.mrf.mxu0
        %v5231 = vadd.f32 0.0, %v5230
        %5232 = vmatmul.f32.gmra.mxu0 %v5211
        %v5233 = vpop.f32.mrf.mxu0
        %v5234 = vadd.f32 0.0, %v5233
        %5235 = vdwg.mxu0
        %v5236 = vld [vmem:[%s12] sm:$0xff]
        %v5238 = vsel %vm5206, %v5231, 0
        %v5241 = vsel %vm5206, %v5234, 0
        %5243 = vmatpush.msra.mxu0 0.0
        %5244 = vmatpush.msra.mxu0 0.0
        %5245 = vmatpush.msra.mxu0 0.0
        %5246 = vmatpush.msra.mxu0 0.0
        %5247 = vmatpush.msra.mxu0 0.0
        %5248 = vmatpush.msra.mxu0 0.0
        %5249 = vmatpush.msra.mxu0 0.0
        %5250 = vmatpush.msra.mxu0 0.0
        %5251 = vmatpush.msra.mxu0 0.0
        %5252 = vmatpush.msra.mxu0 0.0
        %5253 = vmatpush.msra.mxu0 0.0
        %5254 = vmatpush.msra.mxu0 0.0
        %5255 = vmatpush.msra.mxu0 0.0
        %5256 = vmatpush.msra.mxu0 0.0
        %5257 = vmatpush.msra.mxu0 0.0
        %5258 = vmatpush.msra.mxu0 %v5236
        %5259 = vmatmul.f32.gmra.mxu0 %v5238
        %v5260 = vpop.f32.mrf.mxu0
        %v5261 = vadd.f32 0.0, %v5260
        %5262 = vmatmul.f32.gmra.mxu0 %v5241
        %v5263 = vpop.f32.mrf.mxu0
        %v5264 = vadd.f32 0.0, %v5263
        %5265 = vdwg.mxu0
        %vm5266 = vcmask 130048
        %5267 = vst.msk [vmem:[%s583] sm:$0xff] %vm5266, %v5261
        %5268 = vst.msk [vmem:[%s583 + $0x8] sm:$0xff] %vm5266, %v5264
        %s5269 = sand.u32 %s331, 1
        %s5270 = scalar_lea.sflag [#allocation7], %s5269
        %s5271 = sand.u32 %s331, 1
        %s5272 = smul.addr %s5271, 16
        %s5273 = scalar_lea.vmem [#allocation16], %s5272
        // Predicated region
        $region97: #{tpu_custom_call.1} parent=71 // pred_check
          %p5274 = pneg %p341
        $region98: #{tpu_custom_call.1} parent=71 // pred_check_branch
          %5276 = sbr.rel (%p5274) target = $region100
        $region99: #{tpu_custom_call.1} parent=71 // pred_region
          %5278 = vsyncadd %s5270, 0
          %s5279 = smul.addr %s35, 2
          %s5280 = smul.addr %s5279, 8
          %s5281 = scalar_lea.hbm %s13, %s5280
          %s5282 = sshll.u32 %s5273, 4
          %s5283 = int_to_ptr.vmem [resolvable:$true] %s5282
          %s5284 = sshll.u32 %s5281, 4
          %s5285 = int_to_ptr.hbm [resolvable:$true] %s5284
          %5290 = dma.vmem_to_hbm [thread:$0]  %s5283, 256, %s5285, %s5270, 128, 128, 8
        $region100: #{tpu_custom_call.1} parent=71 // pred_fallthru
          _
      $region72: #{tpu_custom_call.1} parent=5 // pred_fallthru
        _
      %p5291 = scmp.le.s32.totalorder 2, %s30
      // Predicated region
      $region101: #{tpu_custom_call.1} parent=5 // pred_check
        %p5292 = pneg %p5291
      $region102: #{tpu_custom_call.1} parent=5 // pred_check_branch
        %5294 = sbr.rel (%p5292) target = $region104
      $region103: #{tpu_custom_call.1} parent=5 // pred_region
        %s5295 = ssub.s32 %s30, 2
        // Predicated region
        $region105: #{tpu_custom_call.1} parent=103 // pred_check
          %p5296 = pneg %p347
        $region106: #{tpu_custom_call.1} parent=103 // pred_check_branch
          %5298 = sbr.rel (%p5296) target = $region108
        $region107: #{tpu_custom_call.1} parent=103 // pred_region
          %s5299 = sand.u32 %s332, 1
          %s5300 = scalar_lea.sflag [#allocation7], %s5299
          %s5301 = sand.u32 %s332, 1
          %s5302 = smul.addr %s5301, 16
          %s5303 = scalar_lea.vmem [#allocation16], %s5302
          %5305 = dma.done %s5300, 256
        $region108: #{tpu_custom_call.1} parent=103 // pred_fallthru
          _
      $region104: #{tpu_custom_call.1} parent=5 // pred_fallthru
        _
    $region6: #{tpu_custom_call.1} parent=1 // loop_footer
      %s34 = sadd.s32 1, %s30
    $region7: #{tpu_custom_call.1} parent=1 // loop_footer_branch
      %29 = sbr.rel target = $region3
    $region8: #{tpu_custom_call.1} parent=1 // loop_exit
      _
    %5306 = vsyncpa [#allocation6], 1
    %s5307 = scalar_lea.sflag [#allocation6], 1
    %5308 = vsyncpa %s5307, 1
    %5309 = vsyncpa [#allocation9], 1
    %s5310 = scalar_lea.sflag [#allocation9], 1
    %5311 = vsyncpa %s5310, 1
    %5312 = vsyncpa [#allocation12], 1
    %5313 = vsyncpa [#allocation15], 1
    %5314 = vsyncpa [#allocation7], 1
    %s5315 = scalar_lea.sflag [#allocation7], 1
    %5316 = vsyncpa %s5315, 1

</llo_original>
